<compile_context>
chip_gen: v5e
topology: v5e:2x2
jax: 0.10.0
libtpu: 0.0.40
codegen_flags: <defaults>
</compile_context>

<pallas_src>
import functools

import jax
import jax.numpy as jnp
import numpy as np
from jax.experimental import pallas as pl
from jax.experimental.pallas import tpu as pltpu


COMPUTE_DTYPE = jnp.bfloat16      # MXU-friendly inputs; f32 accumulation
BN_EPS = 1e-5                     # torch.nn.BatchNorm2d default


def _vmem_limit_bytes():
    """Derive a safe scoped-VMEM limit from the actual chip (v5e/v6e: 128 MiB,
    v7x: 64 MiB) instead of a hard-coded constant."""
    cap = 64 * 1024 * 1024
    try:
        cap = int(getattr(pltpu.get_tpu_info(), "vmem_capacity_bytes", cap))
    except Exception:
        pass
    return max(16 * 1024 * 1024, min(int(cap * 0.4), 64 * 1024 * 1024))


# ----------------------- weight preprocessing (XLA side) --------------------

def _tap_matrices(w, stride, pad, h_in, w_in):
    """Per-tap GEMM operands for ConvTranspose2d(bias=False) in the
    (rows = H, lanes = W*C) activation layout.

    w: (Cin, Cout, K, K)  (PyTorch ConvTranspose2d weight layout)
    Returns:
      R: (K, W_in*Cin, OW*Cout) bf16  -- horizontal taps + channel mixing
      E: (K, OH, H_in)          bf16  -- 0/1 vertical tap / row-selection
      OH, OW: output spatial size
    """
    cin, cout, k, _ = w.shape
    oh = (h_in - 1) * stride - 2 * pad + k
    ow = (w_in - 1) * stride - 2 * pad + k
    pp = k - 1 - pad
    # flipped kernel: wf[:, :, a, b] = w[:, :, k-1-a, k-1-b]
    wf = jnp.flip(w, (2, 3)).astype(jnp.float32)

    # R[a][wi*Cin + ci, o*Cout + co] = sum_b [pp + stride*wi == o + b] * wf[ci, co, a, b]
    wi = np.arange(w_in)[:, None, None]
    oi = np.arange(ow)[None, :, None]
    bi = np.arange(k)[None, None, :]
    sel = jnp.asarray((pp + stride * wi == oi + bi).astype(np.float32))   # (W, OW, K)
    r = jnp.einsum("wob,cdab->awcod", sel, wf)                            # (K, W, Cin, OW, Cout)
    r = r.reshape(k, w_in * cin, ow * cout).astype(COMPUTE_DTYPE)

    # E[a][o, hi] = [o + a == pp + stride*hi]
    ohi = np.arange(oh)[None, :, None]
    hii = np.arange(h_in)[None, None, :]
    ai = np.arange(k)[:, None, None]
    e = jnp.asarray((ohi + ai == pp + stride * hii).astype(np.float32))
    e = e.astype(COMPUTE_DTYPE)                                           # (K, OH, H_in)
    return r, e, oh, ow


def _group_mats(groups, cout):
    """0/1 group-sum matrices for per-channel BN stats over an
    (ow, c)-interleaved lane layout (lane j belongs to channel j % cout)."""
    eye = np.eye(cout, dtype=np.float32)
    g = jnp.asarray(np.tile(eye, (groups, 1)))     # (groups*cout, cout)
    gt = jnp.asarray(np.tile(eye, (1, groups)))    # (cout, groups*cout)
    return g, gt


# ------------------------------ kernel body ----------------------------------

def _deconv_taps(h_list, r_ref, e_ref):
    """acc_n = sum_a (E_a @ h_n) @ R_a   for every batch element n."""
    k, _, h_in = e_ref.shape
    outs = []
    for h_n in h_list:
        acc = None
        for a in range(k):
            if h_in == 1:
                # (OH, 1) * (1, W*Cin) broadcast == exact row selection
                rows = (e_ref[a] * h_n).astype(h_n.dtype)
            else:
                rows = jnp.dot(e_ref[a], h_n,
                               preferred_element_type=jnp.float32).astype(h_n.dtype)
            term = jnp.dot(rows, r_ref[a], preferred_element_type=jnp.float32)
            acc = term if acc is None else acc + term
        outs.append(acc)                                   # (OH, OW*Cout) f32
    return outs


def _bn_relu_lanes(accs, g_ref, b_ref, gm_ref, gt_ref, eps):
    """Training-mode BatchNorm (centered variance) + ReLU over a list of per-n
    (OH, OW*Cout) f32 accumulators; returns bf16 activations."""
    cout = g_ref.shape[1]
    oh, owc = accs[0].shape
    m_total = float(len(accs) * oh * (owc // cout))
    inv_m = 1.0 / m_total
    gm = gm_ref[...]
    gt = gt_ref[...]

    colsum = jnp.sum(accs[0], axis=0, keepdims=True)
    for a in accs[1:]:
        colsum = colsum + jnp.sum(a, axis=0, keepdims=True)
    mean_c = jnp.dot(colsum, gm, preferred_element_type=jnp.float32) * inv_m
    mean_f = jnp.dot(mean_c, gt, preferred_element_type=jnp.float32)

    sq = None
    for a in accs:
        d = a - mean_f
        s = jnp.sum(d * d, axis=0, keepdims=True)
        sq = s if sq is None else sq + s
    var_c = jnp.dot(sq, gm, preferred_element_type=jnp.float32) * inv_m

    scale_c = g_ref[...] * jax.lax.rsqrt(var_c + eps)
    scale_f = jnp.dot(scale_c, gt, preferred_element_type=jnp.float32)
    shift_f = jnp.dot(b_ref[...], gt, preferred_element_type=jnp.float32)

    return [jnp.maximum((a - mean_f) * scale_f + shift_f, 0.0).astype(COMPUTE_DTYPE)
            for a in accs]


def _generator_kernel(*refs, n_bn_layers, eps):
    """Whole-generator fused kernel.

    refs = [x,
            (R, E, gamma, beta, G, GT)  x n_bn_layers,   # deconv+BN+ReLU
            R_last, E_last,                               # deconv+Tanh
            out]
    """
    x_ref = refs[0]
    o_ref = refs[-1]
    n_batch = x_ref.shape[0]

    h = [x_ref[n] for n in range(n_batch)]                 # (1, nz) bf16 each
    idx = 1
    for _ in range(n_bn_layers):
        r_ref, e_ref, g_ref, b_ref, gm_ref, gt_ref = refs[idx:idx + 6]
        idx += 6
        h = _bn_relu_lanes(_deconv_taps(h, r_ref, e_ref),
                           g_ref, b_ref, gm_ref, gt_ref, eps)
    r_ref, e_ref = refs[idx:idx + 2]
    for n, acc in enumerate(_deconv_taps(h, r_ref, e_ref)):
        o_ref[n] = jnp.tanh(acc)                           # (OH, OW*nc) f32


# ----------------------------- Generator module ------------------------------

def init_generator_params(key, nz, ngf, nc, n_classes):
    ks = jax.random.split(key, 12)

    def w(k, cin, cout):
        return 0.05 * jax.random.normal(k, (cin, cout, 4, 4), jnp.float32)

    def bn(k, c):
        g = 1.0 + 0.1 * jax.random.normal(k, (c,), jnp.float32)
        b = 0.1 * jax.random.normal(jax.random.fold_in(k, 1), (c,), jnp.float32)
        return g, b

    params = {
        # label_emb exists in __init__ but is only used in the CUDA multi-GPU
        # branch of forward(); the single-device path ignores it.
        "label_emb": 0.1 * jax.random.normal(ks[0], (n_classes, nz), jnp.float32),
        "w1": w(ks[1], nz, ngf * 8),      "bn1": bn(ks[2], ngf * 8),
        "w2": w(ks[3], ngf * 8, ngf * 4), "bn2": bn(ks[4], ngf * 4),
        "w3": w(ks[5], ngf * 4, ngf * 2), "bn3": bn(ks[6], ngf * 2),
        "w4": w(ks[7], ngf * 2, ngf),     "bn4": bn(ks[8], ngf),
        "w5": w(ks[9], ngf, nc),
    }
    return params


def generator_forward(params, x, labels):
    # forward(): single-device branch -> output = self.main(input)
    # (labels / label_emb are unused on this path, matching the reference)
    del labels
    n_batch, nz = x.shape[0], x.shape[1]

    layer_defs = [
        (params["w1"], params["bn1"], 1, 0),
        (params["w2"], params["bn2"], 2, 1),
        (params["w3"], params["bn3"], 2, 1),
        (params["w4"], params["bn4"], 2, 1),
        (params["w5"], None, 2, 1),
    ]

    h_sp = w_sp = 1
    operands = [x.reshape(n_batch, 1, nz).astype(COMPUTE_DTYPE)]
    for w_p, bn, stride, pad in layer_defs:
        cout = w_p.shape[1]
        r_mat, e_mat, oh, ow = _tap_matrices(w_p, stride, pad, h_sp, w_sp)
        operands += [r_mat, e_mat]
        if bn is not None:
            gamma, beta = bn
            gmat, gtmat = _group_mats(ow, cout)
            operands += [gamma.reshape(1, cout).astype(jnp.float32),
                         beta.reshape(1, cout).astype(jnp.float32), gmat, gtmat]
        h_sp, w_sp = oh, ow

    nc = layer_defs[-1][0].shape[1]
    vmem_limit = _vmem_limit_bytes()

    total_bytes = sum(int(np.prod(op.shape)) * op.dtype.itemsize for op in operands)
    # TODO(synk): add a tiled / multi-call fallback for configs that exceed VMEM
    # (e.g. the module defaults nz=100, ngf=64 with large batches).
    if total_bytes > vmem_limit // 2:
        raise NotImplementedError(
            "generator operands do not fit the single fused-VMEM kernel")

    vmem = pl.BlockSpec(memory_space=pltpu.MemorySpace.VMEM)
    img = pl.pallas_call(
        functools.partial(_generator_kernel,
                          n_bn_layers=len(layer_defs) - 1, eps=BN_EPS),
        out_shape=jax.ShapeDtypeStruct((n_batch, h_sp, w_sp * nc), jnp.float32),
        in_specs=[vmem] * len(operands),
        out_specs=vmem,
        compiler_params=pltpu.CompilerParams(vmem_limit_bytes=vmem_limit),
    )(*operands)

    # (N, OH, OW*nc) -> NHWC -> NCHW
    return jnp.transpose(img.reshape(n_batch, h_sp, w_sp, nc), (0, 3, 1, 2))


# ------------------------------ pure-JAX reference ---------------------------
# Uses the same bf16-input / f32-accumulate precision as the Pallas path so the
# comparison checks the kernel math apples-to-apples.

def _deconv_ref(x, w, stride, pad):
    k = w.shape[2]
    w_conv = jnp.flip(w, (2, 3)).transpose(1, 0, 2, 3)   # (Cout, Cin, K, K)
    return jax.lax.conv_general_dilated(
        x.astype(COMPUTE_DTYPE), w_conv.astype(COMPUTE_DTYPE),
        window_strides=(1, 1),
        padding=[(k - 1 - pad, k - 1 - pad)] * 2,
        lhs_dilation=(stride, stride),
        dimension_numbers=("NCHW", "OIHW", "NCHW"),
        preferred_element_type=jnp.float32)


def _bn_relu_ref(x, g, b, eps=BN_EPS):
    mean = x.mean(axis=(0, 2, 3), keepdims=True)
    var = jnp.square(x - mean).mean(axis=(0, 2, 3), keepdims=True)
    y = (x - mean) / jnp.sqrt(var + eps)
    y = y * g.reshape(1, -1, 1, 1) + b.reshape(1, -1, 1, 1)
    return jnp.maximum(y, 0.0)


def generator_forward_ref(params, x):
    h = _bn_relu_ref(_deconv_ref(x, params["w1"], 1, 0), *params["bn1"])
    h = _bn_relu_ref(_deconv_ref(h, params["w2"], 2, 1), *params["bn2"])
    h = _bn_relu_ref(_deconv_ref(h, params["w3"], 2, 1), *params["bn3"])
    h = _bn_relu_ref(_deconv_ref(h, params["w4"], 2, 1), *params["bn4"])
    return jnp.tanh(_deconv_ref(h, params["w5"], 2, 1))


# ----------------------------------- main ------------------------------------

if __name__ == "__main__":
    # small shapes consistent with the module: nz=32, ngf=8, nc=1
    B, NZ, NGF, NC, NCLASSES = 2, 32, 8, 1, 2

    key = jax.random.PRNGKey(0)
    kp, kx, kl = jax.random.split(key, 3)
    params = init_generator_params(kp, NZ, NGF, NC, NCLASSES)

    x = jax.random.normal(kx, (B, NZ, 1, 1), jnp.float32)     # NCHW latent
    labels = jax.random.randint(kl, (B,), 0, NCLASSES)

    fwd = jax.jit(generator_forward)
    out = jax.block_until_ready(fwd(params, x, labels))       # (B, NC, 64, 64)
    assert out.shape == (B, NC, 64, 64), out.shape

    ref = jax.block_until_ready(generator_forward_ref(params, x))
    np.testing.assert_allclose(np.asarray(out), np.asarray(ref),
                               rtol=2e-2, atol=2e-2)

    print("KERNEL_OK")
</pallas_src>

<mosaic_0001>
module attributes {stable_mosaic.version = 11 : i64} {
  func.func @_generator_kernel(%arg0: memref<2x1x32xbf16, #tpu.memory_space<vmem>>, %arg1: memref<4x32x256xbf16, #tpu.memory_space<vmem>>, %arg2: memref<4x4x1xbf16, #tpu.memory_space<vmem>>, %arg3: memref<1x64xf32, #tpu.memory_space<vmem>>, %arg4: memref<1x64xf32, #tpu.memory_space<vmem>>, %arg5: memref<256x64xf32, #tpu.memory_space<vmem>>, %arg6: memref<64x256xf32, #tpu.memory_space<vmem>>, %arg7: memref<4x256x256xbf16, #tpu.memory_space<vmem>>, %arg8: memref<4x8x4xbf16, #tpu.memory_space<vmem>>, %arg9: memref<1x32xf32, #tpu.memory_space<vmem>>, %arg10: memref<1x32xf32, #tpu.memory_space<vmem>>, %arg11: memref<256x32xf32, #tpu.memory_space<vmem>>, %arg12: memref<32x256xf32, #tpu.memory_space<vmem>>, %arg13: memref<4x256x256xbf16, #tpu.memory_space<vmem>>, %arg14: memref<4x16x8xbf16, #tpu.memory_space<vmem>>, %arg15: memref<1x16xf32, #tpu.memory_space<vmem>>, %arg16: memref<1x16xf32, #tpu.memory_space<vmem>>, %arg17: memref<256x16xf32, #tpu.memory_space<vmem>>, %arg18: memref<16x256xf32, #tpu.memory_space<vmem>>, %arg19: memref<4x256x256xbf16, #tpu.memory_space<vmem>>, %arg20: memref<4x32x16xbf16, #tpu.memory_space<vmem>>, %arg21: memref<1x8xf32, #tpu.memory_space<vmem>>, %arg22: memref<1x8xf32, #tpu.memory_space<vmem>>, %arg23: memref<256x8xf32, #tpu.memory_space<vmem>>, %arg24: memref<8x256xf32, #tpu.memory_space<vmem>>, %arg25: memref<4x256x64xbf16, #tpu.memory_space<vmem>>, %arg26: memref<4x64x32xbf16, #tpu.memory_space<vmem>>, %arg27: memref<2x64x64xf32, #tpu.memory_space<vmem>>) attributes {dimension_semantics = [], scalar_prefetch = 0 : i64, scratch_operands = 0 : i64, tpu.core_type = #tpu.core_type<tc>} {
    %c0 = arith.constant 0 : index
    %c0_0 = arith.constant 0 : index
    %c0_1 = arith.constant 0 : index
    %0 = vector.load %arg0[%c0, %c0_0, %c0_1] : memref<2x1x32xbf16, #tpu.memory_space<vmem>>, vector<1x1x32xbf16>
    %1 = vector.shape_cast %0 : vector<1x1x32xbf16> to vector<1x32xbf16>
    %c1 = arith.constant 1 : index
    %c0_2 = arith.constant 0 : index
    %c0_3 = arith.constant 0 : index
    %2 = vector.load %arg0[%c1, %c0_2, %c0_3] : memref<2x1x32xbf16, #tpu.memory_space<vmem>>, vector<1x1x32xbf16>
    %3 = vector.shape_cast %2 : vector<1x1x32xbf16> to vector<1x32xbf16>
    %c0_4 = arith.constant 0 : index
    %c0_5 = arith.constant 0 : index
    %c0_6 = arith.constant 0 : index
    %4 = vector.load %arg2[%c0_4, %c0_5, %c0_6] : memref<4x4x1xbf16, #tpu.memory_space<vmem>>, vector<1x4x1xbf16>
    %5 = vector.shape_cast %4 : vector<1x4x1xbf16> to vector<4x1xbf16>
    %6 = vector.broadcast %5 : vector<4x1xbf16> to vector<4x32xbf16>
    %7 = vector.broadcast %1 : vector<1x32xbf16> to vector<4x32xbf16>
    %8 = arith.mulf %6, %7 : vector<4x32xbf16>
    %c0_7 = arith.constant 0 : index
    %c0_8 = arith.constant 0 : index
    %c0_9 = arith.constant 0 : index
    %9 = vector.load %arg1[%c0_7, %c0_8, %c0_9] : memref<4x32x256xbf16, #tpu.memory_space<vmem>>, vector<1x32x256xbf16>
    %10 = vector.shape_cast %9 : vector<1x32x256xbf16> to vector<32x256xbf16>
    %cst = arith.constant dense<0.000000e+00> : vector<4x256xf32>
    %11 = tpu.matmul %8, %10, %cst {dimension_numbers = #tpu.dot_dimension_numbers<[1], [0], [0], [1], [0, 0, 1, 1], [], []>} : vector<4x32xbf16>, vector<32x256xbf16>, vector<4x256xf32> -> vector<4x256xf32>
    %c1_10 = arith.constant 1 : index
    %c0_11 = arith.constant 0 : index
    %c0_12 = arith.constant 0 : index
    %12 = vector.load %arg2[%c1_10, %c0_11, %c0_12] : memref<4x4x1xbf16, #tpu.memory_space<vmem>>, vector<1x4x1xbf16>
    %13 = vector.shape_cast %12 : vector<1x4x1xbf16> to vector<4x1xbf16>
    %14 = vector.broadcast %13 : vector<4x1xbf16> to vector<4x32xbf16>
    %15 = vector.broadcast %1 : vector<1x32xbf16> to vector<4x32xbf16>
    %16 = arith.mulf %14, %15 : vector<4x32xbf16>
    %c1_13 = arith.constant 1 : index
    %c0_14 = arith.constant 0 : index
    %c0_15 = arith.constant 0 : index
    %17 = vector.load %arg1[%c1_13, %c0_14, %c0_15] : memref<4x32x256xbf16, #tpu.memory_space<vmem>>, vector<1x32x256xbf16>
    %18 = vector.shape_cast %17 : vector<1x32x256xbf16> to vector<32x256xbf16>
    %cst_16 = arith.constant dense<0.000000e+00> : vector<4x256xf32>
    %19 = tpu.matmul %16, %18, %cst_16 {dimension_numbers = #tpu.dot_dimension_numbers<[1], [0], [0], [1], [0, 0, 1, 1], [], []>} : vector<4x32xbf16>, vector<32x256xbf16>, vector<4x256xf32> -> vector<4x256xf32>
    %20 = arith.addf %11, %19 : vector<4x256xf32>
    %c2 = arith.constant 2 : index
    %c0_17 = arith.constant 0 : index
    %c0_18 = arith.constant 0 : index
    %21 = vector.load %arg2[%c2, %c0_17, %c0_18] : memref<4x4x1xbf16, #tpu.memory_space<vmem>>, vector<1x4x1xbf16>
    %22 = vector.shape_cast %21 : vector<1x4x1xbf16> to vector<4x1xbf16>
    %23 = vector.broadcast %22 : vector<4x1xbf16> to vector<4x32xbf16>
    %24 = vector.broadcast %1 : vector<1x32xbf16> to vector<4x32xbf16>
    %25 = arith.mulf %23, %24 : vector<4x32xbf16>
    %c2_19 = arith.constant 2 : index
    %c0_20 = arith.constant 0 : index
    %c0_21 = arith.constant 0 : index
    %26 = vector.load %arg1[%c2_19, %c0_20, %c0_21] : memref<4x32x256xbf16, #tpu.memory_space<vmem>>, vector<1x32x256xbf16>
    %27 = vector.shape_cast %26 : vector<1x32x256xbf16> to vector<32x256xbf16>
    %cst_22 = arith.constant dense<0.000000e+00> : vector<4x256xf32>
    %28 = tpu.matmul %25, %27, %cst_22 {dimension_numbers = #tpu.dot_dimension_numbers<[1], [0], [0], [1], [0, 0, 1, 1], [], []>} : vector<4x32xbf16>, vector<32x256xbf16>, vector<4x256xf32> -> vector<4x256xf32>
    %29 = arith.addf %20, %28 : vector<4x256xf32>
    %c3 = arith.constant 3 : index
    %c0_23 = arith.constant 0 : index
    %c0_24 = arith.constant 0 : index
    %30 = vector.load %arg2[%c3, %c0_23, %c0_24] : memref<4x4x1xbf16, #tpu.memory_space<vmem>>, vector<1x4x1xbf16>
    %31 = vector.shape_cast %30 : vector<1x4x1xbf16> to vector<4x1xbf16>
    %32 = vector.broadcast %31 : vector<4x1xbf16> to vector<4x32xbf16>
    %33 = vector.broadcast %1 : vector<1x32xbf16> to vector<4x32xbf16>
    %34 = arith.mulf %32, %33 : vector<4x32xbf16>
    %c3_25 = arith.constant 3 : index
    %c0_26 = arith.constant 0 : index
    %c0_27 = arith.constant 0 : index
    %35 = vector.load %arg1[%c3_25, %c0_26, %c0_27] : memref<4x32x256xbf16, #tpu.memory_space<vmem>>, vector<1x32x256xbf16>
    %36 = vector.shape_cast %35 : vector<1x32x256xbf16> to vector<32x256xbf16>
    %cst_28 = arith.constant dense<0.000000e+00> : vector<4x256xf32>
    %37 = tpu.matmul %34, %36, %cst_28 {dimension_numbers = #tpu.dot_dimension_numbers<[1], [0], [0], [1], [0, 0, 1, 1], [], []>} : vector<4x32xbf16>, vector<32x256xbf16>, vector<4x256xf32> -> vector<4x256xf32>
    %38 = arith.addf %29, %37 : vector<4x256xf32>
    %c0_29 = arith.constant 0 : index
    %c0_30 = arith.constant 0 : index
    %c0_31 = arith.constant 0 : index
    %39 = vector.load %arg2[%c0_29, %c0_30, %c0_31] : memref<4x4x1xbf16, #tpu.memory_space<vmem>>, vector<1x4x1xbf16>
    %40 = vector.shape_cast %39 : vector<1x4x1xbf16> to vector<4x1xbf16>
    %41 = vector.broadcast %40 : vector<4x1xbf16> to vector<4x32xbf16>
    %42 = vector.broadcast %3 : vector<1x32xbf16> to vector<4x32xbf16>
    %43 = arith.mulf %41, %42 : vector<4x32xbf16>
    %c0_32 = arith.constant 0 : index
    %c0_33 = arith.constant 0 : index
    %c0_34 = arith.constant 0 : index
    %44 = vector.load %arg1[%c0_32, %c0_33, %c0_34] : memref<4x32x256xbf16, #tpu.memory_space<vmem>>, vector<1x32x256xbf16>
    %45 = vector.shape_cast %44 : vector<1x32x256xbf16> to vector<32x256xbf16>
    %cst_35 = arith.constant dense<0.000000e+00> : vector<4x256xf32>
    %46 = tpu.matmul %43, %45, %cst_35 {dimension_numbers = #tpu.dot_dimension_numbers<[1], [0], [0], [1], [0, 0, 1, 1], [], []>} : vector<4x32xbf16>, vector<32x256xbf16>, vector<4x256xf32> -> vector<4x256xf32>
    %c1_36 = arith.constant 1 : index
    %c0_37 = arith.constant 0 : index
    %c0_38 = arith.constant 0 : index
    %47 = vector.load %arg2[%c1_36, %c0_37, %c0_38] : memref<4x4x1xbf16, #tpu.memory_space<vmem>>, vector<1x4x1xbf16>
    %48 = vector.shape_cast %47 : vector<1x4x1xbf16> to vector<4x1xbf16>
    %49 = vector.broadcast %48 : vector<4x1xbf16> to vector<4x32xbf16>
    %50 = vector.broadcast %3 : vector<1x32xbf16> to vector<4x32xbf16>
    %51 = arith.mulf %49, %50 : vector<4x32xbf16>
    %c1_39 = arith.constant 1 : index
    %c0_40 = arith.constant 0 : index
    %c0_41 = arith.constant 0 : index
    %52 = vector.load %arg1[%c1_39, %c0_40, %c0_41] : memref<4x32x256xbf16, #tpu.memory_space<vmem>>, vector<1x32x256xbf16>
    %53 = vector.shape_cast %52 : vector<1x32x256xbf16> to vector<32x256xbf16>
    %cst_42 = arith.constant dense<0.000000e+00> : vector<4x256xf32>
    %54 = tpu.matmul %51, %53, %cst_42 {dimension_numbers = #tpu.dot_dimension_numbers<[1], [0], [0], [1], [0, 0, 1, 1], [], []>} : vector<4x32xbf16>, vector<32x256xbf16>, vector<4x256xf32> -> vector<4x256xf32>
    %55 = arith.addf %46, %54 : vector<4x256xf32>
    %c2_43 = arith.constant 2 : index
    %c0_44 = arith.constant 0 : index
    %c0_45 = arith.constant 0 : index
    %56 = vector.load %arg2[%c2_43, %c0_44, %c0_45] : memref<4x4x1xbf16, #tpu.memory_space<vmem>>, vector<1x4x1xbf16>
    %57 = vector.shape_cast %56 : vector<1x4x1xbf16> to vector<4x1xbf16>
    %58 = vector.broadcast %57 : vector<4x1xbf16> to vector<4x32xbf16>
    %59 = vector.broadcast %3 : vector<1x32xbf16> to vector<4x32xbf16>
    %60 = arith.mulf %58, %59 : vector<4x32xbf16>
    %c2_46 = arith.constant 2 : index
    %c0_47 = arith.constant 0 : index
    %c0_48 = arith.constant 0 : index
    %61 = vector.load %arg1[%c2_46, %c0_47, %c0_48] : memref<4x32x256xbf16, #tpu.memory_space<vmem>>, vector<1x32x256xbf16>
    %62 = vector.shape_cast %61 : vector<1x32x256xbf16> to vector<32x256xbf16>
    %cst_49 = arith.constant dense<0.000000e+00> : vector<4x256xf32>
    %63 = tpu.matmul %60, %62, %cst_49 {dimension_numbers = #tpu.dot_dimension_numbers<[1], [0], [0], [1], [0, 0, 1, 1], [], []>} : vector<4x32xbf16>, vector<32x256xbf16>, vector<4x256xf32> -> vector<4x256xf32>
    %64 = arith.addf %55, %63 : vector<4x256xf32>
    %c3_50 = arith.constant 3 : index
    %c0_51 = arith.constant 0 : index
    %c0_52 = arith.constant 0 : index
    %65 = vector.load %arg2[%c3_50, %c0_51, %c0_52] : memref<4x4x1xbf16, #tpu.memory_space<vmem>>, vector<1x4x1xbf16>
    %66 = vector.shape_cast %65 : vector<1x4x1xbf16> to vector<4x1xbf16>
    %67 = vector.broadcast %66 : vector<4x1xbf16> to vector<4x32xbf16>
    %68 = vector.broadcast %3 : vector<1x32xbf16> to vector<4x32xbf16>
    %69 = arith.mulf %67, %68 : vector<4x32xbf16>
    %c3_53 = arith.constant 3 : index
    %c0_54 = arith.constant 0 : index
    %c0_55 = arith.constant 0 : index
    %70 = vector.load %arg1[%c3_53, %c0_54, %c0_55] : memref<4x32x256xbf16, #tpu.memory_space<vmem>>, vector<1x32x256xbf16>
    %71 = vector.shape_cast %70 : vector<1x32x256xbf16> to vector<32x256xbf16>
    %cst_56 = arith.constant dense<0.000000e+00> : vector<4x256xf32>
    %72 = tpu.matmul %69, %71, %cst_56 {dimension_numbers = #tpu.dot_dimension_numbers<[1], [0], [0], [1], [0, 0, 1, 1], [], []>} : vector<4x32xbf16>, vector<32x256xbf16>, vector<4x256xf32> -> vector<4x256xf32>
    %73 = arith.addf %64, %72 : vector<4x256xf32>
    %c0_57 = arith.constant 0 : index
    %c0_58 = arith.constant 0 : index
    %74 = vector.load %arg5[%c0_57, %c0_58] : memref<256x64xf32, #tpu.memory_space<vmem>>, vector<256x64xf32>
    %c0_59 = arith.constant 0 : index
    %c0_60 = arith.constant 0 : index
    %75 = vector.load %arg6[%c0_59, %c0_60] : memref<64x256xf32, #tpu.memory_space<vmem>>, vector<64x256xf32>
    %cst_61 = arith.constant dense<0.000000e+00> : vector<256xf32>
    %76 = vector.multi_reduction <add>, %38, %cst_61 [0] : vector<4x256xf32> to vector<256xf32>
    %77 = vector.shape_cast %76 : vector<256xf32> to vector<1x256xf32>
    %cst_62 = arith.constant dense<0.000000e+00> : vector<256xf32>
    %78 = vector.multi_reduction <add>, %73, %cst_62 [0] : vector<4x256xf32> to vector<256xf32>
    %79 = vector.shape_cast %78 : vector<256xf32> to vector<1x256xf32>
    %80 = arith.addf %77, %79 : vector<1x256xf32>
    %cst_63 = arith.constant dense<0.000000e+00> : vector<1x64xf32>
    %81 = tpu.matmul %80, %74, %cst_63 {dimension_numbers = #tpu.dot_dimension_numbers<[1], [0], [0], [1], [0, 0, 1, 1], [], []>} : vector<1x256xf32>, vector<256x64xf32>, vector<1x64xf32> -> vector<1x64xf32>
    %cst_64 = arith.constant 3.125000e-02 : f32
    %82 = vector.broadcast %cst_64 : f32 to vector<1x64xf32>
    %83 = arith.mulf %81, %82 : vector<1x64xf32>
    %cst_65 = arith.constant dense<0.000000e+00> : vector<1x256xf32>
    %84 = tpu.matmul %83, %75, %cst_65 {dimension_numbers = #tpu.dot_dimension_numbers<[1], [0], [0], [1], [0, 0, 1, 1], [], []>} : vector<1x64xf32>, vector<64x256xf32>, vector<1x256xf32> -> vector<1x256xf32>
    %85 = vector.broadcast %84 : vector<1x256xf32> to vector<4x256xf32>
    %86 = arith.subf %38, %85 : vector<4x256xf32>
    %87 = arith.mulf %86, %86 : vector<4x256xf32>
    %cst_66 = arith.constant dense<0.000000e+00> : vector<256xf32>
    %88 = vector.multi_reduction <add>, %87, %cst_66 [0] : vector<4x256xf32> to vector<256xf32>
    %89 = vector.shape_cast %88 : vector<256xf32> to vector<1x256xf32>
    %90 = vector.broadcast %84 : vector<1x256xf32> to vector<4x256xf32>
    %91 = arith.subf %73, %90 : vector<4x256xf32>
    %92 = arith.mulf %91, %91 : vector<4x256xf32>
    %cst_67 = arith.constant dense<0.000000e+00> : vector<256xf32>
    %93 = vector.multi_reduction <add>, %92, %cst_67 [0] : vector<4x256xf32> to vector<256xf32>
    %94 = vector.shape_cast %93 : vector<256xf32> to vector<1x256xf32>
    %95 = arith.addf %89, %94 : vector<1x256xf32>
    %cst_68 = arith.constant dense<0.000000e+00> : vector<1x64xf32>
    %96 = tpu.matmul %95, %74, %cst_68 {dimension_numbers = #tpu.dot_dimension_numbers<[1], [0], [0], [1], [0, 0, 1, 1], [], []>} : vector<1x256xf32>, vector<256x64xf32>, vector<1x64xf32> -> vector<1x64xf32>
    %cst_69 = arith.constant 3.125000e-02 : f32
    %97 = vector.broadcast %cst_69 : f32 to vector<1x64xf32>
    %98 = arith.mulf %96, %97 : vector<1x64xf32>
    %c0_70 = arith.constant 0 : index
    %c0_71 = arith.constant 0 : index
    %99 = vector.load %arg3[%c0_70, %c0_71] : memref<1x64xf32, #tpu.memory_space<vmem>>, vector<1x64xf32>
    %cst_72 = arith.constant 9.99999974E-6 : f32
    %100 = vector.broadcast %cst_72 : f32 to vector<1x64xf32>
    %101 = arith.addf %98, %100 : vector<1x64xf32>
    %102 = math.rsqrt %101 : vector<1x64xf32>
    %103 = arith.mulf %99, %102 : vector<1x64xf32>
    %cst_73 = arith.constant dense<0.000000e+00> : vector<1x256xf32>
    %104 = tpu.matmul %103, %75, %cst_73 {dimension_numbers = #tpu.dot_dimension_numbers<[1], [0], [0], [1], [0, 0, 1, 1], [], []>} : vector<1x64xf32>, vector<64x256xf32>, vector<1x256xf32> -> vector<1x256xf32>
    %c0_74 = arith.constant 0 : index
    %c0_75 = arith.constant 0 : index
    %105 = vector.load %arg4[%c0_74, %c0_75] : memref<1x64xf32, #tpu.memory_space<vmem>>, vector<1x64xf32>
    %cst_76 = arith.constant dense<0.000000e+00> : vector<1x256xf32>
    %106 = tpu.matmul %105, %75, %cst_76 {dimension_numbers = #tpu.dot_dimension_numbers<[1], [0], [0], [1], [0, 0, 1, 1], [], []>} : vector<1x64xf32>, vector<64x256xf32>, vector<1x256xf32> -> vector<1x256xf32>
    %107 = vector.broadcast %84 : vector<1x256xf32> to vector<4x256xf32>
    %108 = arith.subf %38, %107 : vector<4x256xf32>
    %109 = vector.broadcast %104 : vector<1x256xf32> to vector<4x256xf32>
    %110 = arith.mulf %108, %109 : vector<4x256xf32>
    %111 = vector.broadcast %106 : vector<1x256xf32> to vector<4x256xf32>
    %112 = arith.addf %110, %111 : vector<4x256xf32>
    %cst_77 = arith.constant 0.000000e+00 : f32
    %113 = vector.broadcast %cst_77 : f32 to vector<4x256xf32>
    %114 = arith.maximumf %112, %113 : vector<4x256xf32>
    %115 = arith.truncf %114 : vector<4x256xf32> to vector<4x256xbf16>
    %116 = vector.broadcast %84 : vector<1x256xf32> to vector<4x256xf32>
    %117 = arith.subf %73, %116 : vector<4x256xf32>
    %118 = vector.broadcast %104 : vector<1x256xf32> to vector<4x256xf32>
    %119 = arith.mulf %117, %118 : vector<4x256xf32>
    %120 = vector.broadcast %106 : vector<1x256xf32> to vector<4x256xf32>
    %121 = arith.addf %119, %120 : vector<4x256xf32>
    %cst_78 = arith.constant 0.000000e+00 : f32
    %122 = vector.broadcast %cst_78 : f32 to vector<4x256xf32>
    %123 = arith.maximumf %121, %122 : vector<4x256xf32>
    %124 = arith.truncf %123 : vector<4x256xf32> to vector<4x256xbf16>
    %c0_79 = arith.constant 0 : index
    %c0_80 = arith.constant 0 : index
    %c0_81 = arith.constant 0 : index
    %125 = vector.load %arg8[%c0_79, %c0_80, %c0_81] : memref<4x8x4xbf16, #tpu.memory_space<vmem>>, vector<1x8x4xbf16>
    %126 = vector.shape_cast %125 : vector<1x8x4xbf16> to vector<8x4xbf16>
    %cst_82 = arith.constant dense<0.000000e+00> : vector<8x256xf32>
    %127 = tpu.matmul %126, %115, %cst_82 {dimension_numbers = #tpu.dot_dimension_numbers<[1], [0], [0], [1], [0, 0, 1, 1], [], []>} : vector<8x4xbf16>, vector<4x256xbf16>, vector<8x256xf32> -> vector<8x256xf32>
    %128 = arith.truncf %127 : vector<8x256xf32> to vector<8x256xbf16>
    %c0_83 = arith.constant 0 : index
    %c0_84 = arith.constant 0 : index
    %c0_85 = arith.constant 0 : index
    %129 = vector.load %arg7[%c0_83, %c0_84, %c0_85] : memref<4x256x256xbf16, #tpu.memory_space<vmem>>, vector<1x256x256xbf16>
    %130 = vector.shape_cast %129 : vector<1x256x256xbf16> to vector<256x256xbf16>
    %cst_86 = arith.constant dense<0.000000e+00> : vector<8x256xf32>
    %131 = tpu.matmul %128, %130, %cst_86 {dimension_numbers = #tpu.dot_dimension_numbers<[1], [0], [0], [1], [0, 0, 1, 1], [], []>} : vector<8x256xbf16>, vector<256x256xbf16>, vector<8x256xf32> -> vector<8x256xf32>
    %c1_87 = arith.constant 1 : index
    %c0_88 = arith.constant 0 : index
    %c0_89 = arith.constant 0 : index
    %132 = vector.load %arg8[%c1_87, %c0_88, %c0_89] : memref<4x8x4xbf16, #tpu.memory_space<vmem>>, vector<1x8x4xbf16>
    %133 = vector.shape_cast %132 : vector<1x8x4xbf16> to vector<8x4xbf16>
    %cst_90 = arith.constant dense<0.000000e+00> : vector<8x256xf32>
    %134 = tpu.matmul %133, %115, %cst_90 {dimension_numbers = #tpu.dot_dimension_numbers<[1], [0], [0], [1], [0, 0, 1, 1], [], []>} : vector<8x4xbf16>, vector<4x256xbf16>, vector<8x256xf32> -> vector<8x256xf32>
    %135 = arith.truncf %134 : vector<8x256xf32> to vector<8x256xbf16>
    %c1_91 = arith.constant 1 : index
    %c0_92 = arith.constant 0 : index
    %c0_93 = arith.constant 0 : index
    %136 = vector.load %arg7[%c1_91, %c0_92, %c0_93] : memref<4x256x256xbf16, #tpu.memory_space<vmem>>, vector<1x256x256xbf16>
    %137 = vector.shape_cast %136 : vector<1x256x256xbf16> to vector<256x256xbf16>
    %cst_94 = arith.constant dense<0.000000e+00> : vector<8x256xf32>
    %138 = tpu.matmul %135, %137, %cst_94 {dimension_numbers = #tpu.dot_dimension_numbers<[1], [0], [0], [1], [0, 0, 1, 1], [], []>} : vector<8x256xbf16>, vector<256x256xbf16>, vector<8x256xf32> -> vector<8x256xf32>
    %139 = arith.addf %131, %138 : vector<8x256xf32>
    %c2_95 = arith.constant 2 : index
    %c0_96 = arith.constant 0 : index
    %c0_97 = arith.constant 0 : index
    %140 = vector.load %arg8[%c2_95, %c0_96, %c0_97] : memref<4x8x4xbf16, #tpu.memory_space<vmem>>, vector<1x8x4xbf16>
    %141 = vector.shape_cast %140 : vector<1x8x4xbf16> to vector<8x4xbf16>
    %cst_98 = arith.constant dense<0.000000e+00> : vector<8x256xf32>
    %142 = tpu.matmul %141, %115, %cst_98 {dimension_numbers = #tpu.dot_dimension_numbers<[1], [0], [0], [1], [0, 0, 1, 1], [], []>} : vector<8x4xbf16>, vector<4x256xbf16>, vector<8x256xf32> -> vector<8x256xf32>
    %143 = arith.truncf %142 : vector<8x256xf32> to vector<8x256xbf16>
    %c2_99 = arith.constant 2 : index
    %c0_100 = arith.constant 0 : index
    %c0_101 = arith.constant 0 : index
    %144 = vector.load %arg7[%c2_99, %c0_100, %c0_101] : memref<4x256x256xbf16, #tpu.memory_space<vmem>>, vector<1x256x256xbf16>
    %145 = vector.shape_cast %144 : vector<1x256x256xbf16> to vector<256x256xbf16>
    %cst_102 = arith.constant dense<0.000000e+00> : vector<8x256xf32>
    %146 = tpu.matmul %143, %145, %cst_102 {dimension_numbers = #tpu.dot_dimension_numbers<[1], [0], [0], [1], [0, 0, 1, 1], [], []>} : vector<8x256xbf16>, vector<256x256xbf16>, vector<8x256xf32> -> vector<8x256xf32>
    %147 = arith.addf %139, %146 : vector<8x256xf32>
    %c3_103 = arith.constant 3 : index
    %c0_104 = arith.constant 0 : index
    %c0_105 = arith.constant 0 : index
    %148 = vector.load %arg8[%c3_103, %c0_104, %c0_105] : memref<4x8x4xbf16, #tpu.memory_space<vmem>>, vector<1x8x4xbf16>
    %149 = vector.shape_cast %148 : vector<1x8x4xbf16> to vector<8x4xbf16>
    %cst_106 = arith.constant dense<0.000000e+00> : vector<8x256xf32>
    %150 = tpu.matmul %149, %115, %cst_106 {dimension_numbers = #tpu.dot_dimension_numbers<[1], [0], [0], [1], [0, 0, 1, 1], [], []>} : vector<8x4xbf16>, vector<4x256xbf16>, vector<8x256xf32> -> vector<8x256xf32>
    %151 = arith.truncf %150 : vector<8x256xf32> to vector<8x256xbf16>
    %c3_107 = arith.constant 3 : index
    %c0_108 = arith.constant 0 : index
    %c0_109 = arith.constant 0 : index
    %152 = vector.load %arg7[%c3_107, %c0_108, %c0_109] : memref<4x256x256xbf16, #tpu.memory_space<vmem>>, vector<1x256x256xbf16>
    %153 = vector.shape_cast %152 : vector<1x256x256xbf16> to vector<256x256xbf16>
    %cst_110 = arith.constant dense<0.000000e+00> : vector<8x256xf32>
    %154 = tpu.matmul %151, %153, %cst_110 {dimension_numbers = #tpu.dot_dimension_numbers<[1], [0], [0], [1], [0, 0, 1, 1], [], []>} : vector<8x256xbf16>, vector<256x256xbf16>, vector<8x256xf32> -> vector<8x256xf32>
    %155 = arith.addf %147, %154 : vector<8x256xf32>
    %c0_111 = arith.constant 0 : index
    %c0_112 = arith.constant 0 : index
    %c0_113 = arith.constant 0 : index
    %156 = vector.load %arg8[%c0_111, %c0_112, %c0_113] : memref<4x8x4xbf16, #tpu.memory_space<vmem>>, vector<1x8x4xbf16>
    %157 = vector.shape_cast %156 : vector<1x8x4xbf16> to vector<8x4xbf16>
    %cst_114 = arith.constant dense<0.000000e+00> : vector<8x256xf32>
    %158 = tpu.matmul %157, %124, %cst_114 {dimension_numbers = #tpu.dot_dimension_numbers<[1], [0], [0], [1], [0, 0, 1, 1], [], []>} : vector<8x4xbf16>, vector<4x256xbf16>, vector<8x256xf32> -> vector<8x256xf32>
    %159 = arith.truncf %158 : vector<8x256xf32> to vector<8x256xbf16>
    %c0_115 = arith.constant 0 : index
    %c0_116 = arith.constant 0 : index
    %c0_117 = arith.constant 0 : index
    %160 = vector.load %arg7[%c0_115, %c0_116, %c0_117] : memref<4x256x256xbf16, #tpu.memory_space<vmem>>, vector<1x256x256xbf16>
    %161 = vector.shape_cast %160 : vector<1x256x256xbf16> to vector<256x256xbf16>
    %cst_118 = arith.constant dense<0.000000e+00> : vector<8x256xf32>
    %162 = tpu.matmul %159, %161, %cst_118 {dimension_numbers = #tpu.dot_dimension_numbers<[1], [0], [0], [1], [0, 0, 1, 1], [], []>} : vector<8x256xbf16>, vector<256x256xbf16>, vector<8x256xf32> -> vector<8x256xf32>
    %c1_119 = arith.constant 1 : index
    %c0_120 = arith.constant 0 : index
    %c0_121 = arith.constant 0 : index
    %163 = vector.load %arg8[%c1_119, %c0_120, %c0_121] : memref<4x8x4xbf16, #tpu.memory_space<vmem>>, vector<1x8x4xbf16>
    %164 = vector.shape_cast %163 : vector<1x8x4xbf16> to vector<8x4xbf16>
    %cst_122 = arith.constant dense<0.000000e+00> : vector<8x256xf32>
    %165 = tpu.matmul %164, %124, %cst_122 {dimension_numbers = #tpu.dot_dimension_numbers<[1], [0], [0], [1], [0, 0, 1, 1], [], []>} : vector<8x4xbf16>, vector<4x256xbf16>, vector<8x256xf32> -> vector<8x256xf32>
    %166 = arith.truncf %165 : vector<8x256xf32> to vector<8x256xbf16>
    %c1_123 = arith.constant 1 : index
    %c0_124 = arith.constant 0 : index
    %c0_125 = arith.constant 0 : index
    %167 = vector.load %arg7[%c1_123, %c0_124, %c0_125] : memref<4x256x256xbf16, #tpu.memory_space<vmem>>, vector<1x256x256xbf16>
    %168 = vector.shape_cast %167 : vector<1x256x256xbf16> to vector<256x256xbf16>
    %cst_126 = arith.constant dense<0.000000e+00> : vector<8x256xf32>
    %169 = tpu.matmul %166, %168, %cst_126 {dimension_numbers = #tpu.dot_dimension_numbers<[1], [0], [0], [1], [0, 0, 1, 1], [], []>} : vector<8x256xbf16>, vector<256x256xbf16>, vector<8x256xf32> -> vector<8x256xf32>
    %170 = arith.addf %162, %169 : vector<8x256xf32>
    %c2_127 = arith.constant 2 : index
    %c0_128 = arith.constant 0 : index
    %c0_129 = arith.constant 0 : index
    %171 = vector.load %arg8[%c2_127, %c0_128, %c0_129] : memref<4x8x4xbf16, #tpu.memory_space<vmem>>, vector<1x8x4xbf16>
    %172 = vector.shape_cast %171 : vector<1x8x4xbf16> to vector<8x4xbf16>
    %cst_130 = arith.constant dense<0.000000e+00> : vector<8x256xf32>
    %173 = tpu.matmul %172, %124, %cst_130 {dimension_numbers = #tpu.dot_dimension_numbers<[1], [0], [0], [1], [0, 0, 1, 1], [], []>} : vector<8x4xbf16>, vector<4x256xbf16>, vector<8x256xf32> -> vector<8x256xf32>
    %174 = arith.truncf %173 : vector<8x256xf32> to vector<8x256xbf16>
    %c2_131 = arith.constant 2 : index
    %c0_132 = arith.constant 0 : index
    %c0_133 = arith.constant 0 : index
    %175 = vector.load %arg7[%c2_131, %c0_132, %c0_133] : memref<4x256x256xbf16, #tpu.memory_space<vmem>>, vector<1x256x256xbf16>
    %176 = vector.shape_cast %175 : vector<1x256x256xbf16> to vector<256x256xbf16>
    %cst_134 = arith.constant dense<0.000000e+00> : vector<8x256xf32>
    %177 = tpu.matmul %174, %176, %cst_134 {dimension_numbers = #tpu.dot_dimension_numbers<[1], [0], [0], [1], [0, 0, 1, 1], [], []>} : vector<8x256xbf16>, vector<256x256xbf16>, vector<8x256xf32> -> vector<8x256xf32>
    %178 = arith.addf %170, %177 : vector<8x256xf32>
    %c3_135 = arith.constant 3 : index
    %c0_136 = arith.constant 0 : index
    %c0_137 = arith.constant 0 : index
    %179 = vector.load %arg8[%c3_135, %c0_136, %c0_137] : memref<4x8x4xbf16, #tpu.memory_space<vmem>>, vector<1x8x4xbf16>
    %180 = vector.shape_cast %179 : vector<1x8x4xbf16> to vector<8x4xbf16>
    %cst_138 = arith.constant dense<0.000000e+00> : vector<8x256xf32>
    %181 = tpu.matmul %180, %124, %cst_138 {dimension_numbers = #tpu.dot_dimension_numbers<[1], [0], [0], [1], [0, 0, 1, 1], [], []>} : vector<8x4xbf16>, vector<4x256xbf16>, vector<8x256xf32> -> vector<8x256xf32>
    %182 = arith.truncf %181 : vector<8x256xf32> to vector<8x256xbf16>
    %c3_139 = arith.constant 3 : index
    %c0_140 = arith.constant 0 : index
    %c0_141 = arith.constant 0 : index
    %183 = vector.load %arg7[%c3_139, %c0_140, %c0_141] : memref<4x256x256xbf16, #tpu.memory_space<vmem>>, vector<1x256x256xbf16>
    %184 = vector.shape_cast %183 : vector<1x256x256xbf16> to vector<256x256xbf16>
    %cst_142 = arith.constant dense<0.000000e+00> : vector<8x256xf32>
    %185 = tpu.matmul %182, %184, %cst_142 {dimension_numbers = #tpu.dot_dimension_numbers<[1], [0], [0], [1], [0, 0, 1, 1], [], []>} : vector<8x256xbf16>, vector<256x256xbf16>, vector<8x256xf32> -> vector<8x256xf32>
    %186 = arith.addf %178, %185 : vector<8x256xf32>
    %c0_143 = arith.constant 0 : index
    %c0_144 = arith.constant 0 : index
    %187 = vector.load %arg11[%c0_143, %c0_144] : memref<256x32xf32, #tpu.memory_space<vmem>>, vector<256x32xf32>
    %c0_145 = arith.constant 0 : index
    %c0_146 = arith.constant 0 : index
    %188 = vector.load %arg12[%c0_145, %c0_146] : memref<32x256xf32, #tpu.memory_space<vmem>>, vector<32x256xf32>
    %cst_147 = arith.constant dense<0.000000e+00> : vector<256xf32>
    %189 = vector.multi_reduction <add>, %155, %cst_147 [0] : vector<8x256xf32> to vector<256xf32>
    %190 = vector.shape_cast %189 : vector<256xf32> to vector<1x256xf32>
    %cst_148 = arith.constant dense<0.000000e+00> : vector<256xf32>
    %191 = vector.multi_reduction <add>, %186, %cst_148 [0] : vector<8x256xf32> to vector<256xf32>
    %192 = vector.shape_cast %191 : vector<256xf32> to vector<1x256xf32>
    %193 = arith.addf %190, %192 : vector<1x256xf32>
    %cst_149 = arith.constant dense<0.000000e+00> : vector<1x32xf32>
    %194 = tpu.matmul %193, %187, %cst_149 {dimension_numbers = #tpu.dot_dimension_numbers<[1], [0], [0], [1], [0, 0, 1, 1], [], []>} : vector<1x256xf32>, vector<256x32xf32>, vector<1x32xf32> -> vector<1x32xf32>
    %cst_150 = arith.constant 7.812500e-03 : f32
    %195 = vector.broadcast %cst_150 : f32 to vector<1x32xf32>
    %196 = arith.mulf %194, %195 : vector<1x32xf32>
    %cst_151 = arith.constant dense<0.000000e+00> : vector<1x256xf32>
    %197 = tpu.matmul %196, %188, %cst_151 {dimension_numbers = #tpu.dot_dimension_numbers<[1], [0], [0], [1], [0, 0, 1, 1], [], []>} : vector<1x32xf32>, vector<32x256xf32>, vector<1x256xf32> -> vector<1x256xf32>
    %198 = vector.broadcast %197 : vector<1x256xf32> to vector<8x256xf32>
    %199 = arith.subf %155, %198 : vector<8x256xf32>
    %200 = arith.mulf %199, %199 : vector<8x256xf32>
    %cst_152 = arith.constant dense<0.000000e+00> : vector<256xf32>
    %201 = vector.multi_reduction <add>, %200, %cst_152 [0] : vector<8x256xf32> to vector<256xf32>
    %202 = vector.shape_cast %201 : vector<256xf32> to vector<1x256xf32>
    %203 = vector.broadcast %197 : vector<1x256xf32> to vector<8x256xf32>
    %204 = arith.subf %186, %203 : vector<8x256xf32>
    %205 = arith.mulf %204, %204 : vector<8x256xf32>
    %cst_153 = arith.constant dense<0.000000e+00> : vector<256xf32>
    %206 = vector.multi_reduction <add>, %205, %cst_153 [0] : vector<8x256xf32> to vector<256xf32>
    %207 = vector.shape_cast %206 : vector<256xf32> to vector<1x256xf32>
    %208 = arith.addf %202, %207 : vector<1x256xf32>
    %cst_154 = arith.constant dense<0.000000e+00> : vector<1x32xf32>
    %209 = tpu.matmul %208, %187, %cst_154 {dimension_numbers = #tpu.dot_dimension_numbers<[1], [0], [0], [1], [0, 0, 1, 1], [], []>} : vector<1x256xf32>, vector<256x32xf32>, vector<1x32xf32> -> vector<1x32xf32>
    %cst_155 = arith.constant 7.812500e-03 : f32
    %210 = vector.broadcast %cst_155 : f32 to vector<1x32xf32>
    %211 = arith.mulf %209, %210 : vector<1x32xf32>
    %c0_156 = arith.constant 0 : index
    %c0_157 = arith.constant 0 : index
    %212 = vector.load %arg9[%c0_156, %c0_157] : memref<1x32xf32, #tpu.memory_space<vmem>>, vector<1x32xf32>
    %cst_158 = arith.constant 9.99999974E-6 : f32
    %213 = vector.broadcast %cst_158 : f32 to vector<1x32xf32>
    %214 = arith.addf %211, %213 : vector<1x32xf32>
    %215 = math.rsqrt %214 : vector<1x32xf32>
    %216 = arith.mulf %212, %215 : vector<1x32xf32>
    %cst_159 = arith.constant dense<0.000000e+00> : vector<1x256xf32>
    %217 = tpu.matmul %216, %188, %cst_159 {dimension_numbers = #tpu.dot_dimension_numbers<[1], [0], [0], [1], [0, 0, 1, 1], [], []>} : vector<1x32xf32>, vector<32x256xf32>, vector<1x256xf32> -> vector<1x256xf32>
    %c0_160 = arith.constant 0 : index
    %c0_161 = arith.constant 0 : index
    %218 = vector.load %arg10[%c0_160, %c0_161] : memref<1x32xf32, #tpu.memory_space<vmem>>, vector<1x32xf32>
    %cst_162 = arith.constant dense<0.000000e+00> : vector<1x256xf32>
    %219 = tpu.matmul %218, %188, %cst_162 {dimension_numbers = #tpu.dot_dimension_numbers<[1], [0], [0], [1], [0, 0, 1, 1], [], []>} : vector<1x32xf32>, vector<32x256xf32>, vector<1x256xf32> -> vector<1x256xf32>
    %220 = vector.broadcast %197 : vector<1x256xf32> to vector<8x256xf32>
    %221 = arith.subf %155, %220 : vector<8x256xf32>
    %222 = vector.broadcast %217 : vector<1x256xf32> to vector<8x256xf32>
    %223 = arith.mulf %221, %222 : vector<8x256xf32>
    %224 = vector.broadcast %219 : vector<1x256xf32> to vector<8x256xf32>
    %225 = arith.addf %223, %224 : vector<8x256xf32>
    %cst_163 = arith.constant 0.000000e+00 : f32
    %226 = vector.broadcast %cst_163 : f32 to vector<8x256xf32>
    %227 = arith.maximumf %225, %226 : vector<8x256xf32>
    %228 = arith.truncf %227 : vector<8x256xf32> to vector<8x256xbf16>
    %229 = vector.broadcast %197 : vector<1x256xf32> to vector<8x256xf32>
    %230 = arith.subf %186, %229 : vector<8x256xf32>
    %231 = vector.broadcast %217 : vector<1x256xf32> to vector<8x256xf32>
    %232 = arith.mulf %230, %231 : vector<8x256xf32>
    %233 = vector.broadcast %219 : vector<1x256xf32> to vector<8x256xf32>
    %234 = arith.addf %232, %233 : vector<8x256xf32>
    %cst_164 = arith.constant 0.000000e+00 : f32
    %235 = vector.broadcast %cst_164 : f32 to vector<8x256xf32>
    %236 = arith.maximumf %234, %235 : vector<8x256xf32>
    %237 = arith.truncf %236 : vector<8x256xf32> to vector<8x256xbf16>
    %c0_165 = arith.constant 0 : index
    %c0_166 = arith.constant 0 : index
    %c0_167 = arith.constant 0 : index
    %238 = vector.load %arg14[%c0_165, %c0_166, %c0_167] : memref<4x16x8xbf16, #tpu.memory_space<vmem>>, vector<1x16x8xbf16>
    %239 = vector.shape_cast %238 : vector<1x16x8xbf16> to vector<16x8xbf16>
    %cst_168 = arith.constant dense<0.000000e+00> : vector<16x256xf32>
    %240 = tpu.matmul %239, %228, %cst_168 {dimension_numbers = #tpu.dot_dimension_numbers<[1], [0], [0], [1], [0, 0, 1, 1], [], []>} : vector<16x8xbf16>, vector<8x256xbf16>, vector<16x256xf32> -> vector<16x256xf32>
    %241 = arith.truncf %240 : vector<16x256xf32> to vector<16x256xbf16>
    %c0_169 = arith.constant 0 : index
    %c0_170 = arith.constant 0 : index
    %c0_171 = arith.constant 0 : index
    %242 = vector.load %arg13[%c0_169, %c0_170, %c0_171] : memref<4x256x256xbf16, #tpu.memory_space<vmem>>, vector<1x256x256xbf16>
    %243 = vector.shape_cast %242 : vector<1x256x256xbf16> to vector<256x256xbf16>
    %cst_172 = arith.constant dense<0.000000e+00> : vector<16x256xf32>
    %244 = tpu.matmul %241, %243, %cst_172 {dimension_numbers = #tpu.dot_dimension_numbers<[1], [0], [0], [1], [0, 0, 1, 1], [], []>} : vector<16x256xbf16>, vector<256x256xbf16>, vector<16x256xf32> -> vector<16x256xf32>
    %c1_173 = arith.constant 1 : index
    %c0_174 = arith.constant 0 : index
    %c0_175 = arith.constant 0 : index
    %245 = vector.load %arg14[%c1_173, %c0_174, %c0_175] : memref<4x16x8xbf16, #tpu.memory_space<vmem>>, vector<1x16x8xbf16>
    %246 = vector.shape_cast %245 : vector<1x16x8xbf16> to vector<16x8xbf16>
    %cst_176 = arith.constant dense<0.000000e+00> : vector<16x256xf32>
    %247 = tpu.matmul %246, %228, %cst_176 {dimension_numbers = #tpu.dot_dimension_numbers<[1], [0], [0], [1], [0, 0, 1, 1], [], []>} : vector<16x8xbf16>, vector<8x256xbf16>, vector<16x256xf32> -> vector<16x256xf32>
    %248 = arith.truncf %247 : vector<16x256xf32> to vector<16x256xbf16>
    %c1_177 = arith.constant 1 : index
    %c0_178 = arith.constant 0 : index
    %c0_179 = arith.constant 0 : index
    %249 = vector.load %arg13[%c1_177, %c0_178, %c0_179] : memref<4x256x256xbf16, #tpu.memory_space<vmem>>, vector<1x256x256xbf16>
    %250 = vector.shape_cast %249 : vector<1x256x256xbf16> to vector<256x256xbf16>
    %cst_180 = arith.constant dense<0.000000e+00> : vector<16x256xf32>
    %251 = tpu.matmul %248, %250, %cst_180 {dimension_numbers = #tpu.dot_dimension_numbers<[1], [0], [0], [1], [0, 0, 1, 1], [], []>} : vector<16x256xbf16>, vector<256x256xbf16>, vector<16x256xf32> -> vector<16x256xf32>
    %252 = arith.addf %244, %251 : vector<16x256xf32>
    %c2_181 = arith.constant 2 : index
    %c0_182 = arith.constant 0 : index
    %c0_183 = arith.constant 0 : index
    %253 = vector.load %arg14[%c2_181, %c0_182, %c0_183] : memref<4x16x8xbf16, #tpu.memory_space<vmem>>, vector<1x16x8xbf16>
    %254 = vector.shape_cast %253 : vector<1x16x8xbf16> to vector<16x8xbf16>
    %cst_184 = arith.constant dense<0.000000e+00> : vector<16x256xf32>
    %255 = tpu.matmul %254, %228, %cst_184 {dimension_numbers = #tpu.dot_dimension_numbers<[1], [0], [0], [1], [0, 0, 1, 1], [], []>} : vector<16x8xbf16>, vector<8x256xbf16>, vector<16x256xf32> -> vector<16x256xf32>
    %256 = arith.truncf %255 : vector<16x256xf32> to vector<16x256xbf16>
    %c2_185 = arith.constant 2 : index
    %c0_186 = arith.constant 0 : index
    %c0_187 = arith.constant 0 : index
    %257 = vector.load %arg13[%c2_185, %c0_186, %c0_187] : memref<4x256x256xbf16, #tpu.memory_space<vmem>>, vector<1x256x256xbf16>
    %258 = vector.shape_cast %257 : vector<1x256x256xbf16> to vector<256x256xbf16>
    %cst_188 = arith.constant dense<0.000000e+00> : vector<16x256xf32>
    %259 = tpu.matmul %256, %258, %cst_188 {dimension_numbers = #tpu.dot_dimension_numbers<[1], [0], [0], [1], [0, 0, 1, 1], [], []>} : vector<16x256xbf16>, vector<256x256xbf16>, vector<16x256xf32> -> vector<16x256xf32>
    %260 = arith.addf %252, %259 : vector<16x256xf32>
    %c3_189 = arith.constant 3 : index
    %c0_190 = arith.constant 0 : index
    %c0_191 = arith.constant 0 : index
    %261 = vector.load %arg14[%c3_189, %c0_190, %c0_191] : memref<4x16x8xbf16, #tpu.memory_space<vmem>>, vector<1x16x8xbf16>
    %262 = vector.shape_cast %261 : vector<1x16x8xbf16> to vector<16x8xbf16>
    %cst_192 = arith.constant dense<0.000000e+00> : vector<16x256xf32>
    %263 = tpu.matmul %262, %228, %cst_192 {dimension_numbers = #tpu.dot_dimension_numbers<[1], [0], [0], [1], [0, 0, 1, 1], [], []>} : vector<16x8xbf16>, vector<8x256xbf16>, vector<16x256xf32> -> vector<16x256xf32>
    %264 = arith.truncf %263 : vector<16x256xf32> to vector<16x256xbf16>
    %c3_193 = arith.constant 3 : index
    %c0_194 = arith.constant 0 : index
    %c0_195 = arith.constant 0 : index
    %265 = vector.load %arg13[%c3_193, %c0_194, %c0_195] : memref<4x256x256xbf16, #tpu.memory_space<vmem>>, vector<1x256x256xbf16>
    %266 = vector.shape_cast %265 : vector<1x256x256xbf16> to vector<256x256xbf16>
    %cst_196 = arith.constant dense<0.000000e+00> : vector<16x256xf32>
    %267 = tpu.matmul %264, %266, %cst_196 {dimension_numbers = #tpu.dot_dimension_numbers<[1], [0], [0], [1], [0, 0, 1, 1], [], []>} : vector<16x256xbf16>, vector<256x256xbf16>, vector<16x256xf32> -> vector<16x256xf32>
    %268 = arith.addf %260, %267 : vector<16x256xf32>
    %c0_197 = arith.constant 0 : index
    %c0_198 = arith.constant 0 : index
    %c0_199 = arith.constant 0 : index
    %269 = vector.load %arg14[%c0_197, %c0_198, %c0_199] : memref<4x16x8xbf16, #tpu.memory_space<vmem>>, vector<1x16x8xbf16>
    %270 = vector.shape_cast %269 : vector<1x16x8xbf16> to vector<16x8xbf16>
    %cst_200 = arith.constant dense<0.000000e+00> : vector<16x256xf32>
    %271 = tpu.matmul %270, %237, %cst_200 {dimension_numbers = #tpu.dot_dimension_numbers<[1], [0], [0], [1], [0, 0, 1, 1], [], []>} : vector<16x8xbf16>, vector<8x256xbf16>, vector<16x256xf32> -> vector<16x256xf32>
    %272 = arith.truncf %271 : vector<16x256xf32> to vector<16x256xbf16>
    %c0_201 = arith.constant 0 : index
    %c0_202 = arith.constant 0 : index
    %c0_203 = arith.constant 0 : index
    %273 = vector.load %arg13[%c0_201, %c0_202, %c0_203] : memref<4x256x256xbf16, #tpu.memory_space<vmem>>, vector<1x256x256xbf16>
    %274 = vector.shape_cast %273 : vector<1x256x256xbf16> to vector<256x256xbf16>
    %cst_204 = arith.constant dense<0.000000e+00> : vector<16x256xf32>
    %275 = tpu.matmul %272, %274, %cst_204 {dimension_numbers = #tpu.dot_dimension_numbers<[1], [0], [0], [1], [0, 0, 1, 1], [], []>} : vector<16x256xbf16>, vector<256x256xbf16>, vector<16x256xf32> -> vector<16x256xf32>
    %c1_205 = arith.constant 1 : index
    %c0_206 = arith.constant 0 : index
    %c0_207 = arith.constant 0 : index
    %276 = vector.load %arg14[%c1_205, %c0_206, %c0_207] : memref<4x16x8xbf16, #tpu.memory_space<vmem>>, vector<1x16x8xbf16>
    %277 = vector.shape_cast %276 : vector<1x16x8xbf16> to vector<16x8xbf16>
    %cst_208 = arith.constant dense<0.000000e+00> : vector<16x256xf32>
    %278 = tpu.matmul %277, %237, %cst_208 {dimension_numbers = #tpu.dot_dimension_numbers<[1], [0], [0], [1], [0, 0, 1, 1], [], []>} : vector<16x8xbf16>, vector<8x256xbf16>, vector<16x256xf32> -> vector<16x256xf32>
    %279 = arith.truncf %278 : vector<16x256xf32> to vector<16x256xbf16>
    %c1_209 = arith.constant 1 : index
    %c0_210 = arith.constant 0 : index
    %c0_211 = arith.constant 0 : index
    %280 = vector.load %arg13[%c1_209, %c0_210, %c0_211] : memref<4x256x256xbf16, #tpu.memory_space<vmem>>, vector<1x256x256xbf16>
    %281 = vector.shape_cast %280 : vector<1x256x256xbf16> to vector<256x256xbf16>
    %cst_212 = arith.constant dense<0.000000e+00> : vector<16x256xf32>
    %282 = tpu.matmul %279, %281, %cst_212 {dimension_numbers = #tpu.dot_dimension_numbers<[1], [0], [0], [1], [0, 0, 1, 1], [], []>} : vector<16x256xbf16>, vector<256x256xbf16>, vector<16x256xf32> -> vector<16x256xf32>
    %283 = arith.addf %275, %282 : vector<16x256xf32>
    %c2_213 = arith.constant 2 : index
    %c0_214 = arith.constant 0 : index
    %c0_215 = arith.constant 0 : index
    %284 = vector.load %arg14[%c2_213, %c0_214, %c0_215] : memref<4x16x8xbf16, #tpu.memory_space<vmem>>, vector<1x16x8xbf16>
    %285 = vector.shape_cast %284 : vector<1x16x8xbf16> to vector<16x8xbf16>
    %cst_216 = arith.constant dense<0.000000e+00> : vector<16x256xf32>
    %286 = tpu.matmul %285, %237, %cst_216 {dimension_numbers = #tpu.dot_dimension_numbers<[1], [0], [0], [1], [0, 0, 1, 1], [], []>} : vector<16x8xbf16>, vector<8x256xbf16>, vector<16x256xf32> -> vector<16x256xf32>
    %287 = arith.truncf %286 : vector<16x256xf32> to vector<16x256xbf16>
    %c2_217 = arith.constant 2 : index
    %c0_218 = arith.constant 0 : index
    %c0_219 = arith.constant 0 : index
    %288 = vector.load %arg13[%c2_217, %c0_218, %c0_219] : memref<4x256x256xbf16, #tpu.memory_space<vmem>>, vector<1x256x256xbf16>
    %289 = vector.shape_cast %288 : vector<1x256x256xbf16> to vector<256x256xbf16>
    %cst_220 = arith.constant dense<0.000000e+00> : vector<16x256xf32>
    %290 = tpu.matmul %287, %289, %cst_220 {dimension_numbers = #tpu.dot_dimension_numbers<[1], [0], [0], [1], [0, 0, 1, 1], [], []>} : vector<16x256xbf16>, vector<256x256xbf16>, vector<16x256xf32> -> vector<16x256xf32>
    %291 = arith.addf %283, %290 : vector<16x256xf32>
    %c3_221 = arith.constant 3 : index
    %c0_222 = arith.constant 0 : index
    %c0_223 = arith.constant 0 : index
    %292 = vector.load %arg14[%c3_221, %c0_222, %c0_223] : memref<4x16x8xbf16, #tpu.memory_space<vmem>>, vector<1x16x8xbf16>
    %293 = vector.shape_cast %292 : vector<1x16x8xbf16> to vector<16x8xbf16>
    %cst_224 = arith.constant dense<0.000000e+00> : vector<16x256xf32>
    %294 = tpu.matmul %293, %237, %cst_224 {dimension_numbers = #tpu.dot_dimension_numbers<[1], [0], [0], [1], [0, 0, 1, 1], [], []>} : vector<16x8xbf16>, vector<8x256xbf16>, vector<16x256xf32> -> vector<16x256xf32>
    %295 = arith.truncf %294 : vector<16x256xf32> to vector<16x256xbf16>
    %c3_225 = arith.constant 3 : index
    %c0_226 = arith.constant 0 : index
    %c0_227 = arith.constant 0 : index
    %296 = vector.load %arg13[%c3_225, %c0_226, %c0_227] : memref<4x256x256xbf16, #tpu.memory_space<vmem>>, vector<1x256x256xbf16>
    %297 = vector.shape_cast %296 : vector<1x256x256xbf16> to vector<256x256xbf16>
    %cst_228 = arith.constant dense<0.000000e+00> : vector<16x256xf32>
    %298 = tpu.matmul %295, %297, %cst_228 {dimension_numbers = #tpu.dot_dimension_numbers<[1], [0], [0], [1], [0, 0, 1, 1], [], []>} : vector<16x256xbf16>, vector<256x256xbf16>, vector<16x256xf32> -> vector<16x256xf32>
    %299 = arith.addf %291, %298 : vector<16x256xf32>
    %c0_229 = arith.constant 0 : index
    %c0_230 = arith.constant 0 : index
    %300 = vector.load %arg17[%c0_229, %c0_230] : memref<256x16xf32, #tpu.memory_space<vmem>>, vector<256x16xf32>
    %c0_231 = arith.constant 0 : index
    %c0_232 = arith.constant 0 : index
    %301 = vector.load %arg18[%c0_231, %c0_232] : memref<16x256xf32, #tpu.memory_space<vmem>>, vector<16x256xf32>
    %cst_233 = arith.constant dense<0.000000e+00> : vector<256xf32>
    %302 = vector.multi_reduction <add>, %268, %cst_233 [0] : vector<16x256xf32> to vector<256xf32>
    %303 = vector.shape_cast %302 : vector<256xf32> to vector<1x256xf32>
    %cst_234 = arith.constant dense<0.000000e+00> : vector<256xf32>
    %304 = vector.multi_reduction <add>, %299, %cst_234 [0] : vector<16x256xf32> to vector<256xf32>
    %305 = vector.shape_cast %304 : vector<256xf32> to vector<1x256xf32>
    %306 = arith.addf %303, %305 : vector<1x256xf32>
    %cst_235 = arith.constant dense<0.000000e+00> : vector<1x16xf32>
    %307 = tpu.matmul %306, %300, %cst_235 {dimension_numbers = #tpu.dot_dimension_numbers<[1], [0], [0], [1], [0, 0, 1, 1], [], []>} : vector<1x256xf32>, vector<256x16xf32>, vector<1x16xf32> -> vector<1x16xf32>
    %cst_236 = arith.constant 0.001953125 : f32
    %308 = vector.broadcast %cst_236 : f32 to vector<1x16xf32>
    %309 = arith.mulf %307, %308 : vector<1x16xf32>
    %cst_237 = arith.constant dense<0.000000e+00> : vector<1x256xf32>
    %310 = tpu.matmul %309, %301, %cst_237 {dimension_numbers = #tpu.dot_dimension_numbers<[1], [0], [0], [1], [0, 0, 1, 1], [], []>} : vector<1x16xf32>, vector<16x256xf32>, vector<1x256xf32> -> vector<1x256xf32>
    %311 = vector.broadcast %310 : vector<1x256xf32> to vector<16x256xf32>
    %312 = arith.subf %268, %311 : vector<16x256xf32>
    %313 = arith.mulf %312, %312 : vector<16x256xf32>
    %cst_238 = arith.constant dense<0.000000e+00> : vector<256xf32>
    %314 = vector.multi_reduction <add>, %313, %cst_238 [0] : vector<16x256xf32> to vector<256xf32>
    %315 = vector.shape_cast %314 : vector<256xf32> to vector<1x256xf32>
    %316 = vector.broadcast %310 : vector<1x256xf32> to vector<16x256xf32>
    %317 = arith.subf %299, %316 : vector<16x256xf32>
    %318 = arith.mulf %317, %317 : vector<16x256xf32>
    %cst_239 = arith.constant dense<0.000000e+00> : vector<256xf32>
    %319 = vector.multi_reduction <add>, %318, %cst_239 [0] : vector<16x256xf32> to vector<256xf32>
    %320 = vector.shape_cast %319 : vector<256xf32> to vector<1x256xf32>
    %321 = arith.addf %315, %320 : vector<1x256xf32>
    %cst_240 = arith.constant dense<0.000000e+00> : vector<1x16xf32>
    %322 = tpu.matmul %321, %300, %cst_240 {dimension_numbers = #tpu.dot_dimension_numbers<[1], [0], [0], [1], [0, 0, 1, 1], [], []>} : vector<1x256xf32>, vector<256x16xf32>, vector<1x16xf32> -> vector<1x16xf32>
    %cst_241 = arith.constant 0.001953125 : f32
    %323 = vector.broadcast %cst_241 : f32 to vector<1x16xf32>
    %324 = arith.mulf %322, %323 : vector<1x16xf32>
    %c0_242 = arith.constant 0 : index
    %c0_243 = arith.constant 0 : index
    %325 = vector.load %arg15[%c0_242, %c0_243] : memref<1x16xf32, #tpu.memory_space<vmem>>, vector<1x16xf32>
    %cst_244 = arith.constant 9.99999974E-6 : f32
    %326 = vector.broadcast %cst_244 : f32 to vector<1x16xf32>
    %327 = arith.addf %324, %326 : vector<1x16xf32>
    %328 = math.rsqrt %327 : vector<1x16xf32>
    %329 = arith.mulf %325, %328 : vector<1x16xf32>
    %cst_245 = arith.constant dense<0.000000e+00> : vector<1x256xf32>
    %330 = tpu.matmul %329, %301, %cst_245 {dimension_numbers = #tpu.dot_dimension_numbers<[1], [0], [0], [1], [0, 0, 1, 1], [], []>} : vector<1x16xf32>, vector<16x256xf32>, vector<1x256xf32> -> vector<1x256xf32>
    %c0_246 = arith.constant 0 : index
    %c0_247 = arith.constant 0 : index
    %331 = vector.load %arg16[%c0_246, %c0_247] : memref<1x16xf32, #tpu.memory_space<vmem>>, vector<1x16xf32>
    %cst_248 = arith.constant dense<0.000000e+00> : vector<1x256xf32>
    %332 = tpu.matmul %331, %301, %cst_248 {dimension_numbers = #tpu.dot_dimension_numbers<[1], [0], [0], [1], [0, 0, 1, 1], [], []>} : vector<1x16xf32>, vector<16x256xf32>, vector<1x256xf32> -> vector<1x256xf32>
    %333 = vector.broadcast %310 : vector<1x256xf32> to vector<16x256xf32>
    %334 = arith.subf %268, %333 : vector<16x256xf32>
    %335 = vector.broadcast %330 : vector<1x256xf32> to vector<16x256xf32>
    %336 = arith.mulf %334, %335 : vector<16x256xf32>
    %337 = vector.broadcast %332 : vector<1x256xf32> to vector<16x256xf32>
    %338 = arith.addf %336, %337 : vector<16x256xf32>
    %cst_249 = arith.constant 0.000000e+00 : f32
    %339 = vector.broadcast %cst_249 : f32 to vector<16x256xf32>
    %340 = arith.maximumf %338, %339 : vector<16x256xf32>
    %341 = arith.truncf %340 : vector<16x256xf32> to vector<16x256xbf16>
    %342 = vector.broadcast %310 : vector<1x256xf32> to vector<16x256xf32>
    %343 = arith.subf %299, %342 : vector<16x256xf32>
    %344 = vector.broadcast %330 : vector<1x256xf32> to vector<16x256xf32>
    %345 = arith.mulf %343, %344 : vector<16x256xf32>
    %346 = vector.broadcast %332 : vector<1x256xf32> to vector<16x256xf32>
    %347 = arith.addf %345, %346 : vector<16x256xf32>
    %cst_250 = arith.constant 0.000000e+00 : f32
    %348 = vector.broadcast %cst_250 : f32 to vector<16x256xf32>
    %349 = arith.maximumf %347, %348 : vector<16x256xf32>
    %350 = arith.truncf %349 : vector<16x256xf32> to vector<16x256xbf16>
    %c0_251 = arith.constant 0 : index
    %c0_252 = arith.constant 0 : index
    %c0_253 = arith.constant 0 : index
    %351 = vector.load %arg20[%c0_251, %c0_252, %c0_253] : memref<4x32x16xbf16, #tpu.memory_space<vmem>>, vector<1x32x16xbf16>
    %352 = vector.shape_cast %351 : vector<1x32x16xbf16> to vector<32x16xbf16>
    %cst_254 = arith.constant dense<0.000000e+00> : vector<32x256xf32>
    %353 = tpu.matmul %352, %341, %cst_254 {dimension_numbers = #tpu.dot_dimension_numbers<[1], [0], [0], [1], [0, 0, 1, 1], [], []>} : vector<32x16xbf16>, vector<16x256xbf16>, vector<32x256xf32> -> vector<32x256xf32>
    %354 = arith.truncf %353 : vector<32x256xf32> to vector<32x256xbf16>
    %c0_255 = arith.constant 0 : index
    %c0_256 = arith.constant 0 : index
    %c0_257 = arith.constant 0 : index
    %355 = vector.load %arg19[%c0_255, %c0_256, %c0_257] : memref<4x256x256xbf16, #tpu.memory_space<vmem>>, vector<1x256x256xbf16>
    %356 = vector.shape_cast %355 : vector<1x256x256xbf16> to vector<256x256xbf16>
    %cst_258 = arith.constant dense<0.000000e+00> : vector<32x256xf32>
    %357 = tpu.matmul %354, %356, %cst_258 {dimension_numbers = #tpu.dot_dimension_numbers<[1], [0], [0], [1], [0, 0, 1, 1], [], []>} : vector<32x256xbf16>, vector<256x256xbf16>, vector<32x256xf32> -> vector<32x256xf32>
    %c1_259 = arith.constant 1 : index
    %c0_260 = arith.constant 0 : index
    %c0_261 = arith.constant 0 : index
    %358 = vector.load %arg20[%c1_259, %c0_260, %c0_261] : memref<4x32x16xbf16, #tpu.memory_space<vmem>>, vector<1x32x16xbf16>
    %359 = vector.shape_cast %358 : vector<1x32x16xbf16> to vector<32x16xbf16>
    %cst_262 = arith.constant dense<0.000000e+00> : vector<32x256xf32>
    %360 = tpu.matmul %359, %341, %cst_262 {dimension_numbers = #tpu.dot_dimension_numbers<[1], [0], [0], [1], [0, 0, 1, 1], [], []>} : vector<32x16xbf16>, vector<16x256xbf16>, vector<32x256xf32> -> vector<32x256xf32>
    %361 = arith.truncf %360 : vector<32x256xf32> to vector<32x256xbf16>
    %c1_263 = arith.constant 1 : index
    %c0_264 = arith.constant 0 : index
    %c0_265 = arith.constant 0 : index
    %362 = vector.load %arg19[%c1_263, %c0_264, %c0_265] : memref<4x256x256xbf16, #tpu.memory_space<vmem>>, vector<1x256x256xbf16>
    %363 = vector.shape_cast %362 : vector<1x256x256xbf16> to vector<256x256xbf16>
    %cst_266 = arith.constant dense<0.000000e+00> : vector<32x256xf32>
    %364 = tpu.matmul %361, %363, %cst_266 {dimension_numbers = #tpu.dot_dimension_numbers<[1], [0], [0], [1], [0, 0, 1, 1], [], []>} : vector<32x256xbf16>, vector<256x256xbf16>, vector<32x256xf32> -> vector<32x256xf32>
    %365 = arith.addf %357, %364 : vector<32x256xf32>
    %c2_267 = arith.constant 2 : index
    %c0_268 = arith.constant 0 : index
    %c0_269 = arith.constant 0 : index
    %366 = vector.load %arg20[%c2_267, %c0_268, %c0_269] : memref<4x32x16xbf16, #tpu.memory_space<vmem>>, vector<1x32x16xbf16>
    %367 = vector.shape_cast %366 : vector<1x32x16xbf16> to vector<32x16xbf16>
    %cst_270 = arith.constant dense<0.000000e+00> : vector<32x256xf32>
    %368 = tpu.matmul %367, %341, %cst_270 {dimension_numbers = #tpu.dot_dimension_numbers<[1], [0], [0], [1], [0, 0, 1, 1], [], []>} : vector<32x16xbf16>, vector<16x256xbf16>, vector<32x256xf32> -> vector<32x256xf32>
    %369 = arith.truncf %368 : vector<32x256xf32> to vector<32x256xbf16>
    %c2_271 = arith.constant 2 : index
    %c0_272 = arith.constant 0 : index
    %c0_273 = arith.constant 0 : index
    %370 = vector.load %arg19[%c2_271, %c0_272, %c0_273] : memref<4x256x256xbf16, #tpu.memory_space<vmem>>, vector<1x256x256xbf16>
    %371 = vector.shape_cast %370 : vector<1x256x256xbf16> to vector<256x256xbf16>
    %cst_274 = arith.constant dense<0.000000e+00> : vector<32x256xf32>
    %372 = tpu.matmul %369, %371, %cst_274 {dimension_numbers = #tpu.dot_dimension_numbers<[1], [0], [0], [1], [0, 0, 1, 1], [], []>} : vector<32x256xbf16>, vector<256x256xbf16>, vector<32x256xf32> -> vector<32x256xf32>
    %373 = arith.addf %365, %372 : vector<32x256xf32>
    %c3_275 = arith.constant 3 : index
    %c0_276 = arith.constant 0 : index
    %c0_277 = arith.constant 0 : index
    %374 = vector.load %arg20[%c3_275, %c0_276, %c0_277] : memref<4x32x16xbf16, #tpu.memory_space<vmem>>, vector<1x32x16xbf16>
    %375 = vector.shape_cast %374 : vector<1x32x16xbf16> to vector<32x16xbf16>
    %cst_278 = arith.constant dense<0.000000e+00> : vector<32x256xf32>
    %376 = tpu.matmul %375, %341, %cst_278 {dimension_numbers = #tpu.dot_dimension_numbers<[1], [0], [0], [1], [0, 0, 1, 1], [], []>} : vector<32x16xbf16>, vector<16x256xbf16>, vector<32x256xf32> -> vector<32x256xf32>
    %377 = arith.truncf %376 : vector<32x256xf32> to vector<32x256xbf16>
    %c3_279 = arith.constant 3 : index
    %c0_280 = arith.constant 0 : index
    %c0_281 = arith.constant 0 : index
    %378 = vector.load %arg19[%c3_279, %c0_280, %c0_281] : memref<4x256x256xbf16, #tpu.memory_space<vmem>>, vector<1x256x256xbf16>
    %379 = vector.shape_cast %378 : vector<1x256x256xbf16> to vector<256x256xbf16>
    %cst_282 = arith.constant dense<0.000000e+00> : vector<32x256xf32>
    %380 = tpu.matmul %377, %379, %cst_282 {dimension_numbers = #tpu.dot_dimension_numbers<[1], [0], [0], [1], [0, 0, 1, 1], [], []>} : vector<32x256xbf16>, vector<256x256xbf16>, vector<32x256xf32> -> vector<32x256xf32>
    %381 = arith.addf %373, %380 : vector<32x256xf32>
    %c0_283 = arith.constant 0 : index
    %c0_284 = arith.constant 0 : index
    %c0_285 = arith.constant 0 : index
    %382 = vector.load %arg20[%c0_283, %c0_284, %c0_285] : memref<4x32x16xbf16, #tpu.memory_space<vmem>>, vector<1x32x16xbf16>
    %383 = vector.shape_cast %382 : vector<1x32x16xbf16> to vector<32x16xbf16>
    %cst_286 = arith.constant dense<0.000000e+00> : vector<32x256xf32>
    %384 = tpu.matmul %383, %350, %cst_286 {dimension_numbers = #tpu.dot_dimension_numbers<[1], [0], [0], [1], [0, 0, 1, 1], [], []>} : vector<32x16xbf16>, vector<16x256xbf16>, vector<32x256xf32> -> vector<32x256xf32>
    %385 = arith.truncf %384 : vector<32x256xf32> to vector<32x256xbf16>
    %c0_287 = arith.constant 0 : index
    %c0_288 = arith.constant 0 : index
    %c0_289 = arith.constant 0 : index
    %386 = vector.load %arg19[%c0_287, %c0_288, %c0_289] : memref<4x256x256xbf16, #tpu.memory_space<vmem>>, vector<1x256x256xbf16>
    %387 = vector.shape_cast %386 : vector<1x256x256xbf16> to vector<256x256xbf16>
    %cst_290 = arith.constant dense<0.000000e+00> : vector<32x256xf32>
    %388 = tpu.matmul %385, %387, %cst_290 {dimension_numbers = #tpu.dot_dimension_numbers<[1], [0], [0], [1], [0, 0, 1, 1], [], []>} : vector<32x256xbf16>, vector<256x256xbf16>, vector<32x256xf32> -> vector<32x256xf32>
    %c1_291 = arith.constant 1 : index
    %c0_292 = arith.constant 0 : index
    %c0_293 = arith.constant 0 : index
    %389 = vector.load %arg20[%c1_291, %c0_292, %c0_293] : memref<4x32x16xbf16, #tpu.memory_space<vmem>>, vector<1x32x16xbf16>
    %390 = vector.shape_cast %389 : vector<1x32x16xbf16> to vector<32x16xbf16>
    %cst_294 = arith.constant dense<0.000000e+00> : vector<32x256xf32>
    %391 = tpu.matmul %390, %350, %cst_294 {dimension_numbers = #tpu.dot_dimension_numbers<[1], [0], [0], [1], [0, 0, 1, 1], [], []>} : vector<32x16xbf16>, vector<16x256xbf16>, vector<32x256xf32> -> vector<32x256xf32>
    %392 = arith.truncf %391 : vector<32x256xf32> to vector<32x256xbf16>
    %c1_295 = arith.constant 1 : index
    %c0_296 = arith.constant 0 : index
    %c0_297 = arith.constant 0 : index
    %393 = vector.load %arg19[%c1_295, %c0_296, %c0_297] : memref<4x256x256xbf16, #tpu.memory_space<vmem>>, vector<1x256x256xbf16>
    %394 = vector.shape_cast %393 : vector<1x256x256xbf16> to vector<256x256xbf16>
    %cst_298 = arith.constant dense<0.000000e+00> : vector<32x256xf32>
    %395 = tpu.matmul %392, %394, %cst_298 {dimension_numbers = #tpu.dot_dimension_numbers<[1], [0], [0], [1], [0, 0, 1, 1], [], []>} : vector<32x256xbf16>, vector<256x256xbf16>, vector<32x256xf32> -> vector<32x256xf32>
    %396 = arith.addf %388, %395 : vector<32x256xf32>
    %c2_299 = arith.constant 2 : index
    %c0_300 = arith.constant 0 : index
    %c0_301 = arith.constant 0 : index
    %397 = vector.load %arg20[%c2_299, %c0_300, %c0_301] : memref<4x32x16xbf16, #tpu.memory_space<vmem>>, vector<1x32x16xbf16>
    %398 = vector.shape_cast %397 : vector<1x32x16xbf16> to vector<32x16xbf16>
    %cst_302 = arith.constant dense<0.000000e+00> : vector<32x256xf32>
    %399 = tpu.matmul %398, %350, %cst_302 {dimension_numbers = #tpu.dot_dimension_numbers<[1], [0], [0], [1], [0, 0, 1, 1], [], []>} : vector<32x16xbf16>, vector<16x256xbf16>, vector<32x256xf32> -> vector<32x256xf32>
    %400 = arith.truncf %399 : vector<32x256xf32> to vector<32x256xbf16>
    %c2_303 = arith.constant 2 : index
    %c0_304 = arith.constant 0 : index
    %c0_305 = arith.constant 0 : index
    %401 = vector.load %arg19[%c2_303, %c0_304, %c0_305] : memref<4x256x256xbf16, #tpu.memory_space<vmem>>, vector<1x256x256xbf16>
    %402 = vector.shape_cast %401 : vector<1x256x256xbf16> to vector<256x256xbf16>
    %cst_306 = arith.constant dense<0.000000e+00> : vector<32x256xf32>
    %403 = tpu.matmul %400, %402, %cst_306 {dimension_numbers = #tpu.dot_dimension_numbers<[1], [0], [0], [1], [0, 0, 1, 1], [], []>} : vector<32x256xbf16>, vector<256x256xbf16>, vector<32x256xf32> -> vector<32x256xf32>
    %404 = arith.addf %396, %403 : vector<32x256xf32>
    %c3_307 = arith.constant 3 : index
    %c0_308 = arith.constant 0 : index
    %c0_309 = arith.constant 0 : index
    %405 = vector.load %arg20[%c3_307, %c0_308, %c0_309] : memref<4x32x16xbf16, #tpu.memory_space<vmem>>, vector<1x32x16xbf16>
    %406 = vector.shape_cast %405 : vector<1x32x16xbf16> to vector<32x16xbf16>
    %cst_310 = arith.constant dense<0.000000e+00> : vector<32x256xf32>
    %407 = tpu.matmul %406, %350, %cst_310 {dimension_numbers = #tpu.dot_dimension_numbers<[1], [0], [0], [1], [0, 0, 1, 1], [], []>} : vector<32x16xbf16>, vector<16x256xbf16>, vector<32x256xf32> -> vector<32x256xf32>
    %408 = arith.truncf %407 : vector<32x256xf32> to vector<32x256xbf16>
    %c3_311 = arith.constant 3 : index
    %c0_312 = arith.constant 0 : index
    %c0_313 = arith.constant 0 : index
    %409 = vector.load %arg19[%c3_311, %c0_312, %c0_313] : memref<4x256x256xbf16, #tpu.memory_space<vmem>>, vector<1x256x256xbf16>
    %410 = vector.shape_cast %409 : vector<1x256x256xbf16> to vector<256x256xbf16>
    %cst_314 = arith.constant dense<0.000000e+00> : vector<32x256xf32>
    %411 = tpu.matmul %408, %410, %cst_314 {dimension_numbers = #tpu.dot_dimension_numbers<[1], [0], [0], [1], [0, 0, 1, 1], [], []>} : vector<32x256xbf16>, vector<256x256xbf16>, vector<32x256xf32> -> vector<32x256xf32>
    %412 = arith.addf %404, %411 : vector<32x256xf32>
    %c0_315 = arith.constant 0 : index
    %c0_316 = arith.constant 0 : index
    %413 = vector.load %arg23[%c0_315, %c0_316] : memref<256x8xf32, #tpu.memory_space<vmem>>, vector<256x8xf32>
    %c0_317 = arith.constant 0 : index
    %c0_318 = arith.constant 0 : index
    %414 = vector.load %arg24[%c0_317, %c0_318] : memref<8x256xf32, #tpu.memory_space<vmem>>, vector<8x256xf32>
    %cst_319 = arith.constant dense<0.000000e+00> : vector<256xf32>
    %415 = vector.multi_reduction <add>, %381, %cst_319 [0] : vector<32x256xf32> to vector<256xf32>
    %416 = vector.shape_cast %415 : vector<256xf32> to vector<1x256xf32>
    %cst_320 = arith.constant dense<0.000000e+00> : vector<256xf32>
    %417 = vector.multi_reduction <add>, %412, %cst_320 [0] : vector<32x256xf32> to vector<256xf32>
    %418 = vector.shape_cast %417 : vector<256xf32> to vector<1x256xf32>
    %419 = arith.addf %416, %418 : vector<1x256xf32>
    %cst_321 = arith.constant dense<0.000000e+00> : vector<1x8xf32>
    %420 = tpu.matmul %419, %413, %cst_321 {dimension_numbers = #tpu.dot_dimension_numbers<[1], [0], [0], [1], [0, 0, 1, 1], [], []>} : vector<1x256xf32>, vector<256x8xf32>, vector<1x8xf32> -> vector<1x8xf32>
    %cst_322 = arith.constant 4.8828125E-4 : f32
    %421 = vector.broadcast %cst_322 : f32 to vector<1x8xf32>
    %422 = arith.mulf %420, %421 : vector<1x8xf32>
    %cst_323 = arith.constant dense<0.000000e+00> : vector<1x256xf32>
    %423 = tpu.matmul %422, %414, %cst_323 {dimension_numbers = #tpu.dot_dimension_numbers<[1], [0], [0], [1], [0, 0, 1, 1], [], []>} : vector<1x8xf32>, vector<8x256xf32>, vector<1x256xf32> -> vector<1x256xf32>
    %424 = vector.broadcast %423 : vector<1x256xf32> to vector<32x256xf32>
    %425 = arith.subf %381, %424 : vector<32x256xf32>
    %426 = arith.mulf %425, %425 : vector<32x256xf32>
    %cst_324 = arith.constant dense<0.000000e+00> : vector<256xf32>
    %427 = vector.multi_reduction <add>, %426, %cst_324 [0] : vector<32x256xf32> to vector<256xf32>
    %428 = vector.shape_cast %427 : vector<256xf32> to vector<1x256xf32>
    %429 = vector.broadcast %423 : vector<1x256xf32> to vector<32x256xf32>
    %430 = arith.subf %412, %429 : vector<32x256xf32>
    %431 = arith.mulf %430, %430 : vector<32x256xf32>
    %cst_325 = arith.constant dense<0.000000e+00> : vector<256xf32>
    %432 = vector.multi_reduction <add>, %431, %cst_325 [0] : vector<32x256xf32> to vector<256xf32>
    %433 = vector.shape_cast %432 : vector<256xf32> to vector<1x256xf32>
    %434 = arith.addf %428, %433 : vector<1x256xf32>
    %cst_326 = arith.constant dense<0.000000e+00> : vector<1x8xf32>
    %435 = tpu.matmul %434, %413, %cst_326 {dimension_numbers = #tpu.dot_dimension_numbers<[1], [0], [0], [1], [0, 0, 1, 1], [], []>} : vector<1x256xf32>, vector<256x8xf32>, vector<1x8xf32> -> vector<1x8xf32>
    %cst_327 = arith.constant 4.8828125E-4 : f32
    %436 = vector.broadcast %cst_327 : f32 to vector<1x8xf32>
    %437 = arith.mulf %435, %436 : vector<1x8xf32>
    %c0_328 = arith.constant 0 : index
    %c0_329 = arith.constant 0 : index
    %438 = vector.load %arg21[%c0_328, %c0_329] : memref<1x8xf32, #tpu.memory_space<vmem>>, vector<1x8xf32>
    %cst_330 = arith.constant 9.99999974E-6 : f32
    %439 = vector.broadcast %cst_330 : f32 to vector<1x8xf32>
    %440 = arith.addf %437, %439 : vector<1x8xf32>
    %441 = math.rsqrt %440 : vector<1x8xf32>
    %442 = arith.mulf %438, %441 : vector<1x8xf32>
    %cst_331 = arith.constant dense<0.000000e+00> : vector<1x256xf32>
    %443 = tpu.matmul %442, %414, %cst_331 {dimension_numbers = #tpu.dot_dimension_numbers<[1], [0], [0], [1], [0, 0, 1, 1], [], []>} : vector<1x8xf32>, vector<8x256xf32>, vector<1x256xf32> -> vector<1x256xf32>
    %c0_332 = arith.constant 0 : index
    %c0_333 = arith.constant 0 : index
    %444 = vector.load %arg22[%c0_332, %c0_333] : memref<1x8xf32, #tpu.memory_space<vmem>>, vector<1x8xf32>
    %cst_334 = arith.constant dense<0.000000e+00> : vector<1x256xf32>
    %445 = tpu.matmul %444, %414, %cst_334 {dimension_numbers = #tpu.dot_dimension_numbers<[1], [0], [0], [1], [0, 0, 1, 1], [], []>} : vector<1x8xf32>, vector<8x256xf32>, vector<1x256xf32> -> vector<1x256xf32>
    %446 = vector.broadcast %423 : vector<1x256xf32> to vector<32x256xf32>
    %447 = arith.subf %381, %446 : vector<32x256xf32>
    %448 = vector.broadcast %443 : vector<1x256xf32> to vector<32x256xf32>
    %449 = arith.mulf %447, %448 : vector<32x256xf32>
    %450 = vector.broadcast %445 : vector<1x256xf32> to vector<32x256xf32>
    %451 = arith.addf %449, %450 : vector<32x256xf32>
    %cst_335 = arith.constant 0.000000e+00 : f32
    %452 = vector.broadcast %cst_335 : f32 to vector<32x256xf32>
    %453 = arith.maximumf %451, %452 : vector<32x256xf32>
    %454 = arith.truncf %453 : vector<32x256xf32> to vector<32x256xbf16>
    %455 = vector.broadcast %423 : vector<1x256xf32> to vector<32x256xf32>
    %456 = arith.subf %412, %455 : vector<32x256xf32>
    %457 = vector.broadcast %443 : vector<1x256xf32> to vector<32x256xf32>
    %458 = arith.mulf %456, %457 : vector<32x256xf32>
    %459 = vector.broadcast %445 : vector<1x256xf32> to vector<32x256xf32>
    %460 = arith.addf %458, %459 : vector<32x256xf32>
    %cst_336 = arith.constant 0.000000e+00 : f32
    %461 = vector.broadcast %cst_336 : f32 to vector<32x256xf32>
    %462 = arith.maximumf %460, %461 : vector<32x256xf32>
    %463 = arith.truncf %462 : vector<32x256xf32> to vector<32x256xbf16>
    %c0_337 = arith.constant 0 : index
    %c0_338 = arith.constant 0 : index
    %c0_339 = arith.constant 0 : index
    %464 = vector.load %arg26[%c0_337, %c0_338, %c0_339] : memref<4x64x32xbf16, #tpu.memory_space<vmem>>, vector<1x64x32xbf16>
    %465 = vector.shape_cast %464 : vector<1x64x32xbf16> to vector<64x32xbf16>
    %cst_340 = arith.constant dense<0.000000e+00> : vector<64x256xf32>
    %466 = tpu.matmul %465, %454, %cst_340 {dimension_numbers = #tpu.dot_dimension_numbers<[1], [0], [0], [1], [0, 0, 1, 1], [], []>} : vector<64x32xbf16>, vector<32x256xbf16>, vector<64x256xf32> -> vector<64x256xf32>
    %467 = arith.truncf %466 : vector<64x256xf32> to vector<64x256xbf16>
    %c0_341 = arith.constant 0 : index
    %c0_342 = arith.constant 0 : index
    %c0_343 = arith.constant 0 : index
    %468 = vector.load %arg25[%c0_341, %c0_342, %c0_343] : memref<4x256x64xbf16, #tpu.memory_space<vmem>>, vector<1x256x64xbf16>
    %469 = vector.shape_cast %468 : vector<1x256x64xbf16> to vector<256x64xbf16>
    %cst_344 = arith.constant dense<0.000000e+00> : vector<64x64xf32>
    %470 = tpu.matmul %467, %469, %cst_344 {dimension_numbers = #tpu.dot_dimension_numbers<[1], [0], [0], [1], [0, 0, 1, 1], [], []>} : vector<64x256xbf16>, vector<256x64xbf16>, vector<64x64xf32> -> vector<64x64xf32>
    %c1_345 = arith.constant 1 : index
    %c0_346 = arith.constant 0 : index
    %c0_347 = arith.constant 0 : index
    %471 = vector.load %arg26[%c1_345, %c0_346, %c0_347] : memref<4x64x32xbf16, #tpu.memory_space<vmem>>, vector<1x64x32xbf16>
    %472 = vector.shape_cast %471 : vector<1x64x32xbf16> to vector<64x32xbf16>
    %cst_348 = arith.constant dense<0.000000e+00> : vector<64x256xf32>
    %473 = tpu.matmul %472, %454, %cst_348 {dimension_numbers = #tpu.dot_dimension_numbers<[1], [0], [0], [1], [0, 0, 1, 1], [], []>} : vector<64x32xbf16>, vector<32x256xbf16>, vector<64x256xf32> -> vector<64x256xf32>
    %474 = arith.truncf %473 : vector<64x256xf32> to vector<64x256xbf16>
    %c1_349 = arith.constant 1 : index
    %c0_350 = arith.constant 0 : index
    %c0_351 = arith.constant 0 : index
    %475 = vector.load %arg25[%c1_349, %c0_350, %c0_351] : memref<4x256x64xbf16, #tpu.memory_space<vmem>>, vector<1x256x64xbf16>
    %476 = vector.shape_cast %475 : vector<1x256x64xbf16> to vector<256x64xbf16>
    %cst_352 = arith.constant dense<0.000000e+00> : vector<64x64xf32>
    %477 = tpu.matmul %474, %476, %cst_352 {dimension_numbers = #tpu.dot_dimension_numbers<[1], [0], [0], [1], [0, 0, 1, 1], [], []>} : vector<64x256xbf16>, vector<256x64xbf16>, vector<64x64xf32> -> vector<64x64xf32>
    %478 = arith.addf %470, %477 : vector<64x64xf32>
    %c2_353 = arith.constant 2 : index
    %c0_354 = arith.constant 0 : index
    %c0_355 = arith.constant 0 : index
    %479 = vector.load %arg26[%c2_353, %c0_354, %c0_355] : memref<4x64x32xbf16, #tpu.memory_space<vmem>>, vector<1x64x32xbf16>
    %480 = vector.shape_cast %479 : vector<1x64x32xbf16> to vector<64x32xbf16>
    %cst_356 = arith.constant dense<0.000000e+00> : vector<64x256xf32>
    %481 = tpu.matmul %480, %454, %cst_356 {dimension_numbers = #tpu.dot_dimension_numbers<[1], [0], [0], [1], [0, 0, 1, 1], [], []>} : vector<64x32xbf16>, vector<32x256xbf16>, vector<64x256xf32> -> vector<64x256xf32>
    %482 = arith.truncf %481 : vector<64x256xf32> to vector<64x256xbf16>
    %c2_357 = arith.constant 2 : index
    %c0_358 = arith.constant 0 : index
    %c0_359 = arith.constant 0 : index
    %483 = vector.load %arg25[%c2_357, %c0_358, %c0_359] : memref<4x256x64xbf16, #tpu.memory_space<vmem>>, vector<1x256x64xbf16>
    %484 = vector.shape_cast %483 : vector<1x256x64xbf16> to vector<256x64xbf16>
    %cst_360 = arith.constant dense<0.000000e+00> : vector<64x64xf32>
    %485 = tpu.matmul %482, %484, %cst_360 {dimension_numbers = #tpu.dot_dimension_numbers<[1], [0], [0], [1], [0, 0, 1, 1], [], []>} : vector<64x256xbf16>, vector<256x64xbf16>, vector<64x64xf32> -> vector<64x64xf32>
    %486 = arith.addf %478, %485 : vector<64x64xf32>
    %c3_361 = arith.constant 3 : index
    %c0_362 = arith.constant 0 : index
    %c0_363 = arith.constant 0 : index
    %487 = vector.load %arg26[%c3_361, %c0_362, %c0_363] : memref<4x64x32xbf16, #tpu.memory_space<vmem>>, vector<1x64x32xbf16>
    %488 = vector.shape_cast %487 : vector<1x64x32xbf16> to vector<64x32xbf16>
    %cst_364 = arith.constant dense<0.000000e+00> : vector<64x256xf32>
    %489 = tpu.matmul %488, %454, %cst_364 {dimension_numbers = #tpu.dot_dimension_numbers<[1], [0], [0], [1], [0, 0, 1, 1], [], []>} : vector<64x32xbf16>, vector<32x256xbf16>, vector<64x256xf32> -> vector<64x256xf32>
    %490 = arith.truncf %489 : vector<64x256xf32> to vector<64x256xbf16>
    %c3_365 = arith.constant 3 : index
    %c0_366 = arith.constant 0 : index
    %c0_367 = arith.constant 0 : index
    %491 = vector.load %arg25[%c3_365, %c0_366, %c0_367] : memref<4x256x64xbf16, #tpu.memory_space<vmem>>, vector<1x256x64xbf16>
    %492 = vector.shape_cast %491 : vector<1x256x64xbf16> to vector<256x64xbf16>
    %cst_368 = arith.constant dense<0.000000e+00> : vector<64x64xf32>
    %493 = tpu.matmul %490, %492, %cst_368 {dimension_numbers = #tpu.dot_dimension_numbers<[1], [0], [0], [1], [0, 0, 1, 1], [], []>} : vector<64x256xbf16>, vector<256x64xbf16>, vector<64x64xf32> -> vector<64x64xf32>
    %494 = arith.addf %486, %493 : vector<64x64xf32>
    %c0_369 = arith.constant 0 : index
    %c0_370 = arith.constant 0 : index
    %c0_371 = arith.constant 0 : index
    %495 = vector.load %arg26[%c0_369, %c0_370, %c0_371] : memref<4x64x32xbf16, #tpu.memory_space<vmem>>, vector<1x64x32xbf16>
    %496 = vector.shape_cast %495 : vector<1x64x32xbf16> to vector<64x32xbf16>
    %cst_372 = arith.constant dense<0.000000e+00> : vector<64x256xf32>
    %497 = tpu.matmul %496, %463, %cst_372 {dimension_numbers = #tpu.dot_dimension_numbers<[1], [0], [0], [1], [0, 0, 1, 1], [], []>} : vector<64x32xbf16>, vector<32x256xbf16>, vector<64x256xf32> -> vector<64x256xf32>
    %498 = arith.truncf %497 : vector<64x256xf32> to vector<64x256xbf16>
    %c0_373 = arith.constant 0 : index
    %c0_374 = arith.constant 0 : index
    %c0_375 = arith.constant 0 : index
    %499 = vector.load %arg25[%c0_373, %c0_374, %c0_375] : memref<4x256x64xbf16, #tpu.memory_space<vmem>>, vector<1x256x64xbf16>
    %500 = vector.shape_cast %499 : vector<1x256x64xbf16> to vector<256x64xbf16>
    %cst_376 = arith.constant dense<0.000000e+00> : vector<64x64xf32>
    %501 = tpu.matmul %498, %500, %cst_376 {dimension_numbers = #tpu.dot_dimension_numbers<[1], [0], [0], [1], [0, 0, 1, 1], [], []>} : vector<64x256xbf16>, vector<256x64xbf16>, vector<64x64xf32> -> vector<64x64xf32>
    %c1_377 = arith.constant 1 : index
    %c0_378 = arith.constant 0 : index
    %c0_379 = arith.constant 0 : index
    %502 = vector.load %arg26[%c1_377, %c0_378, %c0_379] : memref<4x64x32xbf16, #tpu.memory_space<vmem>>, vector<1x64x32xbf16>
    %503 = vector.shape_cast %502 : vector<1x64x32xbf16> to vector<64x32xbf16>
    %cst_380 = arith.constant dense<0.000000e+00> : vector<64x256xf32>
    %504 = tpu.matmul %503, %463, %cst_380 {dimension_numbers = #tpu.dot_dimension_numbers<[1], [0], [0], [1], [0, 0, 1, 1], [], []>} : vector<64x32xbf16>, vector<32x256xbf16>, vector<64x256xf32> -> vector<64x256xf32>
    %505 = arith.truncf %504 : vector<64x256xf32> to vector<64x256xbf16>
    %c1_381 = arith.constant 1 : index
    %c0_382 = arith.constant 0 : index
    %c0_383 = arith.constant 0 : index
    %506 = vector.load %arg25[%c1_381, %c0_382, %c0_383] : memref<4x256x64xbf16, #tpu.memory_space<vmem>>, vector<1x256x64xbf16>
    %507 = vector.shape_cast %506 : vector<1x256x64xbf16> to vector<256x64xbf16>
    %cst_384 = arith.constant dense<0.000000e+00> : vector<64x64xf32>
    %508 = tpu.matmul %505, %507, %cst_384 {dimension_numbers = #tpu.dot_dimension_numbers<[1], [0], [0], [1], [0, 0, 1, 1], [], []>} : vector<64x256xbf16>, vector<256x64xbf16>, vector<64x64xf32> -> vector<64x64xf32>
    %509 = arith.addf %501, %508 : vector<64x64xf32>
    %c2_385 = arith.constant 2 : index
    %c0_386 = arith.constant 0 : index
    %c0_387 = arith.constant 0 : index
    %510 = vector.load %arg26[%c2_385, %c0_386, %c0_387] : memref<4x64x32xbf16, #tpu.memory_space<vmem>>, vector<1x64x32xbf16>
    %511 = vector.shape_cast %510 : vector<1x64x32xbf16> to vector<64x32xbf16>
    %cst_388 = arith.constant dense<0.000000e+00> : vector<64x256xf32>
    %512 = tpu.matmul %511, %463, %cst_388 {dimension_numbers = #tpu.dot_dimension_numbers<[1], [0], [0], [1], [0, 0, 1, 1], [], []>} : vector<64x32xbf16>, vector<32x256xbf16>, vector<64x256xf32> -> vector<64x256xf32>
    %513 = arith.truncf %512 : vector<64x256xf32> to vector<64x256xbf16>
    %c2_389 = arith.constant 2 : index
    %c0_390 = arith.constant 0 : index
    %c0_391 = arith.constant 0 : index
    %514 = vector.load %arg25[%c2_389, %c0_390, %c0_391] : memref<4x256x64xbf16, #tpu.memory_space<vmem>>, vector<1x256x64xbf16>
    %515 = vector.shape_cast %514 : vector<1x256x64xbf16> to vector<256x64xbf16>
    %cst_392 = arith.constant dense<0.000000e+00> : vector<64x64xf32>
    %516 = tpu.matmul %513, %515, %cst_392 {dimension_numbers = #tpu.dot_dimension_numbers<[1], [0], [0], [1], [0, 0, 1, 1], [], []>} : vector<64x256xbf16>, vector<256x64xbf16>, vector<64x64xf32> -> vector<64x64xf32>
    %517 = arith.addf %509, %516 : vector<64x64xf32>
    %c3_393 = arith.constant 3 : index
    %c0_394 = arith.constant 0 : index
    %c0_395 = arith.constant 0 : index
    %518 = vector.load %arg26[%c3_393, %c0_394, %c0_395] : memref<4x64x32xbf16, #tpu.memory_space<vmem>>, vector<1x64x32xbf16>
    %519 = vector.shape_cast %518 : vector<1x64x32xbf16> to vector<64x32xbf16>
    %cst_396 = arith.constant dense<0.000000e+00> : vector<64x256xf32>
    %520 = tpu.matmul %519, %463, %cst_396 {dimension_numbers = #tpu.dot_dimension_numbers<[1], [0], [0], [1], [0, 0, 1, 1], [], []>} : vector<64x32xbf16>, vector<32x256xbf16>, vector<64x256xf32> -> vector<64x256xf32>
    %521 = arith.truncf %520 : vector<64x256xf32> to vector<64x256xbf16>
    %c3_397 = arith.constant 3 : index
    %c0_398 = arith.constant 0 : index
    %c0_399 = arith.constant 0 : index
    %522 = vector.load %arg25[%c3_397, %c0_398, %c0_399] : memref<4x256x64xbf16, #tpu.memory_space<vmem>>, vector<1x256x64xbf16>
    %523 = vector.shape_cast %522 : vector<1x256x64xbf16> to vector<256x64xbf16>
    %cst_400 = arith.constant dense<0.000000e+00> : vector<64x64xf32>
    %524 = tpu.matmul %521, %523, %cst_400 {dimension_numbers = #tpu.dot_dimension_numbers<[1], [0], [0], [1], [0, 0, 1, 1], [], []>} : vector<64x256xbf16>, vector<256x64xbf16>, vector<64x64xf32> -> vector<64x64xf32>
    %525 = arith.addf %517, %524 : vector<64x64xf32>
    %526 = math.tanh %494 : vector<64x64xf32>
    %c0_401 = arith.constant 0 : index
    %c0_402 = arith.constant 0 : index
    %c0_403 = arith.constant 0 : index
    %527 = vector.load %arg27[%c0_401, %c0_402, %c0_403] : memref<2x64x64xf32, #tpu.memory_space<vmem>>, vector<1x64x64xf32>
    %528 = vector.shape_cast %527 : vector<1x64x64xf32> to vector<64x64xf32>
    %529 = vector.shape_cast %526 : vector<64x64xf32> to vector<1x64x64xf32>
    tpu.vector_store %arg27[%c0_401, %c0_402, %c0_403], %529 {strides = array<i32>} : memref<2x64x64xf32, #tpu.memory_space<vmem>>, vector<1x64x64xf32>,
    %530 = math.tanh %525 : vector<64x64xf32>
    %c1_404 = arith.constant 1 : index
    %c0_405 = arith.constant 0 : index
    %c0_406 = arith.constant 0 : index
    %531 = vector.load %arg27[%c1_404, %c0_405, %c0_406] : memref<2x64x64xf32, #tpu.memory_space<vmem>>, vector<1x64x64xf32>
    %532 = vector.shape_cast %531 : vector<1x64x64xf32> to vector<64x64xf32>
    %533 = vector.shape_cast %530 : vector<64x64xf32> to vector<1x64x64xf32>
    tpu.vector_store %arg27[%c1_404, %c0_405, %c0_406], %533 {strides = array<i32>} : memref<2x64x64xf32, #tpu.memory_space<vmem>>, vector<1x64x64xf32>,
    return
  }
}

</mosaic_0001>

<llo_original>
// kernel: generator_forward.1
$region0: #{generator_forward.1}
  #allocation0 [shape = 'u32[]', space=smem, size = 0x4, offset = 0x4, fixed_abs, tag = 'smem constant byte address 0x4 - core index']
  #allocation1 [shape = 'u32[72,128]{1,0:T(1,128)}', space=vmem, size = 0x9000, scoped, tag = 'internal scratch']
  %s0 = inlined_call_operand.vmem [shape: bf16[2,1,32], index: 0, kind: input, shape index: {}]
  %s1 = inlined_call_operand.vmem [shape: bf16[4,32,256], index: 1, kind: input, shape index: {}]
  %s2 = inlined_call_operand.vmem [shape: bf16[4,4,1], index: 2, kind: input, shape index: {}]
  %s3 = inlined_call_operand.vmem [shape: f32[1,64], index: 3, kind: input, shape index: {}]
  %s4 = inlined_call_operand.vmem [shape: f32[1,64], index: 4, kind: input, shape index: {}]
  %s5 = inlined_call_operand.vmem [shape: f32[256,64], index: 5, kind: input, shape index: {}]
  %s6 = inlined_call_operand.vmem [shape: f32[64,256], index: 6, kind: input, shape index: {}]
  %s7 = inlined_call_operand.vmem [shape: bf16[4,256,256], index: 7, kind: input, shape index: {}]
  %s8 = inlined_call_operand.vmem [shape: bf16[4,8,4], index: 8, kind: input, shape index: {}]
  %s9 = inlined_call_operand.vmem [shape: f32[1,32], index: 9, kind: input, shape index: {}]
  %s10 = inlined_call_operand.vmem [shape: f32[1,32], index: 10, kind: input, shape index: {}]
  %s11 = inlined_call_operand.vmem [shape: f32[256,32], index: 11, kind: input, shape index: {}]
  %s12 = inlined_call_operand.vmem [shape: f32[32,256], index: 12, kind: input, shape index: {}]
  %s13 = inlined_call_operand.vmem [shape: bf16[4,256,256], index: 13, kind: input, shape index: {}]
  %s14 = inlined_call_operand.vmem [shape: bf16[4,16,8], index: 14, kind: input, shape index: {}]
  %s15 = inlined_call_operand.vmem [shape: f32[1,16], index: 15, kind: input, shape index: {}]
  %s16 = inlined_call_operand.vmem [shape: f32[1,16], index: 16, kind: input, shape index: {}]
  %s17 = inlined_call_operand.vmem [shape: f32[256,16], index: 17, kind: input, shape index: {}]
  %s18 = inlined_call_operand.vmem [shape: f32[16,256], index: 18, kind: input, shape index: {}]
  %s19 = inlined_call_operand.vmem [shape: bf16[4,256,256], index: 19, kind: input, shape index: {}]
  %s20 = inlined_call_operand.vmem [shape: bf16[4,32,16], index: 20, kind: input, shape index: {}]
  %s21 = inlined_call_operand.vmem [shape: f32[1,8], index: 21, kind: input, shape index: {}]
  %s22 = inlined_call_operand.vmem [shape: f32[1,8], index: 22, kind: input, shape index: {}]
  %s23 = inlined_call_operand.vmem [shape: f32[256,8], index: 23, kind: input, shape index: {}]
  %s24 = inlined_call_operand.vmem [shape: f32[8,256], index: 24, kind: input, shape index: {}]
  %s25 = inlined_call_operand.vmem [shape: bf16[4,256,64], index: 25, kind: input, shape index: {}]
  %s26 = inlined_call_operand.vmem [shape: bf16[4,64,32], index: 26, kind: input, shape index: {}]
  %s27 = inlined_call_operand.hbm [shape: f32[2,64,64], index: 27, kind: output, shape index: {}]
  %s28 = sld [smem:[#allocation0]]
  $region118: #{generator_forward.1} parent=0
    _
  %s30 = ssub.s32 1, %s28
  %s31 = scalar_select 0, %s30, %s28
  $region1: #{generator_forward.1} parent=0
    #allocation2 [shape = 'u8[65536]{0}', space=vmem, size = 0x10000, scoped, tag = 'output window, operand 0, single buffered']
    #allocation3 [shape = 's32[1]{0}', space=sflag, size = 0x4, scoped, tag = 'scoped memory for generator_forward.1']
    %32 = vsyncpa [#allocation3], 0
    // Predicated region
    $region2: #{generator_forward.1} parent=1 // pred_check
      _
    $region3: #{generator_forward.1} parent=1 // pred_check_branch
      %34 = sbr.rel (0) target = $region5
    $region4: #{generator_forward.1} parent=1 // pred_region
      _
    $region5: #{generator_forward.1} parent=1 // pred_fallthru
      _
    // Predicated region
    $region6: #{generator_forward.1} parent=1 // pred_check
      _
    $region7: #{generator_forward.1} parent=1 // pred_check_branch
      %36 = sbr.rel (0) target = $region9
    $region8: #{generator_forward.1} parent=1 // pred_region
      _
    $region9: #{generator_forward.1} parent=1 // pred_fallthru
      _
    // Predicated region
    $region10: #{generator_forward.1} parent=1 // pred_check
      _
    $region11: #{generator_forward.1} parent=1 // pred_check_branch
      %38 = sbr.rel (0) target = $region13
    $region12: #{generator_forward.1} parent=1 // pred_region
      _
    $region13: #{generator_forward.1} parent=1 // pred_fallthru
      _
    // Predicated region
    $region14: #{generator_forward.1} parent=1 // pred_check
      _
    $region15: #{generator_forward.1} parent=1 // pred_check_branch
      %40 = sbr.rel (0) target = $region17
    $region16: #{generator_forward.1} parent=1 // pred_region
      _
    $region17: #{generator_forward.1} parent=1 // pred_fallthru
      _
    // Predicated region
    $region18: #{generator_forward.1} parent=1 // pred_check
      _
    $region19: #{generator_forward.1} parent=1 // pred_check_branch
      %42 = sbr.rel (0) target = $region21
    $region20: #{generator_forward.1} parent=1 // pred_region
      _
    $region21: #{generator_forward.1} parent=1 // pred_fallthru
      _
    // Predicated region
    $region22: #{generator_forward.1} parent=1 // pred_check
      _
    $region23: #{generator_forward.1} parent=1 // pred_check_branch
      %44 = sbr.rel (0) target = $region25
    $region24: #{generator_forward.1} parent=1 // pred_region
      _
    $region25: #{generator_forward.1} parent=1 // pred_fallthru
      _
    // Predicated region
    $region26: #{generator_forward.1} parent=1 // pred_check
      _
    $region27: #{generator_forward.1} parent=1 // pred_check_branch
      %46 = sbr.rel (0) target = $region29
    $region28: #{generator_forward.1} parent=1 // pred_region
      _
    $region29: #{generator_forward.1} parent=1 // pred_fallthru
      _
    // Predicated region
    $region30: #{generator_forward.1} parent=1 // pred_check
      _
    $region31: #{generator_forward.1} parent=1 // pred_check_branch
      %48 = sbr.rel (0) target = $region33
    $region32: #{generator_forward.1} parent=1 // pred_region
      _
    $region33: #{generator_forward.1} parent=1 // pred_fallthru
      _
    // Predicated region
    $region34: #{generator_forward.1} parent=1 // pred_check
      _
    $region35: #{generator_forward.1} parent=1 // pred_check_branch
      %50 = sbr.rel (0) target = $region37
    $region36: #{generator_forward.1} parent=1 // pred_region
      _
    $region37: #{generator_forward.1} parent=1 // pred_fallthru
      _
    // Predicated region
    $region38: #{generator_forward.1} parent=1 // pred_check
      _
    $region39: #{generator_forward.1} parent=1 // pred_check_branch
      %52 = sbr.rel (0) target = $region41
    $region40: #{generator_forward.1} parent=1 // pred_region
      _
    $region41: #{generator_forward.1} parent=1 // pred_fallthru
      _
    // Predicated region
    $region42: #{generator_forward.1} parent=1 // pred_check
      _
    $region43: #{generator_forward.1} parent=1 // pred_check_branch
      %54 = sbr.rel (0) target = $region45
    $region44: #{generator_forward.1} parent=1 // pred_region
      _
    $region45: #{generator_forward.1} parent=1 // pred_fallthru
      _
    // Predicated region
    $region46: #{generator_forward.1} parent=1 // pred_check
      _
    $region47: #{generator_forward.1} parent=1 // pred_check_branch
      %56 = sbr.rel (0) target = $region49
    $region48: #{generator_forward.1} parent=1 // pred_region
      _
    $region49: #{generator_forward.1} parent=1 // pred_fallthru
      _
    // Predicated region
    $region50: #{generator_forward.1} parent=1 // pred_check
      _
    $region51: #{generator_forward.1} parent=1 // pred_check_branch
      %58 = sbr.rel (0) target = $region53
    $region52: #{generator_forward.1} parent=1 // pred_region
      _
    $region53: #{generator_forward.1} parent=1 // pred_fallthru
      _
    // Predicated region
    $region54: #{generator_forward.1} parent=1 // pred_check
      _
    $region55: #{generator_forward.1} parent=1 // pred_check_branch
      %60 = sbr.rel (0) target = $region57
    $region56: #{generator_forward.1} parent=1 // pred_region
      _
    $region57: #{generator_forward.1} parent=1 // pred_fallthru
      _
    // Predicated region
    $region58: #{generator_forward.1} parent=1 // pred_check
      _
    $region59: #{generator_forward.1} parent=1 // pred_check_branch
      %62 = sbr.rel (0) target = $region61
    $region60: #{generator_forward.1} parent=1 // pred_region
      _
    $region61: #{generator_forward.1} parent=1 // pred_fallthru
      _
    // Predicated region
    $region62: #{generator_forward.1} parent=1 // pred_check
      _
    $region63: #{generator_forward.1} parent=1 // pred_check_branch
      %64 = sbr.rel (0) target = $region65
    $region64: #{generator_forward.1} parent=1 // pred_region
      _
    $region65: #{generator_forward.1} parent=1 // pred_fallthru
      _
    // Predicated region
    $region66: #{generator_forward.1} parent=1 // pred_check
      _
    $region67: #{generator_forward.1} parent=1 // pred_check_branch
      %66 = sbr.rel (0) target = $region69
    $region68: #{generator_forward.1} parent=1 // pred_region
      _
    $region69: #{generator_forward.1} parent=1 // pred_fallthru
      _
    // Predicated region
    $region70: #{generator_forward.1} parent=1 // pred_check
      _
    $region71: #{generator_forward.1} parent=1 // pred_check_branch
      %68 = sbr.rel (0) target = $region73
    $region72: #{generator_forward.1} parent=1 // pred_region
      _
    $region73: #{generator_forward.1} parent=1 // pred_fallthru
      _
    // Predicated region
    $region74: #{generator_forward.1} parent=1 // pred_check
      _
    $region75: #{generator_forward.1} parent=1 // pred_check_branch
      %70 = sbr.rel (0) target = $region77
    $region76: #{generator_forward.1} parent=1 // pred_region
      _
    $region77: #{generator_forward.1} parent=1 // pred_fallthru
      _
    // Predicated region
    $region78: #{generator_forward.1} parent=1 // pred_check
      _
    $region79: #{generator_forward.1} parent=1 // pred_check_branch
      %72 = sbr.rel (0) target = $region81
    $region80: #{generator_forward.1} parent=1 // pred_region
      _
    $region81: #{generator_forward.1} parent=1 // pred_fallthru
      _
    // Predicated region
    $region82: #{generator_forward.1} parent=1 // pred_check
      _
    $region83: #{generator_forward.1} parent=1 // pred_check_branch
      %74 = sbr.rel (0) target = $region85
    $region84: #{generator_forward.1} parent=1 // pred_region
      _
    $region85: #{generator_forward.1} parent=1 // pred_fallthru
      _
    // Predicated region
    $region86: #{generator_forward.1} parent=1 // pred_check
      _
    $region87: #{generator_forward.1} parent=1 // pred_check_branch
      %76 = sbr.rel (0) target = $region89
    $region88: #{generator_forward.1} parent=1 // pred_region
      _
    $region89: #{generator_forward.1} parent=1 // pred_fallthru
      _
    // Predicated region
    $region90: #{generator_forward.1} parent=1 // pred_check
      _
    $region91: #{generator_forward.1} parent=1 // pred_check_branch
      %78 = sbr.rel (0) target = $region93
    $region92: #{generator_forward.1} parent=1 // pred_region
      _
    $region93: #{generator_forward.1} parent=1 // pred_fallthru
      _
    // Predicated region
    $region94: #{generator_forward.1} parent=1 // pred_check
      _
    $region95: #{generator_forward.1} parent=1 // pred_check_branch
      %80 = sbr.rel (0) target = $region97
    $region96: #{generator_forward.1} parent=1 // pred_region
      _
    $region97: #{generator_forward.1} parent=1 // pred_fallthru
      _
    // Predicated region
    $region98: #{generator_forward.1} parent=1 // pred_check
      _
    $region99: #{generator_forward.1} parent=1 // pred_check_branch
      %82 = sbr.rel (0) target = $region101
    $region100: #{generator_forward.1} parent=1 // pred_region
      _
    $region101: #{generator_forward.1} parent=1 // pred_fallthru
      _
    // Predicated region
    $region102: #{generator_forward.1} parent=1 // pred_check
      _
    $region103: #{generator_forward.1} parent=1 // pred_check_branch
      %84 = sbr.rel (0) target = $region105
    $region104: #{generator_forward.1} parent=1 // pred_region
      _
    $region105: #{generator_forward.1} parent=1 // pred_fallthru
      _
    // Predicated region
    $region106: #{generator_forward.1} parent=1 // pred_check
      _
    $region107: #{generator_forward.1} parent=1 // pred_check_branch
      %86 = sbr.rel (0) target = $region109
    $region108: #{generator_forward.1} parent=1 // pred_region
      _
    $region109: #{generator_forward.1} parent=1 // pred_fallthru
      _
    %v88 = vld [vmem:[%s0] sm:$0x1]
    %s89 = scalar_lea.vmem %s0, 1
    %v90 = vld [vmem:[%s89] sm:$0x1]
    %v91 = vld [vmem:[%s2] sm:$0x3]
    %93 = vset.pattern.permute.xlu0 0
    %94 = vperm.xlu0 %93, %v91
    %v95 = vpop.permute.xlu0 %94
    %v98 = vunpack.c.l.s4 269488144
    %v99 = vunpack.c.0.s8 %v98
    %v100 = vperm.slane %v95, %v99
    %v102 = vpack.i.b16 %v88, %v88
    %v104 = vperm.slane %v102, 0
    %v105 = vunpack.c.l.bf16 %v100
    %v106 = vunpack.c.l.bf16 %v104
    %v107 = vmul.f32 %v105, %v106
    %v108 = vpack.c.bf16 %v107, %v107
    %v109 = vld [vmem:[%s1] sm:$0xff]
    %v110 = vld [vmem:[%s1 + $0x8] sm:$0xff]
    %v111 = vld [vmem:[%s1 + $0x10] sm:$0xff]
    %v112 = vld [vmem:[%s1 + $0x18] sm:$0xff]
    %s113 = scalar_lea.vmem %s2, 2
    %v114 = vld [vmem:[%s113] sm:$0x3]
    %116 = vset.pattern.permute.xlu0 0
    %117 = vperm.xlu0 %116, %v114
    %v118 = vpop.permute.xlu0 %117
    %v121 = vunpack.c.l.s4 269488144
    %v122 = vunpack.c.0.s8 %v121
    %v123 = vperm.slane %v118, %v122
    %v124 = vunpack.c.l.bf16 %v123
    %v125 = vmul.f32 %v124, %v106
    %v126 = vpack.c.bf16 %v125, %v125
    %s127 = scalar_lea.vmem %s1, 32
    %v128 = vld [vmem:[%s127] sm:$0xff]
    %v129 = vld [vmem:[%s127 + $0x8] sm:$0xff]
    %v130 = vld [vmem:[%s127 + $0x10] sm:$0xff]
    %v131 = vld [vmem:[%s127 + $0x18] sm:$0xff]
    %v136 = vunpack.c.l.b16 %v128
    %v137 = vunpack.c.h.b16 %v128
    %v138 = vunpack.c.l.b16 %v129
    %v139 = vunpack.c.h.b16 %v129
    %v140 = vunpack.c.l.b16 %v130
    %v141 = vunpack.c.h.b16 %v130
    %v142 = vunpack.c.l.b16 %v131
    %v143 = vunpack.c.h.b16 %v131
    %v144 = vpack.c.b16 %v138, %v136
    %v145 = vpack.c.b16 %v139, %v137
    %v146 = vpack.c.b16 %v142, %v140
    %v147 = vpack.c.b16 %v143, %v141
    %vm152 = vcmask 261120
    %v154 = vsel %vm152, %v126, 0
    %156 = vmatpush.bf16.msra.mxu0 0
    %157 = vmatpush.bf16.msra.mxu0 0
    %158 = vmatpush.bf16.msra.mxu0 0
    %159 = vmatpush.bf16.msra.mxu0 0
    %160 = vmatpush.bf16.msra.mxu0 0
    %161 = vmatpush.bf16.msra.mxu0 0
    %162 = vmatpush.bf16.msra.mxu0 %v146
    %163 = vmatpush.bf16.msra.mxu0 %v144
    %164 = vmatmul.bf16.gmra.mxu0 %v154
    %v165 = vpop.f32.mrf.mxu0
    %v166 = vadd.f32 0.0, %v165
    %v167 = vpop.f32.mrf.mxu0
    %168 = vdwg.mxu0
    %169 = vmatpush.bf16.msra.mxu0 0
    %170 = vmatpush.bf16.msra.mxu0 0
    %171 = vmatpush.bf16.msra.mxu0 0
    %172 = vmatpush.bf16.msra.mxu0 0
    %173 = vmatpush.bf16.msra.mxu0 0
    %174 = vmatpush.bf16.msra.mxu0 0
    %175 = vmatpush.bf16.msra.mxu0 %v147
    %176 = vmatpush.bf16.msra.mxu0 %v145
    %177 = vmatmul.bf16.gmra.mxu0 %v154
    %v178 = vpop.f32.mrf.mxu0
    %v179 = vadd.f32 0.0, %v178
    %v180 = vpop.f32.mrf.mxu0
    %181 = vdwg.mxu0
    %v186 = vunpack.c.l.b16 %v109
    %v187 = vunpack.c.h.b16 %v109
    %v188 = vunpack.c.l.b16 %v110
    %v189 = vunpack.c.h.b16 %v110
    %v190 = vunpack.c.l.b16 %v111
    %v191 = vunpack.c.h.b16 %v111
    %v192 = vunpack.c.l.b16 %v112
    %v193 = vunpack.c.h.b16 %v112
    %v194 = vpack.c.b16 %v188, %v186
    %v195 = vpack.c.b16 %v189, %v187
    %v196 = vpack.c.b16 %v192, %v190
    %v197 = vpack.c.b16 %v193, %v191
    %v203 = vsel %vm152, %v108, 0
    %205 = vmatpush.bf16.msra.mxu0 0
    %206 = vmatpush.bf16.msra.mxu0 0
    %207 = vmatpush.bf16.msra.mxu0 0
    %208 = vmatpush.bf16.msra.mxu0 0
    %209 = vmatpush.bf16.msra.mxu0 0
    %210 = vmatpush.bf16.msra.mxu0 0
    %211 = vmatpush.bf16.msra.mxu0 %v196
    %212 = vmatpush.bf16.msra.mxu0 %v194
    %213 = vmatmul.bf16.gmra.mxu0 %v203
    %v214 = vpop.f32.mrf.mxu0
    %v215 = vadd.f32 %v166, %v214
    %v216 = vpop.f32.mrf.mxu0
    %217 = vdwg.mxu0
    %218 = vmatpush.bf16.msra.mxu0 0
    %219 = vmatpush.bf16.msra.mxu0 0
    %220 = vmatpush.bf16.msra.mxu0 0
    %221 = vmatpush.bf16.msra.mxu0 0
    %222 = vmatpush.bf16.msra.mxu0 0
    %223 = vmatpush.bf16.msra.mxu0 0
    %224 = vmatpush.bf16.msra.mxu0 %v197
    %225 = vmatpush.bf16.msra.mxu0 %v195
    %226 = vmatmul.bf16.gmra.mxu0 %v203
    %v227 = vpop.f32.mrf.mxu0
    %v228 = vadd.f32 %v179, %v227
    %v229 = vpop.f32.mrf.mxu0
    %230 = vdwg.mxu0
    %s231 = scalar_lea.vmem %s2, 4
    %v232 = vld [vmem:[%s231] sm:$0x3]
    %234 = vset.pattern.permute.xlu0 0
    %235 = vperm.xlu0 %234, %v232
    %v236 = vpop.permute.xlu0 %235
    %v239 = vunpack.c.l.s4 269488144
    %v240 = vunpack.c.0.s8 %v239
    %v241 = vperm.slane %v236, %v240
    %v242 = vunpack.c.l.bf16 %v241
    %v243 = vmul.f32 %v242, %v106
    %v244 = vpack.c.bf16 %v243, %v243
    %s245 = scalar_lea.vmem %s1, 64
    %v246 = vld [vmem:[%s245] sm:$0xff]
    %v247 = vld [vmem:[%s245 + $0x8] sm:$0xff]
    %v248 = vld [vmem:[%s245 + $0x10] sm:$0xff]
    %v249 = vld [vmem:[%s245 + $0x18] sm:$0xff]
    %v254 = vunpack.c.l.b16 %v246
    %v255 = vunpack.c.h.b16 %v246
    %v256 = vunpack.c.l.b16 %v247
    %v257 = vunpack.c.h.b16 %v247
    %v258 = vunpack.c.l.b16 %v248
    %v259 = vunpack.c.h.b16 %v248
    %v260 = vunpack.c.l.b16 %v249
    %v261 = vunpack.c.h.b16 %v249
    %v262 = vpack.c.b16 %v256, %v254
    %v263 = vpack.c.b16 %v257, %v255
    %v264 = vpack.c.b16 %v260, %v258
    %v265 = vpack.c.b16 %v261, %v259
    %v271 = vsel %vm152, %v244, 0
    %273 = vmatpush.bf16.msra.mxu0 0
    %274 = vmatpush.bf16.msra.mxu0 0
    %275 = vmatpush.bf16.msra.mxu0 0
    %276 = vmatpush.bf16.msra.mxu0 0
    %277 = vmatpush.bf16.msra.mxu0 0
    %278 = vmatpush.bf16.msra.mxu0 0
    %279 = vmatpush.bf16.msra.mxu0 %v264
    %280 = vmatpush.bf16.msra.mxu0 %v262
    %281 = vmatmul.bf16.gmra.mxu0 %v271
    %v282 = vpop.f32.mrf.mxu0
    %v283 = vadd.f32 0.0, %v282
    %v284 = vpop.f32.mrf.mxu0
    %285 = vdwg.mxu0
    %286 = vmatpush.bf16.msra.mxu0 0
    %287 = vmatpush.bf16.msra.mxu0 0
    %288 = vmatpush.bf16.msra.mxu0 0
    %289 = vmatpush.bf16.msra.mxu0 0
    %290 = vmatpush.bf16.msra.mxu0 0
    %291 = vmatpush.bf16.msra.mxu0 0
    %292 = vmatpush.bf16.msra.mxu0 %v265
    %293 = vmatpush.bf16.msra.mxu0 %v263
    %294 = vmatmul.bf16.gmra.mxu0 %v271
    %v295 = vpop.f32.mrf.mxu0
    %v296 = vadd.f32 0.0, %v295
    %v297 = vpop.f32.mrf.mxu0
    %298 = vdwg.mxu0
    %v299 = vadd.f32 %v215, %v283
    %v300 = vadd.f32 %v228, %v296
    %s301 = scalar_lea.vmem %s2, 6
    %v302 = vld [vmem:[%s301] sm:$0x3]
    %304 = vset.pattern.permute.xlu0 0
    %305 = vperm.xlu0 %304, %v302
    %v306 = vpop.permute.xlu0 %305
    %v309 = vunpack.c.l.s4 269488144
    %v310 = vunpack.c.0.s8 %v309
    %v311 = vperm.slane %v306, %v310
    %v312 = vunpack.c.l.bf16 %v311
    %v313 = vmul.f32 %v312, %v106
    %v314 = vpack.c.bf16 %v313, %v313
    %s315 = scalar_lea.vmem %s1, 96
    %v316 = vld [vmem:[%s315] sm:$0xff]
    %v317 = vld [vmem:[%s315 + $0x8] sm:$0xff]
    %v318 = vld [vmem:[%s315 + $0x10] sm:$0xff]
    %v319 = vld [vmem:[%s315 + $0x18] sm:$0xff]
    %v324 = vunpack.c.l.b16 %v316
    %v325 = vunpack.c.h.b16 %v316
    %v326 = vunpack.c.l.b16 %v317
    %v327 = vunpack.c.h.b16 %v317
    %v328 = vunpack.c.l.b16 %v318
    %v329 = vunpack.c.h.b16 %v318
    %v330 = vunpack.c.l.b16 %v319
    %v331 = vunpack.c.h.b16 %v319
    %v332 = vpack.c.b16 %v326, %v324
    %v333 = vpack.c.b16 %v327, %v325
    %v334 = vpack.c.b16 %v330, %v328
    %v335 = vpack.c.b16 %v331, %v329
    %v341 = vsel %vm152, %v314, 0
    %343 = vmatpush.bf16.msra.mxu0 0
    %344 = vmatpush.bf16.msra.mxu0 0
    %345 = vmatpush.bf16.msra.mxu0 0
    %346 = vmatpush.bf16.msra.mxu0 0
    %347 = vmatpush.bf16.msra.mxu0 0
    %348 = vmatpush.bf16.msra.mxu0 0
    %349 = vmatpush.bf16.msra.mxu0 %v334
    %350 = vmatpush.bf16.msra.mxu0 %v332
    %351 = vmatmul.bf16.gmra.mxu0 %v341
    %v352 = vpop.f32.mrf.mxu0
    %v353 = vadd.f32 0.0, %v352
    %v354 = vpop.f32.mrf.mxu0
    %355 = vdwg.mxu0
    %356 = vmatpush.bf16.msra.mxu0 0
    %357 = vmatpush.bf16.msra.mxu0 0
    %358 = vmatpush.bf16.msra.mxu0 0
    %359 = vmatpush.bf16.msra.mxu0 0
    %360 = vmatpush.bf16.msra.mxu0 0
    %361 = vmatpush.bf16.msra.mxu0 0
    %362 = vmatpush.bf16.msra.mxu0 %v335
    %363 = vmatpush.bf16.msra.mxu0 %v333
    %364 = vmatmul.bf16.gmra.mxu0 %v341
    %v365 = vpop.f32.mrf.mxu0
    %v366 = vadd.f32 0.0, %v365
    %v367 = vpop.f32.mrf.mxu0
    %368 = vdwg.mxu0
    %v369 = vadd.f32 %v299, %v353
    %v370 = vadd.f32 %v300, %v366
    %v372 = vpack.i.b16 %v90, %v90
    %v374 = vperm.slane %v372, 0
    %v375 = vunpack.c.l.bf16 %v374
    %v376 = vmul.f32 %v105, %v375
    %v377 = vpack.c.bf16 %v376, %v376
    %v378 = vmul.f32 %v124, %v375
    %v379 = vpack.c.bf16 %v378, %v378
    %v381 = vsel %vm152, %v379, 0
    %383 = vmatpush.bf16.msra.mxu0 0
    %384 = vmatpush.bf16.msra.mxu0 0
    %385 = vmatpush.bf16.msra.mxu0 0
    %386 = vmatpush.bf16.msra.mxu0 0
    %387 = vmatpush.bf16.msra.mxu0 0
    %388 = vmatpush.bf16.msra.mxu0 0
    %389 = vmatpush.bf16.msra.mxu0 %v146
    %390 = vmatpush.bf16.msra.mxu0 %v144
    %391 = vmatmul.bf16.gmra.mxu0 %v381
    %v392 = vpop.f32.mrf.mxu0
    %v393 = vadd.f32 0.0, %v392
    %v394 = vpop.f32.mrf.mxu0
    %395 = vdwg.mxu0
    %396 = vmatpush.bf16.msra.mxu0 0
    %397 = vmatpush.bf16.msra.mxu0 0
    %398 = vmatpush.bf16.msra.mxu0 0
    %399 = vmatpush.bf16.msra.mxu0 0
    %400 = vmatpush.bf16.msra.mxu0 0
    %401 = vmatpush.bf16.msra.mxu0 0
    %402 = vmatpush.bf16.msra.mxu0 %v147
    %403 = vmatpush.bf16.msra.mxu0 %v145
    %404 = vmatmul.bf16.gmra.mxu0 %v381
    %v405 = vpop.f32.mrf.mxu0
    %v406 = vadd.f32 0.0, %v405
    %v407 = vpop.f32.mrf.mxu0
    %408 = vdwg.mxu0
    %v410 = vsel %vm152, %v377, 0
    %412 = vmatpush.bf16.msra.mxu0 0
    %413 = vmatpush.bf16.msra.mxu0 0
    %414 = vmatpush.bf16.msra.mxu0 0
    %415 = vmatpush.bf16.msra.mxu0 0
    %416 = vmatpush.bf16.msra.mxu0 0
    %417 = vmatpush.bf16.msra.mxu0 0
    %418 = vmatpush.bf16.msra.mxu0 %v196
    %419 = vmatpush.bf16.msra.mxu0 %v194
    %420 = vmatmul.bf16.gmra.mxu0 %v410
    %v421 = vpop.f32.mrf.mxu0
    %v422 = vadd.f32 %v393, %v421
    %v423 = vpop.f32.mrf.mxu0
    %424 = vdwg.mxu0
    %425 = vmatpush.bf16.msra.mxu0 0
    %426 = vmatpush.bf16.msra.mxu0 0
    %427 = vmatpush.bf16.msra.mxu0 0
    %428 = vmatpush.bf16.msra.mxu0 0
    %429 = vmatpush.bf16.msra.mxu0 0
    %430 = vmatpush.bf16.msra.mxu0 0
    %431 = vmatpush.bf16.msra.mxu0 %v197
    %432 = vmatpush.bf16.msra.mxu0 %v195
    %433 = vmatmul.bf16.gmra.mxu0 %v410
    %v434 = vpop.f32.mrf.mxu0
    %v435 = vadd.f32 %v406, %v434
    %v436 = vpop.f32.mrf.mxu0
    %437 = vdwg.mxu0
    %v438 = vmul.f32 %v242, %v375
    %v439 = vpack.c.bf16 %v438, %v438
    %v441 = vsel %vm152, %v439, 0
    %443 = vmatpush.bf16.msra.mxu0 0
    %444 = vmatpush.bf16.msra.mxu0 0
    %445 = vmatpush.bf16.msra.mxu0 0
    %446 = vmatpush.bf16.msra.mxu0 0
    %447 = vmatpush.bf16.msra.mxu0 0
    %448 = vmatpush.bf16.msra.mxu0 0
    %449 = vmatpush.bf16.msra.mxu0 %v264
    %450 = vmatpush.bf16.msra.mxu0 %v262
    %451 = vmatmul.bf16.gmra.mxu0 %v441
    %v452 = vpop.f32.mrf.mxu0
    %v453 = vadd.f32 0.0, %v452
    %v454 = vpop.f32.mrf.mxu0
    %455 = vdwg.mxu0
    %456 = vmatpush.bf16.msra.mxu0 0
    %457 = vmatpush.bf16.msra.mxu0 0
    %458 = vmatpush.bf16.msra.mxu0 0
    %459 = vmatpush.bf16.msra.mxu0 0
    %460 = vmatpush.bf16.msra.mxu0 0
    %461 = vmatpush.bf16.msra.mxu0 0
    %462 = vmatpush.bf16.msra.mxu0 %v265
    %463 = vmatpush.bf16.msra.mxu0 %v263
    %464 = vmatmul.bf16.gmra.mxu0 %v441
    %v465 = vpop.f32.mrf.mxu0
    %v466 = vadd.f32 0.0, %v465
    %v467 = vpop.f32.mrf.mxu0
    %468 = vdwg.mxu0
    %v469 = vadd.f32 %v422, %v453
    %v470 = vadd.f32 %v435, %v466
    %v471 = vmul.f32 %v312, %v375
    %v472 = vpack.c.bf16 %v471, %v471
    %v474 = vsel %vm152, %v472, 0
    %476 = vmatpush.bf16.msra.mxu0 0
    %477 = vmatpush.bf16.msra.mxu0 0
    %478 = vmatpush.bf16.msra.mxu0 0
    %479 = vmatpush.bf16.msra.mxu0 0
    %480 = vmatpush.bf16.msra.mxu0 0
    %481 = vmatpush.bf16.msra.mxu0 0
    %482 = vmatpush.bf16.msra.mxu0 %v334
    %483 = vmatpush.bf16.msra.mxu0 %v332
    %484 = vmatmul.bf16.gmra.mxu0 %v474
    %v485 = vpop.f32.mrf.mxu0
    %v486 = vadd.f32 0.0, %v485
    %v487 = vpop.f32.mrf.mxu0
    %488 = vdwg.mxu0
    %489 = vmatpush.bf16.msra.mxu0 0
    %490 = vmatpush.bf16.msra.mxu0 0
    %491 = vmatpush.bf16.msra.mxu0 0
    %492 = vmatpush.bf16.msra.mxu0 0
    %493 = vmatpush.bf16.msra.mxu0 0
    %494 = vmatpush.bf16.msra.mxu0 0
    %495 = vmatpush.bf16.msra.mxu0 %v335
    %496 = vmatpush.bf16.msra.mxu0 %v333
    %497 = vmatmul.bf16.gmra.mxu0 %v474
    %v498 = vpop.f32.mrf.mxu0
    %v499 = vadd.f32 0.0, %v498
    %v500 = vpop.f32.mrf.mxu0
    %501 = vdwg.mxu0
    %v502 = vadd.f32 %v469, %v486
    %v503 = vadd.f32 %v470, %v499
    %v504 = vld [vmem:[%s5] sm:$0xff]
    %v505 = vld [vmem:[%s5 + $0x8] sm:$0xff]
    %v506 = vld [vmem:[%s5 + $0x10] sm:$0xff]
    %v507 = vld [vmem:[%s5 + $0x18] sm:$0xff]
    %v508 = vld [vmem:[%s5 + $0x20] sm:$0xff]
    %v509 = vld [vmem:[%s5 + $0x28] sm:$0xff]
    %v510 = vld [vmem:[%s5 + $0x30] sm:$0xff]
    %v511 = vld [vmem:[%s5 + $0x38] sm:$0xff]
    %v512 = vld [vmem:[%s5 + $0x40] sm:$0xff]
    %v513 = vld [vmem:[%s5 + $0x48] sm:$0xff]
    %v514 = vld [vmem:[%s5 + $0x50] sm:$0xff]
    %v515 = vld [vmem:[%s5 + $0x58] sm:$0xff]
    %v516 = vld [vmem:[%s5 + $0x60] sm:$0xff]
    %v517 = vld [vmem:[%s5 + $0x68] sm:$0xff]
    %v518 = vld [vmem:[%s5 + $0x70] sm:$0xff]
    %v519 = vld [vmem:[%s5 + $0x78] sm:$0xff]
    %v520 = vld [vmem:[%s5 + $0x80] sm:$0xff]
    %v521 = vld [vmem:[%s5 + $0x88] sm:$0xff]
    %v522 = vld [vmem:[%s5 + $0x90] sm:$0xff]
    %v523 = vld [vmem:[%s5 + $0x98] sm:$0xff]
    %v524 = vld [vmem:[%s5 + $0xa0] sm:$0xff]
    %v525 = vld [vmem:[%s5 + $0xa8] sm:$0xff]
    %v526 = vld [vmem:[%s5 + $0xb0] sm:$0xff]
    %v527 = vld [vmem:[%s5 + $0xb8] sm:$0xff]
    %v528 = vld [vmem:[%s5 + $0xc0] sm:$0xff]
    %v529 = vld [vmem:[%s5 + $0xc8] sm:$0xff]
    %v530 = vld [vmem:[%s5 + $0xd0] sm:$0xff]
    %v531 = vld [vmem:[%s5 + $0xd8] sm:$0xff]
    %v532 = vld [vmem:[%s5 + $0xe0] sm:$0xff]
    %v533 = vld [vmem:[%s5 + $0xe8] sm:$0xff]
    %v534 = vld [vmem:[%s5 + $0xf0] sm:$0xff]
    %v535 = vld [vmem:[%s5 + $0xf8] sm:$0xff]
    %v536 = vld [vmem:[%s6] sm:$0xff]
    %v537 = vld [vmem:[%s6 + $0x8] sm:$0xff]
    %v538 = vld [vmem:[%s6 + $0x10] sm:$0xff]
    %v539 = vld [vmem:[%s6 + $0x18] sm:$0xff]
    %v540 = vld [vmem:[%s6 + $0x20] sm:$0xff]
    %v541 = vld [vmem:[%s6 + $0x28] sm:$0xff]
    %v542 = vld [vmem:[%s6 + $0x30] sm:$0xff]
    %v543 = vld [vmem:[%s6 + $0x38] sm:$0xff]
    %v544 = vld [vmem:[%s6 + $0x40] sm:$0xff]
    %v545 = vld [vmem:[%s6 + $0x48] sm:$0xff]
    %v546 = vld [vmem:[%s6 + $0x50] sm:$0xff]
    %v547 = vld [vmem:[%s6 + $0x58] sm:$0xff]
    %v548 = vld [vmem:[%s6 + $0x60] sm:$0xff]
    %v549 = vld [vmem:[%s6 + $0x68] sm:$0xff]
    %v550 = vld [vmem:[%s6 + $0x70] sm:$0xff]
    %v551 = vld [vmem:[%s6 + $0x78] sm:$0xff]
    %vm552 = vcmask 1043456
    %v553 = vsel %vm552, %v369, 0.0
    %v554 = vrot.slane %v553, 4
    %v555 = vadd.f32 %v553, %v554
    %v556 = vrot.slane %v555, 2
    %v557 = vadd.f32 %v555, %v556
    %v558 = vrot.slane %v557, 1
    %v559 = vadd.f32 %v557, %v558
    %v560 = vsel %vm552, %v370, 0.0
    %v561 = vrot.slane %v560, 4
    %v562 = vadd.f32 %v560, %v561
    %v563 = vrot.slane %v562, 2
    %v564 = vadd.f32 %v562, %v563
    %v565 = vrot.slane %v564, 1
    %v566 = vadd.f32 %v564, %v565
    %v567 = vsel %vm552, %v502, 0.0
    %v568 = vrot.slane %v567, 4
    %v569 = vadd.f32 %v567, %v568
    %v570 = vrot.slane %v569, 2
    %v571 = vadd.f32 %v569, %v570
    %v572 = vrot.slane %v571, 1
    %v573 = vadd.f32 %v571, %v572
    %v574 = vsel %vm552, %v503, 0.0
    %v575 = vrot.slane %v574, 4
    %v576 = vadd.f32 %v574, %v575
    %v577 = vrot.slane %v576, 2
    %v578 = vadd.f32 %v576, %v577
    %v579 = vrot.slane %v578, 1
    %v580 = vadd.f32 %v578, %v579
    %v581 = vadd.f32 %v559, %v573
    %v582 = vadd.f32 %v566, %v580
    %583 = vmatpush.msra.mxu0 %v519
    %584 = vmatpush.msra.mxu0 %v518
    %585 = vmatpush.msra.mxu0 %v517
    %586 = vmatpush.msra.mxu0 %v516
    %587 = vmatpush.msra.mxu0 %v515
    %588 = vmatpush.msra.mxu0 %v514
    %589 = vmatpush.msra.mxu0 %v513
    %590 = vmatpush.msra.mxu0 %v512
    %591 = vmatpush.msra.mxu0 %v511
    %592 = vmatpush.msra.mxu0 %v510
    %593 = vmatpush.msra.mxu0 %v509
    %594 = vmatpush.msra.mxu0 %v508
    %595 = vmatpush.msra.mxu0 %v507
    %596 = vmatpush.msra.mxu0 %v506
    %597 = vmatpush.msra.mxu0 %v505
    %598 = vmatpush.msra.mxu0 %v504
    %599 = vmatmul.f32.gmra.mxu0 %v581
    %v600 = vpop.f32.mrf.mxu0
    %v601 = vadd.f32 0.0, %v600
    %602 = vdwg.mxu0
    %603 = vmatpush.msra.mxu0 %v535
    %604 = vmatpush.msra.mxu0 %v534
    %605 = vmatpush.msra.mxu0 %v533
    %606 = vmatpush.msra.mxu0 %v532
    %607 = vmatpush.msra.mxu0 %v531
    %608 = vmatpush.msra.mxu0 %v530
    %609 = vmatpush.msra.mxu0 %v529
    %610 = vmatpush.msra.mxu0 %v528
    %611 = vmatpush.msra.mxu0 %v527
    %612 = vmatpush.msra.mxu0 %v526
    %613 = vmatpush.msra.mxu0 %v525
    %614 = vmatpush.msra.mxu0 %v524
    %615 = vmatpush.msra.mxu0 %v523
    %616 = vmatpush.msra.mxu0 %v522
    %617 = vmatpush.msra.mxu0 %v521
    %618 = vmatpush.msra.mxu0 %v520
    %619 = vmatmul.f32.gmra.mxu0 %v582
    %v620 = vpop.f32.mrf.mxu0
    %v621 = vadd.f32 %v601, %v620
    %622 = vdwg.mxu0
    %v623 = vmul.f32 %v621, 0.03125
    %vm624 = vcmask 523264
    %v626 = vsel %vm624, %v623, 0
    %628 = vmatpush.msra.mxu0 0.0
    %629 = vmatpush.msra.mxu0 0.0
    %630 = vmatpush.msra.mxu0 0.0
    %631 = vmatpush.msra.mxu0 0.0
    %632 = vmatpush.msra.mxu0 0.0
    %633 = vmatpush.msra.mxu0 0.0
    %634 = vmatpush.msra.mxu0 0.0
    %635 = vmatpush.msra.mxu0 0.0
    %636 = vmatpush.msra.mxu0 %v550
    %637 = vmatpush.msra.mxu0 %v548
    %638 = vmatpush.msra.mxu0 %v546
    %639 = vmatpush.msra.mxu0 %v544
    %640 = vmatpush.msra.mxu0 %v542
    %641 = vmatpush.msra.mxu0 %v540
    %642 = vmatpush.msra.mxu0 %v538
    %643 = vmatpush.msra.mxu0 %v536
    %644 = vmatmul.f32.gmra.mxu0 %v626
    %v645 = vpop.f32.mrf.mxu0
    %v646 = vadd.f32 0.0, %v645
    %647 = vdwg.mxu0
    %648 = vmatpush.msra.mxu0 0.0
    %649 = vmatpush.msra.mxu0 0.0
    %650 = vmatpush.msra.mxu0 0.0
    %651 = vmatpush.msra.mxu0 0.0
    %652 = vmatpush.msra.mxu0 0.0
    %653 = vmatpush.msra.mxu0 0.0
    %654 = vmatpush.msra.mxu0 0.0
    %655 = vmatpush.msra.mxu0 0.0
    %656 = vmatpush.msra.mxu0 %v551
    %657 = vmatpush.msra.mxu0 %v549
    %658 = vmatpush.msra.mxu0 %v547
    %659 = vmatpush.msra.mxu0 %v545
    %660 = vmatpush.msra.mxu0 %v543
    %661 = vmatpush.msra.mxu0 %v541
    %662 = vmatpush.msra.mxu0 %v539
    %663 = vmatpush.msra.mxu0 %v537
    %664 = vmatmul.f32.gmra.mxu0 %v626
    %v665 = vpop.f32.mrf.mxu0
    %v666 = vadd.f32 0.0, %v665
    %667 = vdwg.mxu0
    %v668 = vperm.slane %v646, 0
    %v669 = vperm.slane %v666, 0
    %v670 = vsub.f32 %v369, %v668
    %v671 = vsub.f32 %v370, %v669
    %v672 = vmul.f32 %v670, %v670
    %v673 = vmul.f32 %v671, %v671
    %v674 = vsel %vm552, %v672, 0.0
    %v675 = vrot.slane %v674, 4
    %v676 = vadd.f32 %v674, %v675
    %v677 = vrot.slane %v676, 2
    %v678 = vadd.f32 %v676, %v677
    %v679 = vrot.slane %v678, 1
    %v680 = vadd.f32 %v678, %v679
    %v681 = vsel %vm552, %v673, 0.0
    %v682 = vrot.slane %v681, 4
    %v683 = vadd.f32 %v681, %v682
    %v684 = vrot.slane %v683, 2
    %v685 = vadd.f32 %v683, %v684
    %v686 = vrot.slane %v685, 1
    %v687 = vadd.f32 %v685, %v686
    %v688 = vsub.f32 %v502, %v668
    %v689 = vsub.f32 %v503, %v669
    %v690 = vmul.f32 %v688, %v688
    %v691 = vmul.f32 %v689, %v689
    %v692 = vsel %vm552, %v690, 0.0
    %v693 = vrot.slane %v692, 4
    %v694 = vadd.f32 %v692, %v693
    %v695 = vrot.slane %v694, 2
    %v696 = vadd.f32 %v694, %v695
    %v697 = vrot.slane %v696, 1
    %v698 = vadd.f32 %v696, %v697
    %v699 = vsel %vm552, %v691, 0.0
    %v700 = vrot.slane %v699, 4
    %v701 = vadd.f32 %v699, %v700
    %v702 = vrot.slane %v701, 2
    %v703 = vadd.f32 %v701, %v702
    %v704 = vrot.slane %v703, 1
    %v705 = vadd.f32 %v703, %v704
    %v706 = vadd.f32 %v680, %v698
    %v707 = vadd.f32 %v687, %v705
    %708 = vmatpush.msra.mxu0 %v519
    %709 = vmatpush.msra.mxu0 %v518
    %710 = vmatpush.msra.mxu0 %v517
    %711 = vmatpush.msra.mxu0 %v516
    %712 = vmatpush.msra.mxu0 %v515
    %713 = vmatpush.msra.mxu0 %v514
    %714 = vmatpush.msra.mxu0 %v513
    %715 = vmatpush.msra.mxu0 %v512
    %716 = vmatpush.msra.mxu0 %v511
    %717 = vmatpush.msra.mxu0 %v510
    %718 = vmatpush.msra.mxu0 %v509
    %719 = vmatpush.msra.mxu0 %v508
    %720 = vmatpush.msra.mxu0 %v507
    %721 = vmatpush.msra.mxu0 %v506
    %722 = vmatpush.msra.mxu0 %v505
    %723 = vmatpush.msra.mxu0 %v504
    %724 = vmatmul.f32.gmra.mxu0 %v706
    %v725 = vpop.f32.mrf.mxu0
    %v726 = vadd.f32 0.0, %v725
    %727 = vdwg.mxu0
    %728 = vmatpush.msra.mxu0 %v535
    %729 = vmatpush.msra.mxu0 %v534
    %730 = vmatpush.msra.mxu0 %v533
    %731 = vmatpush.msra.mxu0 %v532
    %732 = vmatpush.msra.mxu0 %v531
    %733 = vmatpush.msra.mxu0 %v530
    %734 = vmatpush.msra.mxu0 %v529
    %735 = vmatpush.msra.mxu0 %v528
    %736 = vmatpush.msra.mxu0 %v527
    %737 = vmatpush.msra.mxu0 %v526
    %738 = vmatpush.msra.mxu0 %v525
    %739 = vmatpush.msra.mxu0 %v524
    %740 = vmatpush.msra.mxu0 %v523
    %741 = vmatpush.msra.mxu0 %v522
    %742 = vmatpush.msra.mxu0 %v521
    %743 = vmatpush.msra.mxu0 %v520
    %744 = vmatmul.f32.gmra.mxu0 %v707
    %v745 = vpop.f32.mrf.mxu0
    %v746 = vadd.f32 %v726, %v745
    %747 = vdwg.mxu0
    %v748 = vmul.f32 %v746, 0.03125
    %v749 = vld [vmem:[%s3] sm:$0x1]
    %v750 = vadd.f32 %v748, 1e-05
    %v751 = vrsqrt.pop %v750
    %v752 = vmul.f32 %v751, %v750
    %v753 = vmul.f32 %v752, %v751
    %v754 = vmul.f32 0.5, %v753
    %v755 = vsub.f32 1.5, %v754
    %v756 = vmul.f32 %v751, %v755
    %vm757 = vweird.f32 %v750
    %vm758 = vweird.f32 %v751
    %vm759 = vmor %vm757, %vm758
    %v760 = vsel %vm759, %v751, %v756
    %v761 = vmul.f32 %v749, %v760
    %v763 = vsel %vm624, %v761, 0
    %765 = vmatpush.msra.mxu0 0.0
    %766 = vmatpush.msra.mxu0 0.0
    %767 = vmatpush.msra.mxu0 0.0
    %768 = vmatpush.msra.mxu0 0.0
    %769 = vmatpush.msra.mxu0 0.0
    %770 = vmatpush.msra.mxu0 0.0
    %771 = vmatpush.msra.mxu0 0.0
    %772 = vmatpush.msra.mxu0 0.0
    %773 = vmatpush.msra.mxu0 %v550
    %774 = vmatpush.msra.mxu0 %v548
    %775 = vmatpush.msra.mxu0 %v546
    %776 = vmatpush.msra.mxu0 %v544
    %777 = vmatpush.msra.mxu0 %v542
    %778 = vmatpush.msra.mxu0 %v540
    %779 = vmatpush.msra.mxu0 %v538
    %780 = vmatpush.msra.mxu0 %v536
    %781 = vmatmul.f32.gmra.mxu0 %v763
    %v782 = vpop.f32.mrf.mxu0
    %v783 = vadd.f32 0.0, %v782
    %784 = vdwg.mxu0
    %785 = vmatpush.msra.mxu0 0.0
    %786 = vmatpush.msra.mxu0 0.0
    %787 = vmatpush.msra.mxu0 0.0
    %788 = vmatpush.msra.mxu0 0.0
    %789 = vmatpush.msra.mxu0 0.0
    %790 = vmatpush.msra.mxu0 0.0
    %791 = vmatpush.msra.mxu0 0.0
    %792 = vmatpush.msra.mxu0 0.0
    %793 = vmatpush.msra.mxu0 %v551
    %794 = vmatpush.msra.mxu0 %v549
    %795 = vmatpush.msra.mxu0 %v547
    %796 = vmatpush.msra.mxu0 %v545
    %797 = vmatpush.msra.mxu0 %v543
    %798 = vmatpush.msra.mxu0 %v541
    %799 = vmatpush.msra.mxu0 %v539
    %800 = vmatpush.msra.mxu0 %v537
    %801 = vmatmul.f32.gmra.mxu0 %v763
    %v802 = vpop.f32.mrf.mxu0
    %v803 = vadd.f32 0.0, %v802
    %804 = vdwg.mxu0
    %v805 = vld [vmem:[%s4] sm:$0x1]
    %v807 = vsel %vm624, %v805, 0
    %809 = vmatpush.msra.mxu0 0.0
    %810 = vmatpush.msra.mxu0 0.0
    %811 = vmatpush.msra.mxu0 0.0
    %812 = vmatpush.msra.mxu0 0.0
    %813 = vmatpush.msra.mxu0 0.0
    %814 = vmatpush.msra.mxu0 0.0
    %815 = vmatpush.msra.mxu0 0.0
    %816 = vmatpush.msra.mxu0 0.0
    %817 = vmatpush.msra.mxu0 %v550
    %818 = vmatpush.msra.mxu0 %v548
    %819 = vmatpush.msra.mxu0 %v546
    %820 = vmatpush.msra.mxu0 %v544
    %821 = vmatpush.msra.mxu0 %v542
    %822 = vmatpush.msra.mxu0 %v540
    %823 = vmatpush.msra.mxu0 %v538
    %824 = vmatpush.msra.mxu0 %v536
    %825 = vmatmul.f32.gmra.mxu0 %v807
    %v826 = vpop.f32.mrf.mxu0
    %v827 = vadd.f32 0.0, %v826
    %828 = vdwg.mxu0
    %829 = vmatpush.msra.mxu0 0.0
    %830 = vmatpush.msra.mxu0 0.0
    %831 = vmatpush.msra.mxu0 0.0
    %832 = vmatpush.msra.mxu0 0.0
    %833 = vmatpush.msra.mxu0 0.0
    %834 = vmatpush.msra.mxu0 0.0
    %835 = vmatpush.msra.mxu0 0.0
    %836 = vmatpush.msra.mxu0 0.0
    %837 = vmatpush.msra.mxu0 %v551
    %838 = vmatpush.msra.mxu0 %v549
    %839 = vmatpush.msra.mxu0 %v547
    %840 = vmatpush.msra.mxu0 %v545
    %841 = vmatpush.msra.mxu0 %v543
    %842 = vmatpush.msra.mxu0 %v541
    %843 = vmatpush.msra.mxu0 %v539
    %844 = vmatpush.msra.mxu0 %v537
    %845 = vmatmul.f32.gmra.mxu0 %v807
    %v846 = vpop.f32.mrf.mxu0
    %v847 = vadd.f32 0.0, %v846
    %848 = vdwg.mxu0
    %v849 = vperm.slane %v783, 0
    %v850 = vperm.slane %v803, 0
    %v851 = vmul.f32 %v670, %v849
    %v852 = vmul.f32 %v671, %v850
    %v853 = vperm.slane %v827, 0
    %v854 = vperm.slane %v847, 0
    %v855 = vadd.f32 %v851, %v853
    %v856 = vadd.f32 %v852, %v854
    %v857 = vmax.f32 %v855, 0.0
    %v858 = vmax.f32 %v856, 0.0
    %v859 = vpack.c.bf16 %v857, %v857
    %v860 = vpack.c.bf16 %v858, %v858
    %v861 = vmul.f32 %v688, %v849
    %v862 = vmul.f32 %v689, %v850
    %v863 = vadd.f32 %v861, %v853
    %v864 = vadd.f32 %v862, %v854
    %v865 = vmax.f32 %v863, 0.0
    %v866 = vmax.f32 %v864, 0.0
    %v867 = vpack.c.bf16 %v865, %v865
    %v868 = vpack.c.bf16 %v866, %v866
    %v869 = vld [vmem:[%s8] sm:$0xf]
    %vm870 = vcmask 31744
    %v872 = vsel %vm870, %v869, 0
    %vm874 = vcmask 1041408
    %v876 = vsel %vm874, %v859, 0
    %v879 = vsel %vm874, %v860, 0
    %881 = vmatpush.bf16.msra.mxu0 0
    %882 = vmatpush.bf16.msra.mxu0 0
    %883 = vmatpush.bf16.msra.mxu0 0
    %884 = vmatpush.bf16.msra.mxu0 0
    %885 = vmatpush.bf16.msra.mxu0 0
    %886 = vmatpush.bf16.msra.mxu0 0
    %887 = vmatpush.bf16.msra.mxu0 0
    %888 = vmatpush.bf16.msra.mxu0 %v876
    %889 = vmatmul.bf16.gmra.mxu0 %v872
    %v890 = vpop.f32.mrf.mxu0
    %v891 = vadd.f32 0.0, %v890
    %v892 = vpop.f32.mrf.mxu0
    %893 = vdwg.mxu0
    %894 = vmatpush.bf16.msra.mxu0 0
    %895 = vmatpush.bf16.msra.mxu0 0
    %896 = vmatpush.bf16.msra.mxu0 0
    %897 = vmatpush.bf16.msra.mxu0 0
    %898 = vmatpush.bf16.msra.mxu0 0
    %899 = vmatpush.bf16.msra.mxu0 0
    %900 = vmatpush.bf16.msra.mxu0 0
    %901 = vmatpush.bf16.msra.mxu0 %v879
    %902 = vmatmul.bf16.gmra.mxu0 %v872
    %v903 = vpop.f32.mrf.mxu0
    %v904 = vadd.f32 0.0, %v903
    %v905 = vpop.f32.mrf.mxu0
    %906 = vdwg.mxu0
    %v907 = vpack.c.bf16 %v891, %v891
    %v908 = vpack.c.bf16 %v904, %v904
    %v909 = vld [vmem:[%s7] sm:$0xff]
    %v910 = vld [vmem:[%s7 + $0x8] sm:$0xff]
    %v911 = vld [vmem:[%s7 + $0x10] sm:$0xff]
    %v912 = vld [vmem:[%s7 + $0x18] sm:$0xff]
    %v913 = vld [vmem:[%s7 + $0x20] sm:$0xff]
    %v914 = vld [vmem:[%s7 + $0x28] sm:$0xff]
    %v915 = vld [vmem:[%s7 + $0x30] sm:$0xff]
    %v916 = vld [vmem:[%s7 + $0x38] sm:$0xff]
    %v917 = vld [vmem:[%s7 + $0x40] sm:$0xff]
    %v918 = vld [vmem:[%s7 + $0x48] sm:$0xff]
    %v919 = vld [vmem:[%s7 + $0x50] sm:$0xff]
    %v920 = vld [vmem:[%s7 + $0x58] sm:$0xff]
    %v921 = vld [vmem:[%s7 + $0x60] sm:$0xff]
    %v922 = vld [vmem:[%s7 + $0x68] sm:$0xff]
    %v923 = vld [vmem:[%s7 + $0x70] sm:$0xff]
    %v924 = vld [vmem:[%s7 + $0x78] sm:$0xff]
    %v925 = vld [vmem:[%s7 + $0x80] sm:$0xff]
    %v926 = vld [vmem:[%s7 + $0x88] sm:$0xff]
    %v927 = vld [vmem:[%s7 + $0x90] sm:$0xff]
    %v928 = vld [vmem:[%s7 + $0x98] sm:$0xff]
    %v929 = vld [vmem:[%s7 + $0xa0] sm:$0xff]
    %v930 = vld [vmem:[%s7 + $0xa8] sm:$0xff]
    %v931 = vld [vmem:[%s7 + $0xb0] sm:$0xff]
    %v932 = vld [vmem:[%s7 + $0xb8] sm:$0xff]
    %v933 = vld [vmem:[%s7 + $0xc0] sm:$0xff]
    %v934 = vld [vmem:[%s7 + $0xc8] sm:$0xff]
    %v935 = vld [vmem:[%s7 + $0xd0] sm:$0xff]
    %v936 = vld [vmem:[%s7 + $0xd8] sm:$0xff]
    %v937 = vld [vmem:[%s7 + $0xe0] sm:$0xff]
    %v938 = vld [vmem:[%s7 + $0xe8] sm:$0xff]
    %v939 = vld [vmem:[%s7 + $0xf0] sm:$0xff]
    %v940 = vld [vmem:[%s7 + $0xf8] sm:$0xff]
    %s941 = scalar_lea.vmem %s8, 4
    %v942 = vld [vmem:[%s941] sm:$0xf]
    %v944 = vsel %vm870, %v942, 0
    %946 = vmatpush.bf16.msra.mxu0 0
    %947 = vmatpush.bf16.msra.mxu0 0
    %948 = vmatpush.bf16.msra.mxu0 0
    %949 = vmatpush.bf16.msra.mxu0 0
    %950 = vmatpush.bf16.msra.mxu0 0
    %951 = vmatpush.bf16.msra.mxu0 0
    %952 = vmatpush.bf16.msra.mxu0 0
    %953 = vmatpush.bf16.msra.mxu0 %v876
    %954 = vmatmul.bf16.gmra.mxu0 %v944
    %v955 = vpop.f32.mrf.mxu0
    %v956 = vadd.f32 0.0, %v955
    %v957 = vpop.f32.mrf.mxu0
    %958 = vdwg.mxu0
    %959 = vmatpush.bf16.msra.mxu0 0
    %960 = vmatpush.bf16.msra.mxu0 0
    %961 = vmatpush.bf16.msra.mxu0 0
    %962 = vmatpush.bf16.msra.mxu0 0
    %963 = vmatpush.bf16.msra.mxu0 0
    %964 = vmatpush.bf16.msra.mxu0 0
    %965 = vmatpush.bf16.msra.mxu0 0
    %966 = vmatpush.bf16.msra.mxu0 %v879
    %967 = vmatmul.bf16.gmra.mxu0 %v944
    %v968 = vpop.f32.mrf.mxu0
    %v969 = vadd.f32 0.0, %v968
    %v970 = vpop.f32.mrf.mxu0
    %971 = vdwg.mxu0
    %v972 = vpack.c.bf16 %v956, %v956
    %v973 = vpack.c.bf16 %v969, %v969
    %s974 = scalar_lea.vmem %s7, 256
    %v975 = vld [vmem:[%s974] sm:$0xff]
    %v976 = vld [vmem:[%s974 + $0x8] sm:$0xff]
    %v977 = vld [vmem:[%s974 + $0x10] sm:$0xff]
    %v978 = vld [vmem:[%s974 + $0x18] sm:$0xff]
    %v979 = vld [vmem:[%s974 + $0x20] sm:$0xff]
    %v980 = vld [vmem:[%s974 + $0x28] sm:$0xff]
    %v981 = vld [vmem:[%s974 + $0x30] sm:$0xff]
    %v982 = vld [vmem:[%s974 + $0x38] sm:$0xff]
    %v983 = vld [vmem:[%s974 + $0x40] sm:$0xff]
    %v984 = vld [vmem:[%s974 + $0x48] sm:$0xff]
    %v985 = vld [vmem:[%s974 + $0x50] sm:$0xff]
    %v986 = vld [vmem:[%s974 + $0x58] sm:$0xff]
    %v987 = vld [vmem:[%s974 + $0x60] sm:$0xff]
    %v988 = vld [vmem:[%s974 + $0x68] sm:$0xff]
    %v989 = vld [vmem:[%s974 + $0x70] sm:$0xff]
    %v990 = vld [vmem:[%s974 + $0x78] sm:$0xff]
    %v991 = vld [vmem:[%s974 + $0x80] sm:$0xff]
    %v992 = vld [vmem:[%s974 + $0x88] sm:$0xff]
    %v993 = vld [vmem:[%s974 + $0x90] sm:$0xff]
    %v994 = vld [vmem:[%s974 + $0x98] sm:$0xff]
    %v995 = vld [vmem:[%s974 + $0xa0] sm:$0xff]
    %v996 = vld [vmem:[%s974 + $0xa8] sm:$0xff]
    %v997 = vld [vmem:[%s974 + $0xb0] sm:$0xff]
    %v998 = vld [vmem:[%s974 + $0xb8] sm:$0xff]
    %v999 = vld [vmem:[%s974 + $0xc0] sm:$0xff]
    %v1000 = vld [vmem:[%s974 + $0xc8] sm:$0xff]
    %v1001 = vld [vmem:[%s974 + $0xd0] sm:$0xff]
    %v1002 = vld [vmem:[%s974 + $0xd8] sm:$0xff]
    %v1003 = vld [vmem:[%s974 + $0xe0] sm:$0xff]
    %v1004 = vld [vmem:[%s974 + $0xe8] sm:$0xff]
    %v1005 = vld [vmem:[%s974 + $0xf0] sm:$0xff]
    %v1006 = vld [vmem:[%s974 + $0xf8] sm:$0xff]
    %v1039 = vunpack.c.l.b16 %v975
    %v1040 = vunpack.c.h.b16 %v975
    %v1041 = vunpack.c.l.b16 %v976
    %v1042 = vunpack.c.h.b16 %v976
    %v1043 = vunpack.c.l.b16 %v977
    %v1044 = vunpack.c.h.b16 %v977
    %v1045 = vunpack.c.l.b16 %v978
    %v1046 = vunpack.c.h.b16 %v978
    %v1047 = vunpack.c.l.b16 %v979
    %v1048 = vunpack.c.h.b16 %v979
    %v1049 = vunpack.c.l.b16 %v980
    %v1050 = vunpack.c.h.b16 %v980
    %v1051 = vunpack.c.l.b16 %v981
    %v1052 = vunpack.c.h.b16 %v981
    %v1053 = vunpack.c.l.b16 %v982
    %v1054 = vunpack.c.h.b16 %v982
    %v1055 = vunpack.c.l.b16 %v983
    %v1056 = vunpack.c.h.b16 %v983
    %v1057 = vunpack.c.l.b16 %v984
    %v1058 = vunpack.c.h.b16 %v984
    %v1059 = vunpack.c.l.b16 %v985
    %v1060 = vunpack.c.h.b16 %v985
    %v1061 = vunpack.c.l.b16 %v986
    %v1062 = vunpack.c.h.b16 %v986
    %v1063 = vunpack.c.l.b16 %v987
    %v1064 = vunpack.c.h.b16 %v987
    %v1065 = vunpack.c.l.b16 %v988
    %v1066 = vunpack.c.h.b16 %v988
    %v1067 = vunpack.c.l.b16 %v989
    %v1068 = vunpack.c.h.b16 %v989
    %v1069 = vunpack.c.l.b16 %v990
    %v1070 = vunpack.c.h.b16 %v990
    %v1071 = vunpack.c.l.b16 %v991
    %v1072 = vunpack.c.h.b16 %v991
    %v1073 = vunpack.c.l.b16 %v992
    %v1074 = vunpack.c.h.b16 %v992
    %v1075 = vunpack.c.l.b16 %v993
    %v1076 = vunpack.c.h.b16 %v993
    %v1077 = vunpack.c.l.b16 %v994
    %v1078 = vunpack.c.h.b16 %v994
    %v1079 = vunpack.c.l.b16 %v995
    %v1080 = vunpack.c.h.b16 %v995
    %v1081 = vunpack.c.l.b16 %v996
    %v1082 = vunpack.c.h.b16 %v996
    %v1083 = vunpack.c.l.b16 %v997
    %v1084 = vunpack.c.h.b16 %v997
    %v1085 = vunpack.c.l.b16 %v998
    %v1086 = vunpack.c.h.b16 %v998
    %v1087 = vunpack.c.l.b16 %v999
    %v1088 = vunpack.c.h.b16 %v999
    %v1089 = vunpack.c.l.b16 %v1000
    %v1090 = vunpack.c.h.b16 %v1000
    %v1091 = vunpack.c.l.b16 %v1001
    %v1092 = vunpack.c.h.b16 %v1001
    %v1093 = vunpack.c.l.b16 %v1002
    %v1094 = vunpack.c.h.b16 %v1002
    %v1095 = vunpack.c.l.b16 %v1003
    %v1096 = vunpack.c.h.b16 %v1003
    %v1097 = vunpack.c.l.b16 %v1004
    %v1098 = vunpack.c.h.b16 %v1004
    %v1099 = vunpack.c.l.b16 %v1005
    %v1100 = vunpack.c.h.b16 %v1005
    %v1101 = vunpack.c.l.b16 %v1006
    %v1102 = vunpack.c.h.b16 %v1006
    %v1103 = vpack.c.b16 %v1041, %v1039
    %v1104 = vpack.c.b16 %v1042, %v1040
    %v1105 = vpack.c.b16 %v1045, %v1043
    %v1106 = vpack.c.b16 %v1046, %v1044
    %v1107 = vpack.c.b16 %v1049, %v1047
    %v1108 = vpack.c.b16 %v1050, %v1048
    %v1109 = vpack.c.b16 %v1053, %v1051
    %v1110 = vpack.c.b16 %v1054, %v1052
    %v1111 = vpack.c.b16 %v1057, %v1055
    %v1112 = vpack.c.b16 %v1058, %v1056
    %v1113 = vpack.c.b16 %v1061, %v1059
    %v1114 = vpack.c.b16 %v1062, %v1060
    %v1115 = vpack.c.b16 %v1065, %v1063
    %v1116 = vpack.c.b16 %v1066, %v1064
    %v1117 = vpack.c.b16 %v1069, %v1067
    %v1118 = vpack.c.b16 %v1070, %v1068
    %v1119 = vpack.c.b16 %v1073, %v1071
    %v1120 = vpack.c.b16 %v1074, %v1072
    %v1121 = vpack.c.b16 %v1077, %v1075
    %v1122 = vpack.c.b16 %v1078, %v1076
    %v1123 = vpack.c.b16 %v1081, %v1079
    %v1124 = vpack.c.b16 %v1082, %v1080
    %v1125 = vpack.c.b16 %v1085, %v1083
    %v1126 = vpack.c.b16 %v1086, %v1084
    %v1127 = vpack.c.b16 %v1089, %v1087
    %v1128 = vpack.c.b16 %v1090, %v1088
    %v1129 = vpack.c.b16 %v1093, %v1091
    %v1130 = vpack.c.b16 %v1094, %v1092
    %v1131 = vpack.c.b16 %v1097, %v1095
    %v1132 = vpack.c.b16 %v1098, %v1096
    %v1133 = vpack.c.b16 %v1101, %v1099
    %v1134 = vpack.c.b16 %v1102, %v1100
    %1167 = vmatpush.bf16.msra.mxu0 %v1117
    %1168 = vmatpush.bf16.msra.mxu0 %v1115
    %1169 = vmatpush.bf16.msra.mxu0 %v1113
    %1170 = vmatpush.bf16.msra.mxu0 %v1111
    %1171 = vmatpush.bf16.msra.mxu0 %v1109
    %1172 = vmatpush.bf16.msra.mxu0 %v1107
    %1173 = vmatpush.bf16.msra.mxu0 %v1105
    %1174 = vmatpush.bf16.msra.mxu0 %v1103
    %1175 = vmatmul.bf16.gmra.mxu0 %v972
    %v1176 = vpop.f32.mrf.mxu0
    %v1177 = vadd.f32 0.0, %v1176
    %v1178 = vpop.f32.mrf.mxu0
    %1179 = vdwg.mxu0
    %1180 = vmatpush.bf16.msra.mxu0 %v1133
    %1181 = vmatpush.bf16.msra.mxu0 %v1131
    %1182 = vmatpush.bf16.msra.mxu0 %v1129
    %1183 = vmatpush.bf16.msra.mxu0 %v1127
    %1184 = vmatpush.bf16.msra.mxu0 %v1125
    %1185 = vmatpush.bf16.msra.mxu0 %v1123
    %1186 = vmatpush.bf16.msra.mxu0 %v1121
    %1187 = vmatpush.bf16.msra.mxu0 %v1119
    %1188 = vmatmul.bf16.gmra.mxu0 %v973
    %v1189 = vpop.f32.mrf.mxu0
    %v1190 = vadd.f32 %v1177, %v1189
    %v1191 = vpop.f32.mrf.mxu0
    %1192 = vdwg.mxu0
    %1193 = vmatpush.bf16.msra.mxu0 %v1118
    %1194 = vmatpush.bf16.msra.mxu0 %v1116
    %1195 = vmatpush.bf16.msra.mxu0 %v1114
    %1196 = vmatpush.bf16.msra.mxu0 %v1112
    %1197 = vmatpush.bf16.msra.mxu0 %v1110
    %1198 = vmatpush.bf16.msra.mxu0 %v1108
    %1199 = vmatpush.bf16.msra.mxu0 %v1106
    %1200 = vmatpush.bf16.msra.mxu0 %v1104
    %1201 = vmatmul.bf16.gmra.mxu0 %v972
    %v1202 = vpop.f32.mrf.mxu0
    %v1203 = vadd.f32 0.0, %v1202
    %v1204 = vpop.f32.mrf.mxu0
    %1205 = vdwg.mxu0
    %1206 = vmatpush.bf16.msra.mxu0 %v1134
    %1207 = vmatpush.bf16.msra.mxu0 %v1132
    %1208 = vmatpush.bf16.msra.mxu0 %v1130
    %1209 = vmatpush.bf16.msra.mxu0 %v1128
    %1210 = vmatpush.bf16.msra.mxu0 %v1126
    %1211 = vmatpush.bf16.msra.mxu0 %v1124
    %1212 = vmatpush.bf16.msra.mxu0 %v1122
    %1213 = vmatpush.bf16.msra.mxu0 %v1120
    %1214 = vmatmul.bf16.gmra.mxu0 %v973
    %v1215 = vpop.f32.mrf.mxu0
    %v1216 = vadd.f32 %v1203, %v1215
    %v1217 = vpop.f32.mrf.mxu0
    %1218 = vdwg.mxu0
    %v1251 = vunpack.c.l.b16 %v909
    %v1252 = vunpack.c.h.b16 %v909
    %v1253 = vunpack.c.l.b16 %v910
    %v1254 = vunpack.c.h.b16 %v910
    %v1255 = vunpack.c.l.b16 %v911
    %v1256 = vunpack.c.h.b16 %v911
    %v1257 = vunpack.c.l.b16 %v912
    %v1258 = vunpack.c.h.b16 %v912
    %v1259 = vunpack.c.l.b16 %v913
    %v1260 = vunpack.c.h.b16 %v913
    %v1261 = vunpack.c.l.b16 %v914
    %v1262 = vunpack.c.h.b16 %v914
    %v1263 = vunpack.c.l.b16 %v915
    %v1264 = vunpack.c.h.b16 %v915
    %v1265 = vunpack.c.l.b16 %v916
    %v1266 = vunpack.c.h.b16 %v916
    %v1267 = vunpack.c.l.b16 %v917
    %v1268 = vunpack.c.h.b16 %v917
    %v1269 = vunpack.c.l.b16 %v918
    %v1270 = vunpack.c.h.b16 %v918
    %v1271 = vunpack.c.l.b16 %v919
    %v1272 = vunpack.c.h.b16 %v919
    %v1273 = vunpack.c.l.b16 %v920
    %v1274 = vunpack.c.h.b16 %v920
    %v1275 = vunpack.c.l.b16 %v921
    %v1276 = vunpack.c.h.b16 %v921
    %v1277 = vunpack.c.l.b16 %v922
    %v1278 = vunpack.c.h.b16 %v922
    %v1279 = vunpack.c.l.b16 %v923
    %v1280 = vunpack.c.h.b16 %v923
    %v1281 = vunpack.c.l.b16 %v924
    %v1282 = vunpack.c.h.b16 %v924
    %v1283 = vunpack.c.l.b16 %v925
    %v1284 = vunpack.c.h.b16 %v925
    %v1285 = vunpack.c.l.b16 %v926
    %v1286 = vunpack.c.h.b16 %v926
    %v1287 = vunpack.c.l.b16 %v927
    %v1288 = vunpack.c.h.b16 %v927
    %v1289 = vunpack.c.l.b16 %v928
    %v1290 = vunpack.c.h.b16 %v928
    %v1291 = vunpack.c.l.b16 %v929
    %v1292 = vunpack.c.h.b16 %v929
    %v1293 = vunpack.c.l.b16 %v930
    %v1294 = vunpack.c.h.b16 %v930
    %v1295 = vunpack.c.l.b16 %v931
    %v1296 = vunpack.c.h.b16 %v931
    %v1297 = vunpack.c.l.b16 %v932
    %v1298 = vunpack.c.h.b16 %v932
    %v1299 = vunpack.c.l.b16 %v933
    %v1300 = vunpack.c.h.b16 %v933
    %v1301 = vunpack.c.l.b16 %v934
    %v1302 = vunpack.c.h.b16 %v934
    %v1303 = vunpack.c.l.b16 %v935
    %v1304 = vunpack.c.h.b16 %v935
    %v1305 = vunpack.c.l.b16 %v936
    %v1306 = vunpack.c.h.b16 %v936
    %v1307 = vunpack.c.l.b16 %v937
    %v1308 = vunpack.c.h.b16 %v937
    %v1309 = vunpack.c.l.b16 %v938
    %v1310 = vunpack.c.h.b16 %v938
    %v1311 = vunpack.c.l.b16 %v939
    %v1312 = vunpack.c.h.b16 %v939
    %v1313 = vunpack.c.l.b16 %v940
    %v1314 = vunpack.c.h.b16 %v940
    %v1315 = vpack.c.b16 %v1253, %v1251
    %v1316 = vpack.c.b16 %v1254, %v1252
    %v1317 = vpack.c.b16 %v1257, %v1255
    %v1318 = vpack.c.b16 %v1258, %v1256
    %v1319 = vpack.c.b16 %v1261, %v1259
    %v1320 = vpack.c.b16 %v1262, %v1260
    %v1321 = vpack.c.b16 %v1265, %v1263
    %v1322 = vpack.c.b16 %v1266, %v1264
    %v1323 = vpack.c.b16 %v1269, %v1267
    %v1324 = vpack.c.b16 %v1270, %v1268
    %v1325 = vpack.c.b16 %v1273, %v1271
    %v1326 = vpack.c.b16 %v1274, %v1272
    %v1327 = vpack.c.b16 %v1277, %v1275
    %v1328 = vpack.c.b16 %v1278, %v1276
    %v1329 = vpack.c.b16 %v1281, %v1279
    %v1330 = vpack.c.b16 %v1282, %v1280
    %v1331 = vpack.c.b16 %v1285, %v1283
    %v1332 = vpack.c.b16 %v1286, %v1284
    %v1333 = vpack.c.b16 %v1289, %v1287
    %v1334 = vpack.c.b16 %v1290, %v1288
    %v1335 = vpack.c.b16 %v1293, %v1291
    %v1336 = vpack.c.b16 %v1294, %v1292
    %v1337 = vpack.c.b16 %v1297, %v1295
    %v1338 = vpack.c.b16 %v1298, %v1296
    %v1339 = vpack.c.b16 %v1301, %v1299
    %v1340 = vpack.c.b16 %v1302, %v1300
    %v1341 = vpack.c.b16 %v1305, %v1303
    %v1342 = vpack.c.b16 %v1306, %v1304
    %v1343 = vpack.c.b16 %v1309, %v1307
    %v1344 = vpack.c.b16 %v1310, %v1308
    %v1345 = vpack.c.b16 %v1313, %v1311
    %v1346 = vpack.c.b16 %v1314, %v1312
    %1379 = vmatpush.bf16.msra.mxu0 %v1329
    %1380 = vmatpush.bf16.msra.mxu0 %v1327
    %1381 = vmatpush.bf16.msra.mxu0 %v1325
    %1382 = vmatpush.bf16.msra.mxu0 %v1323
    %1383 = vmatpush.bf16.msra.mxu0 %v1321
    %1384 = vmatpush.bf16.msra.mxu0 %v1319
    %1385 = vmatpush.bf16.msra.mxu0 %v1317
    %1386 = vmatpush.bf16.msra.mxu0 %v1315
    %1387 = vmatmul.bf16.gmra.mxu0 %v907
    %v1388 = vpop.f32.mrf.mxu0
    %v1389 = vadd.f32 %v1190, %v1388
    %v1390 = vpop.f32.mrf.mxu0
    %1391 = vdwg.mxu0
    %1392 = vmatpush.bf16.msra.mxu0 %v1345
    %1393 = vmatpush.bf16.msra.mxu0 %v1343
    %1394 = vmatpush.bf16.msra.mxu0 %v1341
    %1395 = vmatpush.bf16.msra.mxu0 %v1339
    %1396 = vmatpush.bf16.msra.mxu0 %v1337
    %1397 = vmatpush.bf16.msra.mxu0 %v1335
    %1398 = vmatpush.bf16.msra.mxu0 %v1333
    %1399 = vmatpush.bf16.msra.mxu0 %v1331
    %1400 = vmatmul.bf16.gmra.mxu0 %v908
    %v1401 = vpop.f32.mrf.mxu0
    %v1402 = vadd.f32 %v1389, %v1401
    %v1403 = vpop.f32.mrf.mxu0
    %1404 = vdwg.mxu0
    %1405 = vmatpush.bf16.msra.mxu0 %v1330
    %1406 = vmatpush.bf16.msra.mxu0 %v1328
    %1407 = vmatpush.bf16.msra.mxu0 %v1326
    %1408 = vmatpush.bf16.msra.mxu0 %v1324
    %1409 = vmatpush.bf16.msra.mxu0 %v1322
    %1410 = vmatpush.bf16.msra.mxu0 %v1320
    %1411 = vmatpush.bf16.msra.mxu0 %v1318
    %1412 = vmatpush.bf16.msra.mxu0 %v1316
    %1413 = vmatmul.bf16.gmra.mxu0 %v907
    %v1414 = vpop.f32.mrf.mxu0
    %v1415 = vadd.f32 %v1216, %v1414
    %v1416 = vpop.f32.mrf.mxu0
    %1417 = vdwg.mxu0
    %1418 = vmatpush.bf16.msra.mxu0 %v1346
    %1419 = vmatpush.bf16.msra.mxu0 %v1344
    %1420 = vmatpush.bf16.msra.mxu0 %v1342
    %1421 = vmatpush.bf16.msra.mxu0 %v1340
    %1422 = vmatpush.bf16.msra.mxu0 %v1338
    %1423 = vmatpush.bf16.msra.mxu0 %v1336
    %1424 = vmatpush.bf16.msra.mxu0 %v1334
    %1425 = vmatpush.bf16.msra.mxu0 %v1332
    %1426 = vmatmul.bf16.gmra.mxu0 %v908
    %v1427 = vpop.f32.mrf.mxu0
    %v1428 = vadd.f32 %v1415, %v1427
    %v1429 = vpop.f32.mrf.mxu0
    %1430 = vdwg.mxu0
    %s1431 = scalar_lea.vmem %s8, 8
    %v1432 = vld [vmem:[%s1431] sm:$0xf]
    %v1434 = vsel %vm870, %v1432, 0
    %1436 = vmatpush.bf16.msra.mxu0 0
    %1437 = vmatpush.bf16.msra.mxu0 0
    %1438 = vmatpush.bf16.msra.mxu0 0
    %1439 = vmatpush.bf16.msra.mxu0 0
    %1440 = vmatpush.bf16.msra.mxu0 0
    %1441 = vmatpush.bf16.msra.mxu0 0
    %1442 = vmatpush.bf16.msra.mxu0 0
    %1443 = vmatpush.bf16.msra.mxu0 %v876
    %1444 = vmatmul.bf16.gmra.mxu0 %v1434
    %v1445 = vpop.f32.mrf.mxu0
    %v1446 = vadd.f32 0.0, %v1445
    %v1447 = vpop.f32.mrf.mxu0
    %1448 = vdwg.mxu0
    %1449 = vmatpush.bf16.msra.mxu0 0
    %1450 = vmatpush.bf16.msra.mxu0 0
    %1451 = vmatpush.bf16.msra.mxu0 0
    %1452 = vmatpush.bf16.msra.mxu0 0
    %1453 = vmatpush.bf16.msra.mxu0 0
    %1454 = vmatpush.bf16.msra.mxu0 0
    %1455 = vmatpush.bf16.msra.mxu0 0
    %1456 = vmatpush.bf16.msra.mxu0 %v879
    %1457 = vmatmul.bf16.gmra.mxu0 %v1434
    %v1458 = vpop.f32.mrf.mxu0
    %v1459 = vadd.f32 0.0, %v1458
    %v1460 = vpop.f32.mrf.mxu0
    %1461 = vdwg.mxu0
    %v1462 = vpack.c.bf16 %v1446, %v1446
    %v1463 = vpack.c.bf16 %v1459, %v1459
    %s1464 = scalar_lea.vmem %s7, 512
    %v1465 = vld [vmem:[%s1464] sm:$0xff]
    %v1466 = vld [vmem:[%s1464 + $0x8] sm:$0xff]
    %v1467 = vld [vmem:[%s1464 + $0x10] sm:$0xff]
    %v1468 = vld [vmem:[%s1464 + $0x18] sm:$0xff]
    %v1469 = vld [vmem:[%s1464 + $0x20] sm:$0xff]
    %v1470 = vld [vmem:[%s1464 + $0x28] sm:$0xff]
    %v1471 = vld [vmem:[%s1464 + $0x30] sm:$0xff]
    %v1472 = vld [vmem:[%s1464 + $0x38] sm:$0xff]
    %v1473 = vld [vmem:[%s1464 + $0x40] sm:$0xff]
    %v1474 = vld [vmem:[%s1464 + $0x48] sm:$0xff]
    %v1475 = vld [vmem:[%s1464 + $0x50] sm:$0xff]
    %v1476 = vld [vmem:[%s1464 + $0x58] sm:$0xff]
    %v1477 = vld [vmem:[%s1464 + $0x60] sm:$0xff]
    %v1478 = vld [vmem:[%s1464 + $0x68] sm:$0xff]
    %v1479 = vld [vmem:[%s1464 + $0x70] sm:$0xff]
    %v1480 = vld [vmem:[%s1464 + $0x78] sm:$0xff]
    %v1481 = vld [vmem:[%s1464 + $0x80] sm:$0xff]
    %v1482 = vld [vmem:[%s1464 + $0x88] sm:$0xff]
    %v1483 = vld [vmem:[%s1464 + $0x90] sm:$0xff]
    %v1484 = vld [vmem:[%s1464 + $0x98] sm:$0xff]
    %v1485 = vld [vmem:[%s1464 + $0xa0] sm:$0xff]
    %v1486 = vld [vmem:[%s1464 + $0xa8] sm:$0xff]
    %v1487 = vld [vmem:[%s1464 + $0xb0] sm:$0xff]
    %v1488 = vld [vmem:[%s1464 + $0xb8] sm:$0xff]
    %v1489 = vld [vmem:[%s1464 + $0xc0] sm:$0xff]
    %v1490 = vld [vmem:[%s1464 + $0xc8] sm:$0xff]
    %v1491 = vld [vmem:[%s1464 + $0xd0] sm:$0xff]
    %v1492 = vld [vmem:[%s1464 + $0xd8] sm:$0xff]
    %v1493 = vld [vmem:[%s1464 + $0xe0] sm:$0xff]
    %v1494 = vld [vmem:[%s1464 + $0xe8] sm:$0xff]
    %v1495 = vld [vmem:[%s1464 + $0xf0] sm:$0xff]
    %v1496 = vld [vmem:[%s1464 + $0xf8] sm:$0xff]
    %v1529 = vunpack.c.l.b16 %v1465
    %v1530 = vunpack.c.h.b16 %v1465
    %v1531 = vunpack.c.l.b16 %v1466
    %v1532 = vunpack.c.h.b16 %v1466
    %v1533 = vunpack.c.l.b16 %v1467
    %v1534 = vunpack.c.h.b16 %v1467
    %v1535 = vunpack.c.l.b16 %v1468
    %v1536 = vunpack.c.h.b16 %v1468
    %v1537 = vunpack.c.l.b16 %v1469
    %v1538 = vunpack.c.h.b16 %v1469
    %v1539 = vunpack.c.l.b16 %v1470
    %v1540 = vunpack.c.h.b16 %v1470
    %v1541 = vunpack.c.l.b16 %v1471
    %v1542 = vunpack.c.h.b16 %v1471
    %v1543 = vunpack.c.l.b16 %v1472
    %v1544 = vunpack.c.h.b16 %v1472
    %v1545 = vunpack.c.l.b16 %v1473
    %v1546 = vunpack.c.h.b16 %v1473
    %v1547 = vunpack.c.l.b16 %v1474
    %v1548 = vunpack.c.h.b16 %v1474
    %v1549 = vunpack.c.l.b16 %v1475
    %v1550 = vunpack.c.h.b16 %v1475
    %v1551 = vunpack.c.l.b16 %v1476
    %v1552 = vunpack.c.h.b16 %v1476
    %v1553 = vunpack.c.l.b16 %v1477
    %v1554 = vunpack.c.h.b16 %v1477
    %v1555 = vunpack.c.l.b16 %v1478
    %v1556 = vunpack.c.h.b16 %v1478
    %v1557 = vunpack.c.l.b16 %v1479
    %v1558 = vunpack.c.h.b16 %v1479
    %v1559 = vunpack.c.l.b16 %v1480
    %v1560 = vunpack.c.h.b16 %v1480
    %v1561 = vunpack.c.l.b16 %v1481
    %v1562 = vunpack.c.h.b16 %v1481
    %v1563 = vunpack.c.l.b16 %v1482
    %v1564 = vunpack.c.h.b16 %v1482
    %v1565 = vunpack.c.l.b16 %v1483
    %v1566 = vunpack.c.h.b16 %v1483
    %v1567 = vunpack.c.l.b16 %v1484
    %v1568 = vunpack.c.h.b16 %v1484
    %v1569 = vunpack.c.l.b16 %v1485
    %v1570 = vunpack.c.h.b16 %v1485
    %v1571 = vunpack.c.l.b16 %v1486
    %v1572 = vunpack.c.h.b16 %v1486
    %v1573 = vunpack.c.l.b16 %v1487
    %v1574 = vunpack.c.h.b16 %v1487
    %v1575 = vunpack.c.l.b16 %v1488
    %v1576 = vunpack.c.h.b16 %v1488
    %v1577 = vunpack.c.l.b16 %v1489
    %v1578 = vunpack.c.h.b16 %v1489
    %v1579 = vunpack.c.l.b16 %v1490
    %v1580 = vunpack.c.h.b16 %v1490
    %v1581 = vunpack.c.l.b16 %v1491
    %v1582 = vunpack.c.h.b16 %v1491
    %v1583 = vunpack.c.l.b16 %v1492
    %v1584 = vunpack.c.h.b16 %v1492
    %v1585 = vunpack.c.l.b16 %v1493
    %v1586 = vunpack.c.h.b16 %v1493
    %v1587 = vunpack.c.l.b16 %v1494
    %v1588 = vunpack.c.h.b16 %v1494
    %v1589 = vunpack.c.l.b16 %v1495
    %v1590 = vunpack.c.h.b16 %v1495
    %v1591 = vunpack.c.l.b16 %v1496
    %v1592 = vunpack.c.h.b16 %v1496
    %v1593 = vpack.c.b16 %v1531, %v1529
    %v1594 = vpack.c.b16 %v1532, %v1530
    %v1595 = vpack.c.b16 %v1535, %v1533
    %v1596 = vpack.c.b16 %v1536, %v1534
    %v1597 = vpack.c.b16 %v1539, %v1537
    %v1598 = vpack.c.b16 %v1540, %v1538
    %v1599 = vpack.c.b16 %v1543, %v1541
    %v1600 = vpack.c.b16 %v1544, %v1542
    %v1601 = vpack.c.b16 %v1547, %v1545
    %v1602 = vpack.c.b16 %v1548, %v1546
    %v1603 = vpack.c.b16 %v1551, %v1549
    %v1604 = vpack.c.b16 %v1552, %v1550
    %v1605 = vpack.c.b16 %v1555, %v1553
    %v1606 = vpack.c.b16 %v1556, %v1554
    %v1607 = vpack.c.b16 %v1559, %v1557
    %v1608 = vpack.c.b16 %v1560, %v1558
    %v1609 = vpack.c.b16 %v1563, %v1561
    %v1610 = vpack.c.b16 %v1564, %v1562
    %v1611 = vpack.c.b16 %v1567, %v1565
    %v1612 = vpack.c.b16 %v1568, %v1566
    %v1613 = vpack.c.b16 %v1571, %v1569
    %v1614 = vpack.c.b16 %v1572, %v1570
    %v1615 = vpack.c.b16 %v1575, %v1573
    %v1616 = vpack.c.b16 %v1576, %v1574
    %v1617 = vpack.c.b16 %v1579, %v1577
    %v1618 = vpack.c.b16 %v1580, %v1578
    %v1619 = vpack.c.b16 %v1583, %v1581
    %v1620 = vpack.c.b16 %v1584, %v1582
    %v1621 = vpack.c.b16 %v1587, %v1585
    %v1622 = vpack.c.b16 %v1588, %v1586
    %v1623 = vpack.c.b16 %v1591, %v1589
    %v1624 = vpack.c.b16 %v1592, %v1590
    %1657 = vmatpush.bf16.msra.mxu0 %v1607
    %1658 = vmatpush.bf16.msra.mxu0 %v1605
    %1659 = vmatpush.bf16.msra.mxu0 %v1603
    %1660 = vmatpush.bf16.msra.mxu0 %v1601
    %1661 = vmatpush.bf16.msra.mxu0 %v1599
    %1662 = vmatpush.bf16.msra.mxu0 %v1597
    %1663 = vmatpush.bf16.msra.mxu0 %v1595
    %1664 = vmatpush.bf16.msra.mxu0 %v1593
    %1665 = vmatmul.bf16.gmra.mxu0 %v1462
    %v1666 = vpop.f32.mrf.mxu0
    %v1667 = vadd.f32 0.0, %v1666
    %v1668 = vpop.f32.mrf.mxu0
    %1669 = vdwg.mxu0
    %1670 = vmatpush.bf16.msra.mxu0 %v1623
    %1671 = vmatpush.bf16.msra.mxu0 %v1621
    %1672 = vmatpush.bf16.msra.mxu0 %v1619
    %1673 = vmatpush.bf16.msra.mxu0 %v1617
    %1674 = vmatpush.bf16.msra.mxu0 %v1615
    %1675 = vmatpush.bf16.msra.mxu0 %v1613
    %1676 = vmatpush.bf16.msra.mxu0 %v1611
    %1677 = vmatpush.bf16.msra.mxu0 %v1609
    %1678 = vmatmul.bf16.gmra.mxu0 %v1463
    %v1679 = vpop.f32.mrf.mxu0
    %v1680 = vadd.f32 %v1667, %v1679
    %v1681 = vpop.f32.mrf.mxu0
    %1682 = vdwg.mxu0
    %1683 = vmatpush.bf16.msra.mxu0 %v1608
    %1684 = vmatpush.bf16.msra.mxu0 %v1606
    %1685 = vmatpush.bf16.msra.mxu0 %v1604
    %1686 = vmatpush.bf16.msra.mxu0 %v1602
    %1687 = vmatpush.bf16.msra.mxu0 %v1600
    %1688 = vmatpush.bf16.msra.mxu0 %v1598
    %1689 = vmatpush.bf16.msra.mxu0 %v1596
    %1690 = vmatpush.bf16.msra.mxu0 %v1594
    %1691 = vmatmul.bf16.gmra.mxu0 %v1462
    %v1692 = vpop.f32.mrf.mxu0
    %v1693 = vadd.f32 0.0, %v1692
    %v1694 = vpop.f32.mrf.mxu0
    %1695 = vdwg.mxu0
    %1696 = vmatpush.bf16.msra.mxu0 %v1624
    %1697 = vmatpush.bf16.msra.mxu0 %v1622
    %1698 = vmatpush.bf16.msra.mxu0 %v1620
    %1699 = vmatpush.bf16.msra.mxu0 %v1618
    %1700 = vmatpush.bf16.msra.mxu0 %v1616
    %1701 = vmatpush.bf16.msra.mxu0 %v1614
    %1702 = vmatpush.bf16.msra.mxu0 %v1612
    %1703 = vmatpush.bf16.msra.mxu0 %v1610
    %1704 = vmatmul.bf16.gmra.mxu0 %v1463
    %v1705 = vpop.f32.mrf.mxu0
    %v1706 = vadd.f32 %v1693, %v1705
    %v1707 = vpop.f32.mrf.mxu0
    %1708 = vdwg.mxu0
    %v1709 = vadd.f32 %v1402, %v1680
    %v1710 = vadd.f32 %v1428, %v1706
    %s1711 = scalar_lea.vmem %s8, 12
    %v1712 = vld [vmem:[%s1711] sm:$0xf]
    %v1714 = vsel %vm870, %v1712, 0
    %1716 = vmatpush.bf16.msra.mxu0 0
    %1717 = vmatpush.bf16.msra.mxu0 0
    %1718 = vmatpush.bf16.msra.mxu0 0
    %1719 = vmatpush.bf16.msra.mxu0 0
    %1720 = vmatpush.bf16.msra.mxu0 0
    %1721 = vmatpush.bf16.msra.mxu0 0
    %1722 = vmatpush.bf16.msra.mxu0 0
    %1723 = vmatpush.bf16.msra.mxu0 %v876
    %1724 = vmatmul.bf16.gmra.mxu0 %v1714
    %v1725 = vpop.f32.mrf.mxu0
    %v1726 = vadd.f32 0.0, %v1725
    %v1727 = vpop.f32.mrf.mxu0
    %1728 = vdwg.mxu0
    %1729 = vmatpush.bf16.msra.mxu0 0
    %1730 = vmatpush.bf16.msra.mxu0 0
    %1731 = vmatpush.bf16.msra.mxu0 0
    %1732 = vmatpush.bf16.msra.mxu0 0
    %1733 = vmatpush.bf16.msra.mxu0 0
    %1734 = vmatpush.bf16.msra.mxu0 0
    %1735 = vmatpush.bf16.msra.mxu0 0
    %1736 = vmatpush.bf16.msra.mxu0 %v879
    %1737 = vmatmul.bf16.gmra.mxu0 %v1714
    %v1738 = vpop.f32.mrf.mxu0
    %v1739 = vadd.f32 0.0, %v1738
    %v1740 = vpop.f32.mrf.mxu0
    %1741 = vdwg.mxu0
    %v1742 = vpack.c.bf16 %v1726, %v1726
    %v1743 = vpack.c.bf16 %v1739, %v1739
    %s1744 = scalar_lea.vmem %s7, 768
    %v1745 = vld [vmem:[%s1744] sm:$0xff]
    %v1746 = vld [vmem:[%s1744 + $0x8] sm:$0xff]
    %v1747 = vld [vmem:[%s1744 + $0x10] sm:$0xff]
    %v1748 = vld [vmem:[%s1744 + $0x18] sm:$0xff]
    %v1749 = vld [vmem:[%s1744 + $0x20] sm:$0xff]
    %v1750 = vld [vmem:[%s1744 + $0x28] sm:$0xff]
    %v1751 = vld [vmem:[%s1744 + $0x30] sm:$0xff]
    %v1752 = vld [vmem:[%s1744 + $0x38] sm:$0xff]
    %v1753 = vld [vmem:[%s1744 + $0x40] sm:$0xff]
    %v1754 = vld [vmem:[%s1744 + $0x48] sm:$0xff]
    %v1755 = vld [vmem:[%s1744 + $0x50] sm:$0xff]
    %v1756 = vld [vmem:[%s1744 + $0x58] sm:$0xff]
    %v1757 = vld [vmem:[%s1744 + $0x60] sm:$0xff]
    %v1758 = vld [vmem:[%s1744 + $0x68] sm:$0xff]
    %v1759 = vld [vmem:[%s1744 + $0x70] sm:$0xff]
    %v1760 = vld [vmem:[%s1744 + $0x78] sm:$0xff]
    %v1761 = vld [vmem:[%s1744 + $0x80] sm:$0xff]
    %v1762 = vld [vmem:[%s1744 + $0x88] sm:$0xff]
    %v1763 = vld [vmem:[%s1744 + $0x90] sm:$0xff]
    %v1764 = vld [vmem:[%s1744 + $0x98] sm:$0xff]
    %v1765 = vld [vmem:[%s1744 + $0xa0] sm:$0xff]
    %v1766 = vld [vmem:[%s1744 + $0xa8] sm:$0xff]
    %v1767 = vld [vmem:[%s1744 + $0xb0] sm:$0xff]
    %v1768 = vld [vmem:[%s1744 + $0xb8] sm:$0xff]
    %v1769 = vld [vmem:[%s1744 + $0xc0] sm:$0xff]
    %v1770 = vld [vmem:[%s1744 + $0xc8] sm:$0xff]
    %v1771 = vld [vmem:[%s1744 + $0xd0] sm:$0xff]
    %v1772 = vld [vmem:[%s1744 + $0xd8] sm:$0xff]
    %v1773 = vld [vmem:[%s1744 + $0xe0] sm:$0xff]
    %v1774 = vld [vmem:[%s1744 + $0xe8] sm:$0xff]
    %v1775 = vld [vmem:[%s1744 + $0xf0] sm:$0xff]
    %v1776 = vld [vmem:[%s1744 + $0xf8] sm:$0xff]
    %v1809 = vunpack.c.l.b16 %v1745
    %v1810 = vunpack.c.h.b16 %v1745
    %v1811 = vunpack.c.l.b16 %v1746
    %v1812 = vunpack.c.h.b16 %v1746
    %v1813 = vunpack.c.l.b16 %v1747
    %v1814 = vunpack.c.h.b16 %v1747
    %v1815 = vunpack.c.l.b16 %v1748
    %v1816 = vunpack.c.h.b16 %v1748
    %v1817 = vunpack.c.l.b16 %v1749
    %v1818 = vunpack.c.h.b16 %v1749
    %v1819 = vunpack.c.l.b16 %v1750
    %v1820 = vunpack.c.h.b16 %v1750
    %v1821 = vunpack.c.l.b16 %v1751
    %v1822 = vunpack.c.h.b16 %v1751
    %v1823 = vunpack.c.l.b16 %v1752
    %v1824 = vunpack.c.h.b16 %v1752
    %v1825 = vunpack.c.l.b16 %v1753
    %v1826 = vunpack.c.h.b16 %v1753
    %v1827 = vunpack.c.l.b16 %v1754
    %v1828 = vunpack.c.h.b16 %v1754
    %v1829 = vunpack.c.l.b16 %v1755
    %v1830 = vunpack.c.h.b16 %v1755
    %v1831 = vunpack.c.l.b16 %v1756
    %v1832 = vunpack.c.h.b16 %v1756
    %v1833 = vunpack.c.l.b16 %v1757
    %v1834 = vunpack.c.h.b16 %v1757
    %v1835 = vunpack.c.l.b16 %v1758
    %v1836 = vunpack.c.h.b16 %v1758
    %v1837 = vunpack.c.l.b16 %v1759
    %v1838 = vunpack.c.h.b16 %v1759
    %v1839 = vunpack.c.l.b16 %v1760
    %v1840 = vunpack.c.h.b16 %v1760
    %v1841 = vunpack.c.l.b16 %v1761
    %v1842 = vunpack.c.h.b16 %v1761
    %v1843 = vunpack.c.l.b16 %v1762
    %v1844 = vunpack.c.h.b16 %v1762
    %v1845 = vunpack.c.l.b16 %v1763
    %v1846 = vunpack.c.h.b16 %v1763
    %v1847 = vunpack.c.l.b16 %v1764
    %v1848 = vunpack.c.h.b16 %v1764
    %v1849 = vunpack.c.l.b16 %v1765
    %v1850 = vunpack.c.h.b16 %v1765
    %v1851 = vunpack.c.l.b16 %v1766
    %v1852 = vunpack.c.h.b16 %v1766
    %v1853 = vunpack.c.l.b16 %v1767
    %v1854 = vunpack.c.h.b16 %v1767
    %v1855 = vunpack.c.l.b16 %v1768
    %v1856 = vunpack.c.h.b16 %v1768
    %v1857 = vunpack.c.l.b16 %v1769
    %v1858 = vunpack.c.h.b16 %v1769
    %v1859 = vunpack.c.l.b16 %v1770
    %v1860 = vunpack.c.h.b16 %v1770
    %v1861 = vunpack.c.l.b16 %v1771
    %v1862 = vunpack.c.h.b16 %v1771
    %v1863 = vunpack.c.l.b16 %v1772
    %v1864 = vunpack.c.h.b16 %v1772
    %v1865 = vunpack.c.l.b16 %v1773
    %v1866 = vunpack.c.h.b16 %v1773
    %v1867 = vunpack.c.l.b16 %v1774
    %v1868 = vunpack.c.h.b16 %v1774
    %v1869 = vunpack.c.l.b16 %v1775
    %v1870 = vunpack.c.h.b16 %v1775
    %v1871 = vunpack.c.l.b16 %v1776
    %v1872 = vunpack.c.h.b16 %v1776
    %v1873 = vpack.c.b16 %v1811, %v1809
    %v1874 = vpack.c.b16 %v1812, %v1810
    %v1875 = vpack.c.b16 %v1815, %v1813
    %v1876 = vpack.c.b16 %v1816, %v1814
    %v1877 = vpack.c.b16 %v1819, %v1817
    %v1878 = vpack.c.b16 %v1820, %v1818
    %v1879 = vpack.c.b16 %v1823, %v1821
    %v1880 = vpack.c.b16 %v1824, %v1822
    %v1881 = vpack.c.b16 %v1827, %v1825
    %v1882 = vpack.c.b16 %v1828, %v1826
    %v1883 = vpack.c.b16 %v1831, %v1829
    %v1884 = vpack.c.b16 %v1832, %v1830
    %v1885 = vpack.c.b16 %v1835, %v1833
    %v1886 = vpack.c.b16 %v1836, %v1834
    %v1887 = vpack.c.b16 %v1839, %v1837
    %v1888 = vpack.c.b16 %v1840, %v1838
    %v1889 = vpack.c.b16 %v1843, %v1841
    %v1890 = vpack.c.b16 %v1844, %v1842
    %v1891 = vpack.c.b16 %v1847, %v1845
    %v1892 = vpack.c.b16 %v1848, %v1846
    %v1893 = vpack.c.b16 %v1851, %v1849
    %v1894 = vpack.c.b16 %v1852, %v1850
    %v1895 = vpack.c.b16 %v1855, %v1853
    %v1896 = vpack.c.b16 %v1856, %v1854
    %v1897 = vpack.c.b16 %v1859, %v1857
    %v1898 = vpack.c.b16 %v1860, %v1858
    %v1899 = vpack.c.b16 %v1863, %v1861
    %v1900 = vpack.c.b16 %v1864, %v1862
    %v1901 = vpack.c.b16 %v1867, %v1865
    %v1902 = vpack.c.b16 %v1868, %v1866
    %v1903 = vpack.c.b16 %v1871, %v1869
    %v1904 = vpack.c.b16 %v1872, %v1870
    %1937 = vmatpush.bf16.msra.mxu0 %v1887
    %1938 = vmatpush.bf16.msra.mxu0 %v1885
    %1939 = vmatpush.bf16.msra.mxu0 %v1883
    %1940 = vmatpush.bf16.msra.mxu0 %v1881
    %1941 = vmatpush.bf16.msra.mxu0 %v1879
    %1942 = vmatpush.bf16.msra.mxu0 %v1877
    %1943 = vmatpush.bf16.msra.mxu0 %v1875
    %1944 = vmatpush.bf16.msra.mxu0 %v1873
    %1945 = vmatmul.bf16.gmra.mxu0 %v1742
    %v1946 = vpop.f32.mrf.mxu0
    %v1947 = vadd.f32 0.0, %v1946
    %v1948 = vpop.f32.mrf.mxu0
    %1949 = vdwg.mxu0
    %1950 = vmatpush.bf16.msra.mxu0 %v1903
    %1951 = vmatpush.bf16.msra.mxu0 %v1901
    %1952 = vmatpush.bf16.msra.mxu0 %v1899
    %1953 = vmatpush.bf16.msra.mxu0 %v1897
    %1954 = vmatpush.bf16.msra.mxu0 %v1895
    %1955 = vmatpush.bf16.msra.mxu0 %v1893
    %1956 = vmatpush.bf16.msra.mxu0 %v1891
    %1957 = vmatpush.bf16.msra.mxu0 %v1889
    %1958 = vmatmul.bf16.gmra.mxu0 %v1743
    %v1959 = vpop.f32.mrf.mxu0
    %v1960 = vadd.f32 %v1947, %v1959
    %v1961 = vpop.f32.mrf.mxu0
    %1962 = vdwg.mxu0
    %1963 = vmatpush.bf16.msra.mxu0 %v1888
    %1964 = vmatpush.bf16.msra.mxu0 %v1886
    %1965 = vmatpush.bf16.msra.mxu0 %v1884
    %1966 = vmatpush.bf16.msra.mxu0 %v1882
    %1967 = vmatpush.bf16.msra.mxu0 %v1880
    %1968 = vmatpush.bf16.msra.mxu0 %v1878
    %1969 = vmatpush.bf16.msra.mxu0 %v1876
    %1970 = vmatpush.bf16.msra.mxu0 %v1874
    %1971 = vmatmul.bf16.gmra.mxu0 %v1742
    %v1972 = vpop.f32.mrf.mxu0
    %v1973 = vadd.f32 0.0, %v1972
    %v1974 = vpop.f32.mrf.mxu0
    %1975 = vdwg.mxu0
    %1976 = vmatpush.bf16.msra.mxu0 %v1904
    %1977 = vmatpush.bf16.msra.mxu0 %v1902
    %1978 = vmatpush.bf16.msra.mxu0 %v1900
    %1979 = vmatpush.bf16.msra.mxu0 %v1898
    %1980 = vmatpush.bf16.msra.mxu0 %v1896
    %1981 = vmatpush.bf16.msra.mxu0 %v1894
    %1982 = vmatpush.bf16.msra.mxu0 %v1892
    %1983 = vmatpush.bf16.msra.mxu0 %v1890
    %1984 = vmatmul.bf16.gmra.mxu0 %v1743
    %v1985 = vpop.f32.mrf.mxu0
    %v1986 = vadd.f32 %v1973, %v1985
    %v1987 = vpop.f32.mrf.mxu0
    %1988 = vdwg.mxu0
    %v1989 = vadd.f32 %v1709, %v1960
    %v1990 = vadd.f32 %v1710, %v1986
    %v1992 = vsel %vm874, %v867, 0
    %v1995 = vsel %vm874, %v868, 0
    %1997 = vmatpush.bf16.msra.mxu0 0
    %1998 = vmatpush.bf16.msra.mxu0 0
    %1999 = vmatpush.bf16.msra.mxu0 0
    %2000 = vmatpush.bf16.msra.mxu0 0
    %2001 = vmatpush.bf16.msra.mxu0 0
    %2002 = vmatpush.bf16.msra.mxu0 0
    %2003 = vmatpush.bf16.msra.mxu0 0
    %2004 = vmatpush.bf16.msra.mxu0 %v1992
    %2005 = vmatmul.bf16.gmra.mxu0 %v872
    %v2006 = vpop.f32.mrf.mxu0
    %v2007 = vadd.f32 0.0, %v2006
    %v2008 = vpop.f32.mrf.mxu0
    %2009 = vdwg.mxu0
    %2010 = vmatpush.bf16.msra.mxu0 0
    %2011 = vmatpush.bf16.msra.mxu0 0
    %2012 = vmatpush.bf16.msra.mxu0 0
    %2013 = vmatpush.bf16.msra.mxu0 0
    %2014 = vmatpush.bf16.msra.mxu0 0
    %2015 = vmatpush.bf16.msra.mxu0 0
    %2016 = vmatpush.bf16.msra.mxu0 0
    %2017 = vmatpush.bf16.msra.mxu0 %v1995
    %2018 = vmatmul.bf16.gmra.mxu0 %v872
    %v2019 = vpop.f32.mrf.mxu0
    %v2020 = vadd.f32 0.0, %v2019
    %v2021 = vpop.f32.mrf.mxu0
    %2022 = vdwg.mxu0
    %v2023 = vpack.c.bf16 %v2007, %v2007
    %v2024 = vpack.c.bf16 %v2020, %v2020
    %2025 = vmatpush.bf16.msra.mxu0 0
    %2026 = vmatpush.bf16.msra.mxu0 0
    %2027 = vmatpush.bf16.msra.mxu0 0
    %2028 = vmatpush.bf16.msra.mxu0 0
    %2029 = vmatpush.bf16.msra.mxu0 0
    %2030 = vmatpush.bf16.msra.mxu0 0
    %2031 = vmatpush.bf16.msra.mxu0 0
    %2032 = vmatpush.bf16.msra.mxu0 %v1992
    %2033 = vmatmul.bf16.gmra.mxu0 %v944
    %v2034 = vpop.f32.mrf.mxu0
    %v2035 = vadd.f32 0.0, %v2034
    %v2036 = vpop.f32.mrf.mxu0
    %2037 = vdwg.mxu0
    %2038 = vmatpush.bf16.msra.mxu0 0
    %2039 = vmatpush.bf16.msra.mxu0 0
    %2040 = vmatpush.bf16.msra.mxu0 0
    %2041 = vmatpush.bf16.msra.mxu0 0
    %2042 = vmatpush.bf16.msra.mxu0 0
    %2043 = vmatpush.bf16.msra.mxu0 0
    %2044 = vmatpush.bf16.msra.mxu0 0
    %2045 = vmatpush.bf16.msra.mxu0 %v1995
    %2046 = vmatmul.bf16.gmra.mxu0 %v944
    %v2047 = vpop.f32.mrf.mxu0
    %v2048 = vadd.f32 0.0, %v2047
    %v2049 = vpop.f32.mrf.mxu0
    %2050 = vdwg.mxu0
    %v2051 = vpack.c.bf16 %v2035, %v2035
    %v2052 = vpack.c.bf16 %v2048, %v2048
    %2053 = vmatpush.bf16.msra.mxu0 %v1117
    %2054 = vmatpush.bf16.msra.mxu0 %v1115
    %2055 = vmatpush.bf16.msra.mxu0 %v1113
    %2056 = vmatpush.bf16.msra.mxu0 %v1111
    %2057 = vmatpush.bf16.msra.mxu0 %v1109
    %2058 = vmatpush.bf16.msra.mxu0 %v1107
    %2059 = vmatpush.bf16.msra.mxu0 %v1105
    %2060 = vmatpush.bf16.msra.mxu0 %v1103
    %2061 = vmatmul.bf16.gmra.mxu0 %v2051
    %v2062 = vpop.f32.mrf.mxu0
    %v2063 = vadd.f32 0.0, %v2062
    %v2064 = vpop.f32.mrf.mxu0
    %2065 = vdwg.mxu0
    %2066 = vmatpush.bf16.msra.mxu0 %v1133
    %2067 = vmatpush.bf16.msra.mxu0 %v1131
    %2068 = vmatpush.bf16.msra.mxu0 %v1129
    %2069 = vmatpush.bf16.msra.mxu0 %v1127
    %2070 = vmatpush.bf16.msra.mxu0 %v1125
    %2071 = vmatpush.bf16.msra.mxu0 %v1123
    %2072 = vmatpush.bf16.msra.mxu0 %v1121
    %2073 = vmatpush.bf16.msra.mxu0 %v1119
    %2074 = vmatmul.bf16.gmra.mxu0 %v2052
    %v2075 = vpop.f32.mrf.mxu0
    %v2076 = vadd.f32 %v2063, %v2075
    %v2077 = vpop.f32.mrf.mxu0
    %2078 = vdwg.mxu0
    %2079 = vmatpush.bf16.msra.mxu0 %v1118
    %2080 = vmatpush.bf16.msra.mxu0 %v1116
    %2081 = vmatpush.bf16.msra.mxu0 %v1114
    %2082 = vmatpush.bf16.msra.mxu0 %v1112
    %2083 = vmatpush.bf16.msra.mxu0 %v1110
    %2084 = vmatpush.bf16.msra.mxu0 %v1108
    %2085 = vmatpush.bf16.msra.mxu0 %v1106
    %2086 = vmatpush.bf16.msra.mxu0 %v1104
    %2087 = vmatmul.bf16.gmra.mxu0 %v2051
    %v2088 = vpop.f32.mrf.mxu0
    %v2089 = vadd.f32 0.0, %v2088
    %v2090 = vpop.f32.mrf.mxu0
    %2091 = vdwg.mxu0
    %2092 = vmatpush.bf16.msra.mxu0 %v1134
    %2093 = vmatpush.bf16.msra.mxu0 %v1132
    %2094 = vmatpush.bf16.msra.mxu0 %v1130
    %2095 = vmatpush.bf16.msra.mxu0 %v1128
    %2096 = vmatpush.bf16.msra.mxu0 %v1126
    %2097 = vmatpush.bf16.msra.mxu0 %v1124
    %2098 = vmatpush.bf16.msra.mxu0 %v1122
    %2099 = vmatpush.bf16.msra.mxu0 %v1120
    %2100 = vmatmul.bf16.gmra.mxu0 %v2052
    %v2101 = vpop.f32.mrf.mxu0
    %v2102 = vadd.f32 %v2089, %v2101
    %v2103 = vpop.f32.mrf.mxu0
    %2104 = vdwg.mxu0
    %2105 = vmatpush.bf16.msra.mxu0 %v1329
    %2106 = vmatpush.bf16.msra.mxu0 %v1327
    %2107 = vmatpush.bf16.msra.mxu0 %v1325
    %2108 = vmatpush.bf16.msra.mxu0 %v1323
    %2109 = vmatpush.bf16.msra.mxu0 %v1321
    %2110 = vmatpush.bf16.msra.mxu0 %v1319
    %2111 = vmatpush.bf16.msra.mxu0 %v1317
    %2112 = vmatpush.bf16.msra.mxu0 %v1315
    %2113 = vmatmul.bf16.gmra.mxu0 %v2023
    %v2114 = vpop.f32.mrf.mxu0
    %v2115 = vadd.f32 %v2076, %v2114
    %v2116 = vpop.f32.mrf.mxu0
    %2117 = vdwg.mxu0
    %2118 = vmatpush.bf16.msra.mxu0 %v1345
    %2119 = vmatpush.bf16.msra.mxu0 %v1343
    %2120 = vmatpush.bf16.msra.mxu0 %v1341
    %2121 = vmatpush.bf16.msra.mxu0 %v1339
    %2122 = vmatpush.bf16.msra.mxu0 %v1337
    %2123 = vmatpush.bf16.msra.mxu0 %v1335
    %2124 = vmatpush.bf16.msra.mxu0 %v1333
    %2125 = vmatpush.bf16.msra.mxu0 %v1331
    %2126 = vmatmul.bf16.gmra.mxu0 %v2024
    %v2127 = vpop.f32.mrf.mxu0
    %v2128 = vadd.f32 %v2115, %v2127
    %v2129 = vpop.f32.mrf.mxu0
    %2130 = vdwg.mxu0
    %2131 = vmatpush.bf16.msra.mxu0 %v1330
    %2132 = vmatpush.bf16.msra.mxu0 %v1328
    %2133 = vmatpush.bf16.msra.mxu0 %v1326
    %2134 = vmatpush.bf16.msra.mxu0 %v1324
    %2135 = vmatpush.bf16.msra.mxu0 %v1322
    %2136 = vmatpush.bf16.msra.mxu0 %v1320
    %2137 = vmatpush.bf16.msra.mxu0 %v1318
    %2138 = vmatpush.bf16.msra.mxu0 %v1316
    %2139 = vmatmul.bf16.gmra.mxu0 %v2023
    %v2140 = vpop.f32.mrf.mxu0
    %v2141 = vadd.f32 %v2102, %v2140
    %v2142 = vpop.f32.mrf.mxu0
    %2143 = vdwg.mxu0
    %2144 = vmatpush.bf16.msra.mxu0 %v1346
    %2145 = vmatpush.bf16.msra.mxu0 %v1344
    %2146 = vmatpush.bf16.msra.mxu0 %v1342
    %2147 = vmatpush.bf16.msra.mxu0 %v1340
    %2148 = vmatpush.bf16.msra.mxu0 %v1338
    %2149 = vmatpush.bf16.msra.mxu0 %v1336
    %2150 = vmatpush.bf16.msra.mxu0 %v1334
    %2151 = vmatpush.bf16.msra.mxu0 %v1332
    %2152 = vmatmul.bf16.gmra.mxu0 %v2024
    %v2153 = vpop.f32.mrf.mxu0
    %v2154 = vadd.f32 %v2141, %v2153
    %v2155 = vpop.f32.mrf.mxu0
    %2156 = vdwg.mxu0
    %2157 = vmatpush.bf16.msra.mxu0 0
    %2158 = vmatpush.bf16.msra.mxu0 0
    %2159 = vmatpush.bf16.msra.mxu0 0
    %2160 = vmatpush.bf16.msra.mxu0 0
    %2161 = vmatpush.bf16.msra.mxu0 0
    %2162 = vmatpush.bf16.msra.mxu0 0
    %2163 = vmatpush.bf16.msra.mxu0 0
    %2164 = vmatpush.bf16.msra.mxu0 %v1992
    %2165 = vmatmul.bf16.gmra.mxu0 %v1434
    %v2166 = vpop.f32.mrf.mxu0
    %v2167 = vadd.f32 0.0, %v2166
    %v2168 = vpop.f32.mrf.mxu0
    %2169 = vdwg.mxu0
    %2170 = vmatpush.bf16.msra.mxu0 0
    %2171 = vmatpush.bf16.msra.mxu0 0
    %2172 = vmatpush.bf16.msra.mxu0 0
    %2173 = vmatpush.bf16.msra.mxu0 0
    %2174 = vmatpush.bf16.msra.mxu0 0
    %2175 = vmatpush.bf16.msra.mxu0 0
    %2176 = vmatpush.bf16.msra.mxu0 0
    %2177 = vmatpush.bf16.msra.mxu0 %v1995
    %2178 = vmatmul.bf16.gmra.mxu0 %v1434
    %v2179 = vpop.f32.mrf.mxu0
    %v2180 = vadd.f32 0.0, %v2179
    %v2181 = vpop.f32.mrf.mxu0
    %2182 = vdwg.mxu0
    %v2183 = vpack.c.bf16 %v2167, %v2167
    %v2184 = vpack.c.bf16 %v2180, %v2180
    %2185 = vmatpush.bf16.msra.mxu0 %v1607
    %2186 = vmatpush.bf16.msra.mxu0 %v1605
    %2187 = vmatpush.bf16.msra.mxu0 %v1603
    %2188 = vmatpush.bf16.msra.mxu0 %v1601
    %2189 = vmatpush.bf16.msra.mxu0 %v1599
    %2190 = vmatpush.bf16.msra.mxu0 %v1597
    %2191 = vmatpush.bf16.msra.mxu0 %v1595
    %2192 = vmatpush.bf16.msra.mxu0 %v1593
    %2193 = vmatmul.bf16.gmra.mxu0 %v2183
    %v2194 = vpop.f32.mrf.mxu0
    %v2195 = vadd.f32 0.0, %v2194
    %v2196 = vpop.f32.mrf.mxu0
    %2197 = vdwg.mxu0
    %2198 = vmatpush.bf16.msra.mxu0 %v1623
    %2199 = vmatpush.bf16.msra.mxu0 %v1621
    %2200 = vmatpush.bf16.msra.mxu0 %v1619
    %2201 = vmatpush.bf16.msra.mxu0 %v1617
    %2202 = vmatpush.bf16.msra.mxu0 %v1615
    %2203 = vmatpush.bf16.msra.mxu0 %v1613
    %2204 = vmatpush.bf16.msra.mxu0 %v1611
    %2205 = vmatpush.bf16.msra.mxu0 %v1609
    %2206 = vmatmul.bf16.gmra.mxu0 %v2184
    %v2207 = vpop.f32.mrf.mxu0
    %v2208 = vadd.f32 %v2195, %v2207
    %v2209 = vpop.f32.mrf.mxu0
    %2210 = vdwg.mxu0
    %2211 = vmatpush.bf16.msra.mxu0 %v1608
    %2212 = vmatpush.bf16.msra.mxu0 %v1606
    %2213 = vmatpush.bf16.msra.mxu0 %v1604
    %2214 = vmatpush.bf16.msra.mxu0 %v1602
    %2215 = vmatpush.bf16.msra.mxu0 %v1600
    %2216 = vmatpush.bf16.msra.mxu0 %v1598
    %2217 = vmatpush.bf16.msra.mxu0 %v1596
    %2218 = vmatpush.bf16.msra.mxu0 %v1594
    %2219 = vmatmul.bf16.gmra.mxu0 %v2183
    %v2220 = vpop.f32.mrf.mxu0
    %v2221 = vadd.f32 0.0, %v2220
    %v2222 = vpop.f32.mrf.mxu0
    %2223 = vdwg.mxu0
    %2224 = vmatpush.bf16.msra.mxu0 %v1624
    %2225 = vmatpush.bf16.msra.mxu0 %v1622
    %2226 = vmatpush.bf16.msra.mxu0 %v1620
    %2227 = vmatpush.bf16.msra.mxu0 %v1618
    %2228 = vmatpush.bf16.msra.mxu0 %v1616
    %2229 = vmatpush.bf16.msra.mxu0 %v1614
    %2230 = vmatpush.bf16.msra.mxu0 %v1612
    %2231 = vmatpush.bf16.msra.mxu0 %v1610
    %2232 = vmatmul.bf16.gmra.mxu0 %v2184
    %v2233 = vpop.f32.mrf.mxu0
    %v2234 = vadd.f32 %v2221, %v2233
    %v2235 = vpop.f32.mrf.mxu0
    %2236 = vdwg.mxu0
    %v2237 = vadd.f32 %v2128, %v2208
    %v2238 = vadd.f32 %v2154, %v2234
    %2239 = vmatpush.bf16.msra.mxu0 0
    %2240 = vmatpush.bf16.msra.mxu0 0
    %2241 = vmatpush.bf16.msra.mxu0 0
    %2242 = vmatpush.bf16.msra.mxu0 0
    %2243 = vmatpush.bf16.msra.mxu0 0
    %2244 = vmatpush.bf16.msra.mxu0 0
    %2245 = vmatpush.bf16.msra.mxu0 0
    %2246 = vmatpush.bf16.msra.mxu0 %v1992
    %2247 = vmatmul.bf16.gmra.mxu0 %v1714
    %v2248 = vpop.f32.mrf.mxu0
    %v2249 = vadd.f32 0.0, %v2248
    %v2250 = vpop.f32.mrf.mxu0
    %2251 = vdwg.mxu0
    %2252 = vmatpush.bf16.msra.mxu0 0
    %2253 = vmatpush.bf16.msra.mxu0 0
    %2254 = vmatpush.bf16.msra.mxu0 0
    %2255 = vmatpush.bf16.msra.mxu0 0
    %2256 = vmatpush.bf16.msra.mxu0 0
    %2257 = vmatpush.bf16.msra.mxu0 0
    %2258 = vmatpush.bf16.msra.mxu0 0
    %2259 = vmatpush.bf16.msra.mxu0 %v1995
    %2260 = vmatmul.bf16.gmra.mxu0 %v1714
    %v2261 = vpop.f32.mrf.mxu0
    %v2262 = vadd.f32 0.0, %v2261
    %v2263 = vpop.f32.mrf.mxu0
    %2264 = vdwg.mxu0
    %v2265 = vpack.c.bf16 %v2249, %v2249
    %v2266 = vpack.c.bf16 %v2262, %v2262
    %2267 = vmatpush.bf16.msra.mxu0 %v1887
    %2268 = vmatpush.bf16.msra.mxu0 %v1885
    %2269 = vmatpush.bf16.msra.mxu0 %v1883
    %2270 = vmatpush.bf16.msra.mxu0 %v1881
    %2271 = vmatpush.bf16.msra.mxu0 %v1879
    %2272 = vmatpush.bf16.msra.mxu0 %v1877
    %2273 = vmatpush.bf16.msra.mxu0 %v1875
    %2274 = vmatpush.bf16.msra.mxu0 %v1873
    %2275 = vmatmul.bf16.gmra.mxu0 %v2265
    %v2276 = vpop.f32.mrf.mxu0
    %v2277 = vadd.f32 0.0, %v2276
    %v2278 = vpop.f32.mrf.mxu0
    %2279 = vdwg.mxu0
    %2280 = vmatpush.bf16.msra.mxu0 %v1903
    %2281 = vmatpush.bf16.msra.mxu0 %v1901
    %2282 = vmatpush.bf16.msra.mxu0 %v1899
    %2283 = vmatpush.bf16.msra.mxu0 %v1897
    %2284 = vmatpush.bf16.msra.mxu0 %v1895
    %2285 = vmatpush.bf16.msra.mxu0 %v1893
    %2286 = vmatpush.bf16.msra.mxu0 %v1891
    %2287 = vmatpush.bf16.msra.mxu0 %v1889
    %2288 = vmatmul.bf16.gmra.mxu0 %v2266
    %v2289 = vpop.f32.mrf.mxu0
    %v2290 = vadd.f32 %v2277, %v2289
    %v2291 = vpop.f32.mrf.mxu0
    %2292 = vdwg.mxu0
    %2293 = vmatpush.bf16.msra.mxu0 %v1888
    %2294 = vmatpush.bf16.msra.mxu0 %v1886
    %2295 = vmatpush.bf16.msra.mxu0 %v1884
    %2296 = vmatpush.bf16.msra.mxu0 %v1882
    %2297 = vmatpush.bf16.msra.mxu0 %v1880
    %2298 = vmatpush.bf16.msra.mxu0 %v1878
    %2299 = vmatpush.bf16.msra.mxu0 %v1876
    %2300 = vmatpush.bf16.msra.mxu0 %v1874
    %2301 = vmatmul.bf16.gmra.mxu0 %v2265
    %v2302 = vpop.f32.mrf.mxu0
    %v2303 = vadd.f32 0.0, %v2302
    %v2304 = vpop.f32.mrf.mxu0
    %2305 = vdwg.mxu0
    %2306 = vmatpush.bf16.msra.mxu0 %v1904
    %2307 = vmatpush.bf16.msra.mxu0 %v1902
    %2308 = vmatpush.bf16.msra.mxu0 %v1900
    %2309 = vmatpush.bf16.msra.mxu0 %v1898
    %2310 = vmatpush.bf16.msra.mxu0 %v1896
    %2311 = vmatpush.bf16.msra.mxu0 %v1894
    %2312 = vmatpush.bf16.msra.mxu0 %v1892
    %2313 = vmatpush.bf16.msra.mxu0 %v1890
    %2314 = vmatmul.bf16.gmra.mxu0 %v2266
    %v2315 = vpop.f32.mrf.mxu0
    %v2316 = vadd.f32 %v2303, %v2315
    %v2317 = vpop.f32.mrf.mxu0
    %2318 = vdwg.mxu0
    %v2319 = vadd.f32 %v2237, %v2290
    %v2320 = vadd.f32 %v2238, %v2316
    %v2321 = vld [vmem:[%s11] sm:$0xff]
    %v2322 = vld [vmem:[%s11 + $0x8] sm:$0xff]
    %v2323 = vld [vmem:[%s11 + $0x10] sm:$0xff]
    %v2324 = vld [vmem:[%s11 + $0x18] sm:$0xff]
    %v2325 = vld [vmem:[%s11 + $0x20] sm:$0xff]
    %v2326 = vld [vmem:[%s11 + $0x28] sm:$0xff]
    %v2327 = vld [vmem:[%s11 + $0x30] sm:$0xff]
    %v2328 = vld [vmem:[%s11 + $0x38] sm:$0xff]
    %v2329 = vld [vmem:[%s11 + $0x40] sm:$0xff]
    %v2330 = vld [vmem:[%s11 + $0x48] sm:$0xff]
    %v2331 = vld [vmem:[%s11 + $0x50] sm:$0xff]
    %v2332 = vld [vmem:[%s11 + $0x58] sm:$0xff]
    %v2333 = vld [vmem:[%s11 + $0x60] sm:$0xff]
    %v2334 = vld [vmem:[%s11 + $0x68] sm:$0xff]
    %v2335 = vld [vmem:[%s11 + $0x70] sm:$0xff]
    %v2336 = vld [vmem:[%s11 + $0x78] sm:$0xff]
    %v2337 = vld [vmem:[%s11 + $0x80] sm:$0xff]
    %v2338 = vld [vmem:[%s11 + $0x88] sm:$0xff]
    %v2339 = vld [vmem:[%s11 + $0x90] sm:$0xff]
    %v2340 = vld [vmem:[%s11 + $0x98] sm:$0xff]
    %v2341 = vld [vmem:[%s11 + $0xa0] sm:$0xff]
    %v2342 = vld [vmem:[%s11 + $0xa8] sm:$0xff]
    %v2343 = vld [vmem:[%s11 + $0xb0] sm:$0xff]
    %v2344 = vld [vmem:[%s11 + $0xb8] sm:$0xff]
    %v2345 = vld [vmem:[%s11 + $0xc0] sm:$0xff]
    %v2346 = vld [vmem:[%s11 + $0xc8] sm:$0xff]
    %v2347 = vld [vmem:[%s11 + $0xd0] sm:$0xff]
    %v2348 = vld [vmem:[%s11 + $0xd8] sm:$0xff]
    %v2349 = vld [vmem:[%s11 + $0xe0] sm:$0xff]
    %v2350 = vld [vmem:[%s11 + $0xe8] sm:$0xff]
    %v2351 = vld [vmem:[%s11 + $0xf0] sm:$0xff]
    %v2352 = vld [vmem:[%s11 + $0xf8] sm:$0xff]
    %v2353 = vld [vmem:[%s12] sm:$0xff]
    %v2354 = vld [vmem:[%s12 + $0x8] sm:$0xff]
    %v2355 = vld [vmem:[%s12 + $0x10] sm:$0xff]
    %v2356 = vld [vmem:[%s12 + $0x18] sm:$0xff]
    %v2357 = vld [vmem:[%s12 + $0x20] sm:$0xff]
    %v2358 = vld [vmem:[%s12 + $0x28] sm:$0xff]
    %v2359 = vld [vmem:[%s12 + $0x30] sm:$0xff]
    %v2360 = vld [vmem:[%s12 + $0x38] sm:$0xff]
    %v2361 = vrot.slane %v1989, 4
    %v2362 = vadd.f32 %v1989, %v2361
    %v2363 = vrot.slane %v2362, 2
    %v2364 = vadd.f32 %v2362, %v2363
    %v2365 = vrot.slane %v2364, 1
    %v2366 = vadd.f32 %v2364, %v2365
    %v2367 = vrot.slane %v1990, 4
    %v2368 = vadd.f32 %v1990, %v2367
    %v2369 = vrot.slane %v2368, 2
    %v2370 = vadd.f32 %v2368, %v2369
    %v2371 = vrot.slane %v2370, 1
    %v2372 = vadd.f32 %v2370, %v2371
    %v2373 = vrot.slane %v2319, 4
    %v2374 = vadd.f32 %v2319, %v2373
    %v2375 = vrot.slane %v2374, 2
    %v2376 = vadd.f32 %v2374, %v2375
    %v2377 = vrot.slane %v2376, 1
    %v2378 = vadd.f32 %v2376, %v2377
    %v2379 = vrot.slane %v2320, 4
    %v2380 = vadd.f32 %v2320, %v2379
    %v2381 = vrot.slane %v2380, 2
    %v2382 = vadd.f32 %v2380, %v2381
    %v2383 = vrot.slane %v2382, 1
    %v2384 = vadd.f32 %v2382, %v2383
    %v2385 = vadd.f32 %v2366, %v2378
    %v2386 = vadd.f32 %v2372, %v2384
    %2387 = vmatpush.msra.mxu0 %v2336
    %2388 = vmatpush.msra.mxu0 %v2335
    %2389 = vmatpush.msra.mxu0 %v2334
    %2390 = vmatpush.msra.mxu0 %v2333
    %2391 = vmatpush.msra.mxu0 %v2332
    %2392 = vmatpush.msra.mxu0 %v2331
    %2393 = vmatpush.msra.mxu0 %v2330
    %2394 = vmatpush.msra.mxu0 %v2329
    %2395 = vmatpush.msra.mxu0 %v2328
    %2396 = vmatpush.msra.mxu0 %v2327
    %2397 = vmatpush.msra.mxu0 %v2326
    %2398 = vmatpush.msra.mxu0 %v2325
    %2399 = vmatpush.msra.mxu0 %v2324
    %2400 = vmatpush.msra.mxu0 %v2323
    %2401 = vmatpush.msra.mxu0 %v2322
    %2402 = vmatpush.msra.mxu0 %v2321
    %2403 = vmatmul.f32.gmra.mxu0 %v2385
    %v2404 = vpop.f32.mrf.mxu0
    %v2405 = vadd.f32 0.0, %v2404
    %2406 = vdwg.mxu0
    %2407 = vmatpush.msra.mxu0 %v2352
    %2408 = vmatpush.msra.mxu0 %v2351
    %2409 = vmatpush.msra.mxu0 %v2350
    %2410 = vmatpush.msra.mxu0 %v2349
    %2411 = vmatpush.msra.mxu0 %v2348
    %2412 = vmatpush.msra.mxu0 %v2347
    %2413 = vmatpush.msra.mxu0 %v2346
    %2414 = vmatpush.msra.mxu0 %v2345
    %2415 = vmatpush.msra.mxu0 %v2344
    %2416 = vmatpush.msra.mxu0 %v2343
    %2417 = vmatpush.msra.mxu0 %v2342
    %2418 = vmatpush.msra.mxu0 %v2341
    %2419 = vmatpush.msra.mxu0 %v2340
    %2420 = vmatpush.msra.mxu0 %v2339
    %2421 = vmatpush.msra.mxu0 %v2338
    %2422 = vmatpush.msra.mxu0 %v2337
    %2423 = vmatmul.f32.gmra.mxu0 %v2386
    %v2424 = vpop.f32.mrf.mxu0
    %v2425 = vadd.f32 %v2405, %v2424
    %2426 = vdwg.mxu0
    %v2427 = vmul.f32 %v2425, 0.0078125
    %v2429 = vsel %vm152, %v2427, 0
    %2431 = vmatpush.msra.mxu0 0.0
    %2432 = vmatpush.msra.mxu0 0.0
    %2433 = vmatpush.msra.mxu0 0.0
    %2434 = vmatpush.msra.mxu0 0.0
    %2435 = vmatpush.msra.mxu0 0.0
    %2436 = vmatpush.msra.mxu0 0.0
    %2437 = vmatpush.msra.mxu0 0.0
    %2438 = vmatpush.msra.mxu0 0.0
    %2439 = vmatpush.msra.mxu0 0.0
    %2440 = vmatpush.msra.mxu0 0.0
    %2441 = vmatpush.msra.mxu0 0.0
    %2442 = vmatpush.msra.mxu0 0.0
    %2443 = vmatpush.msra.mxu0 %v2359
    %2444 = vmatpush.msra.mxu0 %v2357
    %2445 = vmatpush.msra.mxu0 %v2355
    %2446 = vmatpush.msra.mxu0 %v2353
    %2447 = vmatmul.f32.gmra.mxu0 %v2429
    %v2448 = vpop.f32.mrf.mxu0
    %v2449 = vadd.f32 0.0, %v2448
    %2450 = vdwg.mxu0
    %2451 = vmatpush.msra.mxu0 0.0
    %2452 = vmatpush.msra.mxu0 0.0
    %2453 = vmatpush.msra.mxu0 0.0
    %2454 = vmatpush.msra.mxu0 0.0
    %2455 = vmatpush.msra.mxu0 0.0
    %2456 = vmatpush.msra.mxu0 0.0
    %2457 = vmatpush.msra.mxu0 0.0
    %2458 = vmatpush.msra.mxu0 0.0
    %2459 = vmatpush.msra.mxu0 0.0
    %2460 = vmatpush.msra.mxu0 0.0
    %2461 = vmatpush.msra.mxu0 0.0
    %2462 = vmatpush.msra.mxu0 0.0
    %2463 = vmatpush.msra.mxu0 %v2360
    %2464 = vmatpush.msra.mxu0 %v2358
    %2465 = vmatpush.msra.mxu0 %v2356
    %2466 = vmatpush.msra.mxu0 %v2354
    %2467 = vmatmul.f32.gmra.mxu0 %v2429
    %v2468 = vpop.f32.mrf.mxu0
    %v2469 = vadd.f32 0.0, %v2468
    %2470 = vdwg.mxu0
    %v2471 = vperm.slane %v2449, 0
    %v2472 = vperm.slane %v2469, 0
    %v2473 = vsub.f32 %v1989, %v2471
    %v2474 = vsub.f32 %v1990, %v2472
    %v2475 = vmul.f32 %v2473, %v2473
    %v2476 = vmul.f32 %v2474, %v2474
    %v2477 = vrot.slane %v2475, 4
    %v2478 = vadd.f32 %v2475, %v2477
    %v2479 = vrot.slane %v2478, 2
    %v2480 = vadd.f32 %v2478, %v2479
    %v2481 = vrot.slane %v2480, 1
    %v2482 = vadd.f32 %v2480, %v2481
    %v2483 = vrot.slane %v2476, 4
    %v2484 = vadd.f32 %v2476, %v2483
    %v2485 = vrot.slane %v2484, 2
    %v2486 = vadd.f32 %v2484, %v2485
    %v2487 = vrot.slane %v2486, 1
    %v2488 = vadd.f32 %v2486, %v2487
    %v2489 = vsub.f32 %v2319, %v2471
    %v2490 = vsub.f32 %v2320, %v2472
    %v2491 = vmul.f32 %v2489, %v2489
    %v2492 = vmul.f32 %v2490, %v2490
    %v2493 = vrot.slane %v2491, 4
    %v2494 = vadd.f32 %v2491, %v2493
    %v2495 = vrot.slane %v2494, 2
    %v2496 = vadd.f32 %v2494, %v2495
    %v2497 = vrot.slane %v2496, 1
    %v2498 = vadd.f32 %v2496, %v2497
    %v2499 = vrot.slane %v2492, 4
    %v2500 = vadd.f32 %v2492, %v2499
    %v2501 = vrot.slane %v2500, 2
    %v2502 = vadd.f32 %v2500, %v2501
    %v2503 = vrot.slane %v2502, 1
    %v2504 = vadd.f32 %v2502, %v2503
    %v2505 = vadd.f32 %v2482, %v2498
    %v2506 = vadd.f32 %v2488, %v2504
    %2507 = vmatpush.msra.mxu0 %v2336
    %2508 = vmatpush.msra.mxu0 %v2335
    %2509 = vmatpush.msra.mxu0 %v2334
    %2510 = vmatpush.msra.mxu0 %v2333
    %2511 = vmatpush.msra.mxu0 %v2332
    %2512 = vmatpush.msra.mxu0 %v2331
    %2513 = vmatpush.msra.mxu0 %v2330
    %2514 = vmatpush.msra.mxu0 %v2329
    %2515 = vmatpush.msra.mxu0 %v2328
    %2516 = vmatpush.msra.mxu0 %v2327
    %2517 = vmatpush.msra.mxu0 %v2326
    %2518 = vmatpush.msra.mxu0 %v2325
    %2519 = vmatpush.msra.mxu0 %v2324
    %2520 = vmatpush.msra.mxu0 %v2323
    %2521 = vmatpush.msra.mxu0 %v2322
    %2522 = vmatpush.msra.mxu0 %v2321
    %2523 = vmatmul.f32.gmra.mxu0 %v2505
    %v2524 = vpop.f32.mrf.mxu0
    %v2525 = vadd.f32 0.0, %v2524
    %2526 = vdwg.mxu0
    %2527 = vmatpush.msra.mxu0 %v2352
    %2528 = vmatpush.msra.mxu0 %v2351
    %2529 = vmatpush.msra.mxu0 %v2350
    %2530 = vmatpush.msra.mxu0 %v2349
    %2531 = vmatpush.msra.mxu0 %v2348
    %2532 = vmatpush.msra.mxu0 %v2347
    %2533 = vmatpush.msra.mxu0 %v2346
    %2534 = vmatpush.msra.mxu0 %v2345
    %2535 = vmatpush.msra.mxu0 %v2344
    %2536 = vmatpush.msra.mxu0 %v2343
    %2537 = vmatpush.msra.mxu0 %v2342
    %2538 = vmatpush.msra.mxu0 %v2341
    %2539 = vmatpush.msra.mxu0 %v2340
    %2540 = vmatpush.msra.mxu0 %v2339
    %2541 = vmatpush.msra.mxu0 %v2338
    %2542 = vmatpush.msra.mxu0 %v2337
    %2543 = vmatmul.f32.gmra.mxu0 %v2506
    %v2544 = vpop.f32.mrf.mxu0
    %v2545 = vadd.f32 %v2525, %v2544
    %2546 = vdwg.mxu0
    %v2547 = vmul.f32 %v2545, 0.0078125
    %v2548 = vld [vmem:[%s9] sm:$0x1]
    %v2549 = vadd.f32 %v2547, 1e-05
    %v2550 = vrsqrt.pop %v2549
    %v2551 = vmul.f32 %v2550, %v2549
    %v2552 = vmul.f32 %v2551, %v2550
    %v2553 = vmul.f32 0.5, %v2552
    %v2554 = vsub.f32 1.5, %v2553
    %v2555 = vmul.f32 %v2550, %v2554
    %vm2556 = vweird.f32 %v2549
    %vm2557 = vweird.f32 %v2550
    %vm2558 = vmor %vm2556, %vm2557
    %v2559 = vsel %vm2558, %v2550, %v2555
    %v2560 = vmul.f32 %v2548, %v2559
    %v2562 = vsel %vm152, %v2560, 0
    %2564 = vmatpush.msra.mxu0 0.0
    %2565 = vmatpush.msra.mxu0 0.0
    %2566 = vmatpush.msra.mxu0 0.0
    %2567 = vmatpush.msra.mxu0 0.0
    %2568 = vmatpush.msra.mxu0 0.0
    %2569 = vmatpush.msra.mxu0 0.0
    %2570 = vmatpush.msra.mxu0 0.0
    %2571 = vmatpush.msra.mxu0 0.0
    %2572 = vmatpush.msra.mxu0 0.0
    %2573 = vmatpush.msra.mxu0 0.0
    %2574 = vmatpush.msra.mxu0 0.0
    %2575 = vmatpush.msra.mxu0 0.0
    %2576 = vmatpush.msra.mxu0 %v2359
    %2577 = vmatpush.msra.mxu0 %v2357
    %2578 = vmatpush.msra.mxu0 %v2355
    %2579 = vmatpush.msra.mxu0 %v2353
    %2580 = vmatmul.f32.gmra.mxu0 %v2562
    %v2581 = vpop.f32.mrf.mxu0
    %v2582 = vadd.f32 0.0, %v2581
    %2583 = vdwg.mxu0
    %2584 = vmatpush.msra.mxu0 0.0
    %2585 = vmatpush.msra.mxu0 0.0
    %2586 = vmatpush.msra.mxu0 0.0
    %2587 = vmatpush.msra.mxu0 0.0
    %2588 = vmatpush.msra.mxu0 0.0
    %2589 = vmatpush.msra.mxu0 0.0
    %2590 = vmatpush.msra.mxu0 0.0
    %2591 = vmatpush.msra.mxu0 0.0
    %2592 = vmatpush.msra.mxu0 0.0
    %2593 = vmatpush.msra.mxu0 0.0
    %2594 = vmatpush.msra.mxu0 0.0
    %2595 = vmatpush.msra.mxu0 0.0
    %2596 = vmatpush.msra.mxu0 %v2360
    %2597 = vmatpush.msra.mxu0 %v2358
    %2598 = vmatpush.msra.mxu0 %v2356
    %2599 = vmatpush.msra.mxu0 %v2354
    %2600 = vmatmul.f32.gmra.mxu0 %v2562
    %v2601 = vpop.f32.mrf.mxu0
    %v2602 = vadd.f32 0.0, %v2601
    %2603 = vdwg.mxu0
    %v2604 = vld [vmem:[%s10] sm:$0x1]
    %v2606 = vsel %vm152, %v2604, 0
    %2608 = vmatpush.msra.mxu0 0.0
    %2609 = vmatpush.msra.mxu0 0.0
    %2610 = vmatpush.msra.mxu0 0.0
    %2611 = vmatpush.msra.mxu0 0.0
    %2612 = vmatpush.msra.mxu0 0.0
    %2613 = vmatpush.msra.mxu0 0.0
    %2614 = vmatpush.msra.mxu0 0.0
    %2615 = vmatpush.msra.mxu0 0.0
    %2616 = vmatpush.msra.mxu0 0.0
    %2617 = vmatpush.msra.mxu0 0.0
    %2618 = vmatpush.msra.mxu0 0.0
    %2619 = vmatpush.msra.mxu0 0.0
    %2620 = vmatpush.msra.mxu0 %v2359
    %2621 = vmatpush.msra.mxu0 %v2357
    %2622 = vmatpush.msra.mxu0 %v2355
    %2623 = vmatpush.msra.mxu0 %v2353
    %2624 = vmatmul.f32.gmra.mxu0 %v2606
    %v2625 = vpop.f32.mrf.mxu0
    %v2626 = vadd.f32 0.0, %v2625
    %2627 = vdwg.mxu0
    %2628 = vmatpush.msra.mxu0 0.0
    %2629 = vmatpush.msra.mxu0 0.0
    %2630 = vmatpush.msra.mxu0 0.0
    %2631 = vmatpush.msra.mxu0 0.0
    %2632 = vmatpush.msra.mxu0 0.0
    %2633 = vmatpush.msra.mxu0 0.0
    %2634 = vmatpush.msra.mxu0 0.0
    %2635 = vmatpush.msra.mxu0 0.0
    %2636 = vmatpush.msra.mxu0 0.0
    %2637 = vmatpush.msra.mxu0 0.0
    %2638 = vmatpush.msra.mxu0 0.0
    %2639 = vmatpush.msra.mxu0 0.0
    %2640 = vmatpush.msra.mxu0 %v2360
    %2641 = vmatpush.msra.mxu0 %v2358
    %2642 = vmatpush.msra.mxu0 %v2356
    %2643 = vmatpush.msra.mxu0 %v2354
    %2644 = vmatmul.f32.gmra.mxu0 %v2606
    %v2645 = vpop.f32.mrf.mxu0
    %v2646 = vadd.f32 0.0, %v2645
    %2647 = vdwg.mxu0
    %v2648 = vperm.slane %v2582, 0
    %v2649 = vperm.slane %v2602, 0
    %v2650 = vmul.f32 %v2473, %v2648
    %v2651 = vmul.f32 %v2474, %v2649
    %v2652 = vperm.slane %v2626, 0
    %v2653 = vperm.slane %v2646, 0
    %v2654 = vadd.f32 %v2650, %v2652
    %v2655 = vadd.f32 %v2651, %v2653
    %v2656 = vmax.f32 %v2654, 0.0
    %v2657 = vmax.f32 %v2655, 0.0
    %v2658 = vpack.c.bf16 %v2656, %v2656
    %v2659 = vpack.c.bf16 %v2657, %v2657
    %v2660 = vmul.f32 %v2489, %v2648
    %v2661 = vmul.f32 %v2490, %v2649
    %v2662 = vadd.f32 %v2660, %v2652
    %v2663 = vadd.f32 %v2661, %v2653
    %v2664 = vmax.f32 %v2662, 0.0
    %v2665 = vmax.f32 %v2663, 0.0
    %v2666 = vpack.c.bf16 %v2664, %v2664
    %v2667 = vpack.c.bf16 %v2665, %v2665
    %v2668 = vld [vmem:[%s14] sm:$0xf]
    %v2669 = vld [vmem:[%s14 + $0x4] sm:$0xf]
    %v2672 = vunpack.c.l.b16 %v2668
    %v2673 = vunpack.c.l.b16 %v2669
    %v2674 = vpack.c.b16 %v2673, %v2672
    %vm2675 = vcmask 64512
    %v2677 = vsel %vm2675, %v2674, 0
    %v2680 = vsel %vm552, %v2658, 0
    %v2683 = vsel %vm552, %v2659, 0
    %2685 = vmatpush.bf16.msra.mxu0 0
    %2686 = vmatpush.bf16.msra.mxu0 0
    %2687 = vmatpush.bf16.msra.mxu0 0
    %2688 = vmatpush.bf16.msra.mxu0 0
    %2689 = vmatpush.bf16.msra.mxu0 0
    %2690 = vmatpush.bf16.msra.mxu0 0
    %2691 = vmatpush.bf16.msra.mxu0 0
    %2692 = vmatpush.bf16.msra.mxu0 %v2680
    %2693 = vmatmul.bf16.gmra.mxu0 %v2677
    %v2694 = vpop.f32.mrf.mxu0
    %v2695 = vadd.f32 0.0, %v2694
    %v2696 = vpop.f32.mrf.mxu0
    %v2697 = vadd.f32 0.0, %v2696
    %2698 = vdwg.mxu0
    %2699 = vmatpush.bf16.msra.mxu0 0
    %2700 = vmatpush.bf16.msra.mxu0 0
    %2701 = vmatpush.bf16.msra.mxu0 0
    %2702 = vmatpush.bf16.msra.mxu0 0
    %2703 = vmatpush.bf16.msra.mxu0 0
    %2704 = vmatpush.bf16.msra.mxu0 0
    %2705 = vmatpush.bf16.msra.mxu0 0
    %2706 = vmatpush.bf16.msra.mxu0 %v2683
    %2707 = vmatmul.bf16.gmra.mxu0 %v2677
    %v2708 = vpop.f32.mrf.mxu0
    %v2709 = vadd.f32 0.0, %v2708
    %v2710 = vpop.f32.mrf.mxu0
    %v2711 = vadd.f32 0.0, %v2710
    %2712 = vdwg.mxu0
    %v2713 = vpack.c.bf16 %v2697, %v2695
    %v2714 = vpack.c.bf16 %v2711, %v2709
    %v2715 = vld [vmem:[%s13] sm:$0xff]
    %v2716 = vld [vmem:[%s13 + $0x8] sm:$0xff]
    %v2717 = vld [vmem:[%s13 + $0x10] sm:$0xff]
    %v2718 = vld [vmem:[%s13 + $0x18] sm:$0xff]
    %v2719 = vld [vmem:[%s13 + $0x20] sm:$0xff]
    %v2720 = vld [vmem:[%s13 + $0x28] sm:$0xff]
    %v2721 = vld [vmem:[%s13 + $0x30] sm:$0xff]
    %v2722 = vld [vmem:[%s13 + $0x38] sm:$0xff]
    %v2723 = vld [vmem:[%s13 + $0x40] sm:$0xff]
    %v2724 = vld [vmem:[%s13 + $0x48] sm:$0xff]
    %v2725 = vld [vmem:[%s13 + $0x50] sm:$0xff]
    %v2726 = vld [vmem:[%s13 + $0x58] sm:$0xff]
    %v2727 = vld [vmem:[%s13 + $0x60] sm:$0xff]
    %v2728 = vld [vmem:[%s13 + $0x68] sm:$0xff]
    %v2729 = vld [vmem:[%s13 + $0x70] sm:$0xff]
    %v2730 = vld [vmem:[%s13 + $0x78] sm:$0xff]
    %v2731 = vld [vmem:[%s13 + $0x80] sm:$0xff]
    %v2732 = vld [vmem:[%s13 + $0x88] sm:$0xff]
    %v2733 = vld [vmem:[%s13 + $0x90] sm:$0xff]
    %v2734 = vld [vmem:[%s13 + $0x98] sm:$0xff]
    %v2735 = vld [vmem:[%s13 + $0xa0] sm:$0xff]
    %v2736 = vld [vmem:[%s13 + $0xa8] sm:$0xff]
    %v2737 = vld [vmem:[%s13 + $0xb0] sm:$0xff]
    %v2738 = vld [vmem:[%s13 + $0xb8] sm:$0xff]
    %v2739 = vld [vmem:[%s13 + $0xc0] sm:$0xff]
    %v2740 = vld [vmem:[%s13 + $0xc8] sm:$0xff]
    %v2741 = vld [vmem:[%s13 + $0xd0] sm:$0xff]
    %v2742 = vld [vmem:[%s13 + $0xd8] sm:$0xff]
    %v2743 = vld [vmem:[%s13 + $0xe0] sm:$0xff]
    %v2744 = vld [vmem:[%s13 + $0xe8] sm:$0xff]
    %v2745 = vld [vmem:[%s13 + $0xf0] sm:$0xff]
    %v2746 = vld [vmem:[%s13 + $0xf8] sm:$0xff]
    %s2747 = scalar_lea.vmem %s14, 8
    %v2748 = vld [vmem:[%s2747] sm:$0xf]
    %v2749 = vld [vmem:[%s2747 + $0x4] sm:$0xf]
    %v2752 = vunpack.c.l.b16 %v2748
    %v2753 = vunpack.c.l.b16 %v2749
    %v2754 = vpack.c.b16 %v2753, %v2752
    %v2756 = vsel %vm2675, %v2754, 0
    %2758 = vmatpush.bf16.msra.mxu0 0
    %2759 = vmatpush.bf16.msra.mxu0 0
    %2760 = vmatpush.bf16.msra.mxu0 0
    %2761 = vmatpush.bf16.msra.mxu0 0
    %2762 = vmatpush.bf16.msra.mxu0 0
    %2763 = vmatpush.bf16.msra.mxu0 0
    %2764 = vmatpush.bf16.msra.mxu0 0
    %2765 = vmatpush.bf16.msra.mxu0 %v2680
    %2766 = vmatmul.bf16.gmra.mxu0 %v2756
    %v2767 = vpop.f32.mrf.mxu0
    %v2768 = vadd.f32 0.0, %v2767
    %v2769 = vpop.f32.mrf.mxu0
    %v2770 = vadd.f32 0.0, %v2769
    %2771 = vdwg.mxu0
    %2772 = vmatpush.bf16.msra.mxu0 0
    %2773 = vmatpush.bf16.msra.mxu0 0
    %2774 = vmatpush.bf16.msra.mxu0 0
    %2775 = vmatpush.bf16.msra.mxu0 0
    %2776 = vmatpush.bf16.msra.mxu0 0
    %2777 = vmatpush.bf16.msra.mxu0 0
    %2778 = vmatpush.bf16.msra.mxu0 0
    %2779 = vmatpush.bf16.msra.mxu0 %v2683
    %2780 = vmatmul.bf16.gmra.mxu0 %v2756
    %v2781 = vpop.f32.mrf.mxu0
    %v2782 = vadd.f32 0.0, %v2781
    %v2783 = vpop.f32.mrf.mxu0
    %v2784 = vadd.f32 0.0, %v2783
    %2785 = vdwg.mxu0
    %v2786 = vpack.c.bf16 %v2770, %v2768
    %v2787 = vpack.c.bf16 %v2784, %v2782
    %s2788 = scalar_lea.vmem %s13, 256
    %v2789 = vld [vmem:[%s2788] sm:$0xff]
    %v2790 = vld [vmem:[%s2788 + $0x8] sm:$0xff]
    %v2791 = vld [vmem:[%s2788 + $0x10] sm:$0xff]
    %v2792 = vld [vmem:[%s2788 + $0x18] sm:$0xff]
    %v2793 = vld [vmem:[%s2788 + $0x20] sm:$0xff]
    %v2794 = vld [vmem:[%s2788 + $0x28] sm:$0xff]
    %v2795 = vld [vmem:[%s2788 + $0x30] sm:$0xff]
    %v2796 = vld [vmem:[%s2788 + $0x38] sm:$0xff]
    %v2797 = vld [vmem:[%s2788 + $0x40] sm:$0xff]
    %v2798 = vld [vmem:[%s2788 + $0x48] sm:$0xff]
    %v2799 = vld [vmem:[%s2788 + $0x50] sm:$0xff]
    %v2800 = vld [vmem:[%s2788 + $0x58] sm:$0xff]
    %v2801 = vld [vmem:[%s2788 + $0x60] sm:$0xff]
    %v2802 = vld [vmem:[%s2788 + $0x68] sm:$0xff]
    %v2803 = vld [vmem:[%s2788 + $0x70] sm:$0xff]
    %v2804 = vld [vmem:[%s2788 + $0x78] sm:$0xff]
    %v2805 = vld [vmem:[%s2788 + $0x80] sm:$0xff]
    %v2806 = vld [vmem:[%s2788 + $0x88] sm:$0xff]
    %v2807 = vld [vmem:[%s2788 + $0x90] sm:$0xff]
    %v2808 = vld [vmem:[%s2788 + $0x98] sm:$0xff]
    %v2809 = vld [vmem:[%s2788 + $0xa0] sm:$0xff]
    %v2810 = vld [vmem:[%s2788 + $0xa8] sm:$0xff]
    %v2811 = vld [vmem:[%s2788 + $0xb0] sm:$0xff]
    %v2812 = vld [vmem:[%s2788 + $0xb8] sm:$0xff]
    %v2813 = vld [vmem:[%s2788 + $0xc0] sm:$0xff]
    %v2814 = vld [vmem:[%s2788 + $0xc8] sm:$0xff]
    %v2815 = vld [vmem:[%s2788 + $0xd0] sm:$0xff]
    %v2816 = vld [vmem:[%s2788 + $0xd8] sm:$0xff]
    %v2817 = vld [vmem:[%s2788 + $0xe0] sm:$0xff]
    %v2818 = vld [vmem:[%s2788 + $0xe8] sm:$0xff]
    %v2819 = vld [vmem:[%s2788 + $0xf0] sm:$0xff]
    %v2820 = vld [vmem:[%s2788 + $0xf8] sm:$0xff]
    %v2853 = vunpack.c.l.b16 %v2789
    %v2854 = vunpack.c.h.b16 %v2789
    %v2855 = vunpack.c.l.b16 %v2790
    %v2856 = vunpack.c.h.b16 %v2790
    %v2857 = vunpack.c.l.b16 %v2791
    %v2858 = vunpack.c.h.b16 %v2791
    %v2859 = vunpack.c.l.b16 %v2792
    %v2860 = vunpack.c.h.b16 %v2792
    %v2861 = vunpack.c.l.b16 %v2793
    %v2862 = vunpack.c.h.b16 %v2793
    %v2863 = vunpack.c.l.b16 %v2794
    %v2864 = vunpack.c.h.b16 %v2794
    %v2865 = vunpack.c.l.b16 %v2795
    %v2866 = vunpack.c.h.b16 %v2795
    %v2867 = vunpack.c.l.b16 %v2796
    %v2868 = vunpack.c.h.b16 %v2796
    %v2869 = vunpack.c.l.b16 %v2797
    %v2870 = vunpack.c.h.b16 %v2797
    %v2871 = vunpack.c.l.b16 %v2798
    %v2872 = vunpack.c.h.b16 %v2798
    %v2873 = vunpack.c.l.b16 %v2799
    %v2874 = vunpack.c.h.b16 %v2799
    %v2875 = vunpack.c.l.b16 %v2800
    %v2876 = vunpack.c.h.b16 %v2800
    %v2877 = vunpack.c.l.b16 %v2801
    %v2878 = vunpack.c.h.b16 %v2801
    %v2879 = vunpack.c.l.b16 %v2802
    %v2880 = vunpack.c.h.b16 %v2802
    %v2881 = vunpack.c.l.b16 %v2803
    %v2882 = vunpack.c.h.b16 %v2803
    %v2883 = vunpack.c.l.b16 %v2804
    %v2884 = vunpack.c.h.b16 %v2804
    %v2885 = vunpack.c.l.b16 %v2805
    %v2886 = vunpack.c.h.b16 %v2805
    %v2887 = vunpack.c.l.b16 %v2806
    %v2888 = vunpack.c.h.b16 %v2806
    %v2889 = vunpack.c.l.b16 %v2807
    %v2890 = vunpack.c.h.b16 %v2807
    %v2891 = vunpack.c.l.b16 %v2808
    %v2892 = vunpack.c.h.b16 %v2808
    %v2893 = vunpack.c.l.b16 %v2809
    %v2894 = vunpack.c.h.b16 %v2809
    %v2895 = vunpack.c.l.b16 %v2810
    %v2896 = vunpack.c.h.b16 %v2810
    %v2897 = vunpack.c.l.b16 %v2811
    %v2898 = vunpack.c.h.b16 %v2811
    %v2899 = vunpack.c.l.b16 %v2812
    %v2900 = vunpack.c.h.b16 %v2812
    %v2901 = vunpack.c.l.b16 %v2813
    %v2902 = vunpack.c.h.b16 %v2813
    %v2903 = vunpack.c.l.b16 %v2814
    %v2904 = vunpack.c.h.b16 %v2814
    %v2905 = vunpack.c.l.b16 %v2815
    %v2906 = vunpack.c.h.b16 %v2815
    %v2907 = vunpack.c.l.b16 %v2816
    %v2908 = vunpack.c.h.b16 %v2816
    %v2909 = vunpack.c.l.b16 %v2817
    %v2910 = vunpack.c.h.b16 %v2817
    %v2911 = vunpack.c.l.b16 %v2818
    %v2912 = vunpack.c.h.b16 %v2818
    %v2913 = vunpack.c.l.b16 %v2819
    %v2914 = vunpack.c.h.b16 %v2819
    %v2915 = vunpack.c.l.b16 %v2820
    %v2916 = vunpack.c.h.b16 %v2820
    %v2917 = vpack.c.b16 %v2855, %v2853
    %v2918 = vpack.c.b16 %v2856, %v2854
    %v2919 = vpack.c.b16 %v2859, %v2857
    %v2920 = vpack.c.b16 %v2860, %v2858
    %v2921 = vpack.c.b16 %v2863, %v2861
    %v2922 = vpack.c.b16 %v2864, %v2862
    %v2923 = vpack.c.b16 %v2867, %v2865
    %v2924 = vpack.c.b16 %v2868, %v2866
    %v2925 = vpack.c.b16 %v2871, %v2869
    %v2926 = vpack.c.b16 %v2872, %v2870
    %v2927 = vpack.c.b16 %v2875, %v2873
    %v2928 = vpack.c.b16 %v2876, %v2874
    %v2929 = vpack.c.b16 %v2879, %v2877
    %v2930 = vpack.c.b16 %v2880, %v2878
    %v2931 = vpack.c.b16 %v2883, %v2881
    %v2932 = vpack.c.b16 %v2884, %v2882
    %v2933 = vpack.c.b16 %v2887, %v2885
    %v2934 = vpack.c.b16 %v2888, %v2886
    %v2935 = vpack.c.b16 %v2891, %v2889
    %v2936 = vpack.c.b16 %v2892, %v2890
    %v2937 = vpack.c.b16 %v2895, %v2893
    %v2938 = vpack.c.b16 %v2896, %v2894
    %v2939 = vpack.c.b16 %v2899, %v2897
    %v2940 = vpack.c.b16 %v2900, %v2898
    %v2941 = vpack.c.b16 %v2903, %v2901
    %v2942 = vpack.c.b16 %v2904, %v2902
    %v2943 = vpack.c.b16 %v2907, %v2905
    %v2944 = vpack.c.b16 %v2908, %v2906
    %v2945 = vpack.c.b16 %v2911, %v2909
    %v2946 = vpack.c.b16 %v2912, %v2910
    %v2947 = vpack.c.b16 %v2915, %v2913
    %v2948 = vpack.c.b16 %v2916, %v2914
    %2981 = vmatpush.bf16.msra.mxu0 %v2931
    %2982 = vmatpush.bf16.msra.mxu0 %v2929
    %2983 = vmatpush.bf16.msra.mxu0 %v2927
    %2984 = vmatpush.bf16.msra.mxu0 %v2925
    %2985 = vmatpush.bf16.msra.mxu0 %v2923
    %2986 = vmatpush.bf16.msra.mxu0 %v2921
    %2987 = vmatpush.bf16.msra.mxu0 %v2919
    %2988 = vmatpush.bf16.msra.mxu0 %v2917
    %2989 = vmatmul.bf16.gmra.mxu0 %v2786
    %v2990 = vpop.f32.mrf.mxu0
    %v2991 = vadd.f32 0.0, %v2990
    %v2992 = vpop.f32.mrf.mxu0
    %v2993 = vadd.f32 0.0, %v2992
    %2994 = vdwg.mxu0
    %2995 = vmatpush.bf16.msra.mxu0 %v2947
    %2996 = vmatpush.bf16.msra.mxu0 %v2945
    %2997 = vmatpush.bf16.msra.mxu0 %v2943
    %2998 = vmatpush.bf16.msra.mxu0 %v2941
    %2999 = vmatpush.bf16.msra.mxu0 %v2939
    %3000 = vmatpush.bf16.msra.mxu0 %v2937
    %3001 = vmatpush.bf16.msra.mxu0 %v2935
    %3002 = vmatpush.bf16.msra.mxu0 %v2933
    %3003 = vmatmul.bf16.gmra.mxu0 %v2787
    %v3004 = vpop.f32.mrf.mxu0
    %v3005 = vadd.f32 %v2991, %v3004
    %v3006 = vpop.f32.mrf.mxu0
    %v3007 = vadd.f32 %v2993, %v3006
    %3008 = vdwg.mxu0
    %3009 = vmatpush.bf16.msra.mxu0 %v2932
    %3010 = vmatpush.bf16.msra.mxu0 %v2930
    %3011 = vmatpush.bf16.msra.mxu0 %v2928
    %3012 = vmatpush.bf16.msra.mxu0 %v2926
    %3013 = vmatpush.bf16.msra.mxu0 %v2924
    %3014 = vmatpush.bf16.msra.mxu0 %v2922
    %3015 = vmatpush.bf16.msra.mxu0 %v2920
    %3016 = vmatpush.bf16.msra.mxu0 %v2918
    %3017 = vmatmul.bf16.gmra.mxu0 %v2786
    %v3018 = vpop.f32.mrf.mxu0
    %v3019 = vadd.f32 0.0, %v3018
    %v3020 = vpop.f32.mrf.mxu0
    %v3021 = vadd.f32 0.0, %v3020
    %3022 = vdwg.mxu0
    %3023 = vmatpush.bf16.msra.mxu0 %v2948
    %3024 = vmatpush.bf16.msra.mxu0 %v2946
    %3025 = vmatpush.bf16.msra.mxu0 %v2944
    %3026 = vmatpush.bf16.msra.mxu0 %v2942
    %3027 = vmatpush.bf16.msra.mxu0 %v2940
    %3028 = vmatpush.bf16.msra.mxu0 %v2938
    %3029 = vmatpush.bf16.msra.mxu0 %v2936
    %3030 = vmatpush.bf16.msra.mxu0 %v2934
    %3031 = vmatmul.bf16.gmra.mxu0 %v2787
    %v3032 = vpop.f32.mrf.mxu0
    %v3033 = vadd.f32 %v3019, %v3032
    %v3034 = vpop.f32.mrf.mxu0
    %v3035 = vadd.f32 %v3021, %v3034
    %3036 = vdwg.mxu0
    %v3069 = vunpack.c.l.b16 %v2715
    %v3070 = vunpack.c.h.b16 %v2715
    %v3071 = vunpack.c.l.b16 %v2716
    %v3072 = vunpack.c.h.b16 %v2716
    %v3073 = vunpack.c.l.b16 %v2717
    %v3074 = vunpack.c.h.b16 %v2717
    %v3075 = vunpack.c.l.b16 %v2718
    %v3076 = vunpack.c.h.b16 %v2718
    %v3077 = vunpack.c.l.b16 %v2719
    %v3078 = vunpack.c.h.b16 %v2719
    %v3079 = vunpack.c.l.b16 %v2720
    %v3080 = vunpack.c.h.b16 %v2720
    %v3081 = vunpack.c.l.b16 %v2721
    %v3082 = vunpack.c.h.b16 %v2721
    %v3083 = vunpack.c.l.b16 %v2722
    %v3084 = vunpack.c.h.b16 %v2722
    %v3085 = vunpack.c.l.b16 %v2723
    %v3086 = vunpack.c.h.b16 %v2723
    %v3087 = vunpack.c.l.b16 %v2724
    %v3088 = vunpack.c.h.b16 %v2724
    %v3089 = vunpack.c.l.b16 %v2725
    %v3090 = vunpack.c.h.b16 %v2725
    %v3091 = vunpack.c.l.b16 %v2726
    %v3092 = vunpack.c.h.b16 %v2726
    %v3093 = vunpack.c.l.b16 %v2727
    %v3094 = vunpack.c.h.b16 %v2727
    %v3095 = vunpack.c.l.b16 %v2728
    %v3096 = vunpack.c.h.b16 %v2728
    %v3097 = vunpack.c.l.b16 %v2729
    %v3098 = vunpack.c.h.b16 %v2729
    %v3099 = vunpack.c.l.b16 %v2730
    %v3100 = vunpack.c.h.b16 %v2730
    %v3101 = vunpack.c.l.b16 %v2731
    %v3102 = vunpack.c.h.b16 %v2731
    %v3103 = vunpack.c.l.b16 %v2732
    %v3104 = vunpack.c.h.b16 %v2732
    %v3105 = vunpack.c.l.b16 %v2733
    %v3106 = vunpack.c.h.b16 %v2733
    %v3107 = vunpack.c.l.b16 %v2734
    %v3108 = vunpack.c.h.b16 %v2734
    %v3109 = vunpack.c.l.b16 %v2735
    %v3110 = vunpack.c.h.b16 %v2735
    %v3111 = vunpack.c.l.b16 %v2736
    %v3112 = vunpack.c.h.b16 %v2736
    %v3113 = vunpack.c.l.b16 %v2737
    %v3114 = vunpack.c.h.b16 %v2737
    %v3115 = vunpack.c.l.b16 %v2738
    %v3116 = vunpack.c.h.b16 %v2738
    %v3117 = vunpack.c.l.b16 %v2739
    %v3118 = vunpack.c.h.b16 %v2739
    %v3119 = vunpack.c.l.b16 %v2740
    %v3120 = vunpack.c.h.b16 %v2740
    %v3121 = vunpack.c.l.b16 %v2741
    %v3122 = vunpack.c.h.b16 %v2741
    %v3123 = vunpack.c.l.b16 %v2742
    %v3124 = vunpack.c.h.b16 %v2742
    %v3125 = vunpack.c.l.b16 %v2743
    %v3126 = vunpack.c.h.b16 %v2743
    %v3127 = vunpack.c.l.b16 %v2744
    %v3128 = vunpack.c.h.b16 %v2744
    %v3129 = vunpack.c.l.b16 %v2745
    %v3130 = vunpack.c.h.b16 %v2745
    %v3131 = vunpack.c.l.b16 %v2746
    %v3132 = vunpack.c.h.b16 %v2746
    %v3133 = vpack.c.b16 %v3071, %v3069
    %v3134 = vpack.c.b16 %v3072, %v3070
    %v3135 = vpack.c.b16 %v3075, %v3073
    %v3136 = vpack.c.b16 %v3076, %v3074
    %v3137 = vpack.c.b16 %v3079, %v3077
    %v3138 = vpack.c.b16 %v3080, %v3078
    %v3139 = vpack.c.b16 %v3083, %v3081
    %v3140 = vpack.c.b16 %v3084, %v3082
    %v3141 = vpack.c.b16 %v3087, %v3085
    %v3142 = vpack.c.b16 %v3088, %v3086
    %v3143 = vpack.c.b16 %v3091, %v3089
    %v3144 = vpack.c.b16 %v3092, %v3090
    %v3145 = vpack.c.b16 %v3095, %v3093
    %v3146 = vpack.c.b16 %v3096, %v3094
    %v3147 = vpack.c.b16 %v3099, %v3097
    %v3148 = vpack.c.b16 %v3100, %v3098
    %v3149 = vpack.c.b16 %v3103, %v3101
    %v3150 = vpack.c.b16 %v3104, %v3102
    %v3151 = vpack.c.b16 %v3107, %v3105
    %v3152 = vpack.c.b16 %v3108, %v3106
    %v3153 = vpack.c.b16 %v3111, %v3109
    %v3154 = vpack.c.b16 %v3112, %v3110
    %v3155 = vpack.c.b16 %v3115, %v3113
    %v3156 = vpack.c.b16 %v3116, %v3114
    %v3157 = vpack.c.b16 %v3119, %v3117
    %v3158 = vpack.c.b16 %v3120, %v3118
    %v3159 = vpack.c.b16 %v3123, %v3121
    %v3160 = vpack.c.b16 %v3124, %v3122
    %v3161 = vpack.c.b16 %v3127, %v3125
    %v3162 = vpack.c.b16 %v3128, %v3126
    %v3163 = vpack.c.b16 %v3131, %v3129
    %v3164 = vpack.c.b16 %v3132, %v3130
    %3197 = vmatpush.bf16.msra.mxu0 %v3147
    %3198 = vmatpush.bf16.msra.mxu0 %v3145
    %3199 = vmatpush.bf16.msra.mxu0 %v3143
    %3200 = vmatpush.bf16.msra.mxu0 %v3141
    %3201 = vmatpush.bf16.msra.mxu0 %v3139
    %3202 = vmatpush.bf16.msra.mxu0 %v3137
    %3203 = vmatpush.bf16.msra.mxu0 %v3135
    %3204 = vmatpush.bf16.msra.mxu0 %v3133
    %3205 = vmatmul.bf16.gmra.mxu0 %v2713
    %v3206 = vpop.f32.mrf.mxu0
    %v3207 = vadd.f32 %v3005, %v3206
    %v3208 = vpop.f32.mrf.mxu0
    %v3209 = vadd.f32 %v3007, %v3208
    %3210 = vdwg.mxu0
    %3211 = vmatpush.bf16.msra.mxu0 %v3163
    %3212 = vmatpush.bf16.msra.mxu0 %v3161
    %3213 = vmatpush.bf16.msra.mxu0 %v3159
    %3214 = vmatpush.bf16.msra.mxu0 %v3157
    %3215 = vmatpush.bf16.msra.mxu0 %v3155
    %3216 = vmatpush.bf16.msra.mxu0 %v3153
    %3217 = vmatpush.bf16.msra.mxu0 %v3151
    %3218 = vmatpush.bf16.msra.mxu0 %v3149
    %3219 = vmatmul.bf16.gmra.mxu0 %v2714
    %v3220 = vpop.f32.mrf.mxu0
    %v3221 = vadd.f32 %v3207, %v3220
    %v3222 = vpop.f32.mrf.mxu0
    %v3223 = vadd.f32 %v3209, %v3222
    %3224 = vdwg.mxu0
    %3225 = vmatpush.bf16.msra.mxu0 %v3148
    %3226 = vmatpush.bf16.msra.mxu0 %v3146
    %3227 = vmatpush.bf16.msra.mxu0 %v3144
    %3228 = vmatpush.bf16.msra.mxu0 %v3142
    %3229 = vmatpush.bf16.msra.mxu0 %v3140
    %3230 = vmatpush.bf16.msra.mxu0 %v3138
    %3231 = vmatpush.bf16.msra.mxu0 %v3136
    %3232 = vmatpush.bf16.msra.mxu0 %v3134
    %3233 = vmatmul.bf16.gmra.mxu0 %v2713
    %v3234 = vpop.f32.mrf.mxu0
    %v3235 = vadd.f32 %v3033, %v3234
    %v3236 = vpop.f32.mrf.mxu0
    %v3237 = vadd.f32 %v3035, %v3236
    %3238 = vdwg.mxu0
    %3239 = vmatpush.bf16.msra.mxu0 %v3164
    %3240 = vmatpush.bf16.msra.mxu0 %v3162
    %3241 = vmatpush.bf16.msra.mxu0 %v3160
    %3242 = vmatpush.bf16.msra.mxu0 %v3158
    %3243 = vmatpush.bf16.msra.mxu0 %v3156
    %3244 = vmatpush.bf16.msra.mxu0 %v3154
    %3245 = vmatpush.bf16.msra.mxu0 %v3152
    %3246 = vmatpush.bf16.msra.mxu0 %v3150
    %3247 = vmatmul.bf16.gmra.mxu0 %v2714
    %v3248 = vpop.f32.mrf.mxu0
    %v3249 = vadd.f32 %v3235, %v3248
    %v3250 = vpop.f32.mrf.mxu0
    %v3251 = vadd.f32 %v3237, %v3250
    %3252 = vdwg.mxu0
    %s3253 = scalar_lea.vmem %s14, 16
    %v3254 = vld [vmem:[%s3253] sm:$0xf]
    %v3255 = vld [vmem:[%s3253 + $0x4] sm:$0xf]
    %v3258 = vunpack.c.l.b16 %v3254
    %v3259 = vunpack.c.l.b16 %v3255
    %v3260 = vpack.c.b16 %v3259, %v3258
    %v3262 = vsel %vm2675, %v3260, 0
    %3264 = vmatpush.bf16.msra.mxu0 0
    %3265 = vmatpush.bf16.msra.mxu0 0
    %3266 = vmatpush.bf16.msra.mxu0 0
    %3267 = vmatpush.bf16.msra.mxu0 0
    %3268 = vmatpush.bf16.msra.mxu0 0
    %3269 = vmatpush.bf16.msra.mxu0 0
    %3270 = vmatpush.bf16.msra.mxu0 0
    %3271 = vmatpush.bf16.msra.mxu0 %v2680
    %3272 = vmatmul.bf16.gmra.mxu0 %v3262
    %v3273 = vpop.f32.mrf.mxu0
    %v3274 = vadd.f32 0.0, %v3273
    %v3275 = vpop.f32.mrf.mxu0
    %v3276 = vadd.f32 0.0, %v3275
    %3277 = vdwg.mxu0
    %3278 = vmatpush.bf16.msra.mxu0 0
    %3279 = vmatpush.bf16.msra.mxu0 0
    %3280 = vmatpush.bf16.msra.mxu0 0
    %3281 = vmatpush.bf16.msra.mxu0 0
    %3282 = vmatpush.bf16.msra.mxu0 0
    %3283 = vmatpush.bf16.msra.mxu0 0
    %3284 = vmatpush.bf16.msra.mxu0 0
    %3285 = vmatpush.bf16.msra.mxu0 %v2683
    %3286 = vmatmul.bf16.gmra.mxu0 %v3262
    %v3287 = vpop.f32.mrf.mxu0
    %v3288 = vadd.f32 0.0, %v3287
    %v3289 = vpop.f32.mrf.mxu0
    %v3290 = vadd.f32 0.0, %v3289
    %3291 = vdwg.mxu0
    %v3292 = vpack.c.bf16 %v3276, %v3274
    %v3293 = vpack.c.bf16 %v3290, %v3288
    %s3294 = scalar_lea.vmem %s13, 512
    %v3295 = vld [vmem:[%s3294] sm:$0xff]
    %v3296 = vld [vmem:[%s3294 + $0x8] sm:$0xff]
    %v3297 = vld [vmem:[%s3294 + $0x10] sm:$0xff]
    %v3298 = vld [vmem:[%s3294 + $0x18] sm:$0xff]
    %v3299 = vld [vmem:[%s3294 + $0x20] sm:$0xff]
    %v3300 = vld [vmem:[%s3294 + $0x28] sm:$0xff]
    %v3301 = vld [vmem:[%s3294 + $0x30] sm:$0xff]
    %v3302 = vld [vmem:[%s3294 + $0x38] sm:$0xff]
    %v3303 = vld [vmem:[%s3294 + $0x40] sm:$0xff]
    %v3304 = vld [vmem:[%s3294 + $0x48] sm:$0xff]
    %v3305 = vld [vmem:[%s3294 + $0x50] sm:$0xff]
    %v3306 = vld [vmem:[%s3294 + $0x58] sm:$0xff]
    %v3307 = vld [vmem:[%s3294 + $0x60] sm:$0xff]
    %v3308 = vld [vmem:[%s3294 + $0x68] sm:$0xff]
    %v3309 = vld [vmem:[%s3294 + $0x70] sm:$0xff]
    %v3310 = vld [vmem:[%s3294 + $0x78] sm:$0xff]
    %v3311 = vld [vmem:[%s3294 + $0x80] sm:$0xff]
    %v3312 = vld [vmem:[%s3294 + $0x88] sm:$0xff]
    %v3313 = vld [vmem:[%s3294 + $0x90] sm:$0xff]
    %v3314 = vld [vmem:[%s3294 + $0x98] sm:$0xff]
    %v3315 = vld [vmem:[%s3294 + $0xa0] sm:$0xff]
    %v3316 = vld [vmem:[%s3294 + $0xa8] sm:$0xff]
    %v3317 = vld [vmem:[%s3294 + $0xb0] sm:$0xff]
    %v3318 = vld [vmem:[%s3294 + $0xb8] sm:$0xff]
    %v3319 = vld [vmem:[%s3294 + $0xc0] sm:$0xff]
    %v3320 = vld [vmem:[%s3294 + $0xc8] sm:$0xff]
    %v3321 = vld [vmem:[%s3294 + $0xd0] sm:$0xff]
    %v3322 = vld [vmem:[%s3294 + $0xd8] sm:$0xff]
    %v3323 = vld [vmem:[%s3294 + $0xe0] sm:$0xff]
    %v3324 = vld [vmem:[%s3294 + $0xe8] sm:$0xff]
    %v3325 = vld [vmem:[%s3294 + $0xf0] sm:$0xff]
    %v3326 = vld [vmem:[%s3294 + $0xf8] sm:$0xff]
    %v3359 = vunpack.c.l.b16 %v3295
    %v3360 = vunpack.c.h.b16 %v3295
    %v3361 = vunpack.c.l.b16 %v3296
    %v3362 = vunpack.c.h.b16 %v3296
    %v3363 = vunpack.c.l.b16 %v3297
    %v3364 = vunpack.c.h.b16 %v3297
    %v3365 = vunpack.c.l.b16 %v3298
    %v3366 = vunpack.c.h.b16 %v3298
    %v3367 = vunpack.c.l.b16 %v3299
    %v3368 = vunpack.c.h.b16 %v3299
    %v3369 = vunpack.c.l.b16 %v3300
    %v3370 = vunpack.c.h.b16 %v3300
    %v3371 = vunpack.c.l.b16 %v3301
    %v3372 = vunpack.c.h.b16 %v3301
    %v3373 = vunpack.c.l.b16 %v3302
    %v3374 = vunpack.c.h.b16 %v3302
    %v3375 = vunpack.c.l.b16 %v3303
    %v3376 = vunpack.c.h.b16 %v3303
    %v3377 = vunpack.c.l.b16 %v3304
    %v3378 = vunpack.c.h.b16 %v3304
    %v3379 = vunpack.c.l.b16 %v3305
    %v3380 = vunpack.c.h.b16 %v3305
    %v3381 = vunpack.c.l.b16 %v3306
    %v3382 = vunpack.c.h.b16 %v3306
    %v3383 = vunpack.c.l.b16 %v3307
    %v3384 = vunpack.c.h.b16 %v3307
    %v3385 = vunpack.c.l.b16 %v3308
    %v3386 = vunpack.c.h.b16 %v3308
    %v3387 = vunpack.c.l.b16 %v3309
    %v3388 = vunpack.c.h.b16 %v3309
    %v3389 = vunpack.c.l.b16 %v3310
    %v3390 = vunpack.c.h.b16 %v3310
    %v3391 = vunpack.c.l.b16 %v3311
    %v3392 = vunpack.c.h.b16 %v3311
    %v3393 = vunpack.c.l.b16 %v3312
    %v3394 = vunpack.c.h.b16 %v3312
    %v3395 = vunpack.c.l.b16 %v3313
    %v3396 = vunpack.c.h.b16 %v3313
    %v3397 = vunpack.c.l.b16 %v3314
    %v3398 = vunpack.c.h.b16 %v3314
    %v3399 = vunpack.c.l.b16 %v3315
    %v3400 = vunpack.c.h.b16 %v3315
    %v3401 = vunpack.c.l.b16 %v3316
    %v3402 = vunpack.c.h.b16 %v3316
    %v3403 = vunpack.c.l.b16 %v3317
    %v3404 = vunpack.c.h.b16 %v3317
    %v3405 = vunpack.c.l.b16 %v3318
    %v3406 = vunpack.c.h.b16 %v3318
    %v3407 = vunpack.c.l.b16 %v3319
    %v3408 = vunpack.c.h.b16 %v3319
    %v3409 = vunpack.c.l.b16 %v3320
    %v3410 = vunpack.c.h.b16 %v3320
    %v3411 = vunpack.c.l.b16 %v3321
    %v3412 = vunpack.c.h.b16 %v3321
    %v3413 = vunpack.c.l.b16 %v3322
    %v3414 = vunpack.c.h.b16 %v3322
    %v3415 = vunpack.c.l.b16 %v3323
    %v3416 = vunpack.c.h.b16 %v3323
    %v3417 = vunpack.c.l.b16 %v3324
    %v3418 = vunpack.c.h.b16 %v3324
    %v3419 = vunpack.c.l.b16 %v3325
    %v3420 = vunpack.c.h.b16 %v3325
    %v3421 = vunpack.c.l.b16 %v3326
    %v3422 = vunpack.c.h.b16 %v3326
    %v3423 = vpack.c.b16 %v3361, %v3359
    %v3424 = vpack.c.b16 %v3362, %v3360
    %v3425 = vpack.c.b16 %v3365, %v3363
    %v3426 = vpack.c.b16 %v3366, %v3364
    %v3427 = vpack.c.b16 %v3369, %v3367
    %v3428 = vpack.c.b16 %v3370, %v3368
    %v3429 = vpack.c.b16 %v3373, %v3371
    %v3430 = vpack.c.b16 %v3374, %v3372
    %v3431 = vpack.c.b16 %v3377, %v3375
    %v3432 = vpack.c.b16 %v3378, %v3376
    %v3433 = vpack.c.b16 %v3381, %v3379
    %v3434 = vpack.c.b16 %v3382, %v3380
    %v3435 = vpack.c.b16 %v3385, %v3383
    %v3436 = vpack.c.b16 %v3386, %v3384
    %v3437 = vpack.c.b16 %v3389, %v3387
    %v3438 = vpack.c.b16 %v3390, %v3388
    %v3439 = vpack.c.b16 %v3393, %v3391
    %v3440 = vpack.c.b16 %v3394, %v3392
    %v3441 = vpack.c.b16 %v3397, %v3395
    %v3442 = vpack.c.b16 %v3398, %v3396
    %v3443 = vpack.c.b16 %v3401, %v3399
    %v3444 = vpack.c.b16 %v3402, %v3400
    %v3445 = vpack.c.b16 %v3405, %v3403
    %v3446 = vpack.c.b16 %v3406, %v3404
    %v3447 = vpack.c.b16 %v3409, %v3407
    %v3448 = vpack.c.b16 %v3410, %v3408
    %v3449 = vpack.c.b16 %v3413, %v3411
    %v3450 = vpack.c.b16 %v3414, %v3412
    %v3451 = vpack.c.b16 %v3417, %v3415
    %v3452 = vpack.c.b16 %v3418, %v3416
    %v3453 = vpack.c.b16 %v3421, %v3419
    %v3454 = vpack.c.b16 %v3422, %v3420
    %3487 = vmatpush.bf16.msra.mxu0 %v3437
    %3488 = vmatpush.bf16.msra.mxu0 %v3435
    %3489 = vmatpush.bf16.msra.mxu0 %v3433
    %3490 = vmatpush.bf16.msra.mxu0 %v3431
    %3491 = vmatpush.bf16.msra.mxu0 %v3429
    %3492 = vmatpush.bf16.msra.mxu0 %v3427
    %3493 = vmatpush.bf16.msra.mxu0 %v3425
    %3494 = vmatpush.bf16.msra.mxu0 %v3423
    %3495 = vmatmul.bf16.gmra.mxu0 %v3292
    %v3496 = vpop.f32.mrf.mxu0
    %v3497 = vadd.f32 0.0, %v3496
    %v3498 = vpop.f32.mrf.mxu0
    %v3499 = vadd.f32 0.0, %v3498
    %3500 = vdwg.mxu0
    %3501 = vmatpush.bf16.msra.mxu0 %v3453
    %3502 = vmatpush.bf16.msra.mxu0 %v3451
    %3503 = vmatpush.bf16.msra.mxu0 %v3449
    %3504 = vmatpush.bf16.msra.mxu0 %v3447
    %3505 = vmatpush.bf16.msra.mxu0 %v3445
    %3506 = vmatpush.bf16.msra.mxu0 %v3443
    %3507 = vmatpush.bf16.msra.mxu0 %v3441
    %3508 = vmatpush.bf16.msra.mxu0 %v3439
    %3509 = vmatmul.bf16.gmra.mxu0 %v3293
    %v3510 = vpop.f32.mrf.mxu0
    %v3511 = vadd.f32 %v3497, %v3510
    %v3512 = vpop.f32.mrf.mxu0
    %v3513 = vadd.f32 %v3499, %v3512
    %3514 = vdwg.mxu0
    %3515 = vmatpush.bf16.msra.mxu0 %v3438
    %3516 = vmatpush.bf16.msra.mxu0 %v3436
    %3517 = vmatpush.bf16.msra.mxu0 %v3434
    %3518 = vmatpush.bf16.msra.mxu0 %v3432
    %3519 = vmatpush.bf16.msra.mxu0 %v3430
    %3520 = vmatpush.bf16.msra.mxu0 %v3428
    %3521 = vmatpush.bf16.msra.mxu0 %v3426
    %3522 = vmatpush.bf16.msra.mxu0 %v3424
    %3523 = vmatmul.bf16.gmra.mxu0 %v3292
    %v3524 = vpop.f32.mrf.mxu0
    %v3525 = vadd.f32 0.0, %v3524
    %v3526 = vpop.f32.mrf.mxu0
    %v3527 = vadd.f32 0.0, %v3526
    %3528 = vdwg.mxu0
    %3529 = vmatpush.bf16.msra.mxu0 %v3454
    %3530 = vmatpush.bf16.msra.mxu0 %v3452
    %3531 = vmatpush.bf16.msra.mxu0 %v3450
    %3532 = vmatpush.bf16.msra.mxu0 %v3448
    %3533 = vmatpush.bf16.msra.mxu0 %v3446
    %3534 = vmatpush.bf16.msra.mxu0 %v3444
    %3535 = vmatpush.bf16.msra.mxu0 %v3442
    %3536 = vmatpush.bf16.msra.mxu0 %v3440
    %3537 = vmatmul.bf16.gmra.mxu0 %v3293
    %v3538 = vpop.f32.mrf.mxu0
    %v3539 = vadd.f32 %v3525, %v3538
    %v3540 = vpop.f32.mrf.mxu0
    %v3541 = vadd.f32 %v3527, %v3540
    %3542 = vdwg.mxu0
    %v3543 = vadd.f32 %v3221, %v3511
    %v3544 = vadd.f32 %v3249, %v3539
    %v3545 = vadd.f32 %v3223, %v3513
    %v3546 = vadd.f32 %v3251, %v3541
    %s3547 = scalar_lea.vmem %s14, 24
    %v3548 = vld [vmem:[%s3547] sm:$0xf]
    %v3549 = vld [vmem:[%s3547 + $0x4] sm:$0xf]
    %v3552 = vunpack.c.l.b16 %v3548
    %v3553 = vunpack.c.l.b16 %v3549
    %v3554 = vpack.c.b16 %v3553, %v3552
    %v3556 = vsel %vm2675, %v3554, 0
    %3558 = vmatpush.bf16.msra.mxu0 0
    %3559 = vmatpush.bf16.msra.mxu0 0
    %3560 = vmatpush.bf16.msra.mxu0 0
    %3561 = vmatpush.bf16.msra.mxu0 0
    %3562 = vmatpush.bf16.msra.mxu0 0
    %3563 = vmatpush.bf16.msra.mxu0 0
    %3564 = vmatpush.bf16.msra.mxu0 0
    %3565 = vmatpush.bf16.msra.mxu0 %v2680
    %3566 = vmatmul.bf16.gmra.mxu0 %v3556
    %v3567 = vpop.f32.mrf.mxu0
    %v3568 = vadd.f32 0.0, %v3567
    %v3569 = vpop.f32.mrf.mxu0
    %v3570 = vadd.f32 0.0, %v3569
    %3571 = vdwg.mxu0
    %3572 = vmatpush.bf16.msra.mxu0 0
    %3573 = vmatpush.bf16.msra.mxu0 0
    %3574 = vmatpush.bf16.msra.mxu0 0
    %3575 = vmatpush.bf16.msra.mxu0 0
    %3576 = vmatpush.bf16.msra.mxu0 0
    %3577 = vmatpush.bf16.msra.mxu0 0
    %3578 = vmatpush.bf16.msra.mxu0 0
    %3579 = vmatpush.bf16.msra.mxu0 %v2683
    %3580 = vmatmul.bf16.gmra.mxu0 %v3556
    %v3581 = vpop.f32.mrf.mxu0
    %v3582 = vadd.f32 0.0, %v3581
    %v3583 = vpop.f32.mrf.mxu0
    %v3584 = vadd.f32 0.0, %v3583
    %3585 = vdwg.mxu0
    %v3586 = vpack.c.bf16 %v3570, %v3568
    %v3587 = vpack.c.bf16 %v3584, %v3582
    %s3588 = scalar_lea.vmem %s13, 768
    %v3589 = vld [vmem:[%s3588] sm:$0xff]
    %v3590 = vld [vmem:[%s3588 + $0x8] sm:$0xff]
    %v3591 = vld [vmem:[%s3588 + $0x10] sm:$0xff]
    %v3592 = vld [vmem:[%s3588 + $0x18] sm:$0xff]
    %v3593 = vld [vmem:[%s3588 + $0x20] sm:$0xff]
    %v3594 = vld [vmem:[%s3588 + $0x28] sm:$0xff]
    %v3595 = vld [vmem:[%s3588 + $0x30] sm:$0xff]
    %v3596 = vld [vmem:[%s3588 + $0x38] sm:$0xff]
    %v3597 = vld [vmem:[%s3588 + $0x40] sm:$0xff]
    %v3598 = vld [vmem:[%s3588 + $0x48] sm:$0xff]
    %v3599 = vld [vmem:[%s3588 + $0x50] sm:$0xff]
    %v3600 = vld [vmem:[%s3588 + $0x58] sm:$0xff]
    %v3601 = vld [vmem:[%s3588 + $0x60] sm:$0xff]
    %v3602 = vld [vmem:[%s3588 + $0x68] sm:$0xff]
    %v3603 = vld [vmem:[%s3588 + $0x70] sm:$0xff]
    %v3604 = vld [vmem:[%s3588 + $0x78] sm:$0xff]
    %v3605 = vld [vmem:[%s3588 + $0x80] sm:$0xff]
    %v3606 = vld [vmem:[%s3588 + $0x88] sm:$0xff]
    %v3607 = vld [vmem:[%s3588 + $0x90] sm:$0xff]
    %v3608 = vld [vmem:[%s3588 + $0x98] sm:$0xff]
    %v3609 = vld [vmem:[%s3588 + $0xa0] sm:$0xff]
    %v3610 = vld [vmem:[%s3588 + $0xa8] sm:$0xff]
    %v3611 = vld [vmem:[%s3588 + $0xb0] sm:$0xff]
    %v3612 = vld [vmem:[%s3588 + $0xb8] sm:$0xff]
    %v3613 = vld [vmem:[%s3588 + $0xc0] sm:$0xff]
    %v3614 = vld [vmem:[%s3588 + $0xc8] sm:$0xff]
    %v3615 = vld [vmem:[%s3588 + $0xd0] sm:$0xff]
    %v3616 = vld [vmem:[%s3588 + $0xd8] sm:$0xff]
    %v3617 = vld [vmem:[%s3588 + $0xe0] sm:$0xff]
    %v3618 = vld [vmem:[%s3588 + $0xe8] sm:$0xff]
    %v3619 = vld [vmem:[%s3588 + $0xf0] sm:$0xff]
    %v3620 = vld [vmem:[%s3588 + $0xf8] sm:$0xff]
    %v3653 = vunpack.c.l.b16 %v3589
    %v3654 = vunpack.c.h.b16 %v3589
    %v3655 = vunpack.c.l.b16 %v3590
    %v3656 = vunpack.c.h.b16 %v3590
    %v3657 = vunpack.c.l.b16 %v3591
    %v3658 = vunpack.c.h.b16 %v3591
    %v3659 = vunpack.c.l.b16 %v3592
    %v3660 = vunpack.c.h.b16 %v3592
    %v3661 = vunpack.c.l.b16 %v3593
    %v3662 = vunpack.c.h.b16 %v3593
    %v3663 = vunpack.c.l.b16 %v3594
    %v3664 = vunpack.c.h.b16 %v3594
    %v3665 = vunpack.c.l.b16 %v3595
    %v3666 = vunpack.c.h.b16 %v3595
    %v3667 = vunpack.c.l.b16 %v3596
    %v3668 = vunpack.c.h.b16 %v3596
    %v3669 = vunpack.c.l.b16 %v3597
    %v3670 = vunpack.c.h.b16 %v3597
    %v3671 = vunpack.c.l.b16 %v3598
    %v3672 = vunpack.c.h.b16 %v3598
    %v3673 = vunpack.c.l.b16 %v3599
    %v3674 = vunpack.c.h.b16 %v3599
    %v3675 = vunpack.c.l.b16 %v3600
    %v3676 = vunpack.c.h.b16 %v3600
    %v3677 = vunpack.c.l.b16 %v3601
    %v3678 = vunpack.c.h.b16 %v3601
    %v3679 = vunpack.c.l.b16 %v3602
    %v3680 = vunpack.c.h.b16 %v3602
    %v3681 = vunpack.c.l.b16 %v3603
    %v3682 = vunpack.c.h.b16 %v3603
    %v3683 = vunpack.c.l.b16 %v3604
    %v3684 = vunpack.c.h.b16 %v3604
    %v3685 = vunpack.c.l.b16 %v3605
    %v3686 = vunpack.c.h.b16 %v3605
    %v3687 = vunpack.c.l.b16 %v3606
    %v3688 = vunpack.c.h.b16 %v3606
    %v3689 = vunpack.c.l.b16 %v3607
    %v3690 = vunpack.c.h.b16 %v3607
    %v3691 = vunpack.c.l.b16 %v3608
    %v3692 = vunpack.c.h.b16 %v3608
    %v3693 = vunpack.c.l.b16 %v3609
    %v3694 = vunpack.c.h.b16 %v3609
    %v3695 = vunpack.c.l.b16 %v3610
    %v3696 = vunpack.c.h.b16 %v3610
    %v3697 = vunpack.c.l.b16 %v3611
    %v3698 = vunpack.c.h.b16 %v3611
    %v3699 = vunpack.c.l.b16 %v3612
    %v3700 = vunpack.c.h.b16 %v3612
    %v3701 = vunpack.c.l.b16 %v3613
    %v3702 = vunpack.c.h.b16 %v3613
    %v3703 = vunpack.c.l.b16 %v3614
    %v3704 = vunpack.c.h.b16 %v3614
    %v3705 = vunpack.c.l.b16 %v3615
    %v3706 = vunpack.c.h.b16 %v3615
    %v3707 = vunpack.c.l.b16 %v3616
    %v3708 = vunpack.c.h.b16 %v3616
    %v3709 = vunpack.c.l.b16 %v3617
    %v3710 = vunpack.c.h.b16 %v3617
    %v3711 = vunpack.c.l.b16 %v3618
    %v3712 = vunpack.c.h.b16 %v3618
    %v3713 = vunpack.c.l.b16 %v3619
    %v3714 = vunpack.c.h.b16 %v3619
    %v3715 = vunpack.c.l.b16 %v3620
    %v3716 = vunpack.c.h.b16 %v3620
    %v3717 = vpack.c.b16 %v3655, %v3653
    %v3718 = vpack.c.b16 %v3656, %v3654
    %v3719 = vpack.c.b16 %v3659, %v3657
    %v3720 = vpack.c.b16 %v3660, %v3658
    %v3721 = vpack.c.b16 %v3663, %v3661
    %v3722 = vpack.c.b16 %v3664, %v3662
    %v3723 = vpack.c.b16 %v3667, %v3665
    %v3724 = vpack.c.b16 %v3668, %v3666
    %v3725 = vpack.c.b16 %v3671, %v3669
    %v3726 = vpack.c.b16 %v3672, %v3670
    %v3727 = vpack.c.b16 %v3675, %v3673
    %v3728 = vpack.c.b16 %v3676, %v3674
    %v3729 = vpack.c.b16 %v3679, %v3677
    %v3730 = vpack.c.b16 %v3680, %v3678
    %v3731 = vpack.c.b16 %v3683, %v3681
    %v3732 = vpack.c.b16 %v3684, %v3682
    %v3733 = vpack.c.b16 %v3687, %v3685
    %v3734 = vpack.c.b16 %v3688, %v3686
    %v3735 = vpack.c.b16 %v3691, %v3689
    %v3736 = vpack.c.b16 %v3692, %v3690
    %v3737 = vpack.c.b16 %v3695, %v3693
    %v3738 = vpack.c.b16 %v3696, %v3694
    %v3739 = vpack.c.b16 %v3699, %v3697
    %v3740 = vpack.c.b16 %v3700, %v3698
    %v3741 = vpack.c.b16 %v3703, %v3701
    %v3742 = vpack.c.b16 %v3704, %v3702
    %v3743 = vpack.c.b16 %v3707, %v3705
    %v3744 = vpack.c.b16 %v3708, %v3706
    %v3745 = vpack.c.b16 %v3711, %v3709
    %v3746 = vpack.c.b16 %v3712, %v3710
    %v3747 = vpack.c.b16 %v3715, %v3713
    %v3748 = vpack.c.b16 %v3716, %v3714
    %3781 = vmatpush.bf16.msra.mxu0 %v3731
    %3782 = vmatpush.bf16.msra.mxu0 %v3729
    %3783 = vmatpush.bf16.msra.mxu0 %v3727
    %3784 = vmatpush.bf16.msra.mxu0 %v3725
    %3785 = vmatpush.bf16.msra.mxu0 %v3723
    %3786 = vmatpush.bf16.msra.mxu0 %v3721
    %3787 = vmatpush.bf16.msra.mxu0 %v3719
    %3788 = vmatpush.bf16.msra.mxu0 %v3717
    %3789 = vmatmul.bf16.gmra.mxu0 %v3586
    %v3790 = vpop.f32.mrf.mxu0
    %v3791 = vadd.f32 0.0, %v3790
    %v3792 = vpop.f32.mrf.mxu0
    %v3793 = vadd.f32 0.0, %v3792
    %3794 = vdwg.mxu0
    %3795 = vmatpush.bf16.msra.mxu0 %v3747
    %3796 = vmatpush.bf16.msra.mxu0 %v3745
    %3797 = vmatpush.bf16.msra.mxu0 %v3743
    %3798 = vmatpush.bf16.msra.mxu0 %v3741
    %3799 = vmatpush.bf16.msra.mxu0 %v3739
    %3800 = vmatpush.bf16.msra.mxu0 %v3737
    %3801 = vmatpush.bf16.msra.mxu0 %v3735
    %3802 = vmatpush.bf16.msra.mxu0 %v3733
    %3803 = vmatmul.bf16.gmra.mxu0 %v3587
    %v3804 = vpop.f32.mrf.mxu0
    %v3805 = vadd.f32 %v3791, %v3804
    %v3806 = vpop.f32.mrf.mxu0
    %v3807 = vadd.f32 %v3793, %v3806
    %3808 = vdwg.mxu0
    %3809 = vmatpush.bf16.msra.mxu0 %v3732
    %3810 = vmatpush.bf16.msra.mxu0 %v3730
    %3811 = vmatpush.bf16.msra.mxu0 %v3728
    %3812 = vmatpush.bf16.msra.mxu0 %v3726
    %3813 = vmatpush.bf16.msra.mxu0 %v3724
    %3814 = vmatpush.bf16.msra.mxu0 %v3722
    %3815 = vmatpush.bf16.msra.mxu0 %v3720
    %3816 = vmatpush.bf16.msra.mxu0 %v3718
    %3817 = vmatmul.bf16.gmra.mxu0 %v3586
    %v3818 = vpop.f32.mrf.mxu0
    %v3819 = vadd.f32 0.0, %v3818
    %v3820 = vpop.f32.mrf.mxu0
    %v3821 = vadd.f32 0.0, %v3820
    %3822 = vdwg.mxu0
    %3823 = vmatpush.bf16.msra.mxu0 %v3748
    %3824 = vmatpush.bf16.msra.mxu0 %v3746
    %3825 = vmatpush.bf16.msra.mxu0 %v3744
    %3826 = vmatpush.bf16.msra.mxu0 %v3742
    %3827 = vmatpush.bf16.msra.mxu0 %v3740
    %3828 = vmatpush.bf16.msra.mxu0 %v3738
    %3829 = vmatpush.bf16.msra.mxu0 %v3736
    %3830 = vmatpush.bf16.msra.mxu0 %v3734
    %3831 = vmatmul.bf16.gmra.mxu0 %v3587
    %v3832 = vpop.f32.mrf.mxu0
    %v3833 = vadd.f32 %v3819, %v3832
    %v3834 = vpop.f32.mrf.mxu0
    %v3835 = vadd.f32 %v3821, %v3834
    %3836 = vdwg.mxu0
    %v3837 = vadd.f32 %v3543, %v3805
    %v3838 = vadd.f32 %v3544, %v3833
    %v3839 = vadd.f32 %v3545, %v3807
    %v3840 = vadd.f32 %v3546, %v3835
    %v3842 = vsel %vm552, %v2666, 0
    %v3845 = vsel %vm552, %v2667, 0
    %3847 = vmatpush.bf16.msra.mxu0 0
    %3848 = vmatpush.bf16.msra.mxu0 0
    %3849 = vmatpush.bf16.msra.mxu0 0
    %3850 = vmatpush.bf16.msra.mxu0 0
    %3851 = vmatpush.bf16.msra.mxu0 0
    %3852 = vmatpush.bf16.msra.mxu0 0
    %3853 = vmatpush.bf16.msra.mxu0 0
    %3854 = vmatpush.bf16.msra.mxu0 %v3842
    %3855 = vmatmul.bf16.gmra.mxu0 %v2677
    %v3856 = vpop.f32.mrf.mxu0
    %v3857 = vadd.f32 0.0, %v3856
    %v3858 = vpop.f32.mrf.mxu0
    %v3859 = vadd.f32 0.0, %v3858
    %3860 = vdwg.mxu0
    %3861 = vmatpush.bf16.msra.mxu0 0
    %3862 = vmatpush.bf16.msra.mxu0 0
    %3863 = vmatpush.bf16.msra.mxu0 0
    %3864 = vmatpush.bf16.msra.mxu0 0
    %3865 = vmatpush.bf16.msra.mxu0 0
    %3866 = vmatpush.bf16.msra.mxu0 0
    %3867 = vmatpush.bf16.msra.mxu0 0
    %3868 = vmatpush.bf16.msra.mxu0 %v3845
    %3869 = vmatmul.bf16.gmra.mxu0 %v2677
    %v3870 = vpop.f32.mrf.mxu0
    %v3871 = vadd.f32 0.0, %v3870
    %v3872 = vpop.f32.mrf.mxu0
    %v3873 = vadd.f32 0.0, %v3872
    %3874 = vdwg.mxu0
    %v3875 = vpack.c.bf16 %v3859, %v3857
    %v3876 = vpack.c.bf16 %v3873, %v3871
    %3877 = vmatpush.bf16.msra.mxu0 0
    %3878 = vmatpush.bf16.msra.mxu0 0
    %3879 = vmatpush.bf16.msra.mxu0 0
    %3880 = vmatpush.bf16.msra.mxu0 0
    %3881 = vmatpush.bf16.msra.mxu0 0
    %3882 = vmatpush.bf16.msra.mxu0 0
    %3883 = vmatpush.bf16.msra.mxu0 0
    %3884 = vmatpush.bf16.msra.mxu0 %v3842
    %3885 = vmatmul.bf16.gmra.mxu0 %v2756
    %v3886 = vpop.f32.mrf.mxu0
    %v3887 = vadd.f32 0.0, %v3886
    %v3888 = vpop.f32.mrf.mxu0
    %v3889 = vadd.f32 0.0, %v3888
    %3890 = vdwg.mxu0
    %3891 = vmatpush.bf16.msra.mxu0 0
    %3892 = vmatpush.bf16.msra.mxu0 0
    %3893 = vmatpush.bf16.msra.mxu0 0
    %3894 = vmatpush.bf16.msra.mxu0 0
    %3895 = vmatpush.bf16.msra.mxu0 0
    %3896 = vmatpush.bf16.msra.mxu0 0
    %3897 = vmatpush.bf16.msra.mxu0 0
    %3898 = vmatpush.bf16.msra.mxu0 %v3845
    %3899 = vmatmul.bf16.gmra.mxu0 %v2756
    %v3900 = vpop.f32.mrf.mxu0
    %v3901 = vadd.f32 0.0, %v3900
    %v3902 = vpop.f32.mrf.mxu0
    %v3903 = vadd.f32 0.0, %v3902
    %3904 = vdwg.mxu0
    %v3905 = vpack.c.bf16 %v3889, %v3887
    %v3906 = vpack.c.bf16 %v3903, %v3901
    %3907 = vmatpush.bf16.msra.mxu0 %v2931
    %3908 = vmatpush.bf16.msra.mxu0 %v2929
    %3909 = vmatpush.bf16.msra.mxu0 %v2927
    %3910 = vmatpush.bf16.msra.mxu0 %v2925
    %3911 = vmatpush.bf16.msra.mxu0 %v2923
    %3912 = vmatpush.bf16.msra.mxu0 %v2921
    %3913 = vmatpush.bf16.msra.mxu0 %v2919
    %3914 = vmatpush.bf16.msra.mxu0 %v2917
    %3915 = vmatmul.bf16.gmra.mxu0 %v3905
    %v3916 = vpop.f32.mrf.mxu0
    %v3917 = vadd.f32 0.0, %v3916
    %v3918 = vpop.f32.mrf.mxu0
    %v3919 = vadd.f32 0.0, %v3918
    %3920 = vdwg.mxu0
    %3921 = vmatpush.bf16.msra.mxu0 %v2947
    %3922 = vmatpush.bf16.msra.mxu0 %v2945
    %3923 = vmatpush.bf16.msra.mxu0 %v2943
    %3924 = vmatpush.bf16.msra.mxu0 %v2941
    %3925 = vmatpush.bf16.msra.mxu0 %v2939
    %3926 = vmatpush.bf16.msra.mxu0 %v2937
    %3927 = vmatpush.bf16.msra.mxu0 %v2935
    %3928 = vmatpush.bf16.msra.mxu0 %v2933
    %3929 = vmatmul.bf16.gmra.mxu0 %v3906
    %v3930 = vpop.f32.mrf.mxu0
    %v3931 = vadd.f32 %v3917, %v3930
    %v3932 = vpop.f32.mrf.mxu0
    %v3933 = vadd.f32 %v3919, %v3932
    %3934 = vdwg.mxu0
    %3935 = vmatpush.bf16.msra.mxu0 %v2932
    %3936 = vmatpush.bf16.msra.mxu0 %v2930
    %3937 = vmatpush.bf16.msra.mxu0 %v2928
    %3938 = vmatpush.bf16.msra.mxu0 %v2926
    %3939 = vmatpush.bf16.msra.mxu0 %v2924
    %3940 = vmatpush.bf16.msra.mxu0 %v2922
    %3941 = vmatpush.bf16.msra.mxu0 %v2920
    %3942 = vmatpush.bf16.msra.mxu0 %v2918
    %3943 = vmatmul.bf16.gmra.mxu0 %v3905
    %v3944 = vpop.f32.mrf.mxu0
    %v3945 = vadd.f32 0.0, %v3944
    %v3946 = vpop.f32.mrf.mxu0
    %v3947 = vadd.f32 0.0, %v3946
    %3948 = vdwg.mxu0
    %3949 = vmatpush.bf16.msra.mxu0 %v2948
    %3950 = vmatpush.bf16.msra.mxu0 %v2946
    %3951 = vmatpush.bf16.msra.mxu0 %v2944
    %3952 = vmatpush.bf16.msra.mxu0 %v2942
    %3953 = vmatpush.bf16.msra.mxu0 %v2940
    %3954 = vmatpush.bf16.msra.mxu0 %v2938
    %3955 = vmatpush.bf16.msra.mxu0 %v2936
    %3956 = vmatpush.bf16.msra.mxu0 %v2934
    %3957 = vmatmul.bf16.gmra.mxu0 %v3906
    %v3958 = vpop.f32.mrf.mxu0
    %v3959 = vadd.f32 %v3945, %v3958
    %v3960 = vpop.f32.mrf.mxu0
    %v3961 = vadd.f32 %v3947, %v3960
    %3962 = vdwg.mxu0
    %3963 = vmatpush.bf16.msra.mxu0 %v3147
    %3964 = vmatpush.bf16.msra.mxu0 %v3145
    %3965 = vmatpush.bf16.msra.mxu0 %v3143
    %3966 = vmatpush.bf16.msra.mxu0 %v3141
    %3967 = vmatpush.bf16.msra.mxu0 %v3139
    %3968 = vmatpush.bf16.msra.mxu0 %v3137
    %3969 = vmatpush.bf16.msra.mxu0 %v3135
    %3970 = vmatpush.bf16.msra.mxu0 %v3133
    %3971 = vmatmul.bf16.gmra.mxu0 %v3875
    %v3972 = vpop.f32.mrf.mxu0
    %v3973 = vadd.f32 %v3931, %v3972
    %v3974 = vpop.f32.mrf.mxu0
    %v3975 = vadd.f32 %v3933, %v3974
    %3976 = vdwg.mxu0
    %3977 = vmatpush.bf16.msra.mxu0 %v3163
    %3978 = vmatpush.bf16.msra.mxu0 %v3161
    %3979 = vmatpush.bf16.msra.mxu0 %v3159
    %3980 = vmatpush.bf16.msra.mxu0 %v3157
    %3981 = vmatpush.bf16.msra.mxu0 %v3155
    %3982 = vmatpush.bf16.msra.mxu0 %v3153
    %3983 = vmatpush.bf16.msra.mxu0 %v3151
    %3984 = vmatpush.bf16.msra.mxu0 %v3149
    %3985 = vmatmul.bf16.gmra.mxu0 %v3876
    %v3986 = vpop.f32.mrf.mxu0
    %v3987 = vadd.f32 %v3973, %v3986
    %v3988 = vpop.f32.mrf.mxu0
    %v3989 = vadd.f32 %v3975, %v3988
    %3990 = vdwg.mxu0
    %3991 = vmatpush.bf16.msra.mxu0 %v3148
    %3992 = vmatpush.bf16.msra.mxu0 %v3146
    %3993 = vmatpush.bf16.msra.mxu0 %v3144
    %3994 = vmatpush.bf16.msra.mxu0 %v3142
    %3995 = vmatpush.bf16.msra.mxu0 %v3140
    %3996 = vmatpush.bf16.msra.mxu0 %v3138
    %3997 = vmatpush.bf16.msra.mxu0 %v3136
    %3998 = vmatpush.bf16.msra.mxu0 %v3134
    %3999 = vmatmul.bf16.gmra.mxu0 %v3875
    %v4000 = vpop.f32.mrf.mxu0
    %v4001 = vadd.f32 %v3959, %v4000
    %v4002 = vpop.f32.mrf.mxu0
    %v4003 = vadd.f32 %v3961, %v4002
    %4004 = vdwg.mxu0
    %4005 = vmatpush.bf16.msra.mxu0 %v3164
    %4006 = vmatpush.bf16.msra.mxu0 %v3162
    %4007 = vmatpush.bf16.msra.mxu0 %v3160
    %4008 = vmatpush.bf16.msra.mxu0 %v3158
    %4009 = vmatpush.bf16.msra.mxu0 %v3156
    %4010 = vmatpush.bf16.msra.mxu0 %v3154
    %4011 = vmatpush.bf16.msra.mxu0 %v3152
    %4012 = vmatpush.bf16.msra.mxu0 %v3150
    %4013 = vmatmul.bf16.gmra.mxu0 %v3876
    %v4014 = vpop.f32.mrf.mxu0
    %v4015 = vadd.f32 %v4001, %v4014
    %v4016 = vpop.f32.mrf.mxu0
    %v4017 = vadd.f32 %v4003, %v4016
    %4018 = vdwg.mxu0
    %4019 = vmatpush.bf16.msra.mxu0 0
    %4020 = vmatpush.bf16.msra.mxu0 0
    %4021 = vmatpush.bf16.msra.mxu0 0
    %4022 = vmatpush.bf16.msra.mxu0 0
    %4023 = vmatpush.bf16.msra.mxu0 0
    %4024 = vmatpush.bf16.msra.mxu0 0
    %4025 = vmatpush.bf16.msra.mxu0 0
    %4026 = vmatpush.bf16.msra.mxu0 %v3842
    %4027 = vmatmul.bf16.gmra.mxu0 %v3262
    %v4028 = vpop.f32.mrf.mxu0
    %v4029 = vadd.f32 0.0, %v4028
    %v4030 = vpop.f32.mrf.mxu0
    %v4031 = vadd.f32 0.0, %v4030
    %4032 = vdwg.mxu0
    %4033 = vmatpush.bf16.msra.mxu0 0
    %4034 = vmatpush.bf16.msra.mxu0 0
    %4035 = vmatpush.bf16.msra.mxu0 0
    %4036 = vmatpush.bf16.msra.mxu0 0
    %4037 = vmatpush.bf16.msra.mxu0 0
    %4038 = vmatpush.bf16.msra.mxu0 0
    %4039 = vmatpush.bf16.msra.mxu0 0
    %4040 = vmatpush.bf16.msra.mxu0 %v3845
    %4041 = vmatmul.bf16.gmra.mxu0 %v3262
    %v4042 = vpop.f32.mrf.mxu0
    %v4043 = vadd.f32 0.0, %v4042
    %v4044 = vpop.f32.mrf.mxu0
    %v4045 = vadd.f32 0.0, %v4044
    %4046 = vdwg.mxu0
    %v4047 = vpack.c.bf16 %v4031, %v4029
    %v4048 = vpack.c.bf16 %v4045, %v4043
    %4049 = vmatpush.bf16.msra.mxu0 %v3437
    %4050 = vmatpush.bf16.msra.mxu0 %v3435
    %4051 = vmatpush.bf16.msra.mxu0 %v3433
    %4052 = vmatpush.bf16.msra.mxu0 %v3431
    %4053 = vmatpush.bf16.msra.mxu0 %v3429
    %4054 = vmatpush.bf16.msra.mxu0 %v3427
    %4055 = vmatpush.bf16.msra.mxu0 %v3425
    %4056 = vmatpush.bf16.msra.mxu0 %v3423
    %4057 = vmatmul.bf16.gmra.mxu0 %v4047
    %v4058 = vpop.f32.mrf.mxu0
    %v4059 = vadd.f32 0.0, %v4058
    %v4060 = vpop.f32.mrf.mxu0
    %v4061 = vadd.f32 0.0, %v4060
    %4062 = vdwg.mxu0
    %4063 = vmatpush.bf16.msra.mxu0 %v3453
    %4064 = vmatpush.bf16.msra.mxu0 %v3451
    %4065 = vmatpush.bf16.msra.mxu0 %v3449
    %4066 = vmatpush.bf16.msra.mxu0 %v3447
    %4067 = vmatpush.bf16.msra.mxu0 %v3445
    %4068 = vmatpush.bf16.msra.mxu0 %v3443
    %4069 = vmatpush.bf16.msra.mxu0 %v3441
    %4070 = vmatpush.bf16.msra.mxu0 %v3439
    %4071 = vmatmul.bf16.gmra.mxu0 %v4048
    %v4072 = vpop.f32.mrf.mxu0
    %v4073 = vadd.f32 %v4059, %v4072
    %v4074 = vpop.f32.mrf.mxu0
    %v4075 = vadd.f32 %v4061, %v4074
    %4076 = vdwg.mxu0
    %4077 = vmatpush.bf16.msra.mxu0 %v3438
    %4078 = vmatpush.bf16.msra.mxu0 %v3436
    %4079 = vmatpush.bf16.msra.mxu0 %v3434
    %4080 = vmatpush.bf16.msra.mxu0 %v3432
    %4081 = vmatpush.bf16.msra.mxu0 %v3430
    %4082 = vmatpush.bf16.msra.mxu0 %v3428
    %4083 = vmatpush.bf16.msra.mxu0 %v3426
    %4084 = vmatpush.bf16.msra.mxu0 %v3424
    %4085 = vmatmul.bf16.gmra.mxu0 %v4047
    %v4086 = vpop.f32.mrf.mxu0
    %v4087 = vadd.f32 0.0, %v4086
    %v4088 = vpop.f32.mrf.mxu0
    %v4089 = vadd.f32 0.0, %v4088
    %4090 = vdwg.mxu0
    %4091 = vmatpush.bf16.msra.mxu0 %v3454
    %4092 = vmatpush.bf16.msra.mxu0 %v3452
    %4093 = vmatpush.bf16.msra.mxu0 %v3450
    %4094 = vmatpush.bf16.msra.mxu0 %v3448
    %4095 = vmatpush.bf16.msra.mxu0 %v3446
    %4096 = vmatpush.bf16.msra.mxu0 %v3444
    %4097 = vmatpush.bf16.msra.mxu0 %v3442
    %4098 = vmatpush.bf16.msra.mxu0 %v3440
    %4099 = vmatmul.bf16.gmra.mxu0 %v4048
    %v4100 = vpop.f32.mrf.mxu0
    %v4101 = vadd.f32 %v4087, %v4100
    %v4102 = vpop.f32.mrf.mxu0
    %v4103 = vadd.f32 %v4089, %v4102
    %4104 = vdwg.mxu0
    %v4105 = vadd.f32 %v3987, %v4073
    %v4106 = vadd.f32 %v4015, %v4101
    %v4107 = vadd.f32 %v3989, %v4075
    %v4108 = vadd.f32 %v4017, %v4103
    %4109 = vmatpush.bf16.msra.mxu0 0
    %4110 = vmatpush.bf16.msra.mxu0 0
    %4111 = vmatpush.bf16.msra.mxu0 0
    %4112 = vmatpush.bf16.msra.mxu0 0
    %4113 = vmatpush.bf16.msra.mxu0 0
    %4114 = vmatpush.bf16.msra.mxu0 0
    %4115 = vmatpush.bf16.msra.mxu0 0
    %4116 = vmatpush.bf16.msra.mxu0 %v3842
    %4117 = vmatmul.bf16.gmra.mxu0 %v3556
    %v4118 = vpop.f32.mrf.mxu0
    %v4119 = vadd.f32 0.0, %v4118
    %v4120 = vpop.f32.mrf.mxu0
    %v4121 = vadd.f32 0.0, %v4120
    %4122 = vdwg.mxu0
    %4123 = vmatpush.bf16.msra.mxu0 0
    %4124 = vmatpush.bf16.msra.mxu0 0
    %4125 = vmatpush.bf16.msra.mxu0 0
    %4126 = vmatpush.bf16.msra.mxu0 0
    %4127 = vmatpush.bf16.msra.mxu0 0
    %4128 = vmatpush.bf16.msra.mxu0 0
    %4129 = vmatpush.bf16.msra.mxu0 0
    %4130 = vmatpush.bf16.msra.mxu0 %v3845
    %4131 = vmatmul.bf16.gmra.mxu0 %v3556
    %v4132 = vpop.f32.mrf.mxu0
    %v4133 = vadd.f32 0.0, %v4132
    %v4134 = vpop.f32.mrf.mxu0
    %v4135 = vadd.f32 0.0, %v4134
    %4136 = vdwg.mxu0
    %v4137 = vpack.c.bf16 %v4121, %v4119
    %v4138 = vpack.c.bf16 %v4135, %v4133
    %4139 = vmatpush.bf16.msra.mxu0 %v3731
    %4140 = vmatpush.bf16.msra.mxu0 %v3729
    %4141 = vmatpush.bf16.msra.mxu0 %v3727
    %4142 = vmatpush.bf16.msra.mxu0 %v3725
    %4143 = vmatpush.bf16.msra.mxu0 %v3723
    %4144 = vmatpush.bf16.msra.mxu0 %v3721
    %4145 = vmatpush.bf16.msra.mxu0 %v3719
    %4146 = vmatpush.bf16.msra.mxu0 %v3717
    %4147 = vmatmul.bf16.gmra.mxu0 %v4137
    %v4148 = vpop.f32.mrf.mxu0
    %v4149 = vadd.f32 0.0, %v4148
    %v4150 = vpop.f32.mrf.mxu0
    %v4151 = vadd.f32 0.0, %v4150
    %4152 = vdwg.mxu0
    %4153 = vmatpush.bf16.msra.mxu0 %v3747
    %4154 = vmatpush.bf16.msra.mxu0 %v3745
    %4155 = vmatpush.bf16.msra.mxu0 %v3743
    %4156 = vmatpush.bf16.msra.mxu0 %v3741
    %4157 = vmatpush.bf16.msra.mxu0 %v3739
    %4158 = vmatpush.bf16.msra.mxu0 %v3737
    %4159 = vmatpush.bf16.msra.mxu0 %v3735
    %4160 = vmatpush.bf16.msra.mxu0 %v3733
    %4161 = vmatmul.bf16.gmra.mxu0 %v4138
    %v4162 = vpop.f32.mrf.mxu0
    %v4163 = vadd.f32 %v4149, %v4162
    %v4164 = vpop.f32.mrf.mxu0
    %v4165 = vadd.f32 %v4151, %v4164
    %4166 = vdwg.mxu0
    %4167 = vmatpush.bf16.msra.mxu0 %v3732
    %4168 = vmatpush.bf16.msra.mxu0 %v3730
    %4169 = vmatpush.bf16.msra.mxu0 %v3728
    %4170 = vmatpush.bf16.msra.mxu0 %v3726
    %4171 = vmatpush.bf16.msra.mxu0 %v3724
    %4172 = vmatpush.bf16.msra.mxu0 %v3722
    %4173 = vmatpush.bf16.msra.mxu0 %v3720
    %4174 = vmatpush.bf16.msra.mxu0 %v3718
    %4175 = vmatmul.bf16.gmra.mxu0 %v4137
    %v4176 = vpop.f32.mrf.mxu0
    %v4177 = vadd.f32 0.0, %v4176
    %v4178 = vpop.f32.mrf.mxu0
    %v4179 = vadd.f32 0.0, %v4178
    %4180 = vdwg.mxu0
    %4181 = vmatpush.bf16.msra.mxu0 %v3748
    %4182 = vmatpush.bf16.msra.mxu0 %v3746
    %4183 = vmatpush.bf16.msra.mxu0 %v3744
    %4184 = vmatpush.bf16.msra.mxu0 %v3742
    %4185 = vmatpush.bf16.msra.mxu0 %v3740
    %4186 = vmatpush.bf16.msra.mxu0 %v3738
    %4187 = vmatpush.bf16.msra.mxu0 %v3736
    %4188 = vmatpush.bf16.msra.mxu0 %v3734
    %4189 = vmatmul.bf16.gmra.mxu0 %v4138
    %v4190 = vpop.f32.mrf.mxu0
    %v4191 = vadd.f32 %v4177, %v4190
    %v4192 = vpop.f32.mrf.mxu0
    %v4193 = vadd.f32 %v4179, %v4192
    %4194 = vdwg.mxu0
    %v4195 = vadd.f32 %v4105, %v4163
    %v4196 = vadd.f32 %v4106, %v4191
    %v4197 = vadd.f32 %v4107, %v4165
    %v4198 = vadd.f32 %v4108, %v4193
    %v4199 = vld [vmem:[%s17] sm:$0xff]
    %v4200 = vld [vmem:[%s17 + $0x8] sm:$0xff]
    %v4201 = vld [vmem:[%s17 + $0x10] sm:$0xff]
    %v4202 = vld [vmem:[%s17 + $0x18] sm:$0xff]
    %v4203 = vld [vmem:[%s17 + $0x20] sm:$0xff]
    %v4204 = vld [vmem:[%s17 + $0x28] sm:$0xff]
    %v4205 = vld [vmem:[%s17 + $0x30] sm:$0xff]
    %v4206 = vld [vmem:[%s17 + $0x38] sm:$0xff]
    %v4207 = vld [vmem:[%s17 + $0x40] sm:$0xff]
    %v4208 = vld [vmem:[%s17 + $0x48] sm:$0xff]
    %v4209 = vld [vmem:[%s17 + $0x50] sm:$0xff]
    %v4210 = vld [vmem:[%s17 + $0x58] sm:$0xff]
    %v4211 = vld [vmem:[%s17 + $0x60] sm:$0xff]
    %v4212 = vld [vmem:[%s17 + $0x68] sm:$0xff]
    %v4213 = vld [vmem:[%s17 + $0x70] sm:$0xff]
    %v4214 = vld [vmem:[%s17 + $0x78] sm:$0xff]
    %v4215 = vld [vmem:[%s17 + $0x80] sm:$0xff]
    %v4216 = vld [vmem:[%s17 + $0x88] sm:$0xff]
    %v4217 = vld [vmem:[%s17 + $0x90] sm:$0xff]
    %v4218 = vld [vmem:[%s17 + $0x98] sm:$0xff]
    %v4219 = vld [vmem:[%s17 + $0xa0] sm:$0xff]
    %v4220 = vld [vmem:[%s17 + $0xa8] sm:$0xff]
    %v4221 = vld [vmem:[%s17 + $0xb0] sm:$0xff]
    %v4222 = vld [vmem:[%s17 + $0xb8] sm:$0xff]
    %v4223 = vld [vmem:[%s17 + $0xc0] sm:$0xff]
    %v4224 = vld [vmem:[%s17 + $0xc8] sm:$0xff]
    %v4225 = vld [vmem:[%s17 + $0xd0] sm:$0xff]
    %v4226 = vld [vmem:[%s17 + $0xd8] sm:$0xff]
    %v4227 = vld [vmem:[%s17 + $0xe0] sm:$0xff]
    %v4228 = vld [vmem:[%s17 + $0xe8] sm:$0xff]
    %v4229 = vld [vmem:[%s17 + $0xf0] sm:$0xff]
    %v4230 = vld [vmem:[%s17 + $0xf8] sm:$0xff]
    %v4231 = vld [vmem:[%s18] sm:$0xff]
    %v4232 = vld [vmem:[%s18 + $0x8] sm:$0xff]
    %v4233 = vld [vmem:[%s18 + $0x10] sm:$0xff]
    %v4234 = vld [vmem:[%s18 + $0x18] sm:$0xff]
    %v4235 = vadd.f32 %v3837, %v3839
    %v4236 = vrot.slane %v4235, 4
    %v4237 = vadd.f32 %v4235, %v4236
    %v4238 = vrot.slane %v4237, 2
    %v4239 = vadd.f32 %v4237, %v4238
    %v4240 = vrot.slane %v4239, 1
    %v4241 = vadd.f32 %v4239, %v4240
    %v4242 = vadd.f32 %v3838, %v3840
    %v4243 = vrot.slane %v4242, 4
    %v4244 = vadd.f32 %v4242, %v4243
    %v4245 = vrot.slane %v4244, 2
    %v4246 = vadd.f32 %v4244, %v4245
    %v4247 = vrot.slane %v4246, 1
    %v4248 = vadd.f32 %v4246, %v4247
    %v4249 = vadd.f32 %v4195, %v4197
    %v4250 = vrot.slane %v4249, 4
    %v4251 = vadd.f32 %v4249, %v4250
    %v4252 = vrot.slane %v4251, 2
    %v4253 = vadd.f32 %v4251, %v4252
    %v4254 = vrot.slane %v4253, 1
    %v4255 = vadd.f32 %v4253, %v4254
    %v4256 = vadd.f32 %v4196, %v4198
    %v4257 = vrot.slane %v4256, 4
    %v4258 = vadd.f32 %v4256, %v4257
    %v4259 = vrot.slane %v4258, 2
    %v4260 = vadd.f32 %v4258, %v4259
    %v4261 = vrot.slane %v4260, 1
    %v4262 = vadd.f32 %v4260, %v4261
    %v4263 = vadd.f32 %v4241, %v4255
    %v4264 = vadd.f32 %v4248, %v4262
    %4265 = vmatpush.msra.mxu0 %v4214
    %4266 = vmatpush.msra.mxu0 %v4213
    %4267 = vmatpush.msra.mxu0 %v4212
    %4268 = vmatpush.msra.mxu0 %v4211
    %4269 = vmatpush.msra.mxu0 %v4210
    %4270 = vmatpush.msra.mxu0 %v4209
    %4271 = vmatpush.msra.mxu0 %v4208
    %4272 = vmatpush.msra.mxu0 %v4207
    %4273 = vmatpush.msra.mxu0 %v4206
    %4274 = vmatpush.msra.mxu0 %v4205
    %4275 = vmatpush.msra.mxu0 %v4204
    %4276 = vmatpush.msra.mxu0 %v4203
    %4277 = vmatpush.msra.mxu0 %v4202
    %4278 = vmatpush.msra.mxu0 %v4201
    %4279 = vmatpush.msra.mxu0 %v4200
    %4280 = vmatpush.msra.mxu0 %v4199
    %4281 = vmatmul.f32.gmra.mxu0 %v4263
    %v4282 = vpop.f32.mrf.mxu0
    %v4283 = vadd.f32 0.0, %v4282
    %4284 = vdwg.mxu0
    %4285 = vmatpush.msra.mxu0 %v4230
    %4286 = vmatpush.msra.mxu0 %v4229
    %4287 = vmatpush.msra.mxu0 %v4228
    %4288 = vmatpush.msra.mxu0 %v4227
    %4289 = vmatpush.msra.mxu0 %v4226
    %4290 = vmatpush.msra.mxu0 %v4225
    %4291 = vmatpush.msra.mxu0 %v4224
    %4292 = vmatpush.msra.mxu0 %v4223
    %4293 = vmatpush.msra.mxu0 %v4222
    %4294 = vmatpush.msra.mxu0 %v4221
    %4295 = vmatpush.msra.mxu0 %v4220
    %4296 = vmatpush.msra.mxu0 %v4219
    %4297 = vmatpush.msra.mxu0 %v4218
    %4298 = vmatpush.msra.mxu0 %v4217
    %4299 = vmatpush.msra.mxu0 %v4216
    %4300 = vmatpush.msra.mxu0 %v4215
    %4301 = vmatmul.f32.gmra.mxu0 %v4264
    %v4302 = vpop.f32.mrf.mxu0
    %v4303 = vadd.f32 %v4283, %v4302
    %4304 = vdwg.mxu0
    %v4305 = vmul.f32 %v4303, 0.001953125
    %vm4306 = vcmask 130048
    %v4308 = vsel %vm4306, %v4305, 0
    %4310 = vmatpush.msra.mxu0 0.0
    %4311 = vmatpush.msra.mxu0 0.0
    %4312 = vmatpush.msra.mxu0 0.0
    %4313 = vmatpush.msra.mxu0 0.0
    %4314 = vmatpush.msra.mxu0 0.0
    %4315 = vmatpush.msra.mxu0 0.0
    %4316 = vmatpush.msra.mxu0 0.0
    %4317 = vmatpush.msra.mxu0 0.0
    %4318 = vmatpush.msra.mxu0 0.0
    %4319 = vmatpush.msra.mxu0 0.0
    %4320 = vmatpush.msra.mxu0 0.0
    %4321 = vmatpush.msra.mxu0 0.0
    %4322 = vmatpush.msra.mxu0 0.0
    %4323 = vmatpush.msra.mxu0 0.0
    %4324 = vmatpush.msra.mxu0 %v4233
    %4325 = vmatpush.msra.mxu0 %v4231
    %4326 = vmatmul.f32.gmra.mxu0 %v4308
    %v4327 = vpop.f32.mrf.mxu0
    %v4328 = vadd.f32 0.0, %v4327
    %4329 = vdwg.mxu0
    %4330 = vmatpush.msra.mxu0 0.0
    %4331 = vmatpush.msra.mxu0 0.0
    %4332 = vmatpush.msra.mxu0 0.0
    %4333 = vmatpush.msra.mxu0 0.0
    %4334 = vmatpush.msra.mxu0 0.0
    %4335 = vmatpush.msra.mxu0 0.0
    %4336 = vmatpush.msra.mxu0 0.0
    %4337 = vmatpush.msra.mxu0 0.0
    %4338 = vmatpush.msra.mxu0 0.0
    %4339 = vmatpush.msra.mxu0 0.0
    %4340 = vmatpush.msra.mxu0 0.0
    %4341 = vmatpush.msra.mxu0 0.0
    %4342 = vmatpush.msra.mxu0 0.0
    %4343 = vmatpush.msra.mxu0 0.0
    %4344 = vmatpush.msra.mxu0 %v4234
    %4345 = vmatpush.msra.mxu0 %v4232
    %4346 = vmatmul.f32.gmra.mxu0 %v4308
    %v4347 = vpop.f32.mrf.mxu0
    %v4348 = vadd.f32 0.0, %v4347
    %4349 = vdwg.mxu0
    %v4350 = vperm.slane %v4328, 0
    %v4351 = vperm.slane %v4348, 0
    %v4352 = vsub.f32 %v3837, %v4350
    %v4353 = vsub.f32 %v3838, %v4351
    %v4354 = vsub.f32 %v3839, %v4350
    %v4355 = vsub.f32 %v3840, %v4351
    %v4356 = vmul.f32 %v4352, %v4352
    %v4357 = vmul.f32 %v4353, %v4353
    %v4358 = vmul.f32 %v4354, %v4354
    %v4359 = vmul.f32 %v4355, %v4355
    %v4360 = vadd.f32 %v4356, %v4358
    %v4361 = vrot.slane %v4360, 4
    %v4362 = vadd.f32 %v4360, %v4361
    %v4363 = vrot.slane %v4362, 2
    %v4364 = vadd.f32 %v4362, %v4363
    %v4365 = vrot.slane %v4364, 1
    %v4366 = vadd.f32 %v4364, %v4365
    %v4367 = vadd.f32 %v4357, %v4359
    %v4368 = vrot.slane %v4367, 4
    %v4369 = vadd.f32 %v4367, %v4368
    %v4370 = vrot.slane %v4369, 2
    %v4371 = vadd.f32 %v4369, %v4370
    %v4372 = vrot.slane %v4371, 1
    %v4373 = vadd.f32 %v4371, %v4372
    %v4374 = vsub.f32 %v4195, %v4350
    %v4375 = vsub.f32 %v4196, %v4351
    %v4376 = vsub.f32 %v4197, %v4350
    %v4377 = vsub.f32 %v4198, %v4351
    %v4378 = vmul.f32 %v4374, %v4374
    %v4379 = vmul.f32 %v4375, %v4375
    %v4380 = vmul.f32 %v4376, %v4376
    %v4381 = vmul.f32 %v4377, %v4377
    %v4382 = vadd.f32 %v4378, %v4380
    %v4383 = vrot.slane %v4382, 4
    %v4384 = vadd.f32 %v4382, %v4383
    %v4385 = vrot.slane %v4384, 2
    %v4386 = vadd.f32 %v4384, %v4385
    %v4387 = vrot.slane %v4386, 1
    %v4388 = vadd.f32 %v4386, %v4387
    %v4389 = vadd.f32 %v4379, %v4381
    %v4390 = vrot.slane %v4389, 4
    %v4391 = vadd.f32 %v4389, %v4390
    %v4392 = vrot.slane %v4391, 2
    %v4393 = vadd.f32 %v4391, %v4392
    %v4394 = vrot.slane %v4393, 1
    %v4395 = vadd.f32 %v4393, %v4394
    %v4396 = vadd.f32 %v4366, %v4388
    %v4397 = vadd.f32 %v4373, %v4395
    %4398 = vmatpush.msra.mxu0 %v4214
    %4399 = vmatpush.msra.mxu0 %v4213
    %4400 = vmatpush.msra.mxu0 %v4212
    %4401 = vmatpush.msra.mxu0 %v4211
    %4402 = vmatpush.msra.mxu0 %v4210
    %4403 = vmatpush.msra.mxu0 %v4209
    %4404 = vmatpush.msra.mxu0 %v4208
    %4405 = vmatpush.msra.mxu0 %v4207
    %4406 = vmatpush.msra.mxu0 %v4206
    %4407 = vmatpush.msra.mxu0 %v4205
    %4408 = vmatpush.msra.mxu0 %v4204
    %4409 = vmatpush.msra.mxu0 %v4203
    %4410 = vmatpush.msra.mxu0 %v4202
    %4411 = vmatpush.msra.mxu0 %v4201
    %4412 = vmatpush.msra.mxu0 %v4200
    %4413 = vmatpush.msra.mxu0 %v4199
    %4414 = vmatmul.f32.gmra.mxu0 %v4396
    %v4415 = vpop.f32.mrf.mxu0
    %v4416 = vadd.f32 0.0, %v4415
    %4417 = vdwg.mxu0
    %4418 = vmatpush.msra.mxu0 %v4230
    %4419 = vmatpush.msra.mxu0 %v4229
    %4420 = vmatpush.msra.mxu0 %v4228
    %4421 = vmatpush.msra.mxu0 %v4227
    %4422 = vmatpush.msra.mxu0 %v4226
    %4423 = vmatpush.msra.mxu0 %v4225
    %4424 = vmatpush.msra.mxu0 %v4224
    %4425 = vmatpush.msra.mxu0 %v4223
    %4426 = vmatpush.msra.mxu0 %v4222
    %4427 = vmatpush.msra.mxu0 %v4221
    %4428 = vmatpush.msra.mxu0 %v4220
    %4429 = vmatpush.msra.mxu0 %v4219
    %4430 = vmatpush.msra.mxu0 %v4218
    %4431 = vmatpush.msra.mxu0 %v4217
    %4432 = vmatpush.msra.mxu0 %v4216
    %4433 = vmatpush.msra.mxu0 %v4215
    %4434 = vmatmul.f32.gmra.mxu0 %v4397
    %v4435 = vpop.f32.mrf.mxu0
    %v4436 = vadd.f32 %v4416, %v4435
    %4437 = vdwg.mxu0
    %v4438 = vmul.f32 %v4436, 0.001953125
    %v4439 = vld [vmem:[%s15] sm:$0x1]
    %v4440 = vadd.f32 %v4438, 1e-05
    %v4441 = vrsqrt.pop %v4440
    %v4442 = vmul.f32 %v4441, %v4440
    %v4443 = vmul.f32 %v4442, %v4441
    %v4444 = vmul.f32 0.5, %v4443
    %v4445 = vsub.f32 1.5, %v4444
    %v4446 = vmul.f32 %v4441, %v4445
    %vm4447 = vweird.f32 %v4440
    %vm4448 = vweird.f32 %v4441
    %vm4449 = vmor %vm4447, %vm4448
    %v4450 = vsel %vm4449, %v4441, %v4446
    %v4451 = vmul.f32 %v4439, %v4450
    %v4453 = vsel %vm4306, %v4451, 0
    %4455 = vmatpush.msra.mxu0 0.0
    %4456 = vmatpush.msra.mxu0 0.0
    %4457 = vmatpush.msra.mxu0 0.0
    %4458 = vmatpush.msra.mxu0 0.0
    %4459 = vmatpush.msra.mxu0 0.0
    %4460 = vmatpush.msra.mxu0 0.0
    %4461 = vmatpush.msra.mxu0 0.0
    %4462 = vmatpush.msra.mxu0 0.0
    %4463 = vmatpush.msra.mxu0 0.0
    %4464 = vmatpush.msra.mxu0 0.0
    %4465 = vmatpush.msra.mxu0 0.0
    %4466 = vmatpush.msra.mxu0 0.0
    %4467 = vmatpush.msra.mxu0 0.0
    %4468 = vmatpush.msra.mxu0 0.0
    %4469 = vmatpush.msra.mxu0 %v4233
    %4470 = vmatpush.msra.mxu0 %v4231
    %4471 = vmatmul.f32.gmra.mxu0 %v4453
    %v4472 = vpop.f32.mrf.mxu0
    %v4473 = vadd.f32 0.0, %v4472
    %4474 = vdwg.mxu0
    %4475 = vmatpush.msra.mxu0 0.0
    %4476 = vmatpush.msra.mxu0 0.0
    %4477 = vmatpush.msra.mxu0 0.0
    %4478 = vmatpush.msra.mxu0 0.0
    %4479 = vmatpush.msra.mxu0 0.0
    %4480 = vmatpush.msra.mxu0 0.0
    %4481 = vmatpush.msra.mxu0 0.0
    %4482 = vmatpush.msra.mxu0 0.0
    %4483 = vmatpush.msra.mxu0 0.0
    %4484 = vmatpush.msra.mxu0 0.0
    %4485 = vmatpush.msra.mxu0 0.0
    %4486 = vmatpush.msra.mxu0 0.0
    %4487 = vmatpush.msra.mxu0 0.0
    %4488 = vmatpush.msra.mxu0 0.0
    %4489 = vmatpush.msra.mxu0 %v4234
    %4490 = vmatpush.msra.mxu0 %v4232
    %4491 = vmatmul.f32.gmra.mxu0 %v4453
    %v4492 = vpop.f32.mrf.mxu0
    %v4493 = vadd.f32 0.0, %v4492
    %4494 = vdwg.mxu0
    %v4495 = vld [vmem:[%s16] sm:$0x1]
    %v4497 = vsel %vm4306, %v4495, 0
    %4499 = vmatpush.msra.mxu0 0.0
    %4500 = vmatpush.msra.mxu0 0.0
    %4501 = vmatpush.msra.mxu0 0.0
    %4502 = vmatpush.msra.mxu0 0.0
    %4503 = vmatpush.msra.mxu0 0.0
    %4504 = vmatpush.msra.mxu0 0.0
    %4505 = vmatpush.msra.mxu0 0.0
    %4506 = vmatpush.msra.mxu0 0.0
    %4507 = vmatpush.msra.mxu0 0.0
    %4508 = vmatpush.msra.mxu0 0.0
    %4509 = vmatpush.msra.mxu0 0.0
    %4510 = vmatpush.msra.mxu0 0.0
    %4511 = vmatpush.msra.mxu0 0.0
    %4512 = vmatpush.msra.mxu0 0.0
    %4513 = vmatpush.msra.mxu0 %v4233
    %4514 = vmatpush.msra.mxu0 %v4231
    %4515 = vmatmul.f32.gmra.mxu0 %v4497
    %v4516 = vpop.f32.mrf.mxu0
    %v4517 = vadd.f32 0.0, %v4516
    %4518 = vdwg.mxu0
    %4519 = vmatpush.msra.mxu0 0.0
    %4520 = vmatpush.msra.mxu0 0.0
    %4521 = vmatpush.msra.mxu0 0.0
    %4522 = vmatpush.msra.mxu0 0.0
    %4523 = vmatpush.msra.mxu0 0.0
    %4524 = vmatpush.msra.mxu0 0.0
    %4525 = vmatpush.msra.mxu0 0.0
    %4526 = vmatpush.msra.mxu0 0.0
    %4527 = vmatpush.msra.mxu0 0.0
    %4528 = vmatpush.msra.mxu0 0.0
    %4529 = vmatpush.msra.mxu0 0.0
    %4530 = vmatpush.msra.mxu0 0.0
    %4531 = vmatpush.msra.mxu0 0.0
    %4532 = vmatpush.msra.mxu0 0.0
    %4533 = vmatpush.msra.mxu0 %v4234
    %4534 = vmatpush.msra.mxu0 %v4232
    %4535 = vmatmul.f32.gmra.mxu0 %v4497
    %v4536 = vpop.f32.mrf.mxu0
    %v4537 = vadd.f32 0.0, %v4536
    %4538 = vdwg.mxu0
    %v4539 = vperm.slane %v4473, 0
    %v4540 = vperm.slane %v4493, 0
    %v4541 = vmul.f32 %v4352, %v4539
    %v4542 = vmul.f32 %v4353, %v4540
    %v4543 = vmul.f32 %v4354, %v4539
    %v4544 = vmul.f32 %v4355, %v4540
    %v4545 = vperm.slane %v4517, 0
    %v4546 = vperm.slane %v4537, 0
    %v4547 = vadd.f32 %v4541, %v4545
    %v4548 = vadd.f32 %v4542, %v4546
    %v4549 = vadd.f32 %v4543, %v4545
    %v4550 = vadd.f32 %v4544, %v4546
    %v4551 = vmax.f32 %v4547, 0.0
    %v4552 = vmax.f32 %v4548, 0.0
    %v4553 = vmax.f32 %v4549, 0.0
    %v4554 = vmax.f32 %v4550, 0.0
    %v4555 = vpack.c.bf16 %v4553, %v4551
    %v4556 = vpack.c.bf16 %v4554, %v4552
    %v4557 = vmul.f32 %v4374, %v4539
    %v4558 = vmul.f32 %v4375, %v4540
    %v4559 = vmul.f32 %v4376, %v4539
    %v4560 = vmul.f32 %v4377, %v4540
    %v4561 = vadd.f32 %v4557, %v4545
    %v4562 = vadd.f32 %v4558, %v4546
    %v4563 = vadd.f32 %v4559, %v4545
    %v4564 = vadd.f32 %v4560, %v4546
    %v4565 = vmax.f32 %v4561, 0.0
    %v4566 = vmax.f32 %v4562, 0.0
    %v4567 = vmax.f32 %v4563, 0.0
    %v4568 = vmax.f32 %v4564, 0.0
    %v4569 = vpack.c.bf16 %v4567, %v4565
    %v4570 = vpack.c.bf16 %v4568, %v4566
    %v4571 = vld [vmem:[%s20] sm:$0xf]
    %v4572 = vld [vmem:[%s20 + $0x4] sm:$0xf]
    %v4573 = vld [vmem:[%s20 + $0x8] sm:$0xf]
    %v4574 = vld [vmem:[%s20 + $0xc] sm:$0xf]
    %v4579 = vunpack.c.l.b16 %v4571
    %v4580 = vunpack.c.l.b16 %v4572
    %v4581 = vunpack.c.l.b16 %v4573
    %v4582 = vunpack.c.l.b16 %v4574
    %v4583 = vpack.c.b16 %v4580, %v4579
    %v4584 = vpack.c.b16 %v4582, %v4581
    %v4586 = vsel %vm4306, %v4583, 0
    %v4589 = vsel %vm4306, %v4584, 0
    %4591 = vmatpush.bf16.msra.mxu0 0
    %4592 = vmatpush.bf16.msra.mxu0 0
    %4593 = vmatpush.bf16.msra.mxu0 0
    %4594 = vmatpush.bf16.msra.mxu0 0
    %4595 = vmatpush.bf16.msra.mxu0 0
    %4596 = vmatpush.bf16.msra.mxu0 0
    %4597 = vmatpush.bf16.msra.mxu0 0
    %4598 = vmatpush.bf16.msra.mxu0 %v4555
    %4599 = vmatmul.bf16.gmra.mxu0 %v4586
    %v4600 = vpop.f32.mrf.mxu0
    %v4601 = vadd.f32 0.0, %v4600
    %v4602 = vpop.f32.mrf.mxu0
    %v4603 = vadd.f32 0.0, %v4602
    %4604 = vmatmul.bf16.gmra.mxu0 %v4589
    %v4605 = vpop.f32.mrf.mxu0
    %v4606 = vadd.f32 0.0, %v4605
    %v4607 = vpop.f32.mrf.mxu0
    %v4608 = vadd.f32 0.0, %v4607
    %4609 = vdwg.mxu0
    %4610 = vmatpush.bf16.msra.mxu0 0
    %4611 = vmatpush.bf16.msra.mxu0 0
    %4612 = vmatpush.bf16.msra.mxu0 0
    %4613 = vmatpush.bf16.msra.mxu0 0
    %4614 = vmatpush.bf16.msra.mxu0 0
    %4615 = vmatpush.bf16.msra.mxu0 0
    %4616 = vmatpush.bf16.msra.mxu0 0
    %4617 = vmatpush.bf16.msra.mxu0 %v4556
    %4618 = vmatmul.bf16.gmra.mxu0 %v4586
    %v4619 = vpop.f32.mrf.mxu0
    %v4620 = vadd.f32 0.0, %v4619
    %v4621 = vpop.f32.mrf.mxu0
    %v4622 = vadd.f32 0.0, %v4621
    %4623 = vmatmul.bf16.gmra.mxu0 %v4589
    %v4624 = vpop.f32.mrf.mxu0
    %v4625 = vadd.f32 0.0, %v4624
    %v4626 = vpop.f32.mrf.mxu0
    %v4627 = vadd.f32 0.0, %v4626
    %4628 = vdwg.mxu0
    %v4629 = vpack.c.bf16 %v4603, %v4601
    %v4630 = vpack.c.bf16 %v4622, %v4620
    %v4631 = vpack.c.bf16 %v4608, %v4606
    %v4632 = vpack.c.bf16 %v4627, %v4625
    %v4633 = vld [vmem:[%s19] sm:$0xff]
    %v4634 = vld [vmem:[%s19 + $0x8] sm:$0xff]
    %v4635 = vld [vmem:[%s19 + $0x10] sm:$0xff]
    %v4636 = vld [vmem:[%s19 + $0x18] sm:$0xff]
    %v4637 = vld [vmem:[%s19 + $0x20] sm:$0xff]
    %v4638 = vld [vmem:[%s19 + $0x28] sm:$0xff]
    %v4639 = vld [vmem:[%s19 + $0x30] sm:$0xff]
    %v4640 = vld [vmem:[%s19 + $0x38] sm:$0xff]
    %v4641 = vld [vmem:[%s19 + $0x40] sm:$0xff]
    %v4642 = vld [vmem:[%s19 + $0x48] sm:$0xff]
    %v4643 = vld [vmem:[%s19 + $0x50] sm:$0xff]
    %v4644 = vld [vmem:[%s19 + $0x58] sm:$0xff]
    %v4645 = vld [vmem:[%s19 + $0x60] sm:$0xff]
    %v4646 = vld [vmem:[%s19 + $0x68] sm:$0xff]
    %v4647 = vld [vmem:[%s19 + $0x70] sm:$0xff]
    %v4648 = vld [vmem:[%s19 + $0x78] sm:$0xff]
    %v4649 = vld [vmem:[%s19 + $0x80] sm:$0xff]
    %v4650 = vld [vmem:[%s19 + $0x88] sm:$0xff]
    %v4651 = vld [vmem:[%s19 + $0x90] sm:$0xff]
    %v4652 = vld [vmem:[%s19 + $0x98] sm:$0xff]
    %v4653 = vld [vmem:[%s19 + $0xa0] sm:$0xff]
    %v4654 = vld [vmem:[%s19 + $0xa8] sm:$0xff]
    %v4655 = vld [vmem:[%s19 + $0xb0] sm:$0xff]
    %v4656 = vld [vmem:[%s19 + $0xb8] sm:$0xff]
    %v4657 = vld [vmem:[%s19 + $0xc0] sm:$0xff]
    %v4658 = vld [vmem:[%s19 + $0xc8] sm:$0xff]
    %v4659 = vld [vmem:[%s19 + $0xd0] sm:$0xff]
    %v4660 = vld [vmem:[%s19 + $0xd8] sm:$0xff]
    %v4661 = vld [vmem:[%s19 + $0xe0] sm:$0xff]
    %v4662 = vld [vmem:[%s19 + $0xe8] sm:$0xff]
    %v4663 = vld [vmem:[%s19 + $0xf0] sm:$0xff]
    %v4664 = vld [vmem:[%s19 + $0xf8] sm:$0xff]
    %s4665 = scalar_lea.vmem %s20, 16
    %v4666 = vld [vmem:[%s4665] sm:$0xf]
    %v4667 = vld [vmem:[%s4665 + $0x4] sm:$0xf]
    %v4668 = vld [vmem:[%s4665 + $0x8] sm:$0xf]
    %v4669 = vld [vmem:[%s4665 + $0xc] sm:$0xf]
    %v4674 = vunpack.c.l.b16 %v4666
    %v4675 = vunpack.c.l.b16 %v4667
    %v4676 = vunpack.c.l.b16 %v4668
    %v4677 = vunpack.c.l.b16 %v4669
    %v4678 = vpack.c.b16 %v4675, %v4674
    %v4679 = vpack.c.b16 %v4677, %v4676
    %v4681 = vsel %vm4306, %v4678, 0
    %v4684 = vsel %vm4306, %v4679, 0
    %4686 = vmatpush.bf16.msra.mxu0 0
    %4687 = vmatpush.bf16.msra.mxu0 0
    %4688 = vmatpush.bf16.msra.mxu0 0
    %4689 = vmatpush.bf16.msra.mxu0 0
    %4690 = vmatpush.bf16.msra.mxu0 0
    %4691 = vmatpush.bf16.msra.mxu0 0
    %4692 = vmatpush.bf16.msra.mxu0 0
    %4693 = vmatpush.bf16.msra.mxu0 %v4555
    %4694 = vmatmul.bf16.gmra.mxu0 %v4681
    %v4695 = vpop.f32.mrf.mxu0
    %v4696 = vadd.f32 0.0, %v4695
    %v4697 = vpop.f32.mrf.mxu0
    %v4698 = vadd.f32 0.0, %v4697
    %4699 = vmatmul.bf16.gmra.mxu0 %v4684
    %v4700 = vpop.f32.mrf.mxu0
    %v4701 = vadd.f32 0.0, %v4700
    %v4702 = vpop.f32.mrf.mxu0
    %v4703 = vadd.f32 0.0, %v4702
    %4704 = vdwg.mxu0
    %4705 = vmatpush.bf16.msra.mxu0 0
    %4706 = vmatpush.bf16.msra.mxu0 0
    %4707 = vmatpush.bf16.msra.mxu0 0
    %4708 = vmatpush.bf16.msra.mxu0 0
    %4709 = vmatpush.bf16.msra.mxu0 0
    %4710 = vmatpush.bf16.msra.mxu0 0
    %4711 = vmatpush.bf16.msra.mxu0 0
    %4712 = vmatpush.bf16.msra.mxu0 %v4556
    %4713 = vmatmul.bf16.gmra.mxu0 %v4681
    %v4714 = vpop.f32.mrf.mxu0
    %v4715 = vadd.f32 0.0, %v4714
    %v4716 = vpop.f32.mrf.mxu0
    %v4717 = vadd.f32 0.0, %v4716
    %4718 = vmatmul.bf16.gmra.mxu0 %v4684
    %v4719 = vpop.f32.mrf.mxu0
    %v4720 = vadd.f32 0.0, %v4719
    %v4721 = vpop.f32.mrf.mxu0
    %v4722 = vadd.f32 0.0, %v4721
    %4723 = vdwg.mxu0
    %v4724 = vpack.c.bf16 %v4698, %v4696
    %v4725 = vpack.c.bf16 %v4717, %v4715
    %v4726 = vpack.c.bf16 %v4703, %v4701
    %v4727 = vpack.c.bf16 %v4722, %v4720
    %s4728 = scalar_lea.vmem %s19, 256
    %v4729 = vld [vmem:[%s4728] sm:$0xff]
    %v4730 = vld [vmem:[%s4728 + $0x8] sm:$0xff]
    %v4731 = vld [vmem:[%s4728 + $0x10] sm:$0xff]
    %v4732 = vld [vmem:[%s4728 + $0x18] sm:$0xff]
    %v4733 = vld [vmem:[%s4728 + $0x20] sm:$0xff]
    %v4734 = vld [vmem:[%s4728 + $0x28] sm:$0xff]
    %v4735 = vld [vmem:[%s4728 + $0x30] sm:$0xff]
    %v4736 = vld [vmem:[%s4728 + $0x38] sm:$0xff]
    %v4737 = vld [vmem:[%s4728 + $0x40] sm:$0xff]
    %v4738 = vld [vmem:[%s4728 + $0x48] sm:$0xff]
    %v4739 = vld [vmem:[%s4728 + $0x50] sm:$0xff]
    %v4740 = vld [vmem:[%s4728 + $0x58] sm:$0xff]
    %v4741 = vld [vmem:[%s4728 + $0x60] sm:$0xff]
    %v4742 = vld [vmem:[%s4728 + $0x68] sm:$0xff]
    %v4743 = vld [vmem:[%s4728 + $0x70] sm:$0xff]
    %v4744 = vld [vmem:[%s4728 + $0x78] sm:$0xff]
    %v4745 = vld [vmem:[%s4728 + $0x80] sm:$0xff]
    %v4746 = vld [vmem:[%s4728 + $0x88] sm:$0xff]
    %v4747 = vld [vmem:[%s4728 + $0x90] sm:$0xff]
    %v4748 = vld [vmem:[%s4728 + $0x98] sm:$0xff]
    %v4749 = vld [vmem:[%s4728 + $0xa0] sm:$0xff]
    %v4750 = vld [vmem:[%s4728 + $0xa8] sm:$0xff]
    %v4751 = vld [vmem:[%s4728 + $0xb0] sm:$0xff]
    %v4752 = vld [vmem:[%s4728 + $0xb8] sm:$0xff]
    %v4753 = vld [vmem:[%s4728 + $0xc0] sm:$0xff]
    %v4754 = vld [vmem:[%s4728 + $0xc8] sm:$0xff]
    %v4755 = vld [vmem:[%s4728 + $0xd0] sm:$0xff]
    %v4756 = vld [vmem:[%s4728 + $0xd8] sm:$0xff]
    %v4757 = vld [vmem:[%s4728 + $0xe0] sm:$0xff]
    %v4758 = vld [vmem:[%s4728 + $0xe8] sm:$0xff]
    %v4759 = vld [vmem:[%s4728 + $0xf0] sm:$0xff]
    %v4760 = vld [vmem:[%s4728 + $0xf8] sm:$0xff]
    %v4793 = vunpack.c.l.b16 %v4729
    %v4794 = vunpack.c.h.b16 %v4729
    %v4795 = vunpack.c.l.b16 %v4730
    %v4796 = vunpack.c.h.b16 %v4730
    %v4797 = vunpack.c.l.b16 %v4731
    %v4798 = vunpack.c.h.b16 %v4731
    %v4799 = vunpack.c.l.b16 %v4732
    %v4800 = vunpack.c.h.b16 %v4732
    %v4801 = vunpack.c.l.b16 %v4733
    %v4802 = vunpack.c.h.b16 %v4733
    %v4803 = vunpack.c.l.b16 %v4734
    %v4804 = vunpack.c.h.b16 %v4734
    %v4805 = vunpack.c.l.b16 %v4735
    %v4806 = vunpack.c.h.b16 %v4735
    %v4807 = vunpack.c.l.b16 %v4736
    %v4808 = vunpack.c.h.b16 %v4736
    %v4809 = vunpack.c.l.b16 %v4737
    %v4810 = vunpack.c.h.b16 %v4737
    %v4811 = vunpack.c.l.b16 %v4738
    %v4812 = vunpack.c.h.b16 %v4738
    %v4813 = vunpack.c.l.b16 %v4739
    %v4814 = vunpack.c.h.b16 %v4739
    %v4815 = vunpack.c.l.b16 %v4740
    %v4816 = vunpack.c.h.b16 %v4740
    %v4817 = vunpack.c.l.b16 %v4741
    %v4818 = vunpack.c.h.b16 %v4741
    %v4819 = vunpack.c.l.b16 %v4742
    %v4820 = vunpack.c.h.b16 %v4742
    %v4821 = vunpack.c.l.b16 %v4743
    %v4822 = vunpack.c.h.b16 %v4743
    %v4823 = vunpack.c.l.b16 %v4744
    %v4824 = vunpack.c.h.b16 %v4744
    %v4825 = vunpack.c.l.b16 %v4745
    %v4826 = vunpack.c.h.b16 %v4745
    %v4827 = vunpack.c.l.b16 %v4746
    %v4828 = vunpack.c.h.b16 %v4746
    %v4829 = vunpack.c.l.b16 %v4747
    %v4830 = vunpack.c.h.b16 %v4747
    %v4831 = vunpack.c.l.b16 %v4748
    %v4832 = vunpack.c.h.b16 %v4748
    %v4833 = vunpack.c.l.b16 %v4749
    %v4834 = vunpack.c.h.b16 %v4749
    %v4835 = vunpack.c.l.b16 %v4750
    %v4836 = vunpack.c.h.b16 %v4750
    %v4837 = vunpack.c.l.b16 %v4751
    %v4838 = vunpack.c.h.b16 %v4751
    %v4839 = vunpack.c.l.b16 %v4752
    %v4840 = vunpack.c.h.b16 %v4752
    %v4841 = vunpack.c.l.b16 %v4753
    %v4842 = vunpack.c.h.b16 %v4753
    %v4843 = vunpack.c.l.b16 %v4754
    %v4844 = vunpack.c.h.b16 %v4754
    %v4845 = vunpack.c.l.b16 %v4755
    %v4846 = vunpack.c.h.b16 %v4755
    %v4847 = vunpack.c.l.b16 %v4756
    %v4848 = vunpack.c.h.b16 %v4756
    %v4849 = vunpack.c.l.b16 %v4757
    %v4850 = vunpack.c.h.b16 %v4757
    %v4851 = vunpack.c.l.b16 %v4758
    %v4852 = vunpack.c.h.b16 %v4758
    %v4853 = vunpack.c.l.b16 %v4759
    %v4854 = vunpack.c.h.b16 %v4759
    %v4855 = vunpack.c.l.b16 %v4760
    %v4856 = vunpack.c.h.b16 %v4760
    %v4857 = vpack.c.b16 %v4795, %v4793
    %v4858 = vpack.c.b16 %v4796, %v4794
    %v4859 = vpack.c.b16 %v4799, %v4797
    %v4860 = vpack.c.b16 %v4800, %v4798
    %v4861 = vpack.c.b16 %v4803, %v4801
    %v4862 = vpack.c.b16 %v4804, %v4802
    %v4863 = vpack.c.b16 %v4807, %v4805
    %v4864 = vpack.c.b16 %v4808, %v4806
    %v4865 = vpack.c.b16 %v4811, %v4809
    %v4866 = vpack.c.b16 %v4812, %v4810
    %v4867 = vpack.c.b16 %v4815, %v4813
    %v4868 = vpack.c.b16 %v4816, %v4814
    %v4869 = vpack.c.b16 %v4819, %v4817
    %v4870 = vpack.c.b16 %v4820, %v4818
    %v4871 = vpack.c.b16 %v4823, %v4821
    %v4872 = vpack.c.b16 %v4824, %v4822
    %v4873 = vpack.c.b16 %v4827, %v4825
    %v4874 = vpack.c.b16 %v4828, %v4826
    %v4875 = vpack.c.b16 %v4831, %v4829
    %v4876 = vpack.c.b16 %v4832, %v4830
    %v4877 = vpack.c.b16 %v4835, %v4833
    %v4878 = vpack.c.b16 %v4836, %v4834
    %v4879 = vpack.c.b16 %v4839, %v4837
    %v4880 = vpack.c.b16 %v4840, %v4838
    %v4881 = vpack.c.b16 %v4843, %v4841
    %v4882 = vpack.c.b16 %v4844, %v4842
    %v4883 = vpack.c.b16 %v4847, %v4845
    %v4884 = vpack.c.b16 %v4848, %v4846
    %v4885 = vpack.c.b16 %v4851, %v4849
    %v4886 = vpack.c.b16 %v4852, %v4850
    %v4887 = vpack.c.b16 %v4855, %v4853
    %v4888 = vpack.c.b16 %v4856, %v4854
    %4921 = vmatpush.bf16.msra.mxu0 %v4871
    %4922 = vmatpush.bf16.msra.mxu0 %v4869
    %4923 = vmatpush.bf16.msra.mxu0 %v4867
    %4924 = vmatpush.bf16.msra.mxu0 %v4865
    %4925 = vmatpush.bf16.msra.mxu0 %v4863
    %4926 = vmatpush.bf16.msra.mxu0 %v4861
    %4927 = vmatpush.bf16.msra.mxu0 %v4859
    %4928 = vmatpush.bf16.msra.mxu0 %v4857
    %4929 = vmatmul.bf16.gmra.mxu0 %v4724
    %v4930 = vpop.f32.mrf.mxu0
    %v4931 = vadd.f32 0.0, %v4930
    %v4932 = vpop.f32.mrf.mxu0
    %v4933 = vadd.f32 0.0, %v4932
    %4934 = vmatmul.bf16.gmra.mxu0 %v4726
    %v4935 = vpop.f32.mrf.mxu0
    %v4936 = vadd.f32 0.0, %v4935
    %v4937 = vpop.f32.mrf.mxu0
    %v4938 = vadd.f32 0.0, %v4937
    %4939 = vdwg.mxu0
    %4940 = vmatpush.bf16.msra.mxu0 %v4887
    %4941 = vmatpush.bf16.msra.mxu0 %v4885
    %4942 = vmatpush.bf16.msra.mxu0 %v4883
    %4943 = vmatpush.bf16.msra.mxu0 %v4881
    %4944 = vmatpush.bf16.msra.mxu0 %v4879
    %4945 = vmatpush.bf16.msra.mxu0 %v4877
    %4946 = vmatpush.bf16.msra.mxu0 %v4875
    %4947 = vmatpush.bf16.msra.mxu0 %v4873
    %4948 = vmatmul.bf16.gmra.mxu0 %v4725
    %v4949 = vpop.f32.mrf.mxu0
    %v4950 = vadd.f32 %v4931, %v4949
    %v4951 = vpop.f32.mrf.mxu0
    %v4952 = vadd.f32 %v4933, %v4951
    %4953 = vmatmul.bf16.gmra.mxu0 %v4727
    %v4954 = vpop.f32.mrf.mxu0
    %v4955 = vadd.f32 %v4936, %v4954
    %v4956 = vpop.f32.mrf.mxu0
    %v4957 = vadd.f32 %v4938, %v4956
    %4958 = vdwg.mxu0
    %4959 = vmatpush.bf16.msra.mxu0 %v4872
    %4960 = vmatpush.bf16.msra.mxu0 %v4870
    %4961 = vmatpush.bf16.msra.mxu0 %v4868
    %4962 = vmatpush.bf16.msra.mxu0 %v4866
    %4963 = vmatpush.bf16.msra.mxu0 %v4864
    %4964 = vmatpush.bf16.msra.mxu0 %v4862
    %4965 = vmatpush.bf16.msra.mxu0 %v4860
    %4966 = vmatpush.bf16.msra.mxu0 %v4858
    %4967 = vmatmul.bf16.gmra.mxu0 %v4724
    %v4968 = vpop.f32.mrf.mxu0
    %v4969 = vadd.f32 0.0, %v4968
    %v4970 = vpop.f32.mrf.mxu0
    %v4971 = vadd.f32 0.0, %v4970
    %4972 = vmatmul.bf16.gmra.mxu0 %v4726
    %v4973 = vpop.f32.mrf.mxu0
    %v4974 = vadd.f32 0.0, %v4973
    %v4975 = vpop.f32.mrf.mxu0
    %v4976 = vadd.f32 0.0, %v4975
    %4977 = vdwg.mxu0
    %4978 = vmatpush.bf16.msra.mxu0 %v4888
    %4979 = vmatpush.bf16.msra.mxu0 %v4886
    %4980 = vmatpush.bf16.msra.mxu0 %v4884
    %4981 = vmatpush.bf16.msra.mxu0 %v4882
    %4982 = vmatpush.bf16.msra.mxu0 %v4880
    %4983 = vmatpush.bf16.msra.mxu0 %v4878
    %4984 = vmatpush.bf16.msra.mxu0 %v4876
    %4985 = vmatpush.bf16.msra.mxu0 %v4874
    %4986 = vmatmul.bf16.gmra.mxu0 %v4725
    %v4987 = vpop.f32.mrf.mxu0
    %v4988 = vadd.f32 %v4969, %v4987
    %v4989 = vpop.f32.mrf.mxu0
    %v4990 = vadd.f32 %v4971, %v4989
    %4991 = vmatmul.bf16.gmra.mxu0 %v4727
    %v4992 = vpop.f32.mrf.mxu0
    %v4993 = vadd.f32 %v4974, %v4992
    %v4994 = vpop.f32.mrf.mxu0
    %v4995 = vadd.f32 %v4976, %v4994
    %4996 = vdwg.mxu0
    %v5029 = vunpack.c.l.b16 %v4633
    %v5030 = vunpack.c.h.b16 %v4633
    %v5031 = vunpack.c.l.b16 %v4634
    %v5032 = vunpack.c.h.b16 %v4634
    %v5033 = vunpack.c.l.b16 %v4635
    %v5034 = vunpack.c.h.b16 %v4635
    %v5035 = vunpack.c.l.b16 %v4636
    %v5036 = vunpack.c.h.b16 %v4636
    %v5037 = vunpack.c.l.b16 %v4637
    %v5038 = vunpack.c.h.b16 %v4637
    %v5039 = vunpack.c.l.b16 %v4638
    %v5040 = vunpack.c.h.b16 %v4638
    %v5041 = vunpack.c.l.b16 %v4639
    %v5042 = vunpack.c.h.b16 %v4639
    %v5043 = vunpack.c.l.b16 %v4640
    %v5044 = vunpack.c.h.b16 %v4640
    %v5045 = vunpack.c.l.b16 %v4641
    %v5046 = vunpack.c.h.b16 %v4641
    %v5047 = vunpack.c.l.b16 %v4642
    %v5048 = vunpack.c.h.b16 %v4642
    %v5049 = vunpack.c.l.b16 %v4643
    %v5050 = vunpack.c.h.b16 %v4643
    %v5051 = vunpack.c.l.b16 %v4644
    %v5052 = vunpack.c.h.b16 %v4644
    %v5053 = vunpack.c.l.b16 %v4645
    %v5054 = vunpack.c.h.b16 %v4645
    %v5055 = vunpack.c.l.b16 %v4646
    %v5056 = vunpack.c.h.b16 %v4646
    %v5057 = vunpack.c.l.b16 %v4647
    %v5058 = vunpack.c.h.b16 %v4647
    %v5059 = vunpack.c.l.b16 %v4648
    %v5060 = vunpack.c.h.b16 %v4648
    %v5061 = vunpack.c.l.b16 %v4649
    %v5062 = vunpack.c.h.b16 %v4649
    %v5063 = vunpack.c.l.b16 %v4650
    %v5064 = vunpack.c.h.b16 %v4650
    %v5065 = vunpack.c.l.b16 %v4651
    %v5066 = vunpack.c.h.b16 %v4651
    %v5067 = vunpack.c.l.b16 %v4652
    %v5068 = vunpack.c.h.b16 %v4652
    %v5069 = vunpack.c.l.b16 %v4653
    %v5070 = vunpack.c.h.b16 %v4653
    %v5071 = vunpack.c.l.b16 %v4654
    %v5072 = vunpack.c.h.b16 %v4654
    %v5073 = vunpack.c.l.b16 %v4655
    %v5074 = vunpack.c.h.b16 %v4655
    %v5075 = vunpack.c.l.b16 %v4656
    %v5076 = vunpack.c.h.b16 %v4656
    %v5077 = vunpack.c.l.b16 %v4657
    %v5078 = vunpack.c.h.b16 %v4657
    %v5079 = vunpack.c.l.b16 %v4658
    %v5080 = vunpack.c.h.b16 %v4658
    %v5081 = vunpack.c.l.b16 %v4659
    %v5082 = vunpack.c.h.b16 %v4659
    %v5083 = vunpack.c.l.b16 %v4660
    %v5084 = vunpack.c.h.b16 %v4660
    %v5085 = vunpack.c.l.b16 %v4661
    %v5086 = vunpack.c.h.b16 %v4661
    %v5087 = vunpack.c.l.b16 %v4662
    %v5088 = vunpack.c.h.b16 %v4662
    %v5089 = vunpack.c.l.b16 %v4663
    %v5090 = vunpack.c.h.b16 %v4663
    %v5091 = vunpack.c.l.b16 %v4664
    %v5092 = vunpack.c.h.b16 %v4664
    %v5093 = vpack.c.b16 %v5031, %v5029
    %v5094 = vpack.c.b16 %v5032, %v5030
    %v5095 = vpack.c.b16 %v5035, %v5033
    %v5096 = vpack.c.b16 %v5036, %v5034
    %v5097 = vpack.c.b16 %v5039, %v5037
    %v5098 = vpack.c.b16 %v5040, %v5038
    %v5099 = vpack.c.b16 %v5043, %v5041
    %v5100 = vpack.c.b16 %v5044, %v5042
    %v5101 = vpack.c.b16 %v5047, %v5045
    %v5102 = vpack.c.b16 %v5048, %v5046
    %v5103 = vpack.c.b16 %v5051, %v5049
    %v5104 = vpack.c.b16 %v5052, %v5050
    %v5105 = vpack.c.b16 %v5055, %v5053
    %v5106 = vpack.c.b16 %v5056, %v5054
    %v5107 = vpack.c.b16 %v5059, %v5057
    %v5108 = vpack.c.b16 %v5060, %v5058
    %v5109 = vpack.c.b16 %v5063, %v5061
    %v5110 = vpack.c.b16 %v5064, %v5062
    %v5111 = vpack.c.b16 %v5067, %v5065
    %v5112 = vpack.c.b16 %v5068, %v5066
    %v5113 = vpack.c.b16 %v5071, %v5069
    %v5114 = vpack.c.b16 %v5072, %v5070
    %v5115 = vpack.c.b16 %v5075, %v5073
    %v5116 = vpack.c.b16 %v5076, %v5074
    %v5117 = vpack.c.b16 %v5079, %v5077
    %v5118 = vpack.c.b16 %v5080, %v5078
    %v5119 = vpack.c.b16 %v5083, %v5081
    %v5120 = vpack.c.b16 %v5084, %v5082
    %v5121 = vpack.c.b16 %v5087, %v5085
    %v5122 = vpack.c.b16 %v5088, %v5086
    %v5123 = vpack.c.b16 %v5091, %v5089
    %v5124 = vpack.c.b16 %v5092, %v5090
    %5157 = vmatpush.bf16.msra.mxu0 %v5107
    %5158 = vmatpush.bf16.msra.mxu0 %v5105
    %5159 = vmatpush.bf16.msra.mxu0 %v5103
    %5160 = vmatpush.bf16.msra.mxu0 %v5101
    %5161 = vmatpush.bf16.msra.mxu0 %v5099
    %5162 = vmatpush.bf16.msra.mxu0 %v5097
    %5163 = vmatpush.bf16.msra.mxu0 %v5095
    %5164 = vmatpush.bf16.msra.mxu0 %v5093
    %5165 = vmatmul.bf16.gmra.mxu0 %v4629
    %v5166 = vpop.f32.mrf.mxu0
    %v5167 = vadd.f32 %v4950, %v5166
    %v5168 = vpop.f32.mrf.mxu0
    %v5169 = vadd.f32 %v4952, %v5168
    %5170 = vmatmul.bf16.gmra.mxu0 %v4631
    %v5171 = vpop.f32.mrf.mxu0
    %v5172 = vadd.f32 %v4955, %v5171
    %v5173 = vpop.f32.mrf.mxu0
    %v5174 = vadd.f32 %v4957, %v5173
    %5175 = vdwg.mxu0
    %5176 = vmatpush.bf16.msra.mxu0 %v5123
    %5177 = vmatpush.bf16.msra.mxu0 %v5121
    %5178 = vmatpush.bf16.msra.mxu0 %v5119
    %5179 = vmatpush.bf16.msra.mxu0 %v5117
    %5180 = vmatpush.bf16.msra.mxu0 %v5115
    %5181 = vmatpush.bf16.msra.mxu0 %v5113
    %5182 = vmatpush.bf16.msra.mxu0 %v5111
    %5183 = vmatpush.bf16.msra.mxu0 %v5109
    %5184 = vmatmul.bf16.gmra.mxu0 %v4630
    %v5185 = vpop.f32.mrf.mxu0
    %v5186 = vadd.f32 %v5167, %v5185
    %v5187 = vpop.f32.mrf.mxu0
    %v5188 = vadd.f32 %v5169, %v5187
    %5189 = vmatmul.bf16.gmra.mxu0 %v4632
    %v5190 = vpop.f32.mrf.mxu0
    %v5191 = vadd.f32 %v5172, %v5190
    %v5192 = vpop.f32.mrf.mxu0
    %v5193 = vadd.f32 %v5174, %v5192
    %5194 = vdwg.mxu0
    %5195 = vmatpush.bf16.msra.mxu0 %v5108
    %5196 = vmatpush.bf16.msra.mxu0 %v5106
    %5197 = vmatpush.bf16.msra.mxu0 %v5104
    %5198 = vmatpush.bf16.msra.mxu0 %v5102
    %5199 = vmatpush.bf16.msra.mxu0 %v5100
    %5200 = vmatpush.bf16.msra.mxu0 %v5098
    %5201 = vmatpush.bf16.msra.mxu0 %v5096
    %5202 = vmatpush.bf16.msra.mxu0 %v5094
    %5203 = vmatmul.bf16.gmra.mxu0 %v4629
    %v5204 = vpop.f32.mrf.mxu0
    %v5205 = vadd.f32 %v4988, %v5204
    %v5206 = vpop.f32.mrf.mxu0
    %v5207 = vadd.f32 %v4990, %v5206
    %5208 = vmatmul.bf16.gmra.mxu0 %v4631
    %v5209 = vpop.f32.mrf.mxu0
    %v5210 = vadd.f32 %v4993, %v5209
    %v5211 = vpop.f32.mrf.mxu0
    %v5212 = vadd.f32 %v4995, %v5211
    %5213 = vdwg.mxu0
    %5214 = vmatpush.bf16.msra.mxu0 %v5124
    %5215 = vmatpush.bf16.msra.mxu0 %v5122
    %5216 = vmatpush.bf16.msra.mxu0 %v5120
    %5217 = vmatpush.bf16.msra.mxu0 %v5118
    %5218 = vmatpush.bf16.msra.mxu0 %v5116
    %5219 = vmatpush.bf16.msra.mxu0 %v5114
    %5220 = vmatpush.bf16.msra.mxu0 %v5112
    %5221 = vmatpush.bf16.msra.mxu0 %v5110
    %5222 = vmatmul.bf16.gmra.mxu0 %v4630
    %v5223 = vpop.f32.mrf.mxu0
    %v5224 = vadd.f32 %v5205, %v5223
    %v5225 = vpop.f32.mrf.mxu0
    %v5226 = vadd.f32 %v5207, %v5225
    %5227 = vmatmul.bf16.gmra.mxu0 %v4632
    %v5228 = vpop.f32.mrf.mxu0
    %v5229 = vadd.f32 %v5210, %v5228
    %v5230 = vpop.f32.mrf.mxu0
    %v5231 = vadd.f32 %v5212, %v5230
    %5232 = vdwg.mxu0
    %s5233 = scalar_lea.vmem %s20, 32
    %v5234 = vld [vmem:[%s5233] sm:$0xf]
    %v5235 = vld [vmem:[%s5233 + $0x4] sm:$0xf]
    %v5236 = vld [vmem:[%s5233 + $0x8] sm:$0xf]
    %v5237 = vld [vmem:[%s5233 + $0xc] sm:$0xf]
    %v5242 = vunpack.c.l.b16 %v5234
    %v5243 = vunpack.c.l.b16 %v5235
    %v5244 = vunpack.c.l.b16 %v5236
    %v5245 = vunpack.c.l.b16 %v5237
    %v5246 = vpack.c.b16 %v5243, %v5242
    %v5247 = vpack.c.b16 %v5245, %v5244
    %v5249 = vsel %vm4306, %v5246, 0
    %v5252 = vsel %vm4306, %v5247, 0
    %5254 = vmatpush.bf16.msra.mxu0 0
    %5255 = vmatpush.bf16.msra.mxu0 0
    %5256 = vmatpush.bf16.msra.mxu0 0
    %5257 = vmatpush.bf16.msra.mxu0 0
    %5258 = vmatpush.bf16.msra.mxu0 0
    %5259 = vmatpush.bf16.msra.mxu0 0
    %5260 = vmatpush.bf16.msra.mxu0 0
    %5261 = vmatpush.bf16.msra.mxu0 %v4555
    %5262 = vmatmul.bf16.gmra.mxu0 %v5249
    %v5263 = vpop.f32.mrf.mxu0
    %v5264 = vadd.f32 0.0, %v5263
    %v5265 = vpop.f32.mrf.mxu0
    %v5266 = vadd.f32 0.0, %v5265
    %5267 = vmatmul.bf16.gmra.mxu0 %v5252
    %v5268 = vpop.f32.mrf.mxu0
    %v5269 = vadd.f32 0.0, %v5268
    %v5270 = vpop.f32.mrf.mxu0
    %v5271 = vadd.f32 0.0, %v5270
    %5272 = vdwg.mxu0
    %5273 = vmatpush.bf16.msra.mxu0 0
    %5274 = vmatpush.bf16.msra.mxu0 0
    %5275 = vmatpush.bf16.msra.mxu0 0
    %5276 = vmatpush.bf16.msra.mxu0 0
    %5277 = vmatpush.bf16.msra.mxu0 0
    %5278 = vmatpush.bf16.msra.mxu0 0
    %5279 = vmatpush.bf16.msra.mxu0 0
    %5280 = vmatpush.bf16.msra.mxu0 %v4556
    %5281 = vmatmul.bf16.gmra.mxu0 %v5249
    %v5282 = vpop.f32.mrf.mxu0
    %v5283 = vadd.f32 0.0, %v5282
    %v5284 = vpop.f32.mrf.mxu0
    %v5285 = vadd.f32 0.0, %v5284
    %5286 = vmatmul.bf16.gmra.mxu0 %v5252
    %v5287 = vpop.f32.mrf.mxu0
    %v5288 = vadd.f32 0.0, %v5287
    %v5289 = vpop.f32.mrf.mxu0
    %v5290 = vadd.f32 0.0, %v5289
    %5291 = vdwg.mxu0
    %v5292 = vpack.c.bf16 %v5266, %v5264
    %v5293 = vpack.c.bf16 %v5285, %v5283
    %v5294 = vpack.c.bf16 %v5271, %v5269
    %v5295 = vpack.c.bf16 %v5290, %v5288
    %s5296 = scalar_lea.vmem %s19, 512
    %v5297 = vld [vmem:[%s5296] sm:$0xff]
    %v5298 = vld [vmem:[%s5296 + $0x8] sm:$0xff]
    %v5299 = vld [vmem:[%s5296 + $0x10] sm:$0xff]
    %v5300 = vld [vmem:[%s5296 + $0x18] sm:$0xff]
    %v5301 = vld [vmem:[%s5296 + $0x20] sm:$0xff]
    %v5302 = vld [vmem:[%s5296 + $0x28] sm:$0xff]
    %v5303 = vld [vmem:[%s5296 + $0x30] sm:$0xff]
    %v5304 = vld [vmem:[%s5296 + $0x38] sm:$0xff]
    %v5305 = vld [vmem:[%s5296 + $0x40] sm:$0xff]
    %v5306 = vld [vmem:[%s5296 + $0x48] sm:$0xff]
    %v5307 = vld [vmem:[%s5296 + $0x50] sm:$0xff]
    %v5308 = vld [vmem:[%s5296 + $0x58] sm:$0xff]
    %v5309 = vld [vmem:[%s5296 + $0x60] sm:$0xff]
    %v5310 = vld [vmem:[%s5296 + $0x68] sm:$0xff]
    %v5311 = vld [vmem:[%s5296 + $0x70] sm:$0xff]
    %v5312 = vld [vmem:[%s5296 + $0x78] sm:$0xff]
    %v5313 = vld [vmem:[%s5296 + $0x80] sm:$0xff]
    %v5314 = vld [vmem:[%s5296 + $0x88] sm:$0xff]
    %v5315 = vld [vmem:[%s5296 + $0x90] sm:$0xff]
    %v5316 = vld [vmem:[%s5296 + $0x98] sm:$0xff]
    %v5317 = vld [vmem:[%s5296 + $0xa0] sm:$0xff]
    %v5318 = vld [vmem:[%s5296 + $0xa8] sm:$0xff]
    %v5319 = vld [vmem:[%s5296 + $0xb0] sm:$0xff]
    %v5320 = vld [vmem:[%s5296 + $0xb8] sm:$0xff]
    %v5321 = vld [vmem:[%s5296 + $0xc0] sm:$0xff]
    %v5322 = vld [vmem:[%s5296 + $0xc8] sm:$0xff]
    %v5323 = vld [vmem:[%s5296 + $0xd0] sm:$0xff]
    %v5324 = vld [vmem:[%s5296 + $0xd8] sm:$0xff]
    %v5325 = vld [vmem:[%s5296 + $0xe0] sm:$0xff]
    %v5326 = vld [vmem:[%s5296 + $0xe8] sm:$0xff]
    %v5327 = vld [vmem:[%s5296 + $0xf0] sm:$0xff]
    %v5328 = vld [vmem:[%s5296 + $0xf8] sm:$0xff]
    %v5361 = vunpack.c.l.b16 %v5297
    %v5362 = vunpack.c.h.b16 %v5297
    %v5363 = vunpack.c.l.b16 %v5298
    %v5364 = vunpack.c.h.b16 %v5298
    %v5365 = vunpack.c.l.b16 %v5299
    %v5366 = vunpack.c.h.b16 %v5299
    %v5367 = vunpack.c.l.b16 %v5300
    %v5368 = vunpack.c.h.b16 %v5300
    %v5369 = vunpack.c.l.b16 %v5301
    %v5370 = vunpack.c.h.b16 %v5301
    %v5371 = vunpack.c.l.b16 %v5302
    %v5372 = vunpack.c.h.b16 %v5302
    %v5373 = vunpack.c.l.b16 %v5303
    %v5374 = vunpack.c.h.b16 %v5303
    %v5375 = vunpack.c.l.b16 %v5304
    %v5376 = vunpack.c.h.b16 %v5304
    %v5377 = vunpack.c.l.b16 %v5305
    %v5378 = vunpack.c.h.b16 %v5305
    %v5379 = vunpack.c.l.b16 %v5306
    %v5380 = vunpack.c.h.b16 %v5306
    %v5381 = vunpack.c.l.b16 %v5307
    %v5382 = vunpack.c.h.b16 %v5307
    %v5383 = vunpack.c.l.b16 %v5308
    %v5384 = vunpack.c.h.b16 %v5308
    %v5385 = vunpack.c.l.b16 %v5309
    %v5386 = vunpack.c.h.b16 %v5309
    %v5387 = vunpack.c.l.b16 %v5310
    %v5388 = vunpack.c.h.b16 %v5310
    %v5389 = vunpack.c.l.b16 %v5311
    %v5390 = vunpack.c.h.b16 %v5311
    %v5391 = vunpack.c.l.b16 %v5312
    %v5392 = vunpack.c.h.b16 %v5312
    %v5393 = vunpack.c.l.b16 %v5313
    %v5394 = vunpack.c.h.b16 %v5313
    %v5395 = vunpack.c.l.b16 %v5314
    %v5396 = vunpack.c.h.b16 %v5314
    %v5397 = vunpack.c.l.b16 %v5315
    %v5398 = vunpack.c.h.b16 %v5315
    %v5399 = vunpack.c.l.b16 %v5316
    %v5400 = vunpack.c.h.b16 %v5316
    %v5401 = vunpack.c.l.b16 %v5317
    %v5402 = vunpack.c.h.b16 %v5317
    %v5403 = vunpack.c.l.b16 %v5318
    %v5404 = vunpack.c.h.b16 %v5318
    %v5405 = vunpack.c.l.b16 %v5319
    %v5406 = vunpack.c.h.b16 %v5319
    %v5407 = vunpack.c.l.b16 %v5320
    %v5408 = vunpack.c.h.b16 %v5320
    %v5409 = vunpack.c.l.b16 %v5321
    %v5410 = vunpack.c.h.b16 %v5321
    %v5411 = vunpack.c.l.b16 %v5322
    %v5412 = vunpack.c.h.b16 %v5322
    %v5413 = vunpack.c.l.b16 %v5323
    %v5414 = vunpack.c.h.b16 %v5323
    %v5415 = vunpack.c.l.b16 %v5324
    %v5416 = vunpack.c.h.b16 %v5324
    %v5417 = vunpack.c.l.b16 %v5325
    %v5418 = vunpack.c.h.b16 %v5325
    %v5419 = vunpack.c.l.b16 %v5326
    %v5420 = vunpack.c.h.b16 %v5326
    %v5421 = vunpack.c.l.b16 %v5327
    %v5422 = vunpack.c.h.b16 %v5327
    %v5423 = vunpack.c.l.b16 %v5328
    %v5424 = vunpack.c.h.b16 %v5328
    %v5425 = vpack.c.b16 %v5363, %v5361
    %v5426 = vpack.c.b16 %v5364, %v5362
    %v5427 = vpack.c.b16 %v5367, %v5365
    %v5428 = vpack.c.b16 %v5368, %v5366
    %v5429 = vpack.c.b16 %v5371, %v5369
    %v5430 = vpack.c.b16 %v5372, %v5370
    %v5431 = vpack.c.b16 %v5375, %v5373
    %v5432 = vpack.c.b16 %v5376, %v5374
    %v5433 = vpack.c.b16 %v5379, %v5377
    %v5434 = vpack.c.b16 %v5380, %v5378
    %v5435 = vpack.c.b16 %v5383, %v5381
    %v5436 = vpack.c.b16 %v5384, %v5382
    %v5437 = vpack.c.b16 %v5387, %v5385
    %v5438 = vpack.c.b16 %v5388, %v5386
    %v5439 = vpack.c.b16 %v5391, %v5389
    %v5440 = vpack.c.b16 %v5392, %v5390
    %v5441 = vpack.c.b16 %v5395, %v5393
    %v5442 = vpack.c.b16 %v5396, %v5394
    %v5443 = vpack.c.b16 %v5399, %v5397
    %v5444 = vpack.c.b16 %v5400, %v5398
    %v5445 = vpack.c.b16 %v5403, %v5401
    %v5446 = vpack.c.b16 %v5404, %v5402
    %v5447 = vpack.c.b16 %v5407, %v5405
    %v5448 = vpack.c.b16 %v5408, %v5406
    %v5449 = vpack.c.b16 %v5411, %v5409
    %v5450 = vpack.c.b16 %v5412, %v5410
    %v5451 = vpack.c.b16 %v5415, %v5413
    %v5452 = vpack.c.b16 %v5416, %v5414
    %v5453 = vpack.c.b16 %v5419, %v5417
    %v5454 = vpack.c.b16 %v5420, %v5418
    %v5455 = vpack.c.b16 %v5423, %v5421
    %v5456 = vpack.c.b16 %v5424, %v5422
    %5489 = vmatpush.bf16.msra.mxu0 %v5439
    %5490 = vmatpush.bf16.msra.mxu0 %v5437
    %5491 = vmatpush.bf16.msra.mxu0 %v5435
    %5492 = vmatpush.bf16.msra.mxu0 %v5433
    %5493 = vmatpush.bf16.msra.mxu0 %v5431
    %5494 = vmatpush.bf16.msra.mxu0 %v5429
    %5495 = vmatpush.bf16.msra.mxu0 %v5427
    %5496 = vmatpush.bf16.msra.mxu0 %v5425
    %5497 = vmatmul.bf16.gmra.mxu0 %v5292
    %v5498 = vpop.f32.mrf.mxu0
    %v5499 = vadd.f32 0.0, %v5498
    %v5500 = vpop.f32.mrf.mxu0
    %v5501 = vadd.f32 0.0, %v5500
    %5502 = vmatmul.bf16.gmra.mxu0 %v5294
    %v5503 = vpop.f32.mrf.mxu0
    %v5504 = vadd.f32 0.0, %v5503
    %v5505 = vpop.f32.mrf.mxu0
    %v5506 = vadd.f32 0.0, %v5505
    %5507 = vdwg.mxu0
    %5508 = vmatpush.bf16.msra.mxu0 %v5455
    %5509 = vmatpush.bf16.msra.mxu0 %v5453
    %5510 = vmatpush.bf16.msra.mxu0 %v5451
    %5511 = vmatpush.bf16.msra.mxu0 %v5449
    %5512 = vmatpush.bf16.msra.mxu0 %v5447
    %5513 = vmatpush.bf16.msra.mxu0 %v5445
    %5514 = vmatpush.bf16.msra.mxu0 %v5443
    %5515 = vmatpush.bf16.msra.mxu0 %v5441
    %5516 = vmatmul.bf16.gmra.mxu0 %v5293
    %v5517 = vpop.f32.mrf.mxu0
    %v5518 = vadd.f32 %v5499, %v5517
    %v5519 = vpop.f32.mrf.mxu0
    %v5520 = vadd.f32 %v5501, %v5519
    %5521 = vmatmul.bf16.gmra.mxu0 %v5295
    %v5522 = vpop.f32.mrf.mxu0
    %v5523 = vadd.f32 %v5504, %v5522
    %v5524 = vpop.f32.mrf.mxu0
    %v5525 = vadd.f32 %v5506, %v5524
    %5526 = vdwg.mxu0
    %5527 = vmatpush.bf16.msra.mxu0 %v5440
    %5528 = vmatpush.bf16.msra.mxu0 %v5438
    %5529 = vmatpush.bf16.msra.mxu0 %v5436
    %5530 = vmatpush.bf16.msra.mxu0 %v5434
    %5531 = vmatpush.bf16.msra.mxu0 %v5432
    %5532 = vmatpush.bf16.msra.mxu0 %v5430
    %5533 = vmatpush.bf16.msra.mxu0 %v5428
    %5534 = vmatpush.bf16.msra.mxu0 %v5426
    %5535 = vmatmul.bf16.gmra.mxu0 %v5292
    %v5536 = vpop.f32.mrf.mxu0
    %v5537 = vadd.f32 0.0, %v5536
    %v5538 = vpop.f32.mrf.mxu0
    %v5539 = vadd.f32 0.0, %v5538
    %5540 = vmatmul.bf16.gmra.mxu0 %v5294
    %v5541 = vpop.f32.mrf.mxu0
    %v5542 = vadd.f32 0.0, %v5541
    %v5543 = vpop.f32.mrf.mxu0
    %v5544 = vadd.f32 0.0, %v5543
    %5545 = vdwg.mxu0
    %5546 = vmatpush.bf16.msra.mxu0 %v5456
    %5547 = vmatpush.bf16.msra.mxu0 %v5454
    %5548 = vmatpush.bf16.msra.mxu0 %v5452
    %5549 = vmatpush.bf16.msra.mxu0 %v5450
    %5550 = vmatpush.bf16.msra.mxu0 %v5448
    %5551 = vmatpush.bf16.msra.mxu0 %v5446
    %5552 = vmatpush.bf16.msra.mxu0 %v5444
    %5553 = vmatpush.bf16.msra.mxu0 %v5442
    %5554 = vmatmul.bf16.gmra.mxu0 %v5293
    %v5555 = vpop.f32.mrf.mxu0
    %v5556 = vadd.f32 %v5537, %v5555
    %v5557 = vpop.f32.mrf.mxu0
    %v5558 = vadd.f32 %v5539, %v5557
    %5559 = vmatmul.bf16.gmra.mxu0 %v5295
    %v5560 = vpop.f32.mrf.mxu0
    %v5561 = vadd.f32 %v5542, %v5560
    %v5562 = vpop.f32.mrf.mxu0
    %v5563 = vadd.f32 %v5544, %v5562
    %5564 = vdwg.mxu0
    %v5565 = vadd.f32 %v5186, %v5518
    %v5566 = vadd.f32 %v5224, %v5556
    %v5567 = vadd.f32 %v5188, %v5520
    %v5568 = vadd.f32 %v5226, %v5558
    %v5569 = vadd.f32 %v5191, %v5523
    %v5570 = vadd.f32 %v5229, %v5561
    %v5571 = vadd.f32 %v5193, %v5525
    %v5572 = vadd.f32 %v5231, %v5563
    %s5573 = scalar_lea.vmem %s20, 48
    %v5574 = vld [vmem:[%s5573] sm:$0xf]
    %v5575 = vld [vmem:[%s5573 + $0x4] sm:$0xf]
    %v5576 = vld [vmem:[%s5573 + $0x8] sm:$0xf]
    %v5577 = vld [vmem:[%s5573 + $0xc] sm:$0xf]
    %v5582 = vunpack.c.l.b16 %v5574
    %v5583 = vunpack.c.l.b16 %v5575
    %v5584 = vunpack.c.l.b16 %v5576
    %v5585 = vunpack.c.l.b16 %v5577
    %v5586 = vpack.c.b16 %v5583, %v5582
    %v5587 = vpack.c.b16 %v5585, %v5584
    %v5589 = vsel %vm4306, %v5586, 0
    %v5592 = vsel %vm4306, %v5587, 0
    %5594 = vmatpush.bf16.msra.mxu0 0
    %5595 = vmatpush.bf16.msra.mxu0 0
    %5596 = vmatpush.bf16.msra.mxu0 0
    %5597 = vmatpush.bf16.msra.mxu0 0
    %5598 = vmatpush.bf16.msra.mxu0 0
    %5599 = vmatpush.bf16.msra.mxu0 0
    %5600 = vmatpush.bf16.msra.mxu0 0
    %5601 = vmatpush.bf16.msra.mxu0 %v4555
    %5602 = vmatmul.bf16.gmra.mxu0 %v5589
    %v5603 = vpop.f32.mrf.mxu0
    %v5604 = vadd.f32 0.0, %v5603
    %v5605 = vpop.f32.mrf.mxu0
    %v5606 = vadd.f32 0.0, %v5605
    %5607 = vmatmul.bf16.gmra.mxu0 %v5592
    %v5608 = vpop.f32.mrf.mxu0
    %v5609 = vadd.f32 0.0, %v5608
    %v5610 = vpop.f32.mrf.mxu0
    %v5611 = vadd.f32 0.0, %v5610
    %5612 = vdwg.mxu0
    %5613 = vmatpush.bf16.msra.mxu0 0
    %5614 = vmatpush.bf16.msra.mxu0 0
    %5615 = vmatpush.bf16.msra.mxu0 0
    %5616 = vmatpush.bf16.msra.mxu0 0
    %5617 = vmatpush.bf16.msra.mxu0 0
    %5618 = vmatpush.bf16.msra.mxu0 0
    %5619 = vmatpush.bf16.msra.mxu0 0
    %5620 = vmatpush.bf16.msra.mxu0 %v4556
    %5621 = vmatmul.bf16.gmra.mxu0 %v5589
    %v5622 = vpop.f32.mrf.mxu0
    %v5623 = vadd.f32 0.0, %v5622
    %v5624 = vpop.f32.mrf.mxu0
    %v5625 = vadd.f32 0.0, %v5624
    %5626 = vmatmul.bf16.gmra.mxu0 %v5592
    %v5627 = vpop.f32.mrf.mxu0
    %v5628 = vadd.f32 0.0, %v5627
    %v5629 = vpop.f32.mrf.mxu0
    %v5630 = vadd.f32 0.0, %v5629
    %5631 = vdwg.mxu0
    %v5632 = vpack.c.bf16 %v5606, %v5604
    %v5633 = vpack.c.bf16 %v5625, %v5623
    %v5634 = vpack.c.bf16 %v5611, %v5609
    %v5635 = vpack.c.bf16 %v5630, %v5628
    %s5636 = scalar_lea.vmem %s19, 768
    %v5637 = vld [vmem:[%s5636] sm:$0xff]
    %v5638 = vld [vmem:[%s5636 + $0x8] sm:$0xff]
    %v5639 = vld [vmem:[%s5636 + $0x10] sm:$0xff]
    %v5640 = vld [vmem:[%s5636 + $0x18] sm:$0xff]
    %v5641 = vld [vmem:[%s5636 + $0x20] sm:$0xff]
    %v5642 = vld [vmem:[%s5636 + $0x28] sm:$0xff]
    %v5643 = vld [vmem:[%s5636 + $0x30] sm:$0xff]
    %v5644 = vld [vmem:[%s5636 + $0x38] sm:$0xff]
    %v5645 = vld [vmem:[%s5636 + $0x40] sm:$0xff]
    %v5646 = vld [vmem:[%s5636 + $0x48] sm:$0xff]
    %v5647 = vld [vmem:[%s5636 + $0x50] sm:$0xff]
    %v5648 = vld [vmem:[%s5636 + $0x58] sm:$0xff]
    %v5649 = vld [vmem:[%s5636 + $0x60] sm:$0xff]
    %v5650 = vld [vmem:[%s5636 + $0x68] sm:$0xff]
    %v5651 = vld [vmem:[%s5636 + $0x70] sm:$0xff]
    %v5652 = vld [vmem:[%s5636 + $0x78] sm:$0xff]
    %v5653 = vld [vmem:[%s5636 + $0x80] sm:$0xff]
    %v5654 = vld [vmem:[%s5636 + $0x88] sm:$0xff]
    %v5655 = vld [vmem:[%s5636 + $0x90] sm:$0xff]
    %v5656 = vld [vmem:[%s5636 + $0x98] sm:$0xff]
    %v5657 = vld [vmem:[%s5636 + $0xa0] sm:$0xff]
    %v5658 = vld [vmem:[%s5636 + $0xa8] sm:$0xff]
    %v5659 = vld [vmem:[%s5636 + $0xb0] sm:$0xff]
    %v5660 = vld [vmem:[%s5636 + $0xb8] sm:$0xff]
    %v5661 = vld [vmem:[%s5636 + $0xc0] sm:$0xff]
    %v5662 = vld [vmem:[%s5636 + $0xc8] sm:$0xff]
    %v5663 = vld [vmem:[%s5636 + $0xd0] sm:$0xff]
    %v5664 = vld [vmem:[%s5636 + $0xd8] sm:$0xff]
    %v5665 = vld [vmem:[%s5636 + $0xe0] sm:$0xff]
    %v5666 = vld [vmem:[%s5636 + $0xe8] sm:$0xff]
    %v5667 = vld [vmem:[%s5636 + $0xf0] sm:$0xff]
    %v5668 = vld [vmem:[%s5636 + $0xf8] sm:$0xff]
    %v5701 = vunpack.c.l.b16 %v5637
    %v5702 = vunpack.c.h.b16 %v5637
    %v5703 = vunpack.c.l.b16 %v5638
    %v5704 = vunpack.c.h.b16 %v5638
    %v5705 = vunpack.c.l.b16 %v5639
    %v5706 = vunpack.c.h.b16 %v5639
    %v5707 = vunpack.c.l.b16 %v5640
    %v5708 = vunpack.c.h.b16 %v5640
    %v5709 = vunpack.c.l.b16 %v5641
    %v5710 = vunpack.c.h.b16 %v5641
    %v5711 = vunpack.c.l.b16 %v5642
    %v5712 = vunpack.c.h.b16 %v5642
    %v5713 = vunpack.c.l.b16 %v5643
    %v5714 = vunpack.c.h.b16 %v5643
    %v5715 = vunpack.c.l.b16 %v5644
    %v5716 = vunpack.c.h.b16 %v5644
    %v5717 = vunpack.c.l.b16 %v5645
    %v5718 = vunpack.c.h.b16 %v5645
    %v5719 = vunpack.c.l.b16 %v5646
    %v5720 = vunpack.c.h.b16 %v5646
    %v5721 = vunpack.c.l.b16 %v5647
    %v5722 = vunpack.c.h.b16 %v5647
    %v5723 = vunpack.c.l.b16 %v5648
    %v5724 = vunpack.c.h.b16 %v5648
    %v5725 = vunpack.c.l.b16 %v5649
    %v5726 = vunpack.c.h.b16 %v5649
    %v5727 = vunpack.c.l.b16 %v5650
    %v5728 = vunpack.c.h.b16 %v5650
    %v5729 = vunpack.c.l.b16 %v5651
    %v5730 = vunpack.c.h.b16 %v5651
    %v5731 = vunpack.c.l.b16 %v5652
    %v5732 = vunpack.c.h.b16 %v5652
    %v5733 = vunpack.c.l.b16 %v5653
    %v5734 = vunpack.c.h.b16 %v5653
    %v5735 = vunpack.c.l.b16 %v5654
    %v5736 = vunpack.c.h.b16 %v5654
    %v5737 = vunpack.c.l.b16 %v5655
    %v5738 = vunpack.c.h.b16 %v5655
    %v5739 = vunpack.c.l.b16 %v5656
    %v5740 = vunpack.c.h.b16 %v5656
    %v5741 = vunpack.c.l.b16 %v5657
    %v5742 = vunpack.c.h.b16 %v5657
    %v5743 = vunpack.c.l.b16 %v5658
    %v5744 = vunpack.c.h.b16 %v5658
    %v5745 = vunpack.c.l.b16 %v5659
    %v5746 = vunpack.c.h.b16 %v5659
    %v5747 = vunpack.c.l.b16 %v5660
    %v5748 = vunpack.c.h.b16 %v5660
    %v5749 = vunpack.c.l.b16 %v5661
    %v5750 = vunpack.c.h.b16 %v5661
    %v5751 = vunpack.c.l.b16 %v5662
    %v5752 = vunpack.c.h.b16 %v5662
    %v5753 = vunpack.c.l.b16 %v5663
    %v5754 = vunpack.c.h.b16 %v5663
    %v5755 = vunpack.c.l.b16 %v5664
    %v5756 = vunpack.c.h.b16 %v5664
    %v5757 = vunpack.c.l.b16 %v5665
    %v5758 = vunpack.c.h.b16 %v5665
    %v5759 = vunpack.c.l.b16 %v5666
    %v5760 = vunpack.c.h.b16 %v5666
    %v5761 = vunpack.c.l.b16 %v5667
    %v5762 = vunpack.c.h.b16 %v5667
    %v5763 = vunpack.c.l.b16 %v5668
    %v5764 = vunpack.c.h.b16 %v5668
    %v5765 = vpack.c.b16 %v5703, %v5701
    %v5766 = vpack.c.b16 %v5704, %v5702
    %v5767 = vpack.c.b16 %v5707, %v5705
    %v5768 = vpack.c.b16 %v5708, %v5706
    %v5769 = vpack.c.b16 %v5711, %v5709
    %v5770 = vpack.c.b16 %v5712, %v5710
    %v5771 = vpack.c.b16 %v5715, %v5713
    %v5772 = vpack.c.b16 %v5716, %v5714
    %v5773 = vpack.c.b16 %v5719, %v5717
    %v5774 = vpack.c.b16 %v5720, %v5718
    %v5775 = vpack.c.b16 %v5723, %v5721
    %v5776 = vpack.c.b16 %v5724, %v5722
    %v5777 = vpack.c.b16 %v5727, %v5725
    %v5778 = vpack.c.b16 %v5728, %v5726
    %v5779 = vpack.c.b16 %v5731, %v5729
    %v5780 = vpack.c.b16 %v5732, %v5730
    %v5781 = vpack.c.b16 %v5735, %v5733
    %v5782 = vpack.c.b16 %v5736, %v5734
    %v5783 = vpack.c.b16 %v5739, %v5737
    %v5784 = vpack.c.b16 %v5740, %v5738
    %v5785 = vpack.c.b16 %v5743, %v5741
    %v5786 = vpack.c.b16 %v5744, %v5742
    %v5787 = vpack.c.b16 %v5747, %v5745
    %v5788 = vpack.c.b16 %v5748, %v5746
    %v5789 = vpack.c.b16 %v5751, %v5749
    %v5790 = vpack.c.b16 %v5752, %v5750
    %v5791 = vpack.c.b16 %v5755, %v5753
    %v5792 = vpack.c.b16 %v5756, %v5754
    %v5793 = vpack.c.b16 %v5759, %v5757
    %v5794 = vpack.c.b16 %v5760, %v5758
    %v5795 = vpack.c.b16 %v5763, %v5761
    %v5796 = vpack.c.b16 %v5764, %v5762
    %5829 = vmatpush.bf16.msra.mxu0 %v5779
    %5830 = vmatpush.bf16.msra.mxu0 %v5777
    %5831 = vmatpush.bf16.msra.mxu0 %v5775
    %5832 = vmatpush.bf16.msra.mxu0 %v5773
    %5833 = vmatpush.bf16.msra.mxu0 %v5771
    %5834 = vmatpush.bf16.msra.mxu0 %v5769
    %5835 = vmatpush.bf16.msra.mxu0 %v5767
    %5836 = vmatpush.bf16.msra.mxu0 %v5765
    %5837 = vmatmul.bf16.gmra.mxu0 %v5632
    %v5838 = vpop.f32.mrf.mxu0
    %v5839 = vadd.f32 0.0, %v5838
    %v5840 = vpop.f32.mrf.mxu0
    %v5841 = vadd.f32 0.0, %v5840
    %5842 = vmatmul.bf16.gmra.mxu0 %v5634
    %v5843 = vpop.f32.mrf.mxu0
    %v5844 = vadd.f32 0.0, %v5843
    %v5845 = vpop.f32.mrf.mxu0
    %v5846 = vadd.f32 0.0, %v5845
    %5847 = vdwg.mxu0
    %5848 = vmatpush.bf16.msra.mxu0 %v5795
    %5849 = vmatpush.bf16.msra.mxu0 %v5793
    %5850 = vmatpush.bf16.msra.mxu0 %v5791
    %5851 = vmatpush.bf16.msra.mxu0 %v5789
    %5852 = vmatpush.bf16.msra.mxu0 %v5787
    %5853 = vmatpush.bf16.msra.mxu0 %v5785
    %5854 = vmatpush.bf16.msra.mxu0 %v5783
    %5855 = vmatpush.bf16.msra.mxu0 %v5781
    %5856 = vmatmul.bf16.gmra.mxu0 %v5633
    %v5857 = vpop.f32.mrf.mxu0
    %v5858 = vadd.f32 %v5839, %v5857
    %v5859 = vpop.f32.mrf.mxu0
    %v5860 = vadd.f32 %v5841, %v5859
    %5861 = vmatmul.bf16.gmra.mxu0 %v5635
    %v5862 = vpop.f32.mrf.mxu0
    %v5863 = vadd.f32 %v5844, %v5862
    %v5864 = vpop.f32.mrf.mxu0
    %v5865 = vadd.f32 %v5846, %v5864
    %5866 = vdwg.mxu0
    %5867 = vmatpush.bf16.msra.mxu0 %v5780
    %5868 = vmatpush.bf16.msra.mxu0 %v5778
    %5869 = vmatpush.bf16.msra.mxu0 %v5776
    %5870 = vmatpush.bf16.msra.mxu0 %v5774
    %5871 = vmatpush.bf16.msra.mxu0 %v5772
    %5872 = vmatpush.bf16.msra.mxu0 %v5770
    %5873 = vmatpush.bf16.msra.mxu0 %v5768
    %5874 = vmatpush.bf16.msra.mxu0 %v5766
    %5875 = vmatmul.bf16.gmra.mxu0 %v5632
    %v5876 = vpop.f32.mrf.mxu0
    %v5877 = vadd.f32 0.0, %v5876
    %v5878 = vpop.f32.mrf.mxu0
    %v5879 = vadd.f32 0.0, %v5878
    %5880 = vmatmul.bf16.gmra.mxu0 %v5634
    %v5881 = vpop.f32.mrf.mxu0
    %v5882 = vadd.f32 0.0, %v5881
    %v5883 = vpop.f32.mrf.mxu0
    %v5884 = vadd.f32 0.0, %v5883
    %5885 = vdwg.mxu0
    %5886 = vmatpush.bf16.msra.mxu0 %v5796
    %5887 = vmatpush.bf16.msra.mxu0 %v5794
    %5888 = vmatpush.bf16.msra.mxu0 %v5792
    %5889 = vmatpush.bf16.msra.mxu0 %v5790
    %5890 = vmatpush.bf16.msra.mxu0 %v5788
    %5891 = vmatpush.bf16.msra.mxu0 %v5786
    %5892 = vmatpush.bf16.msra.mxu0 %v5784
    %5893 = vmatpush.bf16.msra.mxu0 %v5782
    %5894 = vmatmul.bf16.gmra.mxu0 %v5633
    %v5895 = vpop.f32.mrf.mxu0
    %v5896 = vadd.f32 %v5877, %v5895
    %v5897 = vpop.f32.mrf.mxu0
    %v5898 = vadd.f32 %v5879, %v5897
    %5899 = vmatmul.bf16.gmra.mxu0 %v5635
    %v5900 = vpop.f32.mrf.mxu0
    %v5901 = vadd.f32 %v5882, %v5900
    %v5902 = vpop.f32.mrf.mxu0
    %v5903 = vadd.f32 %v5884, %v5902
    %5904 = vdwg.mxu0
    %v5905 = vadd.f32 %v5565, %v5858
    %v5906 = vadd.f32 %v5566, %v5896
    %v5907 = vadd.f32 %v5567, %v5860
    %v5908 = vadd.f32 %v5568, %v5898
    %v5909 = vadd.f32 %v5569, %v5863
    %v5910 = vadd.f32 %v5570, %v5901
    %v5911 = vadd.f32 %v5571, %v5865
    %v5912 = vadd.f32 %v5572, %v5903
    %5913 = vmatpush.bf16.msra.mxu0 0
    %5914 = vmatpush.bf16.msra.mxu0 0
    %5915 = vmatpush.bf16.msra.mxu0 0
    %5916 = vmatpush.bf16.msra.mxu0 0
    %5917 = vmatpush.bf16.msra.mxu0 0
    %5918 = vmatpush.bf16.msra.mxu0 0
    %5919 = vmatpush.bf16.msra.mxu0 0
    %5920 = vmatpush.bf16.msra.mxu0 %v4569
    %5921 = vmatmul.bf16.gmra.mxu0 %v4586
    %v5922 = vpop.f32.mrf.mxu0
    %v5923 = vadd.f32 0.0, %v5922
    %v5924 = vpop.f32.mrf.mxu0
    %v5925 = vadd.f32 0.0, %v5924
    %5926 = vmatmul.bf16.gmra.mxu0 %v4589
    %v5927 = vpop.f32.mrf.mxu0
    %v5928 = vadd.f32 0.0, %v5927
    %v5929 = vpop.f32.mrf.mxu0
    %v5930 = vadd.f32 0.0, %v5929
    %5931 = vdwg.mxu0
    %5932 = vmatpush.bf16.msra.mxu0 0
    %5933 = vmatpush.bf16.msra.mxu0 0
    %5934 = vmatpush.bf16.msra.mxu0 0
    %5935 = vmatpush.bf16.msra.mxu0 0
    %5936 = vmatpush.bf16.msra.mxu0 0
    %5937 = vmatpush.bf16.msra.mxu0 0
    %5938 = vmatpush.bf16.msra.mxu0 0
    %5939 = vmatpush.bf16.msra.mxu0 %v4570
    %5940 = vmatmul.bf16.gmra.mxu0 %v4586
    %v5941 = vpop.f32.mrf.mxu0
    %v5942 = vadd.f32 0.0, %v5941
    %v5943 = vpop.f32.mrf.mxu0
    %v5944 = vadd.f32 0.0, %v5943
    %5945 = vmatmul.bf16.gmra.mxu0 %v4589
    %v5946 = vpop.f32.mrf.mxu0
    %v5947 = vadd.f32 0.0, %v5946
    %v5948 = vpop.f32.mrf.mxu0
    %v5949 = vadd.f32 0.0, %v5948
    %5950 = vdwg.mxu0
    %v5951 = vpack.c.bf16 %v5925, %v5923
    %v5952 = vpack.c.bf16 %v5944, %v5942
    %v5953 = vpack.c.bf16 %v5930, %v5928
    %v5954 = vpack.c.bf16 %v5949, %v5947
    %5955 = vmatpush.bf16.msra.mxu0 0
    %5956 = vmatpush.bf16.msra.mxu0 0
    %5957 = vmatpush.bf16.msra.mxu0 0
    %5958 = vmatpush.bf16.msra.mxu0 0
    %5959 = vmatpush.bf16.msra.mxu0 0
    %5960 = vmatpush.bf16.msra.mxu0 0
    %5961 = vmatpush.bf16.msra.mxu0 0
    %5962 = vmatpush.bf16.msra.mxu0 %v4569
    %5963 = vmatmul.bf16.gmra.mxu0 %v4681
    %v5964 = vpop.f32.mrf.mxu0
    %v5965 = vadd.f32 0.0, %v5964
    %v5966 = vpop.f32.mrf.mxu0
    %v5967 = vadd.f32 0.0, %v5966
    %5968 = vmatmul.bf16.gmra.mxu0 %v4684
    %v5969 = vpop.f32.mrf.mxu0
    %v5970 = vadd.f32 0.0, %v5969
    %v5971 = vpop.f32.mrf.mxu0
    %v5972 = vadd.f32 0.0, %v5971
    %5973 = vdwg.mxu0
    %5974 = vmatpush.bf16.msra.mxu0 0
    %5975 = vmatpush.bf16.msra.mxu0 0
    %5976 = vmatpush.bf16.msra.mxu0 0
    %5977 = vmatpush.bf16.msra.mxu0 0
    %5978 = vmatpush.bf16.msra.mxu0 0
    %5979 = vmatpush.bf16.msra.mxu0 0
    %5980 = vmatpush.bf16.msra.mxu0 0
    %5981 = vmatpush.bf16.msra.mxu0 %v4570
    %5982 = vmatmul.bf16.gmra.mxu0 %v4681
    %v5983 = vpop.f32.mrf.mxu0
    %v5984 = vadd.f32 0.0, %v5983
    %v5985 = vpop.f32.mrf.mxu0
    %v5986 = vadd.f32 0.0, %v5985
    %5987 = vmatmul.bf16.gmra.mxu0 %v4684
    %v5988 = vpop.f32.mrf.mxu0
    %v5989 = vadd.f32 0.0, %v5988
    %v5990 = vpop.f32.mrf.mxu0
    %v5991 = vadd.f32 0.0, %v5990
    %5992 = vdwg.mxu0
    %v5993 = vpack.c.bf16 %v5967, %v5965
    %v5994 = vpack.c.bf16 %v5986, %v5984
    %v5995 = vpack.c.bf16 %v5972, %v5970
    %v5996 = vpack.c.bf16 %v5991, %v5989
    %5997 = vmatpush.bf16.msra.mxu0 %v4871
    %5998 = vmatpush.bf16.msra.mxu0 %v4869
    %5999 = vmatpush.bf16.msra.mxu0 %v4867
    %6000 = vmatpush.bf16.msra.mxu0 %v4865
    %6001 = vmatpush.bf16.msra.mxu0 %v4863
    %6002 = vmatpush.bf16.msra.mxu0 %v4861
    %6003 = vmatpush.bf16.msra.mxu0 %v4859
    %6004 = vmatpush.bf16.msra.mxu0 %v4857
    %6005 = vmatmul.bf16.gmra.mxu0 %v5993
    %v6006 = vpop.f32.mrf.mxu0
    %v6007 = vadd.f32 0.0, %v6006
    %v6008 = vpop.f32.mrf.mxu0
    %v6009 = vadd.f32 0.0, %v6008
    %6010 = vmatmul.bf16.gmra.mxu0 %v5995
    %v6011 = vpop.f32.mrf.mxu0
    %v6012 = vadd.f32 0.0, %v6011
    %v6013 = vpop.f32.mrf.mxu0
    %v6014 = vadd.f32 0.0, %v6013
    %6015 = vdwg.mxu0
    %6016 = vmatpush.bf16.msra.mxu0 %v4887
    %6017 = vmatpush.bf16.msra.mxu0 %v4885
    %6018 = vmatpush.bf16.msra.mxu0 %v4883
    %6019 = vmatpush.bf16.msra.mxu0 %v4881
    %6020 = vmatpush.bf16.msra.mxu0 %v4879
    %6021 = vmatpush.bf16.msra.mxu0 %v4877
    %6022 = vmatpush.bf16.msra.mxu0 %v4875
    %6023 = vmatpush.bf16.msra.mxu0 %v4873
    %6024 = vmatmul.bf16.gmra.mxu0 %v5994
    %v6025 = vpop.f32.mrf.mxu0
    %v6026 = vadd.f32 %v6007, %v6025
    %v6027 = vpop.f32.mrf.mxu0
    %v6028 = vadd.f32 %v6009, %v6027
    %6029 = vmatmul.bf16.gmra.mxu0 %v5996
    %v6030 = vpop.f32.mrf.mxu0
    %v6031 = vadd.f32 %v6012, %v6030
    %v6032 = vpop.f32.mrf.mxu0
    %v6033 = vadd.f32 %v6014, %v6032
    %6034 = vdwg.mxu0
    %6035 = vmatpush.bf16.msra.mxu0 %v4872
    %6036 = vmatpush.bf16.msra.mxu0 %v4870
    %6037 = vmatpush.bf16.msra.mxu0 %v4868
    %6038 = vmatpush.bf16.msra.mxu0 %v4866
    %6039 = vmatpush.bf16.msra.mxu0 %v4864
    %6040 = vmatpush.bf16.msra.mxu0 %v4862
    %6041 = vmatpush.bf16.msra.mxu0 %v4860
    %6042 = vmatpush.bf16.msra.mxu0 %v4858
    %6043 = vmatmul.bf16.gmra.mxu0 %v5993
    %v6044 = vpop.f32.mrf.mxu0
    %v6045 = vadd.f32 0.0, %v6044
    %v6046 = vpop.f32.mrf.mxu0
    %v6047 = vadd.f32 0.0, %v6046
    %6048 = vmatmul.bf16.gmra.mxu0 %v5995
    %v6049 = vpop.f32.mrf.mxu0
    %v6050 = vadd.f32 0.0, %v6049
    %v6051 = vpop.f32.mrf.mxu0
    %v6052 = vadd.f32 0.0, %v6051
    %6053 = vdwg.mxu0
    %6054 = vmatpush.bf16.msra.mxu0 %v4888
    %6055 = vmatpush.bf16.msra.mxu0 %v4886
    %6056 = vmatpush.bf16.msra.mxu0 %v4884
    %6057 = vmatpush.bf16.msra.mxu0 %v4882
    %6058 = vmatpush.bf16.msra.mxu0 %v4880
    %6059 = vmatpush.bf16.msra.mxu0 %v4878
    %6060 = vmatpush.bf16.msra.mxu0 %v4876
    %6061 = vmatpush.bf16.msra.mxu0 %v4874
    %6062 = vmatmul.bf16.gmra.mxu0 %v5994
    %v6063 = vpop.f32.mrf.mxu0
    %v6064 = vadd.f32 %v6045, %v6063
    %v6065 = vpop.f32.mrf.mxu0
    %v6066 = vadd.f32 %v6047, %v6065
    %6067 = vmatmul.bf16.gmra.mxu0 %v5996
    %v6068 = vpop.f32.mrf.mxu0
    %v6069 = vadd.f32 %v6050, %v6068
    %v6070 = vpop.f32.mrf.mxu0
    %v6071 = vadd.f32 %v6052, %v6070
    %6072 = vdwg.mxu0
    %6073 = vmatpush.bf16.msra.mxu0 %v5107
    %6074 = vmatpush.bf16.msra.mxu0 %v5105
    %6075 = vmatpush.bf16.msra.mxu0 %v5103
    %6076 = vmatpush.bf16.msra.mxu0 %v5101
    %6077 = vmatpush.bf16.msra.mxu0 %v5099
    %6078 = vmatpush.bf16.msra.mxu0 %v5097
    %6079 = vmatpush.bf16.msra.mxu0 %v5095
    %6080 = vmatpush.bf16.msra.mxu0 %v5093
    %6081 = vmatmul.bf16.gmra.mxu0 %v5951
    %v6082 = vpop.f32.mrf.mxu0
    %v6083 = vadd.f32 %v6026, %v6082
    %v6084 = vpop.f32.mrf.mxu0
    %v6085 = vadd.f32 %v6028, %v6084
    %6086 = vmatmul.bf16.gmra.mxu0 %v5953
    %v6087 = vpop.f32.mrf.mxu0
    %v6088 = vadd.f32 %v6031, %v6087
    %v6089 = vpop.f32.mrf.mxu0
    %v6090 = vadd.f32 %v6033, %v6089
    %6091 = vdwg.mxu0
    %6092 = vmatpush.bf16.msra.mxu0 %v5123
    %6093 = vmatpush.bf16.msra.mxu0 %v5121
    %6094 = vmatpush.bf16.msra.mxu0 %v5119
    %6095 = vmatpush.bf16.msra.mxu0 %v5117
    %6096 = vmatpush.bf16.msra.mxu0 %v5115
    %6097 = vmatpush.bf16.msra.mxu0 %v5113
    %6098 = vmatpush.bf16.msra.mxu0 %v5111
    %6099 = vmatpush.bf16.msra.mxu0 %v5109
    %6100 = vmatmul.bf16.gmra.mxu0 %v5952
    %v6101 = vpop.f32.mrf.mxu0
    %v6102 = vadd.f32 %v6083, %v6101
    %v6103 = vpop.f32.mrf.mxu0
    %v6104 = vadd.f32 %v6085, %v6103
    %6105 = vmatmul.bf16.gmra.mxu0 %v5954
    %v6106 = vpop.f32.mrf.mxu0
    %v6107 = vadd.f32 %v6088, %v6106
    %v6108 = vpop.f32.mrf.mxu0
    %v6109 = vadd.f32 %v6090, %v6108
    %6110 = vdwg.mxu0
    %6111 = vmatpush.bf16.msra.mxu0 %v5108
    %6112 = vmatpush.bf16.msra.mxu0 %v5106
    %6113 = vmatpush.bf16.msra.mxu0 %v5104
    %6114 = vmatpush.bf16.msra.mxu0 %v5102
    %6115 = vmatpush.bf16.msra.mxu0 %v5100
    %6116 = vmatpush.bf16.msra.mxu0 %v5098
    %6117 = vmatpush.bf16.msra.mxu0 %v5096
    %6118 = vmatpush.bf16.msra.mxu0 %v5094
    %6119 = vmatmul.bf16.gmra.mxu0 %v5951
    %v6120 = vpop.f32.mrf.mxu0
    %v6121 = vadd.f32 %v6064, %v6120
    %v6122 = vpop.f32.mrf.mxu0
    %v6123 = vadd.f32 %v6066, %v6122
    %6124 = vmatmul.bf16.gmra.mxu0 %v5953
    %v6125 = vpop.f32.mrf.mxu0
    %v6126 = vadd.f32 %v6069, %v6125
    %v6127 = vpop.f32.mrf.mxu0
    %v6128 = vadd.f32 %v6071, %v6127
    %6129 = vdwg.mxu0
    %6130 = vmatpush.bf16.msra.mxu0 %v5124
    %6131 = vmatpush.bf16.msra.mxu0 %v5122
    %6132 = vmatpush.bf16.msra.mxu0 %v5120
    %6133 = vmatpush.bf16.msra.mxu0 %v5118
    %6134 = vmatpush.bf16.msra.mxu0 %v5116
    %6135 = vmatpush.bf16.msra.mxu0 %v5114
    %6136 = vmatpush.bf16.msra.mxu0 %v5112
    %6137 = vmatpush.bf16.msra.mxu0 %v5110
    %6138 = vmatmul.bf16.gmra.mxu0 %v5952
    %v6139 = vpop.f32.mrf.mxu0
    %v6140 = vadd.f32 %v6121, %v6139
    %v6141 = vpop.f32.mrf.mxu0
    %v6142 = vadd.f32 %v6123, %v6141
    %6143 = vmatmul.bf16.gmra.mxu0 %v5954
    %v6144 = vpop.f32.mrf.mxu0
    %v6145 = vadd.f32 %v6126, %v6144
    %v6146 = vpop.f32.mrf.mxu0
    %v6147 = vadd.f32 %v6128, %v6146
    %6148 = vdwg.mxu0
    %6149 = vmatpush.bf16.msra.mxu0 0
    %6150 = vmatpush.bf16.msra.mxu0 0
    %6151 = vmatpush.bf16.msra.mxu0 0
    %6152 = vmatpush.bf16.msra.mxu0 0
    %6153 = vmatpush.bf16.msra.mxu0 0
    %6154 = vmatpush.bf16.msra.mxu0 0
    %6155 = vmatpush.bf16.msra.mxu0 0
    %6156 = vmatpush.bf16.msra.mxu0 %v4569
    %6157 = vmatmul.bf16.gmra.mxu0 %v5249
    %v6158 = vpop.f32.mrf.mxu0
    %v6159 = vadd.f32 0.0, %v6158
    %v6160 = vpop.f32.mrf.mxu0
    %v6161 = vadd.f32 0.0, %v6160
    %6162 = vmatmul.bf16.gmra.mxu0 %v5252
    %v6163 = vpop.f32.mrf.mxu0
    %v6164 = vadd.f32 0.0, %v6163
    %v6165 = vpop.f32.mrf.mxu0
    %v6166 = vadd.f32 0.0, %v6165
    %6167 = vdwg.mxu0
    %6168 = vmatpush.bf16.msra.mxu0 0
    %6169 = vmatpush.bf16.msra.mxu0 0
    %6170 = vmatpush.bf16.msra.mxu0 0
    %6171 = vmatpush.bf16.msra.mxu0 0
    %6172 = vmatpush.bf16.msra.mxu0 0
    %6173 = vmatpush.bf16.msra.mxu0 0
    %6174 = vmatpush.bf16.msra.mxu0 0
    %6175 = vmatpush.bf16.msra.mxu0 %v4570
    %6176 = vmatmul.bf16.gmra.mxu0 %v5249
    %v6177 = vpop.f32.mrf.mxu0
    %v6178 = vadd.f32 0.0, %v6177
    %v6179 = vpop.f32.mrf.mxu0
    %v6180 = vadd.f32 0.0, %v6179
    %6181 = vmatmul.bf16.gmra.mxu0 %v5252
    %v6182 = vpop.f32.mrf.mxu0
    %v6183 = vadd.f32 0.0, %v6182
    %v6184 = vpop.f32.mrf.mxu0
    %v6185 = vadd.f32 0.0, %v6184
    %6186 = vdwg.mxu0
    %v6187 = vpack.c.bf16 %v6161, %v6159
    %v6188 = vpack.c.bf16 %v6180, %v6178
    %v6189 = vpack.c.bf16 %v6166, %v6164
    %v6190 = vpack.c.bf16 %v6185, %v6183
    %6191 = vmatpush.bf16.msra.mxu0 %v5439
    %6192 = vmatpush.bf16.msra.mxu0 %v5437
    %6193 = vmatpush.bf16.msra.mxu0 %v5435
    %6194 = vmatpush.bf16.msra.mxu0 %v5433
    %6195 = vmatpush.bf16.msra.mxu0 %v5431
    %6196 = vmatpush.bf16.msra.mxu0 %v5429
    %6197 = vmatpush.bf16.msra.mxu0 %v5427
    %6198 = vmatpush.bf16.msra.mxu0 %v5425
    %6199 = vmatmul.bf16.gmra.mxu0 %v6187
    %v6200 = vpop.f32.mrf.mxu0
    %v6201 = vadd.f32 0.0, %v6200
    %v6202 = vpop.f32.mrf.mxu0
    %v6203 = vadd.f32 0.0, %v6202
    %6204 = vmatmul.bf16.gmra.mxu0 %v6189
    %v6205 = vpop.f32.mrf.mxu0
    %v6206 = vadd.f32 0.0, %v6205
    %v6207 = vpop.f32.mrf.mxu0
    %v6208 = vadd.f32 0.0, %v6207
    %6209 = vdwg.mxu0
    %6210 = vmatpush.bf16.msra.mxu0 %v5455
    %6211 = vmatpush.bf16.msra.mxu0 %v5453
    %6212 = vmatpush.bf16.msra.mxu0 %v5451
    %6213 = vmatpush.bf16.msra.mxu0 %v5449
    %6214 = vmatpush.bf16.msra.mxu0 %v5447
    %6215 = vmatpush.bf16.msra.mxu0 %v5445
    %6216 = vmatpush.bf16.msra.mxu0 %v5443
    %6217 = vmatpush.bf16.msra.mxu0 %v5441
    %6218 = vmatmul.bf16.gmra.mxu0 %v6188
    %v6219 = vpop.f32.mrf.mxu0
    %v6220 = vadd.f32 %v6201, %v6219
    %v6221 = vpop.f32.mrf.mxu0
    %v6222 = vadd.f32 %v6203, %v6221
    %6223 = vmatmul.bf16.gmra.mxu0 %v6190
    %v6224 = vpop.f32.mrf.mxu0
    %v6225 = vadd.f32 %v6206, %v6224
    %v6226 = vpop.f32.mrf.mxu0
    %v6227 = vadd.f32 %v6208, %v6226
    %6228 = vdwg.mxu0
    %6229 = vmatpush.bf16.msra.mxu0 %v5440
    %6230 = vmatpush.bf16.msra.mxu0 %v5438
    %6231 = vmatpush.bf16.msra.mxu0 %v5436
    %6232 = vmatpush.bf16.msra.mxu0 %v5434
    %6233 = vmatpush.bf16.msra.mxu0 %v5432
    %6234 = vmatpush.bf16.msra.mxu0 %v5430
    %6235 = vmatpush.bf16.msra.mxu0 %v5428
    %6236 = vmatpush.bf16.msra.mxu0 %v5426
    %6237 = vmatmul.bf16.gmra.mxu0 %v6187
    %v6238 = vpop.f32.mrf.mxu0
    %v6239 = vadd.f32 0.0, %v6238
    %v6240 = vpop.f32.mrf.mxu0
    %v6241 = vadd.f32 0.0, %v6240
    %6242 = vmatmul.bf16.gmra.mxu0 %v6189
    %v6243 = vpop.f32.mrf.mxu0
    %v6244 = vadd.f32 0.0, %v6243
    %v6245 = vpop.f32.mrf.mxu0
    %v6246 = vadd.f32 0.0, %v6245
    %6247 = vdwg.mxu0
    %6248 = vmatpush.bf16.msra.mxu0 %v5456
    %6249 = vmatpush.bf16.msra.mxu0 %v5454
    %6250 = vmatpush.bf16.msra.mxu0 %v5452
    %6251 = vmatpush.bf16.msra.mxu0 %v5450
    %6252 = vmatpush.bf16.msra.mxu0 %v5448
    %6253 = vmatpush.bf16.msra.mxu0 %v5446
    %6254 = vmatpush.bf16.msra.mxu0 %v5444
    %6255 = vmatpush.bf16.msra.mxu0 %v5442
    %6256 = vmatmul.bf16.gmra.mxu0 %v6188
    %v6257 = vpop.f32.mrf.mxu0
    %v6258 = vadd.f32 %v6239, %v6257
    %v6259 = vpop.f32.mrf.mxu0
    %v6260 = vadd.f32 %v6241, %v6259
    %6261 = vmatmul.bf16.gmra.mxu0 %v6190
    %v6262 = vpop.f32.mrf.mxu0
    %v6263 = vadd.f32 %v6244, %v6262
    %v6264 = vpop.f32.mrf.mxu0
    %v6265 = vadd.f32 %v6246, %v6264
    %6266 = vdwg.mxu0
    %v6267 = vadd.f32 %v6102, %v6220
    %v6268 = vadd.f32 %v6140, %v6258
    %v6269 = vadd.f32 %v6104, %v6222
    %v6270 = vadd.f32 %v6142, %v6260
    %v6271 = vadd.f32 %v6107, %v6225
    %v6272 = vadd.f32 %v6145, %v6263
    %v6273 = vadd.f32 %v6109, %v6227
    %v6274 = vadd.f32 %v6147, %v6265
    %6275 = vmatpush.bf16.msra.mxu0 0
    %6276 = vmatpush.bf16.msra.mxu0 0
    %6277 = vmatpush.bf16.msra.mxu0 0
    %6278 = vmatpush.bf16.msra.mxu0 0
    %6279 = vmatpush.bf16.msra.mxu0 0
    %6280 = vmatpush.bf16.msra.mxu0 0
    %6281 = vmatpush.bf16.msra.mxu0 0
    %6282 = vmatpush.bf16.msra.mxu0 %v4569
    %6283 = vmatmul.bf16.gmra.mxu0 %v5589
    %v6284 = vpop.f32.mrf.mxu0
    %v6285 = vadd.f32 0.0, %v6284
    %v6286 = vpop.f32.mrf.mxu0
    %v6287 = vadd.f32 0.0, %v6286
    %6288 = vmatmul.bf16.gmra.mxu0 %v5592
    %v6289 = vpop.f32.mrf.mxu0
    %v6290 = vadd.f32 0.0, %v6289
    %v6291 = vpop.f32.mrf.mxu0
    %v6292 = vadd.f32 0.0, %v6291
    %6293 = vdwg.mxu0
    %6294 = vmatpush.bf16.msra.mxu0 0
    %6295 = vmatpush.bf16.msra.mxu0 0
    %6296 = vmatpush.bf16.msra.mxu0 0
    %6297 = vmatpush.bf16.msra.mxu0 0
    %6298 = vmatpush.bf16.msra.mxu0 0
    %6299 = vmatpush.bf16.msra.mxu0 0
    %6300 = vmatpush.bf16.msra.mxu0 0
    %6301 = vmatpush.bf16.msra.mxu0 %v4570
    %6302 = vmatmul.bf16.gmra.mxu0 %v5589
    %v6303 = vpop.f32.mrf.mxu0
    %v6304 = vadd.f32 0.0, %v6303
    %v6305 = vpop.f32.mrf.mxu0
    %v6306 = vadd.f32 0.0, %v6305
    %6307 = vmatmul.bf16.gmra.mxu0 %v5592
    %v6308 = vpop.f32.mrf.mxu0
    %v6309 = vadd.f32 0.0, %v6308
    %v6310 = vpop.f32.mrf.mxu0
    %v6311 = vadd.f32 0.0, %v6310
    %6312 = vdwg.mxu0
    %v6313 = vpack.c.bf16 %v6287, %v6285
    %v6314 = vpack.c.bf16 %v6306, %v6304
    %v6315 = vpack.c.bf16 %v6292, %v6290
    %v6316 = vpack.c.bf16 %v6311, %v6309
    %6317 = vmatpush.bf16.msra.mxu0 %v5779
    %6318 = vmatpush.bf16.msra.mxu0 %v5777
    %6319 = vmatpush.bf16.msra.mxu0 %v5775
    %6320 = vmatpush.bf16.msra.mxu0 %v5773
    %6321 = vmatpush.bf16.msra.mxu0 %v5771
    %6322 = vmatpush.bf16.msra.mxu0 %v5769
    %6323 = vmatpush.bf16.msra.mxu0 %v5767
    %6324 = vmatpush.bf16.msra.mxu0 %v5765
    %6325 = vmatmul.bf16.gmra.mxu0 %v6313
    %v6326 = vpop.f32.mrf.mxu0
    %v6327 = vadd.f32 0.0, %v6326
    %v6328 = vpop.f32.mrf.mxu0
    %v6329 = vadd.f32 0.0, %v6328
    %6330 = vmatmul.bf16.gmra.mxu0 %v6315
    %v6331 = vpop.f32.mrf.mxu0
    %v6332 = vadd.f32 0.0, %v6331
    %v6333 = vpop.f32.mrf.mxu0
    %v6334 = vadd.f32 0.0, %v6333
    %6335 = vdwg.mxu0
    %6336 = vmatpush.bf16.msra.mxu0 %v5795
    %6337 = vmatpush.bf16.msra.mxu0 %v5793
    %6338 = vmatpush.bf16.msra.mxu0 %v5791
    %6339 = vmatpush.bf16.msra.mxu0 %v5789
    %6340 = vmatpush.bf16.msra.mxu0 %v5787
    %6341 = vmatpush.bf16.msra.mxu0 %v5785
    %6342 = vmatpush.bf16.msra.mxu0 %v5783
    %6343 = vmatpush.bf16.msra.mxu0 %v5781
    %6344 = vmatmul.bf16.gmra.mxu0 %v6314
    %v6345 = vpop.f32.mrf.mxu0
    %v6346 = vadd.f32 %v6327, %v6345
    %v6347 = vpop.f32.mrf.mxu0
    %v6348 = vadd.f32 %v6329, %v6347
    %6349 = vmatmul.bf16.gmra.mxu0 %v6316
    %v6350 = vpop.f32.mrf.mxu0
    %v6351 = vadd.f32 %v6332, %v6350
    %v6352 = vpop.f32.mrf.mxu0
    %v6353 = vadd.f32 %v6334, %v6352
    %6354 = vdwg.mxu0
    %6355 = vmatpush.bf16.msra.mxu0 %v5780
    %6356 = vmatpush.bf16.msra.mxu0 %v5778
    %6357 = vmatpush.bf16.msra.mxu0 %v5776
    %6358 = vmatpush.bf16.msra.mxu0 %v5774
    %6359 = vmatpush.bf16.msra.mxu0 %v5772
    %6360 = vmatpush.bf16.msra.mxu0 %v5770
    %6361 = vmatpush.bf16.msra.mxu0 %v5768
    %6362 = vmatpush.bf16.msra.mxu0 %v5766
    %6363 = vmatmul.bf16.gmra.mxu0 %v6313
    %v6364 = vpop.f32.mrf.mxu0
    %v6365 = vadd.f32 0.0, %v6364
    %v6366 = vpop.f32.mrf.mxu0
    %v6367 = vadd.f32 0.0, %v6366
    %6368 = vmatmul.bf16.gmra.mxu0 %v6315
    %v6369 = vpop.f32.mrf.mxu0
    %v6370 = vadd.f32 0.0, %v6369
    %v6371 = vpop.f32.mrf.mxu0
    %v6372 = vadd.f32 0.0, %v6371
    %6373 = vdwg.mxu0
    %6374 = vmatpush.bf16.msra.mxu0 %v5796
    %6375 = vmatpush.bf16.msra.mxu0 %v5794
    %6376 = vmatpush.bf16.msra.mxu0 %v5792
    %6377 = vmatpush.bf16.msra.mxu0 %v5790
    %6378 = vmatpush.bf16.msra.mxu0 %v5788
    %6379 = vmatpush.bf16.msra.mxu0 %v5786
    %6380 = vmatpush.bf16.msra.mxu0 %v5784
    %6381 = vmatpush.bf16.msra.mxu0 %v5782
    %6382 = vmatmul.bf16.gmra.mxu0 %v6314
    %v6383 = vpop.f32.mrf.mxu0
    %v6384 = vadd.f32 %v6365, %v6383
    %v6385 = vpop.f32.mrf.mxu0
    %v6386 = vadd.f32 %v6367, %v6385
    %6387 = vmatmul.bf16.gmra.mxu0 %v6316
    %v6388 = vpop.f32.mrf.mxu0
    %v6389 = vadd.f32 %v6370, %v6388
    %v6390 = vpop.f32.mrf.mxu0
    %v6391 = vadd.f32 %v6372, %v6390
    %6392 = vdwg.mxu0
    %v6393 = vadd.f32 %v6267, %v6346
    %v6394 = vadd.f32 %v6268, %v6384
    %v6395 = vadd.f32 %v6269, %v6348
    %v6396 = vadd.f32 %v6270, %v6386
    %v6397 = vadd.f32 %v6271, %v6351
    %v6398 = vadd.f32 %v6272, %v6389
    %v6399 = vadd.f32 %v6273, %v6353
    %v6400 = vadd.f32 %v6274, %v6391
    %v6401 = vld [vmem:[%s23] sm:$0xff]
    %v6402 = vld [vmem:[%s23 + $0x8] sm:$0xff]
    %v6403 = vld [vmem:[%s23 + $0x10] sm:$0xff]
    %v6404 = vld [vmem:[%s23 + $0x18] sm:$0xff]
    %v6405 = vld [vmem:[%s23 + $0x20] sm:$0xff]
    %v6406 = vld [vmem:[%s23 + $0x28] sm:$0xff]
    %v6407 = vld [vmem:[%s23 + $0x30] sm:$0xff]
    %v6408 = vld [vmem:[%s23 + $0x38] sm:$0xff]
    %v6409 = vld [vmem:[%s23 + $0x40] sm:$0xff]
    %v6410 = vld [vmem:[%s23 + $0x48] sm:$0xff]
    %v6411 = vld [vmem:[%s23 + $0x50] sm:$0xff]
    %v6412 = vld [vmem:[%s23 + $0x58] sm:$0xff]
    %v6413 = vld [vmem:[%s23 + $0x60] sm:$0xff]
    %v6414 = vld [vmem:[%s23 + $0x68] sm:$0xff]
    %v6415 = vld [vmem:[%s23 + $0x70] sm:$0xff]
    %v6416 = vld [vmem:[%s23 + $0x78] sm:$0xff]
    %v6417 = vld [vmem:[%s23 + $0x80] sm:$0xff]
    %v6418 = vld [vmem:[%s23 + $0x88] sm:$0xff]
    %v6419 = vld [vmem:[%s23 + $0x90] sm:$0xff]
    %v6420 = vld [vmem:[%s23 + $0x98] sm:$0xff]
    %v6421 = vld [vmem:[%s23 + $0xa0] sm:$0xff]
    %v6422 = vld [vmem:[%s23 + $0xa8] sm:$0xff]
    %v6423 = vld [vmem:[%s23 + $0xb0] sm:$0xff]
    %v6424 = vld [vmem:[%s23 + $0xb8] sm:$0xff]
    %v6425 = vld [vmem:[%s23 + $0xc0] sm:$0xff]
    %v6426 = vld [vmem:[%s23 + $0xc8] sm:$0xff]
    %v6427 = vld [vmem:[%s23 + $0xd0] sm:$0xff]
    %v6428 = vld [vmem:[%s23 + $0xd8] sm:$0xff]
    %v6429 = vld [vmem:[%s23 + $0xe0] sm:$0xff]
    %v6430 = vld [vmem:[%s23 + $0xe8] sm:$0xff]
    %v6431 = vld [vmem:[%s23 + $0xf0] sm:$0xff]
    %v6432 = vld [vmem:[%s23 + $0xf8] sm:$0xff]
    %v6433 = vld [vmem:[%s24] sm:$0xff]
    %v6434 = vld [vmem:[%s24 + $0x8] sm:$0xff]
    %v6435 = vadd.f32 %v5905, %v5907
    %v6436 = vadd.f32 %v6435, %v5909
    %v6437 = vadd.f32 %v6436, %v5911
    %v6438 = vrot.slane %v6437, 4
    %v6439 = vadd.f32 %v6437, %v6438
    %v6440 = vrot.slane %v6439, 2
    %v6441 = vadd.f32 %v6439, %v6440
    %v6442 = vrot.slane %v6441, 1
    %v6443 = vadd.f32 %v6441, %v6442
    %v6444 = vadd.f32 %v5906, %v5908
    %v6445 = vadd.f32 %v6444, %v5910
    %v6446 = vadd.f32 %v6445, %v5912
    %v6447 = vrot.slane %v6446, 4
    %v6448 = vadd.f32 %v6446, %v6447
    %v6449 = vrot.slane %v6448, 2
    %v6450 = vadd.f32 %v6448, %v6449
    %v6451 = vrot.slane %v6450, 1
    %v6452 = vadd.f32 %v6450, %v6451
    %v6453 = vadd.f32 %v6393, %v6395
    %v6454 = vadd.f32 %v6453, %v6397
    %v6455 = vadd.f32 %v6454, %v6399
    %v6456 = vrot.slane %v6455, 4
    %v6457 = vadd.f32 %v6455, %v6456
    %v6458 = vrot.slane %v6457, 2
    %v6459 = vadd.f32 %v6457, %v6458
    %v6460 = vrot.slane %v6459, 1
    %v6461 = vadd.f32 %v6459, %v6460
    %v6462 = vadd.f32 %v6394, %v6396
    %v6463 = vadd.f32 %v6462, %v6398
    %v6464 = vadd.f32 %v6463, %v6400
    %v6465 = vrot.slane %v6464, 4
    %v6466 = vadd.f32 %v6464, %v6465
    %v6467 = vrot.slane %v6466, 2
    %v6468 = vadd.f32 %v6466, %v6467
    %v6469 = vrot.slane %v6468, 1
    %v6470 = vadd.f32 %v6468, %v6469
    %v6471 = vadd.f32 %v6443, %v6461
    %v6472 = vadd.f32 %v6452, %v6470
    %6473 = vmatpush.msra.mxu0 %v6416
    %6474 = vmatpush.msra.mxu0 %v6415
    %6475 = vmatpush.msra.mxu0 %v6414
    %6476 = vmatpush.msra.mxu0 %v6413
    %6477 = vmatpush.msra.mxu0 %v6412
    %6478 = vmatpush.msra.mxu0 %v6411
    %6479 = vmatpush.msra.mxu0 %v6410
    %6480 = vmatpush.msra.mxu0 %v6409
    %6481 = vmatpush.msra.mxu0 %v6408
    %6482 = vmatpush.msra.mxu0 %v6407
    %6483 = vmatpush.msra.mxu0 %v6406
    %6484 = vmatpush.msra.mxu0 %v6405
    %6485 = vmatpush.msra.mxu0 %v6404
    %6486 = vmatpush.msra.mxu0 %v6403
    %6487 = vmatpush.msra.mxu0 %v6402
    %6488 = vmatpush.msra.mxu0 %v6401
    %6489 = vmatmul.f32.gmra.mxu0 %v6471
    %v6490 = vpop.f32.mrf.mxu0
    %v6491 = vadd.f32 0.0, %v6490
    %6492 = vdwg.mxu0
    %6493 = vmatpush.msra.mxu0 %v6432
    %6494 = vmatpush.msra.mxu0 %v6431
    %6495 = vmatpush.msra.mxu0 %v6430
    %6496 = vmatpush.msra.mxu0 %v6429
    %6497 = vmatpush.msra.mxu0 %v6428
    %6498 = vmatpush.msra.mxu0 %v6427
    %6499 = vmatpush.msra.mxu0 %v6426
    %6500 = vmatpush.msra.mxu0 %v6425
    %6501 = vmatpush.msra.mxu0 %v6424
    %6502 = vmatpush.msra.mxu0 %v6423
    %6503 = vmatpush.msra.mxu0 %v6422
    %6504 = vmatpush.msra.mxu0 %v6421
    %6505 = vmatpush.msra.mxu0 %v6420
    %6506 = vmatpush.msra.mxu0 %v6419
    %6507 = vmatpush.msra.mxu0 %v6418
    %6508 = vmatpush.msra.mxu0 %v6417
    %6509 = vmatmul.f32.gmra.mxu0 %v6472
    %v6510 = vpop.f32.mrf.mxu0
    %v6511 = vadd.f32 %v6491, %v6510
    %6512 = vdwg.mxu0
    %v6513 = vmul.f32 %v6511, 0.00048828125
    %v6515 = vsel %vm2675, %v6513, 0
    %6517 = vmatpush.msra.mxu0 0.0
    %6518 = vmatpush.msra.mxu0 0.0
    %6519 = vmatpush.msra.mxu0 0.0
    %6520 = vmatpush.msra.mxu0 0.0
    %6521 = vmatpush.msra.mxu0 0.0
    %6522 = vmatpush.msra.mxu0 0.0
    %6523 = vmatpush.msra.mxu0 0.0
    %6524 = vmatpush.msra.mxu0 0.0
    %6525 = vmatpush.msra.mxu0 0.0
    %6526 = vmatpush.msra.mxu0 0.0
    %6527 = vmatpush.msra.mxu0 0.0
    %6528 = vmatpush.msra.mxu0 0.0
    %6529 = vmatpush.msra.mxu0 0.0
    %6530 = vmatpush.msra.mxu0 0.0
    %6531 = vmatpush.msra.mxu0 0.0
    %6532 = vmatpush.msra.mxu0 %v6433
    %6533 = vmatmul.f32.gmra.mxu0 %v6515
    %v6534 = vpop.f32.mrf.mxu0
    %v6535 = vadd.f32 0.0, %v6534
    %6536 = vdwg.mxu0
    %6537 = vmatpush.msra.mxu0 0.0
    %6538 = vmatpush.msra.mxu0 0.0
    %6539 = vmatpush.msra.mxu0 0.0
    %6540 = vmatpush.msra.mxu0 0.0
    %6541 = vmatpush.msra.mxu0 0.0
    %6542 = vmatpush.msra.mxu0 0.0
    %6543 = vmatpush.msra.mxu0 0.0
    %6544 = vmatpush.msra.mxu0 0.0
    %6545 = vmatpush.msra.mxu0 0.0
    %6546 = vmatpush.msra.mxu0 0.0
    %6547 = vmatpush.msra.mxu0 0.0
    %6548 = vmatpush.msra.mxu0 0.0
    %6549 = vmatpush.msra.mxu0 0.0
    %6550 = vmatpush.msra.mxu0 0.0
    %6551 = vmatpush.msra.mxu0 0.0
    %6552 = vmatpush.msra.mxu0 %v6434
    %6553 = vmatmul.f32.gmra.mxu0 %v6515
    %v6554 = vpop.f32.mrf.mxu0
    %v6555 = vadd.f32 0.0, %v6554
    %6556 = vdwg.mxu0
    %v6557 = vperm.slane %v6535, 0
    %v6558 = vperm.slane %v6555, 0
    %v6559 = vsub.f32 %v5905, %v6557
    %v6560 = vsub.f32 %v5906, %v6558
    %v6561 = vsub.f32 %v5907, %v6557
    %v6562 = vsub.f32 %v5908, %v6558
    %v6563 = vsub.f32 %v5909, %v6557
    %v6564 = vsub.f32 %v5910, %v6558
    %v6565 = vsub.f32 %v5911, %v6557
    %v6566 = vsub.f32 %v5912, %v6558
    %v6567 = vmul.f32 %v6559, %v6559
    %v6568 = vmul.f32 %v6560, %v6560
    %v6569 = vmul.f32 %v6561, %v6561
    %v6570 = vmul.f32 %v6562, %v6562
    %v6571 = vmul.f32 %v6563, %v6563
    %v6572 = vmul.f32 %v6564, %v6564
    %v6573 = vmul.f32 %v6565, %v6565
    %v6574 = vmul.f32 %v6566, %v6566
    %v6575 = vadd.f32 %v6567, %v6569
    %v6576 = vadd.f32 %v6575, %v6571
    %v6577 = vadd.f32 %v6576, %v6573
    %v6578 = vrot.slane %v6577, 4
    %v6579 = vadd.f32 %v6577, %v6578
    %v6580 = vrot.slane %v6579, 2
    %v6581 = vadd.f32 %v6579, %v6580
    %v6582 = vrot.slane %v6581, 1
    %v6583 = vadd.f32 %v6581, %v6582
    %v6584 = vadd.f32 %v6568, %v6570
    %v6585 = vadd.f32 %v6584, %v6572
    %v6586 = vadd.f32 %v6585, %v6574
    %v6587 = vrot.slane %v6586, 4
    %v6588 = vadd.f32 %v6586, %v6587
    %v6589 = vrot.slane %v6588, 2
    %v6590 = vadd.f32 %v6588, %v6589
    %v6591 = vrot.slane %v6590, 1
    %v6592 = vadd.f32 %v6590, %v6591
    %v6593 = vsub.f32 %v6393, %v6557
    %v6594 = vsub.f32 %v6394, %v6558
    %v6595 = vsub.f32 %v6395, %v6557
    %v6596 = vsub.f32 %v6396, %v6558
    %v6597 = vsub.f32 %v6397, %v6557
    %v6598 = vsub.f32 %v6398, %v6558
    %v6599 = vsub.f32 %v6399, %v6557
    %v6600 = vsub.f32 %v6400, %v6558
    %v6601 = vmul.f32 %v6593, %v6593
    %v6602 = vmul.f32 %v6594, %v6594
    %v6603 = vmul.f32 %v6595, %v6595
    %v6604 = vmul.f32 %v6596, %v6596
    %v6605 = vmul.f32 %v6597, %v6597
    %v6606 = vmul.f32 %v6598, %v6598
    %v6607 = vmul.f32 %v6599, %v6599
    %v6608 = vmul.f32 %v6600, %v6600
    %v6609 = vadd.f32 %v6601, %v6603
    %v6610 = vadd.f32 %v6609, %v6605
    %v6611 = vadd.f32 %v6610, %v6607
    %v6612 = vrot.slane %v6611, 4
    %v6613 = vadd.f32 %v6611, %v6612
    %v6614 = vrot.slane %v6613, 2
    %v6615 = vadd.f32 %v6613, %v6614
    %v6616 = vrot.slane %v6615, 1
    %v6617 = vadd.f32 %v6615, %v6616
    %v6618 = vadd.f32 %v6602, %v6604
    %v6619 = vadd.f32 %v6618, %v6606
    %v6620 = vadd.f32 %v6619, %v6608
    %v6621 = vrot.slane %v6620, 4
    %v6622 = vadd.f32 %v6620, %v6621
    %v6623 = vrot.slane %v6622, 2
    %v6624 = vadd.f32 %v6622, %v6623
    %v6625 = vrot.slane %v6624, 1
    %v6626 = vadd.f32 %v6624, %v6625
    %v6627 = vadd.f32 %v6583, %v6617
    %v6628 = vadd.f32 %v6592, %v6626
    %6629 = vmatpush.msra.mxu0 %v6416
    %6630 = vmatpush.msra.mxu0 %v6415
    %6631 = vmatpush.msra.mxu0 %v6414
    %6632 = vmatpush.msra.mxu0 %v6413
    %6633 = vmatpush.msra.mxu0 %v6412
    %6634 = vmatpush.msra.mxu0 %v6411
    %6635 = vmatpush.msra.mxu0 %v6410
    %6636 = vmatpush.msra.mxu0 %v6409
    %6637 = vmatpush.msra.mxu0 %v6408
    %6638 = vmatpush.msra.mxu0 %v6407
    %6639 = vmatpush.msra.mxu0 %v6406
    %6640 = vmatpush.msra.mxu0 %v6405
    %6641 = vmatpush.msra.mxu0 %v6404
    %6642 = vmatpush.msra.mxu0 %v6403
    %6643 = vmatpush.msra.mxu0 %v6402
    %6644 = vmatpush.msra.mxu0 %v6401
    %6645 = vmatmul.f32.gmra.mxu0 %v6627
    %v6646 = vpop.f32.mrf.mxu0
    %v6647 = vadd.f32 0.0, %v6646
    %6648 = vdwg.mxu0
    %6649 = vmatpush.msra.mxu0 %v6432
    %6650 = vmatpush.msra.mxu0 %v6431
    %6651 = vmatpush.msra.mxu0 %v6430
    %6652 = vmatpush.msra.mxu0 %v6429
    %6653 = vmatpush.msra.mxu0 %v6428
    %6654 = vmatpush.msra.mxu0 %v6427
    %6655 = vmatpush.msra.mxu0 %v6426
    %6656 = vmatpush.msra.mxu0 %v6425
    %6657 = vmatpush.msra.mxu0 %v6424
    %6658 = vmatpush.msra.mxu0 %v6423
    %6659 = vmatpush.msra.mxu0 %v6422
    %6660 = vmatpush.msra.mxu0 %v6421
    %6661 = vmatpush.msra.mxu0 %v6420
    %6662 = vmatpush.msra.mxu0 %v6419
    %6663 = vmatpush.msra.mxu0 %v6418
    %6664 = vmatpush.msra.mxu0 %v6417
    %6665 = vmatmul.f32.gmra.mxu0 %v6628
    %v6666 = vpop.f32.mrf.mxu0
    %v6667 = vadd.f32 %v6647, %v6666
    %6668 = vdwg.mxu0
    %v6669 = vmul.f32 %v6667, 0.00048828125
    %v6670 = vld [vmem:[%s21] sm:$0x1]
    %v6671 = vadd.f32 %v6669, 1e-05
    %v6672 = vrsqrt.pop %v6671
    %v6673 = vmul.f32 %v6672, %v6671
    %v6674 = vmul.f32 %v6673, %v6672
    %v6675 = vmul.f32 0.5, %v6674
    %v6676 = vsub.f32 1.5, %v6675
    %v6677 = vmul.f32 %v6672, %v6676
    %vm6678 = vweird.f32 %v6671
    %vm6679 = vweird.f32 %v6672
    %vm6680 = vmor %vm6678, %vm6679
    %v6681 = vsel %vm6680, %v6672, %v6677
    %v6682 = vmul.f32 %v6670, %v6681
    %v6684 = vsel %vm2675, %v6682, 0
    %6686 = vmatpush.msra.mxu0 0.0
    %6687 = vmatpush.msra.mxu0 0.0
    %6688 = vmatpush.msra.mxu0 0.0
    %6689 = vmatpush.msra.mxu0 0.0
    %6690 = vmatpush.msra.mxu0 0.0
    %6691 = vmatpush.msra.mxu0 0.0
    %6692 = vmatpush.msra.mxu0 0.0
    %6693 = vmatpush.msra.mxu0 0.0
    %6694 = vmatpush.msra.mxu0 0.0
    %6695 = vmatpush.msra.mxu0 0.0
    %6696 = vmatpush.msra.mxu0 0.0
    %6697 = vmatpush.msra.mxu0 0.0
    %6698 = vmatpush.msra.mxu0 0.0
    %6699 = vmatpush.msra.mxu0 0.0
    %6700 = vmatpush.msra.mxu0 0.0
    %6701 = vmatpush.msra.mxu0 %v6433
    %6702 = vmatmul.f32.gmra.mxu0 %v6684
    %v6703 = vpop.f32.mrf.mxu0
    %v6704 = vadd.f32 0.0, %v6703
    %6705 = vdwg.mxu0
    %6706 = vmatpush.msra.mxu0 0.0
    %6707 = vmatpush.msra.mxu0 0.0
    %6708 = vmatpush.msra.mxu0 0.0
    %6709 = vmatpush.msra.mxu0 0.0
    %6710 = vmatpush.msra.mxu0 0.0
    %6711 = vmatpush.msra.mxu0 0.0
    %6712 = vmatpush.msra.mxu0 0.0
    %6713 = vmatpush.msra.mxu0 0.0
    %6714 = vmatpush.msra.mxu0 0.0
    %6715 = vmatpush.msra.mxu0 0.0
    %6716 = vmatpush.msra.mxu0 0.0
    %6717 = vmatpush.msra.mxu0 0.0
    %6718 = vmatpush.msra.mxu0 0.0
    %6719 = vmatpush.msra.mxu0 0.0
    %6720 = vmatpush.msra.mxu0 0.0
    %6721 = vmatpush.msra.mxu0 %v6434
    %6722 = vmatmul.f32.gmra.mxu0 %v6684
    %v6723 = vpop.f32.mrf.mxu0
    %v6724 = vadd.f32 0.0, %v6723
    %6725 = vdwg.mxu0
    %v6726 = vld [vmem:[%s22] sm:$0x1]
    %v6728 = vsel %vm2675, %v6726, 0
    %6730 = vmatpush.msra.mxu0 0.0
    %6731 = vmatpush.msra.mxu0 0.0
    %6732 = vmatpush.msra.mxu0 0.0
    %6733 = vmatpush.msra.mxu0 0.0
    %6734 = vmatpush.msra.mxu0 0.0
    %6735 = vmatpush.msra.mxu0 0.0
    %6736 = vmatpush.msra.mxu0 0.0
    %6737 = vmatpush.msra.mxu0 0.0
    %6738 = vmatpush.msra.mxu0 0.0
    %6739 = vmatpush.msra.mxu0 0.0
    %6740 = vmatpush.msra.mxu0 0.0
    %6741 = vmatpush.msra.mxu0 0.0
    %6742 = vmatpush.msra.mxu0 0.0
    %6743 = vmatpush.msra.mxu0 0.0
    %6744 = vmatpush.msra.mxu0 0.0
    %6745 = vmatpush.msra.mxu0 %v6433
    %6746 = vmatmul.f32.gmra.mxu0 %v6728
    %v6747 = vpop.f32.mrf.mxu0
    %v6748 = vadd.f32 0.0, %v6747
    %6749 = vdwg.mxu0
    %6750 = vmatpush.msra.mxu0 0.0
    %6751 = vmatpush.msra.mxu0 0.0
    %6752 = vmatpush.msra.mxu0 0.0
    %6753 = vmatpush.msra.mxu0 0.0
    %6754 = vmatpush.msra.mxu0 0.0
    %6755 = vmatpush.msra.mxu0 0.0
    %6756 = vmatpush.msra.mxu0 0.0
    %6757 = vmatpush.msra.mxu0 0.0
    %6758 = vmatpush.msra.mxu0 0.0
    %6759 = vmatpush.msra.mxu0 0.0
    %6760 = vmatpush.msra.mxu0 0.0
    %6761 = vmatpush.msra.mxu0 0.0
    %6762 = vmatpush.msra.mxu0 0.0
    %6763 = vmatpush.msra.mxu0 0.0
    %6764 = vmatpush.msra.mxu0 0.0
    %6765 = vmatpush.msra.mxu0 %v6434
    %6766 = vmatmul.f32.gmra.mxu0 %v6728
    %v6767 = vpop.f32.mrf.mxu0
    %v6768 = vadd.f32 0.0, %v6767
    %6769 = vdwg.mxu0
    %v6770 = vperm.slane %v6704, 0
    %v6771 = vperm.slane %v6724, 0
    %v6772 = vmul.f32 %v6559, %v6770
    %v6773 = vmul.f32 %v6560, %v6771
    %v6774 = vmul.f32 %v6561, %v6770
    %v6775 = vmul.f32 %v6562, %v6771
    %v6776 = vmul.f32 %v6563, %v6770
    %v6777 = vmul.f32 %v6564, %v6771
    %v6778 = vmul.f32 %v6565, %v6770
    %v6779 = vmul.f32 %v6566, %v6771
    %v6780 = vperm.slane %v6748, 0
    %v6781 = vperm.slane %v6768, 0
    %v6782 = vadd.f32 %v6772, %v6780
    %v6783 = vadd.f32 %v6773, %v6781
    %v6784 = vadd.f32 %v6774, %v6780
    %v6785 = vadd.f32 %v6775, %v6781
    %v6786 = vadd.f32 %v6776, %v6780
    %v6787 = vadd.f32 %v6777, %v6781
    %v6788 = vadd.f32 %v6778, %v6780
    %v6789 = vadd.f32 %v6779, %v6781
    %v6790 = vmax.f32 %v6782, 0.0
    %v6791 = vmax.f32 %v6783, 0.0
    %v6792 = vmax.f32 %v6784, 0.0
    %v6793 = vmax.f32 %v6785, 0.0
    %v6794 = vmax.f32 %v6786, 0.0
    %v6795 = vmax.f32 %v6787, 0.0
    %v6796 = vmax.f32 %v6788, 0.0
    %v6797 = vmax.f32 %v6789, 0.0
    %v6798 = vpack.c.bf16 %v6792, %v6790
    %v6799 = vpack.c.bf16 %v6793, %v6791
    %v6800 = vpack.c.bf16 %v6796, %v6794
    %v6801 = vpack.c.bf16 %v6797, %v6795
    %v6802 = vmul.f32 %v6593, %v6770
    %v6803 = vmul.f32 %v6594, %v6771
    %v6804 = vmul.f32 %v6595, %v6770
    %v6805 = vmul.f32 %v6596, %v6771
    %v6806 = vmul.f32 %v6597, %v6770
    %v6807 = vmul.f32 %v6598, %v6771
    %v6808 = vmul.f32 %v6599, %v6770
    %v6809 = vmul.f32 %v6600, %v6771
    %v6810 = vadd.f32 %v6802, %v6780
    %v6811 = vadd.f32 %v6803, %v6781
    %v6812 = vadd.f32 %v6804, %v6780
    %v6813 = vadd.f32 %v6805, %v6781
    %v6814 = vadd.f32 %v6806, %v6780
    %v6815 = vadd.f32 %v6807, %v6781
    %v6816 = vadd.f32 %v6808, %v6780
    %v6817 = vadd.f32 %v6809, %v6781
    %v6818 = vmax.f32 %v6810, 0.0
    %v6819 = vmax.f32 %v6811, 0.0
    %v6820 = vmax.f32 %v6812, 0.0
    %v6821 = vmax.f32 %v6813, 0.0
    %v6822 = vmax.f32 %v6814, 0.0
    %v6823 = vmax.f32 %v6815, 0.0
    %v6824 = vmax.f32 %v6816, 0.0
    %v6825 = vmax.f32 %v6817, 0.0
    %v6826 = vpack.c.bf16 %v6820, %v6818
    %v6827 = vpack.c.bf16 %v6821, %v6819
    %v6828 = vpack.c.bf16 %v6824, %v6822
    %v6829 = vpack.c.bf16 %v6825, %v6823
    %v6830 = vld [vmem:[%s26] sm:$0xf]
    %v6831 = vld [vmem:[%s26 + $0x4] sm:$0xf]
    %v6832 = vld [vmem:[%s26 + $0x8] sm:$0xf]
    %v6833 = vld [vmem:[%s26 + $0xc] sm:$0xf]
    %v6834 = vld [vmem:[%s26 + $0x10] sm:$0xf]
    %v6835 = vld [vmem:[%s26 + $0x14] sm:$0xf]
    %v6836 = vld [vmem:[%s26 + $0x18] sm:$0xf]
    %v6837 = vld [vmem:[%s26 + $0x1c] sm:$0xf]
    %v6846 = vunpack.c.l.b16 %v6830
    %v6847 = vunpack.c.l.b16 %v6831
    %v6848 = vunpack.c.l.b16 %v6832
    %v6849 = vunpack.c.l.b16 %v6833
    %v6850 = vunpack.c.l.b16 %v6834
    %v6851 = vunpack.c.l.b16 %v6835
    %v6852 = vunpack.c.l.b16 %v6836
    %v6853 = vunpack.c.l.b16 %v6837
    %v6854 = vpack.c.b16 %v6847, %v6846
    %v6855 = vpack.c.b16 %v6849, %v6848
    %v6856 = vpack.c.b16 %v6851, %v6850
    %v6857 = vpack.c.b16 %v6853, %v6852
    %v6859 = vsel %vm152, %v6854, 0
    %v6862 = vsel %vm152, %v6855, 0
    %v6865 = vsel %vm152, %v6856, 0
    %v6868 = vsel %vm152, %v6857, 0
    %6870 = vmatpush.bf16.msra.mxu0 0
    %6871 = vmatpush.bf16.msra.mxu0 0
    %6872 = vmatpush.bf16.msra.mxu0 0
    %6873 = vmatpush.bf16.msra.mxu0 0
    %6874 = vmatpush.bf16.msra.mxu0 0
    %6875 = vmatpush.bf16.msra.mxu0 0
    %6876 = vmatpush.bf16.msra.mxu0 %v6800
    %6877 = vmatpush.bf16.msra.mxu0 %v6798
    %6878 = vmatmul.bf16.gmra.mxu0 %v6859
    %v6879 = vpop.f32.mrf.mxu0
    %v6880 = vadd.f32 0.0, %v6879
    %v6881 = vpop.f32.mrf.mxu0
    %v6882 = vadd.f32 0.0, %v6881
    %6883 = vmatmul.bf16.gmra.mxu0 %v6862
    %v6884 = vpop.f32.mrf.mxu0
    %v6885 = vadd.f32 0.0, %v6884
    %v6886 = vpop.f32.mrf.mxu0
    %v6887 = vadd.f32 0.0, %v6886
    %6888 = vmatmul.bf16.gmra.mxu0 %v6865
    %v6889 = vpop.f32.mrf.mxu0
    %v6890 = vadd.f32 0.0, %v6889
    %v6891 = vpop.f32.mrf.mxu0
    %v6892 = vadd.f32 0.0, %v6891
    %6893 = vmatmul.bf16.gmra.mxu0 %v6868
    %v6894 = vpop.f32.mrf.mxu0
    %v6895 = vadd.f32 0.0, %v6894
    %v6896 = vpop.f32.mrf.mxu0
    %v6897 = vadd.f32 0.0, %v6896
    %6898 = vdwg.mxu0
    %6899 = vmatpush.bf16.msra.mxu0 0
    %6900 = vmatpush.bf16.msra.mxu0 0
    %6901 = vmatpush.bf16.msra.mxu0 0
    %6902 = vmatpush.bf16.msra.mxu0 0
    %6903 = vmatpush.bf16.msra.mxu0 0
    %6904 = vmatpush.bf16.msra.mxu0 0
    %6905 = vmatpush.bf16.msra.mxu0 %v6801
    %6906 = vmatpush.bf16.msra.mxu0 %v6799
    %6907 = vmatmul.bf16.gmra.mxu0 %v6859
    %v6908 = vpop.f32.mrf.mxu0
    %v6909 = vadd.f32 0.0, %v6908
    %v6910 = vpop.f32.mrf.mxu0
    %v6911 = vadd.f32 0.0, %v6910
    %6912 = vmatmul.bf16.gmra.mxu0 %v6862
    %v6913 = vpop.f32.mrf.mxu0
    %v6914 = vadd.f32 0.0, %v6913
    %v6915 = vpop.f32.mrf.mxu0
    %v6916 = vadd.f32 0.0, %v6915
    %6917 = vmatmul.bf16.gmra.mxu0 %v6865
    %v6918 = vpop.f32.mrf.mxu0
    %v6919 = vadd.f32 0.0, %v6918
    %v6920 = vpop.f32.mrf.mxu0
    %v6921 = vadd.f32 0.0, %v6920
    %6922 = vmatmul.bf16.gmra.mxu0 %v6868
    %v6923 = vpop.f32.mrf.mxu0
    %v6924 = vadd.f32 0.0, %v6923
    %v6925 = vpop.f32.mrf.mxu0
    %v6926 = vadd.f32 0.0, %v6925
    %6927 = vdwg.mxu0
    %v6928 = vpack.c.bf16 %v6882, %v6880
    %v6929 = vpack.c.bf16 %v6911, %v6909
    %v6930 = vpack.c.bf16 %v6887, %v6885
    %v6931 = vpack.c.bf16 %v6916, %v6914
    %v6932 = vpack.c.bf16 %v6892, %v6890
    %v6933 = vpack.c.bf16 %v6921, %v6919
    %v6934 = vpack.c.bf16 %v6897, %v6895
    %v6935 = vpack.c.bf16 %v6926, %v6924
    %v6936 = vld [vmem:[%s25] sm:$0xf]
    %v6937 = vld [vmem:[%s25 + $0x4] sm:$0xf]
    %v6938 = vld [vmem:[%s25 + $0x8] sm:$0xf]
    %v6939 = vld [vmem:[%s25 + $0xc] sm:$0xf]
    %v6940 = vld [vmem:[%s25 + $0x10] sm:$0xf]
    %v6941 = vld [vmem:[%s25 + $0x14] sm:$0xf]
    %v6942 = vld [vmem:[%s25 + $0x18] sm:$0xf]
    %v6943 = vld [vmem:[%s25 + $0x1c] sm:$0xf]
    %v6944 = vld [vmem:[%s25 + $0x20] sm:$0xf]
    %v6945 = vld [vmem:[%s25 + $0x24] sm:$0xf]
    %v6946 = vld [vmem:[%s25 + $0x28] sm:$0xf]
    %v6947 = vld [vmem:[%s25 + $0x2c] sm:$0xf]
    %v6948 = vld [vmem:[%s25 + $0x30] sm:$0xf]
    %v6949 = vld [vmem:[%s25 + $0x34] sm:$0xf]
    %v6950 = vld [vmem:[%s25 + $0x38] sm:$0xf]
    %v6951 = vld [vmem:[%s25 + $0x3c] sm:$0xf]
    %v6952 = vld [vmem:[%s25 + $0x40] sm:$0xf]
    %v6953 = vld [vmem:[%s25 + $0x44] sm:$0xf]
    %v6954 = vld [vmem:[%s25 + $0x48] sm:$0xf]
    %v6955 = vld [vmem:[%s25 + $0x4c] sm:$0xf]
    %v6956 = vld [vmem:[%s25 + $0x50] sm:$0xf]
    %v6957 = vld [vmem:[%s25 + $0x54] sm:$0xf]
    %v6958 = vld [vmem:[%s25 + $0x58] sm:$0xf]
    %v6959 = vld [vmem:[%s25 + $0x5c] sm:$0xf]
    %v6960 = vld [vmem:[%s25 + $0x60] sm:$0xf]
    %v6961 = vld [vmem:[%s25 + $0x64] sm:$0xf]
    %v6962 = vld [vmem:[%s25 + $0x68] sm:$0xf]
    %v6963 = vld [vmem:[%s25 + $0x6c] sm:$0xf]
    %v6964 = vld [vmem:[%s25 + $0x70] sm:$0xf]
    %v6965 = vld [vmem:[%s25 + $0x74] sm:$0xf]
    %v6966 = vld [vmem:[%s25 + $0x78] sm:$0xf]
    %v6967 = vld [vmem:[%s25 + $0x7c] sm:$0xf]
    %s6968 = scalar_lea.vmem %s26, 32
    %v6969 = vld [vmem:[%s6968] sm:$0xf]
    %v6970 = vld [vmem:[%s6968 + $0x4] sm:$0xf]
    %v6971 = vld [vmem:[%s6968 + $0x8] sm:$0xf]
    %v6972 = vld [vmem:[%s6968 + $0xc] sm:$0xf]
    %v6973 = vld [vmem:[%s6968 + $0x10] sm:$0xf]
    %v6974 = vld [vmem:[%s6968 + $0x14] sm:$0xf]
    %v6975 = vld [vmem:[%s6968 + $0x18] sm:$0xf]
    %v6976 = vld [vmem:[%s6968 + $0x1c] sm:$0xf]
    %v6985 = vunpack.c.l.b16 %v6969
    %v6986 = vunpack.c.l.b16 %v6970
    %v6987 = vunpack.c.l.b16 %v6971
    %v6988 = vunpack.c.l.b16 %v6972
    %v6989 = vunpack.c.l.b16 %v6973
    %v6990 = vunpack.c.l.b16 %v6974
    %v6991 = vunpack.c.l.b16 %v6975
    %v6992 = vunpack.c.l.b16 %v6976
    %v6993 = vpack.c.b16 %v6986, %v6985
    %v6994 = vpack.c.b16 %v6988, %v6987
    %v6995 = vpack.c.b16 %v6990, %v6989
    %v6996 = vpack.c.b16 %v6992, %v6991
    %v6998 = vsel %vm152, %v6993, 0
    %v7001 = vsel %vm152, %v6994, 0
    %v7004 = vsel %vm152, %v6995, 0
    %v7007 = vsel %vm152, %v6996, 0
    %7009 = vmatpush.bf16.msra.mxu0 0
    %7010 = vmatpush.bf16.msra.mxu0 0
    %7011 = vmatpush.bf16.msra.mxu0 0
    %7012 = vmatpush.bf16.msra.mxu0 0
    %7013 = vmatpush.bf16.msra.mxu0 0
    %7014 = vmatpush.bf16.msra.mxu0 0
    %7015 = vmatpush.bf16.msra.mxu0 %v6800
    %7016 = vmatpush.bf16.msra.mxu0 %v6798
    %7017 = vmatmul.bf16.gmra.mxu0 %v6998
    %v7018 = vpop.f32.mrf.mxu0
    %v7019 = vadd.f32 0.0, %v7018
    %v7020 = vpop.f32.mrf.mxu0
    %v7021 = vadd.f32 0.0, %v7020
    %7022 = vmatmul.bf16.gmra.mxu0 %v7001
    %v7023 = vpop.f32.mrf.mxu0
    %v7024 = vadd.f32 0.0, %v7023
    %v7025 = vpop.f32.mrf.mxu0
    %v7026 = vadd.f32 0.0, %v7025
    %7027 = vmatmul.bf16.gmra.mxu0 %v7004
    %v7028 = vpop.f32.mrf.mxu0
    %v7029 = vadd.f32 0.0, %v7028
    %v7030 = vpop.f32.mrf.mxu0
    %v7031 = vadd.f32 0.0, %v7030
    %7032 = vmatmul.bf16.gmra.mxu0 %v7007
    %v7033 = vpop.f32.mrf.mxu0
    %v7034 = vadd.f32 0.0, %v7033
    %v7035 = vpop.f32.mrf.mxu0
    %v7036 = vadd.f32 0.0, %v7035
    %7037 = vdwg.mxu0
    %7038 = vmatpush.bf16.msra.mxu0 0
    %7039 = vmatpush.bf16.msra.mxu0 0
    %7040 = vmatpush.bf16.msra.mxu0 0
    %7041 = vmatpush.bf16.msra.mxu0 0
    %7042 = vmatpush.bf16.msra.mxu0 0
    %7043 = vmatpush.bf16.msra.mxu0 0
    %7044 = vmatpush.bf16.msra.mxu0 %v6801
    %7045 = vmatpush.bf16.msra.mxu0 %v6799
    %7046 = vmatmul.bf16.gmra.mxu0 %v6998
    %v7047 = vpop.f32.mrf.mxu0
    %v7048 = vadd.f32 0.0, %v7047
    %v7049 = vpop.f32.mrf.mxu0
    %v7050 = vadd.f32 0.0, %v7049
    %7051 = vmatmul.bf16.gmra.mxu0 %v7001
    %v7052 = vpop.f32.mrf.mxu0
    %v7053 = vadd.f32 0.0, %v7052
    %v7054 = vpop.f32.mrf.mxu0
    %v7055 = vadd.f32 0.0, %v7054
    %7056 = vmatmul.bf16.gmra.mxu0 %v7004
    %v7057 = vpop.f32.mrf.mxu0
    %v7058 = vadd.f32 0.0, %v7057
    %v7059 = vpop.f32.mrf.mxu0
    %v7060 = vadd.f32 0.0, %v7059
    %7061 = vmatmul.bf16.gmra.mxu0 %v7007
    %v7062 = vpop.f32.mrf.mxu0
    %v7063 = vadd.f32 0.0, %v7062
    %v7064 = vpop.f32.mrf.mxu0
    %v7065 = vadd.f32 0.0, %v7064
    %7066 = vdwg.mxu0
    %v7067 = vpack.c.bf16 %v7021, %v7019
    %v7068 = vpack.c.bf16 %v7050, %v7048
    %v7069 = vpack.c.bf16 %v7026, %v7024
    %v7070 = vpack.c.bf16 %v7055, %v7053
    %v7071 = vpack.c.bf16 %v7031, %v7029
    %v7072 = vpack.c.bf16 %v7060, %v7058
    %v7073 = vpack.c.bf16 %v7036, %v7034
    %v7074 = vpack.c.bf16 %v7065, %v7063
    %s7075 = scalar_lea.vmem %s25, 128
    %v7076 = vld [vmem:[%s7075] sm:$0xf]
    %v7077 = vld [vmem:[%s7075 + $0x4] sm:$0xf]
    %v7078 = vld [vmem:[%s7075 + $0x8] sm:$0xf]
    %v7079 = vld [vmem:[%s7075 + $0xc] sm:$0xf]
    %v7080 = vld [vmem:[%s7075 + $0x10] sm:$0xf]
    %v7081 = vld [vmem:[%s7075 + $0x14] sm:$0xf]
    %v7082 = vld [vmem:[%s7075 + $0x18] sm:$0xf]
    %v7083 = vld [vmem:[%s7075 + $0x1c] sm:$0xf]
    %v7084 = vld [vmem:[%s7075 + $0x20] sm:$0xf]
    %v7085 = vld [vmem:[%s7075 + $0x24] sm:$0xf]
    %v7086 = vld [vmem:[%s7075 + $0x28] sm:$0xf]
    %v7087 = vld [vmem:[%s7075 + $0x2c] sm:$0xf]
    %v7088 = vld [vmem:[%s7075 + $0x30] sm:$0xf]
    %v7089 = vld [vmem:[%s7075 + $0x34] sm:$0xf]
    %v7090 = vld [vmem:[%s7075 + $0x38] sm:$0xf]
    %v7091 = vld [vmem:[%s7075 + $0x3c] sm:$0xf]
    %v7092 = vld [vmem:[%s7075 + $0x40] sm:$0xf]
    %v7093 = vld [vmem:[%s7075 + $0x44] sm:$0xf]
    %v7094 = vld [vmem:[%s7075 + $0x48] sm:$0xf]
    %v7095 = vld [vmem:[%s7075 + $0x4c] sm:$0xf]
    %v7096 = vld [vmem:[%s7075 + $0x50] sm:$0xf]
    %v7097 = vld [vmem:[%s7075 + $0x54] sm:$0xf]
    %v7098 = vld [vmem:[%s7075 + $0x58] sm:$0xf]
    %v7099 = vld [vmem:[%s7075 + $0x5c] sm:$0xf]
    %v7100 = vld [vmem:[%s7075 + $0x60] sm:$0xf]
    %v7101 = vld [vmem:[%s7075 + $0x64] sm:$0xf]
    %v7102 = vld [vmem:[%s7075 + $0x68] sm:$0xf]
    %v7103 = vld [vmem:[%s7075 + $0x6c] sm:$0xf]
    %v7104 = vld [vmem:[%s7075 + $0x70] sm:$0xf]
    %v7105 = vld [vmem:[%s7075 + $0x74] sm:$0xf]
    %v7106 = vld [vmem:[%s7075 + $0x78] sm:$0xf]
    %v7107 = vld [vmem:[%s7075 + $0x7c] sm:$0xf]
    %v7140 = vunpack.c.l.b16 %v7076
    %v7141 = vunpack.c.l.b16 %v7077
    %v7142 = vunpack.c.l.b16 %v7078
    %v7143 = vunpack.c.l.b16 %v7079
    %v7144 = vunpack.c.l.b16 %v7080
    %v7145 = vunpack.c.l.b16 %v7081
    %v7146 = vunpack.c.l.b16 %v7082
    %v7147 = vunpack.c.l.b16 %v7083
    %v7148 = vunpack.c.l.b16 %v7084
    %v7149 = vunpack.c.l.b16 %v7085
    %v7150 = vunpack.c.l.b16 %v7086
    %v7151 = vunpack.c.l.b16 %v7087
    %v7152 = vunpack.c.l.b16 %v7088
    %v7153 = vunpack.c.l.b16 %v7089
    %v7154 = vunpack.c.l.b16 %v7090
    %v7155 = vunpack.c.l.b16 %v7091
    %v7156 = vunpack.c.l.b16 %v7092
    %v7157 = vunpack.c.l.b16 %v7093
    %v7158 = vunpack.c.l.b16 %v7094
    %v7159 = vunpack.c.l.b16 %v7095
    %v7160 = vunpack.c.l.b16 %v7096
    %v7161 = vunpack.c.l.b16 %v7097
    %v7162 = vunpack.c.l.b16 %v7098
    %v7163 = vunpack.c.l.b16 %v7099
    %v7164 = vunpack.c.l.b16 %v7100
    %v7165 = vunpack.c.l.b16 %v7101
    %v7166 = vunpack.c.l.b16 %v7102
    %v7167 = vunpack.c.l.b16 %v7103
    %v7168 = vunpack.c.l.b16 %v7104
    %v7169 = vunpack.c.l.b16 %v7105
    %v7170 = vunpack.c.l.b16 %v7106
    %v7171 = vunpack.c.l.b16 %v7107
    %v7172 = vpack.c.b16 %v7141, %v7140
    %v7173 = vpack.c.b16 %v7143, %v7142
    %v7174 = vpack.c.b16 %v7145, %v7144
    %v7175 = vpack.c.b16 %v7147, %v7146
    %v7176 = vpack.c.b16 %v7149, %v7148
    %v7177 = vpack.c.b16 %v7151, %v7150
    %v7178 = vpack.c.b16 %v7153, %v7152
    %v7179 = vpack.c.b16 %v7155, %v7154
    %v7180 = vpack.c.b16 %v7157, %v7156
    %v7181 = vpack.c.b16 %v7159, %v7158
    %v7182 = vpack.c.b16 %v7161, %v7160
    %v7183 = vpack.c.b16 %v7163, %v7162
    %v7184 = vpack.c.b16 %v7165, %v7164
    %v7185 = vpack.c.b16 %v7167, %v7166
    %v7186 = vpack.c.b16 %v7169, %v7168
    %v7187 = vpack.c.b16 %v7171, %v7170
    %7204 = vmatpush.bf16.msra.mxu0 %v7179
    %7205 = vmatpush.bf16.msra.mxu0 %v7178
    %7206 = vmatpush.bf16.msra.mxu0 %v7177
    %7207 = vmatpush.bf16.msra.mxu0 %v7176
    %7208 = vmatpush.bf16.msra.mxu0 %v7175
    %7209 = vmatpush.bf16.msra.mxu0 %v7174
    %7210 = vmatpush.bf16.msra.mxu0 %v7173
    %7211 = vmatpush.bf16.msra.mxu0 %v7172
    %7212 = vmatmul.bf16.gmra.mxu0 %v7067
    %v7213 = vpop.f32.mrf.mxu0
    %v7214 = vadd.f32 0.0, %v7213
    %v7215 = vpop.f32.mrf.mxu0
    %v7216 = vadd.f32 0.0, %v7215
    %7217 = vmatmul.bf16.gmra.mxu0 %v7069
    %v7218 = vpop.f32.mrf.mxu0
    %v7219 = vadd.f32 0.0, %v7218
    %v7220 = vpop.f32.mrf.mxu0
    %v7221 = vadd.f32 0.0, %v7220
    %7222 = vmatmul.bf16.gmra.mxu0 %v7071
    %v7223 = vpop.f32.mrf.mxu0
    %v7224 = vadd.f32 0.0, %v7223
    %v7225 = vpop.f32.mrf.mxu0
    %v7226 = vadd.f32 0.0, %v7225
    %7227 = vmatmul.bf16.gmra.mxu0 %v7073
    %v7228 = vpop.f32.mrf.mxu0
    %v7229 = vadd.f32 0.0, %v7228
    %v7230 = vpop.f32.mrf.mxu0
    %v7231 = vadd.f32 0.0, %v7230
    %7232 = vdwg.mxu0
    %7233 = vmatpush.bf16.msra.mxu0 %v7187
    %7234 = vmatpush.bf16.msra.mxu0 %v7186
    %7235 = vmatpush.bf16.msra.mxu0 %v7185
    %7236 = vmatpush.bf16.msra.mxu0 %v7184
    %7237 = vmatpush.bf16.msra.mxu0 %v7183
    %7238 = vmatpush.bf16.msra.mxu0 %v7182
    %7239 = vmatpush.bf16.msra.mxu0 %v7181
    %7240 = vmatpush.bf16.msra.mxu0 %v7180
    %7241 = vmatmul.bf16.gmra.mxu0 %v7068
    %v7242 = vpop.f32.mrf.mxu0
    %v7243 = vadd.f32 %v7214, %v7242
    %v7244 = vpop.f32.mrf.mxu0
    %v7245 = vadd.f32 %v7216, %v7244
    %7246 = vmatmul.bf16.gmra.mxu0 %v7070
    %v7247 = vpop.f32.mrf.mxu0
    %v7248 = vadd.f32 %v7219, %v7247
    %v7249 = vpop.f32.mrf.mxu0
    %v7250 = vadd.f32 %v7221, %v7249
    %7251 = vmatmul.bf16.gmra.mxu0 %v7072
    %v7252 = vpop.f32.mrf.mxu0
    %v7253 = vadd.f32 %v7224, %v7252
    %v7254 = vpop.f32.mrf.mxu0
    %v7255 = vadd.f32 %v7226, %v7254
    %7256 = vmatmul.bf16.gmra.mxu0 %v7074
    %v7257 = vpop.f32.mrf.mxu0
    %v7258 = vadd.f32 %v7229, %v7257
    %v7259 = vpop.f32.mrf.mxu0
    %v7260 = vadd.f32 %v7231, %v7259
    %7261 = vdwg.mxu0
    %v7294 = vunpack.c.l.b16 %v6936
    %v7295 = vunpack.c.l.b16 %v6937
    %v7296 = vunpack.c.l.b16 %v6938
    %v7297 = vunpack.c.l.b16 %v6939
    %v7298 = vunpack.c.l.b16 %v6940
    %v7299 = vunpack.c.l.b16 %v6941
    %v7300 = vunpack.c.l.b16 %v6942
    %v7301 = vunpack.c.l.b16 %v6943
    %v7302 = vunpack.c.l.b16 %v6944
    %v7303 = vunpack.c.l.b16 %v6945
    %v7304 = vunpack.c.l.b16 %v6946
    %v7305 = vunpack.c.l.b16 %v6947
    %v7306 = vunpack.c.l.b16 %v6948
    %v7307 = vunpack.c.l.b16 %v6949
    %v7308 = vunpack.c.l.b16 %v6950
    %v7309 = vunpack.c.l.b16 %v6951
    %v7310 = vunpack.c.l.b16 %v6952
    %v7311 = vunpack.c.l.b16 %v6953
    %v7312 = vunpack.c.l.b16 %v6954
    %v7313 = vunpack.c.l.b16 %v6955
    %v7314 = vunpack.c.l.b16 %v6956
    %v7315 = vunpack.c.l.b16 %v6957
    %v7316 = vunpack.c.l.b16 %v6958
    %v7317 = vunpack.c.l.b16 %v6959
    %v7318 = vunpack.c.l.b16 %v6960
    %v7319 = vunpack.c.l.b16 %v6961
    %v7320 = vunpack.c.l.b16 %v6962
    %v7321 = vunpack.c.l.b16 %v6963
    %v7322 = vunpack.c.l.b16 %v6964
    %v7323 = vunpack.c.l.b16 %v6965
    %v7324 = vunpack.c.l.b16 %v6966
    %v7325 = vunpack.c.l.b16 %v6967
    %v7326 = vpack.c.b16 %v7295, %v7294
    %v7327 = vpack.c.b16 %v7297, %v7296
    %v7328 = vpack.c.b16 %v7299, %v7298
    %v7329 = vpack.c.b16 %v7301, %v7300
    %v7330 = vpack.c.b16 %v7303, %v7302
    %v7331 = vpack.c.b16 %v7305, %v7304
    %v7332 = vpack.c.b16 %v7307, %v7306
    %v7333 = vpack.c.b16 %v7309, %v7308
    %v7334 = vpack.c.b16 %v7311, %v7310
    %v7335 = vpack.c.b16 %v7313, %v7312
    %v7336 = vpack.c.b16 %v7315, %v7314
    %v7337 = vpack.c.b16 %v7317, %v7316
    %v7338 = vpack.c.b16 %v7319, %v7318
    %v7339 = vpack.c.b16 %v7321, %v7320
    %v7340 = vpack.c.b16 %v7323, %v7322
    %v7341 = vpack.c.b16 %v7325, %v7324
    %7358 = vmatpush.bf16.msra.mxu0 %v7333
    %7359 = vmatpush.bf16.msra.mxu0 %v7332
    %7360 = vmatpush.bf16.msra.mxu0 %v7331
    %7361 = vmatpush.bf16.msra.mxu0 %v7330
    %7362 = vmatpush.bf16.msra.mxu0 %v7329
    %7363 = vmatpush.bf16.msra.mxu0 %v7328
    %7364 = vmatpush.bf16.msra.mxu0 %v7327
    %7365 = vmatpush.bf16.msra.mxu0 %v7326
    %7366 = vmatmul.bf16.gmra.mxu0 %v6928
    %v7367 = vpop.f32.mrf.mxu0
    %v7368 = vadd.f32 %v7243, %v7367
    %v7369 = vpop.f32.mrf.mxu0
    %v7370 = vadd.f32 %v7245, %v7369
    %7371 = vmatmul.bf16.gmra.mxu0 %v6930
    %v7372 = vpop.f32.mrf.mxu0
    %v7373 = vadd.f32 %v7248, %v7372
    %v7374 = vpop.f32.mrf.mxu0
    %v7375 = vadd.f32 %v7250, %v7374
    %7376 = vmatmul.bf16.gmra.mxu0 %v6932
    %v7377 = vpop.f32.mrf.mxu0
    %v7378 = vadd.f32 %v7253, %v7377
    %v7379 = vpop.f32.mrf.mxu0
    %v7380 = vadd.f32 %v7255, %v7379
    %7381 = vmatmul.bf16.gmra.mxu0 %v6934
    %v7382 = vpop.f32.mrf.mxu0
    %v7383 = vadd.f32 %v7258, %v7382
    %v7384 = vpop.f32.mrf.mxu0
    %v7385 = vadd.f32 %v7260, %v7384
    %7386 = vdwg.mxu0
    %7387 = vmatpush.bf16.msra.mxu0 %v7341
    %7388 = vmatpush.bf16.msra.mxu0 %v7340
    %7389 = vmatpush.bf16.msra.mxu0 %v7339
    %7390 = vmatpush.bf16.msra.mxu0 %v7338
    %7391 = vmatpush.bf16.msra.mxu0 %v7337
    %7392 = vmatpush.bf16.msra.mxu0 %v7336
    %7393 = vmatpush.bf16.msra.mxu0 %v7335
    %7394 = vmatpush.bf16.msra.mxu0 %v7334
    %7395 = vmatmul.bf16.gmra.mxu0 %v6929
    %v7396 = vpop.f32.mrf.mxu0
    %v7397 = vadd.f32 %v7368, %v7396
    %v7398 = vpop.f32.mrf.mxu0
    %v7399 = vadd.f32 %v7370, %v7398
    %7400 = vmatmul.bf16.gmra.mxu0 %v6931
    %v7401 = vpop.f32.mrf.mxu0
    %v7402 = vadd.f32 %v7373, %v7401
    %v7403 = vpop.f32.mrf.mxu0
    %v7404 = vadd.f32 %v7375, %v7403
    %7405 = vmatmul.bf16.gmra.mxu0 %v6933
    %v7406 = vpop.f32.mrf.mxu0
    %v7407 = vadd.f32 %v7378, %v7406
    %v7408 = vpop.f32.mrf.mxu0
    %v7409 = vadd.f32 %v7380, %v7408
    %7410 = vmatmul.bf16.gmra.mxu0 %v6935
    %v7411 = vpop.f32.mrf.mxu0
    %v7412 = vadd.f32 %v7383, %v7411
    %v7413 = vpop.f32.mrf.mxu0
    %v7414 = vadd.f32 %v7385, %v7413
    %7415 = vdwg.mxu0
    %s7416 = scalar_lea.vmem %s26, 64
    %v7417 = vld [vmem:[%s7416] sm:$0xf]
    %v7418 = vld [vmem:[%s7416 + $0x4] sm:$0xf]
    %v7419 = vld [vmem:[%s7416 + $0x8] sm:$0xf]
    %v7420 = vld [vmem:[%s7416 + $0xc] sm:$0xf]
    %v7421 = vld [vmem:[%s7416 + $0x10] sm:$0xf]
    %v7422 = vld [vmem:[%s7416 + $0x14] sm:$0xf]
    %v7423 = vld [vmem:[%s7416 + $0x18] sm:$0xf]
    %v7424 = vld [vmem:[%s7416 + $0x1c] sm:$0xf]
    %v7433 = vunpack.c.l.b16 %v7417
    %v7434 = vunpack.c.l.b16 %v7418
    %v7435 = vunpack.c.l.b16 %v7419
    %v7436 = vunpack.c.l.b16 %v7420
    %v7437 = vunpack.c.l.b16 %v7421
    %v7438 = vunpack.c.l.b16 %v7422
    %v7439 = vunpack.c.l.b16 %v7423
    %v7440 = vunpack.c.l.b16 %v7424
    %v7441 = vpack.c.b16 %v7434, %v7433
    %v7442 = vpack.c.b16 %v7436, %v7435
    %v7443 = vpack.c.b16 %v7438, %v7437
    %v7444 = vpack.c.b16 %v7440, %v7439
    %v7446 = vsel %vm152, %v7441, 0
    %v7449 = vsel %vm152, %v7442, 0
    %v7452 = vsel %vm152, %v7443, 0
    %v7455 = vsel %vm152, %v7444, 0
    %7457 = vmatpush.bf16.msra.mxu0 0
    %7458 = vmatpush.bf16.msra.mxu0 0
    %7459 = vmatpush.bf16.msra.mxu0 0
    %7460 = vmatpush.bf16.msra.mxu0 0
    %7461 = vmatpush.bf16.msra.mxu0 0
    %7462 = vmatpush.bf16.msra.mxu0 0
    %7463 = vmatpush.bf16.msra.mxu0 %v6800
    %7464 = vmatpush.bf16.msra.mxu0 %v6798
    %7465 = vmatmul.bf16.gmra.mxu0 %v7446
    %v7466 = vpop.f32.mrf.mxu0
    %v7467 = vadd.f32 0.0, %v7466
    %v7468 = vpop.f32.mrf.mxu0
    %v7469 = vadd.f32 0.0, %v7468
    %7470 = vmatmul.bf16.gmra.mxu0 %v7449
    %v7471 = vpop.f32.mrf.mxu0
    %v7472 = vadd.f32 0.0, %v7471
    %v7473 = vpop.f32.mrf.mxu0
    %v7474 = vadd.f32 0.0, %v7473
    %7475 = vmatmul.bf16.gmra.mxu0 %v7452
    %v7476 = vpop.f32.mrf.mxu0
    %v7477 = vadd.f32 0.0, %v7476
    %v7478 = vpop.f32.mrf.mxu0
    %v7479 = vadd.f32 0.0, %v7478
    %7480 = vmatmul.bf16.gmra.mxu0 %v7455
    %v7481 = vpop.f32.mrf.mxu0
    %v7482 = vadd.f32 0.0, %v7481
    %v7483 = vpop.f32.mrf.mxu0
    %v7484 = vadd.f32 0.0, %v7483
    %7485 = vdwg.mxu0
    %7486 = vmatpush.bf16.msra.mxu0 0
    %7487 = vmatpush.bf16.msra.mxu0 0
    %7488 = vmatpush.bf16.msra.mxu0 0
    %7489 = vmatpush.bf16.msra.mxu0 0
    %7490 = vmatpush.bf16.msra.mxu0 0
    %7491 = vmatpush.bf16.msra.mxu0 0
    %7492 = vmatpush.bf16.msra.mxu0 %v6801
    %7493 = vmatpush.bf16.msra.mxu0 %v6799
    %7494 = vmatmul.bf16.gmra.mxu0 %v7446
    %v7495 = vpop.f32.mrf.mxu0
    %v7496 = vadd.f32 0.0, %v7495
    %v7497 = vpop.f32.mrf.mxu0
    %v7498 = vadd.f32 0.0, %v7497
    %7499 = vmatmul.bf16.gmra.mxu0 %v7449
    %v7500 = vpop.f32.mrf.mxu0
    %v7501 = vadd.f32 0.0, %v7500
    %v7502 = vpop.f32.mrf.mxu0
    %v7503 = vadd.f32 0.0, %v7502
    %7504 = vmatmul.bf16.gmra.mxu0 %v7452
    %v7505 = vpop.f32.mrf.mxu0
    %v7506 = vadd.f32 0.0, %v7505
    %v7507 = vpop.f32.mrf.mxu0
    %v7508 = vadd.f32 0.0, %v7507
    %7509 = vmatmul.bf16.gmra.mxu0 %v7455
    %v7510 = vpop.f32.mrf.mxu0
    %v7511 = vadd.f32 0.0, %v7510
    %v7512 = vpop.f32.mrf.mxu0
    %v7513 = vadd.f32 0.0, %v7512
    %7514 = vdwg.mxu0
    %v7515 = vpack.c.bf16 %v7469, %v7467
    %v7516 = vpack.c.bf16 %v7498, %v7496
    %v7517 = vpack.c.bf16 %v7474, %v7472
    %v7518 = vpack.c.bf16 %v7503, %v7501
    %v7519 = vpack.c.bf16 %v7479, %v7477
    %v7520 = vpack.c.bf16 %v7508, %v7506
    %v7521 = vpack.c.bf16 %v7484, %v7482
    %v7522 = vpack.c.bf16 %v7513, %v7511
    %s7523 = scalar_lea.vmem %s25, 256
    %v7524 = vld [vmem:[%s7523] sm:$0xf]
    %v7525 = vld [vmem:[%s7523 + $0x4] sm:$0xf]
    %v7526 = vld [vmem:[%s7523 + $0x8] sm:$0xf]
    %v7527 = vld [vmem:[%s7523 + $0xc] sm:$0xf]
    %v7528 = vld [vmem:[%s7523 + $0x10] sm:$0xf]
    %v7529 = vld [vmem:[%s7523 + $0x14] sm:$0xf]
    %v7530 = vld [vmem:[%s7523 + $0x18] sm:$0xf]
    %v7531 = vld [vmem:[%s7523 + $0x1c] sm:$0xf]
    %v7532 = vld [vmem:[%s7523 + $0x20] sm:$0xf]
    %v7533 = vld [vmem:[%s7523 + $0x24] sm:$0xf]
    %v7534 = vld [vmem:[%s7523 + $0x28] sm:$0xf]
    %v7535 = vld [vmem:[%s7523 + $0x2c] sm:$0xf]
    %v7536 = vld [vmem:[%s7523 + $0x30] sm:$0xf]
    %v7537 = vld [vmem:[%s7523 + $0x34] sm:$0xf]
    %v7538 = vld [vmem:[%s7523 + $0x38] sm:$0xf]
    %v7539 = vld [vmem:[%s7523 + $0x3c] sm:$0xf]
    %v7540 = vld [vmem:[%s7523 + $0x40] sm:$0xf]
    %v7541 = vld [vmem:[%s7523 + $0x44] sm:$0xf]
    %v7542 = vld [vmem:[%s7523 + $0x48] sm:$0xf]
    %v7543 = vld [vmem:[%s7523 + $0x4c] sm:$0xf]
    %v7544 = vld [vmem:[%s7523 + $0x50] sm:$0xf]
    %v7545 = vld [vmem:[%s7523 + $0x54] sm:$0xf]
    %v7546 = vld [vmem:[%s7523 + $0x58] sm:$0xf]
    %v7547 = vld [vmem:[%s7523 + $0x5c] sm:$0xf]
    %v7548 = vld [vmem:[%s7523 + $0x60] sm:$0xf]
    %v7549 = vld [vmem:[%s7523 + $0x64] sm:$0xf]
    %v7550 = vld [vmem:[%s7523 + $0x68] sm:$0xf]
    %v7551 = vld [vmem:[%s7523 + $0x6c] sm:$0xf]
    %v7552 = vld [vmem:[%s7523 + $0x70] sm:$0xf]
    %v7553 = vld [vmem:[%s7523 + $0x74] sm:$0xf]
    %v7554 = vld [vmem:[%s7523 + $0x78] sm:$0xf]
    %v7555 = vld [vmem:[%s7523 + $0x7c] sm:$0xf]
    %v7588 = vunpack.c.l.b16 %v7524
    %v7589 = vunpack.c.l.b16 %v7525
    %v7590 = vunpack.c.l.b16 %v7526
    %v7591 = vunpack.c.l.b16 %v7527
    %v7592 = vunpack.c.l.b16 %v7528
    %v7593 = vunpack.c.l.b16 %v7529
    %v7594 = vunpack.c.l.b16 %v7530
    %v7595 = vunpack.c.l.b16 %v7531
    %v7596 = vunpack.c.l.b16 %v7532
    %v7597 = vunpack.c.l.b16 %v7533
    %v7598 = vunpack.c.l.b16 %v7534
    %v7599 = vunpack.c.l.b16 %v7535
    %v7600 = vunpack.c.l.b16 %v7536
    %v7601 = vunpack.c.l.b16 %v7537
    %v7602 = vunpack.c.l.b16 %v7538
    %v7603 = vunpack.c.l.b16 %v7539
    %v7604 = vunpack.c.l.b16 %v7540
    %v7605 = vunpack.c.l.b16 %v7541
    %v7606 = vunpack.c.l.b16 %v7542
    %v7607 = vunpack.c.l.b16 %v7543
    %v7608 = vunpack.c.l.b16 %v7544
    %v7609 = vunpack.c.l.b16 %v7545
    %v7610 = vunpack.c.l.b16 %v7546
    %v7611 = vunpack.c.l.b16 %v7547
    %v7612 = vunpack.c.l.b16 %v7548
    %v7613 = vunpack.c.l.b16 %v7549
    %v7614 = vunpack.c.l.b16 %v7550
    %v7615 = vunpack.c.l.b16 %v7551
    %v7616 = vunpack.c.l.b16 %v7552
    %v7617 = vunpack.c.l.b16 %v7553
    %v7618 = vunpack.c.l.b16 %v7554
    %v7619 = vunpack.c.l.b16 %v7555
    %v7620 = vpack.c.b16 %v7589, %v7588
    %v7621 = vpack.c.b16 %v7591, %v7590
    %v7622 = vpack.c.b16 %v7593, %v7592
    %v7623 = vpack.c.b16 %v7595, %v7594
    %v7624 = vpack.c.b16 %v7597, %v7596
    %v7625 = vpack.c.b16 %v7599, %v7598
    %v7626 = vpack.c.b16 %v7601, %v7600
    %v7627 = vpack.c.b16 %v7603, %v7602
    %v7628 = vpack.c.b16 %v7605, %v7604
    %v7629 = vpack.c.b16 %v7607, %v7606
    %v7630 = vpack.c.b16 %v7609, %v7608
    %v7631 = vpack.c.b16 %v7611, %v7610
    %v7632 = vpack.c.b16 %v7613, %v7612
    %v7633 = vpack.c.b16 %v7615, %v7614
    %v7634 = vpack.c.b16 %v7617, %v7616
    %v7635 = vpack.c.b16 %v7619, %v7618
    %7652 = vmatpush.bf16.msra.mxu0 %v7627
    %7653 = vmatpush.bf16.msra.mxu0 %v7626
    %7654 = vmatpush.bf16.msra.mxu0 %v7625
    %7655 = vmatpush.bf16.msra.mxu0 %v7624
    %7656 = vmatpush.bf16.msra.mxu0 %v7623
    %7657 = vmatpush.bf16.msra.mxu0 %v7622
    %7658 = vmatpush.bf16.msra.mxu0 %v7621
    %7659 = vmatpush.bf16.msra.mxu0 %v7620
    %7660 = vmatmul.bf16.gmra.mxu0 %v7515
    %v7661 = vpop.f32.mrf.mxu0
    %v7662 = vadd.f32 0.0, %v7661
    %v7663 = vpop.f32.mrf.mxu0
    %v7664 = vadd.f32 0.0, %v7663
    %7665 = vmatmul.bf16.gmra.mxu0 %v7517
    %v7666 = vpop.f32.mrf.mxu0
    %v7667 = vadd.f32 0.0, %v7666
    %v7668 = vpop.f32.mrf.mxu0
    %v7669 = vadd.f32 0.0, %v7668
    %7670 = vmatmul.bf16.gmra.mxu0 %v7519
    %v7671 = vpop.f32.mrf.mxu0
    %v7672 = vadd.f32 0.0, %v7671
    %v7673 = vpop.f32.mrf.mxu0
    %v7674 = vadd.f32 0.0, %v7673
    %7675 = vmatmul.bf16.gmra.mxu0 %v7521
    %v7676 = vpop.f32.mrf.mxu0
    %v7677 = vadd.f32 0.0, %v7676
    %v7678 = vpop.f32.mrf.mxu0
    %v7679 = vadd.f32 0.0, %v7678
    %7680 = vdwg.mxu0
    %7681 = vmatpush.bf16.msra.mxu0 %v7635
    %7682 = vmatpush.bf16.msra.mxu0 %v7634
    %7683 = vmatpush.bf16.msra.mxu0 %v7633
    %7684 = vmatpush.bf16.msra.mxu0 %v7632
    %7685 = vmatpush.bf16.msra.mxu0 %v7631
    %7686 = vmatpush.bf16.msra.mxu0 %v7630
    %7687 = vmatpush.bf16.msra.mxu0 %v7629
    %7688 = vmatpush.bf16.msra.mxu0 %v7628
    %7689 = vmatmul.bf16.gmra.mxu0 %v7516
    %v7690 = vpop.f32.mrf.mxu0
    %v7691 = vadd.f32 %v7662, %v7690
    %v7692 = vpop.f32.mrf.mxu0
    %v7693 = vadd.f32 %v7664, %v7692
    %7694 = vmatmul.bf16.gmra.mxu0 %v7518
    %v7695 = vpop.f32.mrf.mxu0
    %v7696 = vadd.f32 %v7667, %v7695
    %v7697 = vpop.f32.mrf.mxu0
    %v7698 = vadd.f32 %v7669, %v7697
    %7699 = vmatmul.bf16.gmra.mxu0 %v7520
    %v7700 = vpop.f32.mrf.mxu0
    %v7701 = vadd.f32 %v7672, %v7700
    %v7702 = vpop.f32.mrf.mxu0
    %v7703 = vadd.f32 %v7674, %v7702
    %7704 = vmatmul.bf16.gmra.mxu0 %v7522
    %v7705 = vpop.f32.mrf.mxu0
    %v7706 = vadd.f32 %v7677, %v7705
    %v7707 = vpop.f32.mrf.mxu0
    %v7708 = vadd.f32 %v7679, %v7707
    %7709 = vdwg.mxu0
    %v7710 = vadd.f32 %v7397, %v7691
    %v7711 = vadd.f32 %v7399, %v7693
    %v7712 = vadd.f32 %v7402, %v7696
    %v7713 = vadd.f32 %v7404, %v7698
    %v7714 = vadd.f32 %v7407, %v7701
    %v7715 = vadd.f32 %v7409, %v7703
    %v7716 = vadd.f32 %v7412, %v7706
    %v7717 = vadd.f32 %v7414, %v7708
    %s7718 = scalar_lea.vmem %s26, 96
    %v7719 = vld [vmem:[%s7718] sm:$0xf]
    %v7720 = vld [vmem:[%s7718 + $0x4] sm:$0xf]
    %v7721 = vld [vmem:[%s7718 + $0x8] sm:$0xf]
    %v7722 = vld [vmem:[%s7718 + $0xc] sm:$0xf]
    %v7723 = vld [vmem:[%s7718 + $0x10] sm:$0xf]
    %v7724 = vld [vmem:[%s7718 + $0x14] sm:$0xf]
    %v7725 = vld [vmem:[%s7718 + $0x18] sm:$0xf]
    %v7726 = vld [vmem:[%s7718 + $0x1c] sm:$0xf]
    %v7735 = vunpack.c.l.b16 %v7719
    %v7736 = vunpack.c.l.b16 %v7720
    %v7737 = vunpack.c.l.b16 %v7721
    %v7738 = vunpack.c.l.b16 %v7722
    %v7739 = vunpack.c.l.b16 %v7723
    %v7740 = vunpack.c.l.b16 %v7724
    %v7741 = vunpack.c.l.b16 %v7725
    %v7742 = vunpack.c.l.b16 %v7726
    %v7743 = vpack.c.b16 %v7736, %v7735
    %v7744 = vpack.c.b16 %v7738, %v7737
    %v7745 = vpack.c.b16 %v7740, %v7739
    %v7746 = vpack.c.b16 %v7742, %v7741
    %v7748 = vsel %vm152, %v7743, 0
    %v7751 = vsel %vm152, %v7744, 0
    %v7754 = vsel %vm152, %v7745, 0
    %v7757 = vsel %vm152, %v7746, 0
    %7759 = vmatpush.bf16.msra.mxu0 0
    %7760 = vmatpush.bf16.msra.mxu0 0
    %7761 = vmatpush.bf16.msra.mxu0 0
    %7762 = vmatpush.bf16.msra.mxu0 0
    %7763 = vmatpush.bf16.msra.mxu0 0
    %7764 = vmatpush.bf16.msra.mxu0 0
    %7765 = vmatpush.bf16.msra.mxu0 %v6800
    %7766 = vmatpush.bf16.msra.mxu0 %v6798
    %7767 = vmatmul.bf16.gmra.mxu0 %v7748
    %v7768 = vpop.f32.mrf.mxu0
    %v7769 = vadd.f32 0.0, %v7768
    %v7770 = vpop.f32.mrf.mxu0
    %v7771 = vadd.f32 0.0, %v7770
    %7772 = vmatmul.bf16.gmra.mxu0 %v7751
    %v7773 = vpop.f32.mrf.mxu0
    %v7774 = vadd.f32 0.0, %v7773
    %v7775 = vpop.f32.mrf.mxu0
    %v7776 = vadd.f32 0.0, %v7775
    %7777 = vmatmul.bf16.gmra.mxu0 %v7754
    %v7778 = vpop.f32.mrf.mxu0
    %v7779 = vadd.f32 0.0, %v7778
    %v7780 = vpop.f32.mrf.mxu0
    %v7781 = vadd.f32 0.0, %v7780
    %7782 = vmatmul.bf16.gmra.mxu0 %v7757
    %v7783 = vpop.f32.mrf.mxu0
    %v7784 = vadd.f32 0.0, %v7783
    %v7785 = vpop.f32.mrf.mxu0
    %v7786 = vadd.f32 0.0, %v7785
    %7787 = vdwg.mxu0
    %7788 = vmatpush.bf16.msra.mxu0 0
    %7789 = vmatpush.bf16.msra.mxu0 0
    %7790 = vmatpush.bf16.msra.mxu0 0
    %7791 = vmatpush.bf16.msra.mxu0 0
    %7792 = vmatpush.bf16.msra.mxu0 0
    %7793 = vmatpush.bf16.msra.mxu0 0
    %7794 = vmatpush.bf16.msra.mxu0 %v6801
    %7795 = vmatpush.bf16.msra.mxu0 %v6799
    %7796 = vmatmul.bf16.gmra.mxu0 %v7748
    %v7797 = vpop.f32.mrf.mxu0
    %v7798 = vadd.f32 0.0, %v7797
    %v7799 = vpop.f32.mrf.mxu0
    %v7800 = vadd.f32 0.0, %v7799
    %7801 = vmatmul.bf16.gmra.mxu0 %v7751
    %v7802 = vpop.f32.mrf.mxu0
    %v7803 = vadd.f32 0.0, %v7802
    %v7804 = vpop.f32.mrf.mxu0
    %v7805 = vadd.f32 0.0, %v7804
    %7806 = vmatmul.bf16.gmra.mxu0 %v7754
    %v7807 = vpop.f32.mrf.mxu0
    %v7808 = vadd.f32 0.0, %v7807
    %v7809 = vpop.f32.mrf.mxu0
    %v7810 = vadd.f32 0.0, %v7809
    %7811 = vmatmul.bf16.gmra.mxu0 %v7757
    %v7812 = vpop.f32.mrf.mxu0
    %v7813 = vadd.f32 0.0, %v7812
    %v7814 = vpop.f32.mrf.mxu0
    %v7815 = vadd.f32 0.0, %v7814
    %7816 = vdwg.mxu0
    %v7817 = vpack.c.bf16 %v7771, %v7769
    %v7818 = vpack.c.bf16 %v7800, %v7798
    %v7819 = vpack.c.bf16 %v7776, %v7774
    %v7820 = vpack.c.bf16 %v7805, %v7803
    %v7821 = vpack.c.bf16 %v7781, %v7779
    %v7822 = vpack.c.bf16 %v7810, %v7808
    %v7823 = vpack.c.bf16 %v7786, %v7784
    %v7824 = vpack.c.bf16 %v7815, %v7813
    %s7825 = scalar_lea.vmem %s25, 384
    %v7826 = vld [vmem:[%s7825] sm:$0xf]
    %v7827 = vld [vmem:[%s7825 + $0x4] sm:$0xf]
    %v7828 = vld [vmem:[%s7825 + $0x8] sm:$0xf]
    %v7829 = vld [vmem:[%s7825 + $0xc] sm:$0xf]
    %v7830 = vld [vmem:[%s7825 + $0x10] sm:$0xf]
    %v7831 = vld [vmem:[%s7825 + $0x14] sm:$0xf]
    %v7832 = vld [vmem:[%s7825 + $0x18] sm:$0xf]
    %v7833 = vld [vmem:[%s7825 + $0x1c] sm:$0xf]
    %v7834 = vld [vmem:[%s7825 + $0x20] sm:$0xf]
    %v7835 = vld [vmem:[%s7825 + $0x24] sm:$0xf]
    %v7836 = vld [vmem:[%s7825 + $0x28] sm:$0xf]
    %v7837 = vld [vmem:[%s7825 + $0x2c] sm:$0xf]
    %v7838 = vld [vmem:[%s7825 + $0x30] sm:$0xf]
    %v7839 = vld [vmem:[%s7825 + $0x34] sm:$0xf]
    %v7840 = vld [vmem:[%s7825 + $0x38] sm:$0xf]
    %v7841 = vld [vmem:[%s7825 + $0x3c] sm:$0xf]
    %v7842 = vld [vmem:[%s7825 + $0x40] sm:$0xf]
    %v7843 = vld [vmem:[%s7825 + $0x44] sm:$0xf]
    %v7844 = vld [vmem:[%s7825 + $0x48] sm:$0xf]
    %v7845 = vld [vmem:[%s7825 + $0x4c] sm:$0xf]
    %v7846 = vld [vmem:[%s7825 + $0x50] sm:$0xf]
    %v7847 = vld [vmem:[%s7825 + $0x54] sm:$0xf]
    %v7848 = vld [vmem:[%s7825 + $0x58] sm:$0xf]
    %v7849 = vld [vmem:[%s7825 + $0x5c] sm:$0xf]
    %v7850 = vld [vmem:[%s7825 + $0x60] sm:$0xf]
    %v7851 = vld [vmem:[%s7825 + $0x64] sm:$0xf]
    %v7852 = vld [vmem:[%s7825 + $0x68] sm:$0xf]
    %v7853 = vld [vmem:[%s7825 + $0x6c] sm:$0xf]
    %v7854 = vld [vmem:[%s7825 + $0x70] sm:$0xf]
    %v7855 = vld [vmem:[%s7825 + $0x74] sm:$0xf]
    %v7856 = vld [vmem:[%s7825 + $0x78] sm:$0xf]
    %v7857 = vld [vmem:[%s7825 + $0x7c] sm:$0xf]
    %v7890 = vunpack.c.l.b16 %v7826
    %v7891 = vunpack.c.l.b16 %v7827
    %v7892 = vunpack.c.l.b16 %v7828
    %v7893 = vunpack.c.l.b16 %v7829
    %v7894 = vunpack.c.l.b16 %v7830
    %v7895 = vunpack.c.l.b16 %v7831
    %v7896 = vunpack.c.l.b16 %v7832
    %v7897 = vunpack.c.l.b16 %v7833
    %v7898 = vunpack.c.l.b16 %v7834
    %v7899 = vunpack.c.l.b16 %v7835
    %v7900 = vunpack.c.l.b16 %v7836
    %v7901 = vunpack.c.l.b16 %v7837
    %v7902 = vunpack.c.l.b16 %v7838
    %v7903 = vunpack.c.l.b16 %v7839
    %v7904 = vunpack.c.l.b16 %v7840
    %v7905 = vunpack.c.l.b16 %v7841
    %v7906 = vunpack.c.l.b16 %v7842
    %v7907 = vunpack.c.l.b16 %v7843
    %v7908 = vunpack.c.l.b16 %v7844
    %v7909 = vunpack.c.l.b16 %v7845
    %v7910 = vunpack.c.l.b16 %v7846
    %v7911 = vunpack.c.l.b16 %v7847
    %v7912 = vunpack.c.l.b16 %v7848
    %v7913 = vunpack.c.l.b16 %v7849
    %v7914 = vunpack.c.l.b16 %v7850
    %v7915 = vunpack.c.l.b16 %v7851
    %v7916 = vunpack.c.l.b16 %v7852
    %v7917 = vunpack.c.l.b16 %v7853
    %v7918 = vunpack.c.l.b16 %v7854
    %v7919 = vunpack.c.l.b16 %v7855
    %v7920 = vunpack.c.l.b16 %v7856
    %v7921 = vunpack.c.l.b16 %v7857
    %v7922 = vpack.c.b16 %v7891, %v7890
    %v7923 = vpack.c.b16 %v7893, %v7892
    %v7924 = vpack.c.b16 %v7895, %v7894
    %v7925 = vpack.c.b16 %v7897, %v7896
    %v7926 = vpack.c.b16 %v7899, %v7898
    %v7927 = vpack.c.b16 %v7901, %v7900
    %v7928 = vpack.c.b16 %v7903, %v7902
    %v7929 = vpack.c.b16 %v7905, %v7904
    %v7930 = vpack.c.b16 %v7907, %v7906
    %v7931 = vpack.c.b16 %v7909, %v7908
    %v7932 = vpack.c.b16 %v7911, %v7910
    %v7933 = vpack.c.b16 %v7913, %v7912
    %v7934 = vpack.c.b16 %v7915, %v7914
    %v7935 = vpack.c.b16 %v7917, %v7916
    %v7936 = vpack.c.b16 %v7919, %v7918
    %v7937 = vpack.c.b16 %v7921, %v7920
    %7954 = vmatpush.bf16.msra.mxu0 %v7929
    %7955 = vmatpush.bf16.msra.mxu0 %v7928
    %7956 = vmatpush.bf16.msra.mxu0 %v7927
    %7957 = vmatpush.bf16.msra.mxu0 %v7926
    %7958 = vmatpush.bf16.msra.mxu0 %v7925
    %7959 = vmatpush.bf16.msra.mxu0 %v7924
    %7960 = vmatpush.bf16.msra.mxu0 %v7923
    %7961 = vmatpush.bf16.msra.mxu0 %v7922
    %7962 = vmatmul.bf16.gmra.mxu0 %v7817
    %v7963 = vpop.f32.mrf.mxu0
    %v7964 = vadd.f32 0.0, %v7963
    %v7965 = vpop.f32.mrf.mxu0
    %v7966 = vadd.f32 0.0, %v7965
    %7967 = vmatmul.bf16.gmra.mxu0 %v7819
    %v7968 = vpop.f32.mrf.mxu0
    %v7969 = vadd.f32 0.0, %v7968
    %v7970 = vpop.f32.mrf.mxu0
    %v7971 = vadd.f32 0.0, %v7970
    %7972 = vmatmul.bf16.gmra.mxu0 %v7821
    %v7973 = vpop.f32.mrf.mxu0
    %v7974 = vadd.f32 0.0, %v7973
    %v7975 = vpop.f32.mrf.mxu0
    %v7976 = vadd.f32 0.0, %v7975
    %7977 = vmatmul.bf16.gmra.mxu0 %v7823
    %v7978 = vpop.f32.mrf.mxu0
    %v7979 = vadd.f32 0.0, %v7978
    %v7980 = vpop.f32.mrf.mxu0
    %v7981 = vadd.f32 0.0, %v7980
    %7982 = vdwg.mxu0
    %7983 = vmatpush.bf16.msra.mxu0 %v7937
    %7984 = vmatpush.bf16.msra.mxu0 %v7936
    %7985 = vmatpush.bf16.msra.mxu0 %v7935
    %7986 = vmatpush.bf16.msra.mxu0 %v7934
    %7987 = vmatpush.bf16.msra.mxu0 %v7933
    %7988 = vmatpush.bf16.msra.mxu0 %v7932
    %7989 = vmatpush.bf16.msra.mxu0 %v7931
    %7990 = vmatpush.bf16.msra.mxu0 %v7930
    %7991 = vmatmul.bf16.gmra.mxu0 %v7818
    %v7992 = vpop.f32.mrf.mxu0
    %v7993 = vadd.f32 %v7964, %v7992
    %v7994 = vpop.f32.mrf.mxu0
    %v7995 = vadd.f32 %v7966, %v7994
    %7996 = vmatmul.bf16.gmra.mxu0 %v7820
    %v7997 = vpop.f32.mrf.mxu0
    %v7998 = vadd.f32 %v7969, %v7997
    %v7999 = vpop.f32.mrf.mxu0
    %v8000 = vadd.f32 %v7971, %v7999
    %8001 = vmatmul.bf16.gmra.mxu0 %v7822
    %v8002 = vpop.f32.mrf.mxu0
    %v8003 = vadd.f32 %v7974, %v8002
    %v8004 = vpop.f32.mrf.mxu0
    %v8005 = vadd.f32 %v7976, %v8004
    %8006 = vmatmul.bf16.gmra.mxu0 %v7824
    %v8007 = vpop.f32.mrf.mxu0
    %v8008 = vadd.f32 %v7979, %v8007
    %v8009 = vpop.f32.mrf.mxu0
    %v8010 = vadd.f32 %v7981, %v8009
    %8011 = vdwg.mxu0
    %v8012 = vadd.f32 %v7710, %v7993
    %v8013 = vadd.f32 %v7711, %v7995
    %v8014 = vadd.f32 %v7712, %v7998
    %v8015 = vadd.f32 %v7713, %v8000
    %v8016 = vadd.f32 %v7714, %v8003
    %v8017 = vadd.f32 %v7715, %v8005
    %v8018 = vadd.f32 %v7716, %v8008
    %v8019 = vadd.f32 %v7717, %v8010
    %8020 = vmatpush.bf16.msra.mxu0 0
    %8021 = vmatpush.bf16.msra.mxu0 0
    %8022 = vmatpush.bf16.msra.mxu0 0
    %8023 = vmatpush.bf16.msra.mxu0 0
    %8024 = vmatpush.bf16.msra.mxu0 0
    %8025 = vmatpush.bf16.msra.mxu0 0
    %8026 = vmatpush.bf16.msra.mxu0 %v6828
    %8027 = vmatpush.bf16.msra.mxu0 %v6826
    %8028 = vmatmul.bf16.gmra.mxu0 %v6859
    %v8029 = vpop.f32.mrf.mxu0
    %v8030 = vadd.f32 0.0, %v8029
    %v8031 = vpop.f32.mrf.mxu0
    %v8032 = vadd.f32 0.0, %v8031
    %8033 = vmatmul.bf16.gmra.mxu0 %v6862
    %v8034 = vpop.f32.mrf.mxu0
    %v8035 = vadd.f32 0.0, %v8034
    %v8036 = vpop.f32.mrf.mxu0
    %v8037 = vadd.f32 0.0, %v8036
    %8038 = vmatmul.bf16.gmra.mxu0 %v6865
    %v8039 = vpop.f32.mrf.mxu0
    %v8040 = vadd.f32 0.0, %v8039
    %v8041 = vpop.f32.mrf.mxu0
    %v8042 = vadd.f32 0.0, %v8041
    %8043 = vmatmul.bf16.gmra.mxu0 %v6868
    %v8044 = vpop.f32.mrf.mxu0
    %v8045 = vadd.f32 0.0, %v8044
    %v8046 = vpop.f32.mrf.mxu0
    %v8047 = vadd.f32 0.0, %v8046
    %8048 = vdwg.mxu0
    %8049 = vmatpush.bf16.msra.mxu0 0
    %8050 = vmatpush.bf16.msra.mxu0 0
    %8051 = vmatpush.bf16.msra.mxu0 0
    %8052 = vmatpush.bf16.msra.mxu0 0
    %8053 = vmatpush.bf16.msra.mxu0 0
    %8054 = vmatpush.bf16.msra.mxu0 0
    %8055 = vmatpush.bf16.msra.mxu0 %v6829
    %8056 = vmatpush.bf16.msra.mxu0 %v6827
    %8057 = vmatmul.bf16.gmra.mxu0 %v6859
    %v8058 = vpop.f32.mrf.mxu0
    %v8059 = vadd.f32 0.0, %v8058
    %v8060 = vpop.f32.mrf.mxu0
    %v8061 = vadd.f32 0.0, %v8060
    %8062 = vmatmul.bf16.gmra.mxu0 %v6862
    %v8063 = vpop.f32.mrf.mxu0
    %v8064 = vadd.f32 0.0, %v8063
    %v8065 = vpop.f32.mrf.mxu0
    %v8066 = vadd.f32 0.0, %v8065
    %8067 = vmatmul.bf16.gmra.mxu0 %v6865
    %v8068 = vpop.f32.mrf.mxu0
    %v8069 = vadd.f32 0.0, %v8068
    %v8070 = vpop.f32.mrf.mxu0
    %v8071 = vadd.f32 0.0, %v8070
    %8072 = vmatmul.bf16.gmra.mxu0 %v6868
    %v8073 = vpop.f32.mrf.mxu0
    %v8074 = vadd.f32 0.0, %v8073
    %v8075 = vpop.f32.mrf.mxu0
    %v8076 = vadd.f32 0.0, %v8075
    %8077 = vdwg.mxu0
    %v8078 = vpack.c.bf16 %v8032, %v8030
    %v8079 = vpack.c.bf16 %v8061, %v8059
    %v8080 = vpack.c.bf16 %v8037, %v8035
    %v8081 = vpack.c.bf16 %v8066, %v8064
    %v8082 = vpack.c.bf16 %v8042, %v8040
    %v8083 = vpack.c.bf16 %v8071, %v8069
    %v8084 = vpack.c.bf16 %v8047, %v8045
    %v8085 = vpack.c.bf16 %v8076, %v8074
    %8086 = vmatpush.bf16.msra.mxu0 0
    %8087 = vmatpush.bf16.msra.mxu0 0
    %8088 = vmatpush.bf16.msra.mxu0 0
    %8089 = vmatpush.bf16.msra.mxu0 0
    %8090 = vmatpush.bf16.msra.mxu0 0
    %8091 = vmatpush.bf16.msra.mxu0 0
    %8092 = vmatpush.bf16.msra.mxu0 %v6828
    %8093 = vmatpush.bf16.msra.mxu0 %v6826
    %8094 = vmatmul.bf16.gmra.mxu0 %v6998
    %v8095 = vpop.f32.mrf.mxu0
    %v8096 = vadd.f32 0.0, %v8095
    %v8097 = vpop.f32.mrf.mxu0
    %v8098 = vadd.f32 0.0, %v8097
    %8099 = vmatmul.bf16.gmra.mxu0 %v7001
    %v8100 = vpop.f32.mrf.mxu0
    %v8101 = vadd.f32 0.0, %v8100
    %v8102 = vpop.f32.mrf.mxu0
    %v8103 = vadd.f32 0.0, %v8102
    %8104 = vmatmul.bf16.gmra.mxu0 %v7004
    %v8105 = vpop.f32.mrf.mxu0
    %v8106 = vadd.f32 0.0, %v8105
    %v8107 = vpop.f32.mrf.mxu0
    %v8108 = vadd.f32 0.0, %v8107
    %8109 = vmatmul.bf16.gmra.mxu0 %v7007
    %v8110 = vpop.f32.mrf.mxu0
    %v8111 = vadd.f32 0.0, %v8110
    %v8112 = vpop.f32.mrf.mxu0
    %v8113 = vadd.f32 0.0, %v8112
    %8114 = vdwg.mxu0
    %8115 = vmatpush.bf16.msra.mxu0 0
    %8116 = vmatpush.bf16.msra.mxu0 0
    %8117 = vmatpush.bf16.msra.mxu0 0
    %8118 = vmatpush.bf16.msra.mxu0 0
    %8119 = vmatpush.bf16.msra.mxu0 0
    %8120 = vmatpush.bf16.msra.mxu0 0
    %8121 = vmatpush.bf16.msra.mxu0 %v6829
    %8122 = vmatpush.bf16.msra.mxu0 %v6827
    %8123 = vmatmul.bf16.gmra.mxu0 %v6998
    %v8124 = vpop.f32.mrf.mxu0
    %v8125 = vadd.f32 0.0, %v8124
    %v8126 = vpop.f32.mrf.mxu0
    %v8127 = vadd.f32 0.0, %v8126
    %8128 = vmatmul.bf16.gmra.mxu0 %v7001
    %v8129 = vpop.f32.mrf.mxu0
    %v8130 = vadd.f32 0.0, %v8129
    %v8131 = vpop.f32.mrf.mxu0
    %v8132 = vadd.f32 0.0, %v8131
    %8133 = vmatmul.bf16.gmra.mxu0 %v7004
    %v8134 = vpop.f32.mrf.mxu0
    %v8135 = vadd.f32 0.0, %v8134
    %v8136 = vpop.f32.mrf.mxu0
    %v8137 = vadd.f32 0.0, %v8136
    %8138 = vmatmul.bf16.gmra.mxu0 %v7007
    %v8139 = vpop.f32.mrf.mxu0
    %v8140 = vadd.f32 0.0, %v8139
    %v8141 = vpop.f32.mrf.mxu0
    %v8142 = vadd.f32 0.0, %v8141
    %8143 = vdwg.mxu0
    %v8144 = vpack.c.bf16 %v8098, %v8096
    %v8145 = vpack.c.bf16 %v8127, %v8125
    %v8146 = vpack.c.bf16 %v8103, %v8101
    %v8147 = vpack.c.bf16 %v8132, %v8130
    %v8148 = vpack.c.bf16 %v8108, %v8106
    %v8149 = vpack.c.bf16 %v8137, %v8135
    %v8150 = vpack.c.bf16 %v8113, %v8111
    %v8151 = vpack.c.bf16 %v8142, %v8140
    %8152 = vmatpush.bf16.msra.mxu0 %v7179
    %8153 = vmatpush.bf16.msra.mxu0 %v7178
    %8154 = vmatpush.bf16.msra.mxu0 %v7177
    %8155 = vmatpush.bf16.msra.mxu0 %v7176
    %8156 = vmatpush.bf16.msra.mxu0 %v7175
    %8157 = vmatpush.bf16.msra.mxu0 %v7174
    %8158 = vmatpush.bf16.msra.mxu0 %v7173
    %8159 = vmatpush.bf16.msra.mxu0 %v7172
    %8160 = vmatmul.bf16.gmra.mxu0 %v8144
    %v8161 = vpop.f32.mrf.mxu0
    %v8162 = vadd.f32 0.0, %v8161
    %v8163 = vpop.f32.mrf.mxu0
    %v8164 = vadd.f32 0.0, %v8163
    %8165 = vmatmul.bf16.gmra.mxu0 %v8146
    %v8166 = vpop.f32.mrf.mxu0
    %v8167 = vadd.f32 0.0, %v8166
    %v8168 = vpop.f32.mrf.mxu0
    %v8169 = vadd.f32 0.0, %v8168
    %8170 = vmatmul.bf16.gmra.mxu0 %v8148
    %v8171 = vpop.f32.mrf.mxu0
    %v8172 = vadd.f32 0.0, %v8171
    %v8173 = vpop.f32.mrf.mxu0
    %v8174 = vadd.f32 0.0, %v8173
    %8175 = vmatmul.bf16.gmra.mxu0 %v8150
    %v8176 = vpop.f32.mrf.mxu0
    %v8177 = vadd.f32 0.0, %v8176
    %v8178 = vpop.f32.mrf.mxu0
    %v8179 = vadd.f32 0.0, %v8178
    %8180 = vdwg.mxu0
    %8181 = vmatpush.bf16.msra.mxu0 %v7187
    %8182 = vmatpush.bf16.msra.mxu0 %v7186
    %8183 = vmatpush.bf16.msra.mxu0 %v7185
    %8184 = vmatpush.bf16.msra.mxu0 %v7184
    %8185 = vmatpush.bf16.msra.mxu0 %v7183
    %8186 = vmatpush.bf16.msra.mxu0 %v7182
    %8187 = vmatpush.bf16.msra.mxu0 %v7181
    %8188 = vmatpush.bf16.msra.mxu0 %v7180
    %8189 = vmatmul.bf16.gmra.mxu0 %v8145
    %v8190 = vpop.f32.mrf.mxu0
    %v8191 = vadd.f32 %v8162, %v8190
    %v8192 = vpop.f32.mrf.mxu0
    %v8193 = vadd.f32 %v8164, %v8192
    %8194 = vmatmul.bf16.gmra.mxu0 %v8147
    %v8195 = vpop.f32.mrf.mxu0
    %v8196 = vadd.f32 %v8167, %v8195
    %v8197 = vpop.f32.mrf.mxu0
    %v8198 = vadd.f32 %v8169, %v8197
    %8199 = vmatmul.bf16.gmra.mxu0 %v8149
    %v8200 = vpop.f32.mrf.mxu0
    %v8201 = vadd.f32 %v8172, %v8200
    %v8202 = vpop.f32.mrf.mxu0
    %v8203 = vadd.f32 %v8174, %v8202
    %8204 = vmatmul.bf16.gmra.mxu0 %v8151
    %v8205 = vpop.f32.mrf.mxu0
    %v8206 = vadd.f32 %v8177, %v8205
    %v8207 = vpop.f32.mrf.mxu0
    %v8208 = vadd.f32 %v8179, %v8207
    %8209 = vdwg.mxu0
    %8210 = vmatpush.bf16.msra.mxu0 %v7333
    %8211 = vmatpush.bf16.msra.mxu0 %v7332
    %8212 = vmatpush.bf16.msra.mxu0 %v7331
    %8213 = vmatpush.bf16.msra.mxu0 %v7330
    %8214 = vmatpush.bf16.msra.mxu0 %v7329
    %8215 = vmatpush.bf16.msra.mxu0 %v7328
    %8216 = vmatpush.bf16.msra.mxu0 %v7327
    %8217 = vmatpush.bf16.msra.mxu0 %v7326
    %8218 = vmatmul.bf16.gmra.mxu0 %v8078
    %v8219 = vpop.f32.mrf.mxu0
    %v8220 = vadd.f32 %v8191, %v8219
    %v8221 = vpop.f32.mrf.mxu0
    %v8222 = vadd.f32 %v8193, %v8221
    %8223 = vmatmul.bf16.gmra.mxu0 %v8080
    %v8224 = vpop.f32.mrf.mxu0
    %v8225 = vadd.f32 %v8196, %v8224
    %v8226 = vpop.f32.mrf.mxu0
    %v8227 = vadd.f32 %v8198, %v8226
    %8228 = vmatmul.bf16.gmra.mxu0 %v8082
    %v8229 = vpop.f32.mrf.mxu0
    %v8230 = vadd.f32 %v8201, %v8229
    %v8231 = vpop.f32.mrf.mxu0
    %v8232 = vadd.f32 %v8203, %v8231
    %8233 = vmatmul.bf16.gmra.mxu0 %v8084
    %v8234 = vpop.f32.mrf.mxu0
    %v8235 = vadd.f32 %v8206, %v8234
    %v8236 = vpop.f32.mrf.mxu0
    %v8237 = vadd.f32 %v8208, %v8236
    %8238 = vdwg.mxu0
    %8239 = vmatpush.bf16.msra.mxu0 %v7341
    %8240 = vmatpush.bf16.msra.mxu0 %v7340
    %8241 = vmatpush.bf16.msra.mxu0 %v7339
    %8242 = vmatpush.bf16.msra.mxu0 %v7338
    %8243 = vmatpush.bf16.msra.mxu0 %v7337
    %8244 = vmatpush.bf16.msra.mxu0 %v7336
    %8245 = vmatpush.bf16.msra.mxu0 %v7335
    %8246 = vmatpush.bf16.msra.mxu0 %v7334
    %8247 = vmatmul.bf16.gmra.mxu0 %v8079
    %v8248 = vpop.f32.mrf.mxu0
    %v8249 = vadd.f32 %v8220, %v8248
    %v8250 = vpop.f32.mrf.mxu0
    %v8251 = vadd.f32 %v8222, %v8250
    %8252 = vmatmul.bf16.gmra.mxu0 %v8081
    %v8253 = vpop.f32.mrf.mxu0
    %v8254 = vadd.f32 %v8225, %v8253
    %v8255 = vpop.f32.mrf.mxu0
    %v8256 = vadd.f32 %v8227, %v8255
    %8257 = vmatmul.bf16.gmra.mxu0 %v8083
    %v8258 = vpop.f32.mrf.mxu0
    %v8259 = vadd.f32 %v8230, %v8258
    %v8260 = vpop.f32.mrf.mxu0
    %v8261 = vadd.f32 %v8232, %v8260
    %8262 = vmatmul.bf16.gmra.mxu0 %v8085
    %v8263 = vpop.f32.mrf.mxu0
    %v8264 = vadd.f32 %v8235, %v8263
    %v8265 = vpop.f32.mrf.mxu0
    %v8266 = vadd.f32 %v8237, %v8265
    %8267 = vdwg.mxu0
    %8268 = vmatpush.bf16.msra.mxu0 0
    %8269 = vmatpush.bf16.msra.mxu0 0
    %8270 = vmatpush.bf16.msra.mxu0 0
    %8271 = vmatpush.bf16.msra.mxu0 0
    %8272 = vmatpush.bf16.msra.mxu0 0
    %8273 = vmatpush.bf16.msra.mxu0 0
    %8274 = vmatpush.bf16.msra.mxu0 %v6828
    %8275 = vmatpush.bf16.msra.mxu0 %v6826
    %8276 = vmatmul.bf16.gmra.mxu0 %v7446
    %v8277 = vpop.f32.mrf.mxu0
    %v8278 = vadd.f32 0.0, %v8277
    %v8279 = vpop.f32.mrf.mxu0
    %v8280 = vadd.f32 0.0, %v8279
    %8281 = vmatmul.bf16.gmra.mxu0 %v7449
    %v8282 = vpop.f32.mrf.mxu0
    %v8283 = vadd.f32 0.0, %v8282
    %v8284 = vpop.f32.mrf.mxu0
    %v8285 = vadd.f32 0.0, %v8284
    %8286 = vmatmul.bf16.gmra.mxu0 %v7452
    %v8287 = vpop.f32.mrf.mxu0
    %v8288 = vadd.f32 0.0, %v8287
    %v8289 = vpop.f32.mrf.mxu0
    %v8290 = vadd.f32 0.0, %v8289
    %8291 = vmatmul.bf16.gmra.mxu0 %v7455
    %v8292 = vpop.f32.mrf.mxu0
    %v8293 = vadd.f32 0.0, %v8292
    %v8294 = vpop.f32.mrf.mxu0
    %v8295 = vadd.f32 0.0, %v8294
    %8296 = vdwg.mxu0
    %8297 = vmatpush.bf16.msra.mxu0 0
    %8298 = vmatpush.bf16.msra.mxu0 0
    %8299 = vmatpush.bf16.msra.mxu0 0
    %8300 = vmatpush.bf16.msra.mxu0 0
    %8301 = vmatpush.bf16.msra.mxu0 0
    %8302 = vmatpush.bf16.msra.mxu0 0
    %8303 = vmatpush.bf16.msra.mxu0 %v6829
    %8304 = vmatpush.bf16.msra.mxu0 %v6827
    %8305 = vmatmul.bf16.gmra.mxu0 %v7446
    %v8306 = vpop.f32.mrf.mxu0
    %v8307 = vadd.f32 0.0, %v8306
    %v8308 = vpop.f32.mrf.mxu0
    %v8309 = vadd.f32 0.0, %v8308
    %8310 = vmatmul.bf16.gmra.mxu0 %v7449
    %v8311 = vpop.f32.mrf.mxu0
    %v8312 = vadd.f32 0.0, %v8311
    %v8313 = vpop.f32.mrf.mxu0
    %v8314 = vadd.f32 0.0, %v8313
    %8315 = vmatmul.bf16.gmra.mxu0 %v7452
    %v8316 = vpop.f32.mrf.mxu0
    %v8317 = vadd.f32 0.0, %v8316
    %v8318 = vpop.f32.mrf.mxu0
    %v8319 = vadd.f32 0.0, %v8318
    %8320 = vmatmul.bf16.gmra.mxu0 %v7455
    %v8321 = vpop.f32.mrf.mxu0
    %v8322 = vadd.f32 0.0, %v8321
    %v8323 = vpop.f32.mrf.mxu0
    %v8324 = vadd.f32 0.0, %v8323
    %8325 = vdwg.mxu0
    %v8326 = vpack.c.bf16 %v8280, %v8278
    %v8327 = vpack.c.bf16 %v8309, %v8307
    %v8328 = vpack.c.bf16 %v8285, %v8283
    %v8329 = vpack.c.bf16 %v8314, %v8312
    %v8330 = vpack.c.bf16 %v8290, %v8288
    %v8331 = vpack.c.bf16 %v8319, %v8317
    %v8332 = vpack.c.bf16 %v8295, %v8293
    %v8333 = vpack.c.bf16 %v8324, %v8322
    %8334 = vmatpush.bf16.msra.mxu0 %v7627
    %8335 = vmatpush.bf16.msra.mxu0 %v7626
    %8336 = vmatpush.bf16.msra.mxu0 %v7625
    %8337 = vmatpush.bf16.msra.mxu0 %v7624
    %8338 = vmatpush.bf16.msra.mxu0 %v7623
    %8339 = vmatpush.bf16.msra.mxu0 %v7622
    %8340 = vmatpush.bf16.msra.mxu0 %v7621
    %8341 = vmatpush.bf16.msra.mxu0 %v7620
    %8342 = vmatmul.bf16.gmra.mxu0 %v8326
    %v8343 = vpop.f32.mrf.mxu0
    %v8344 = vadd.f32 0.0, %v8343
    %v8345 = vpop.f32.mrf.mxu0
    %v8346 = vadd.f32 0.0, %v8345
    %8347 = vmatmul.bf16.gmra.mxu0 %v8328
    %v8348 = vpop.f32.mrf.mxu0
    %v8349 = vadd.f32 0.0, %v8348
    %v8350 = vpop.f32.mrf.mxu0
    %v8351 = vadd.f32 0.0, %v8350
    %8352 = vmatmul.bf16.gmra.mxu0 %v8330
    %v8353 = vpop.f32.mrf.mxu0
    %v8354 = vadd.f32 0.0, %v8353
    %v8355 = vpop.f32.mrf.mxu0
    %v8356 = vadd.f32 0.0, %v8355
    %8357 = vmatmul.bf16.gmra.mxu0 %v8332
    %v8358 = vpop.f32.mrf.mxu0
    %v8359 = vadd.f32 0.0, %v8358
    %v8360 = vpop.f32.mrf.mxu0
    %v8361 = vadd.f32 0.0, %v8360
    %8362 = vdwg.mxu0
    %8363 = vmatpush.bf16.msra.mxu0 %v7635
    %8364 = vmatpush.bf16.msra.mxu0 %v7634
    %8365 = vmatpush.bf16.msra.mxu0 %v7633
    %8366 = vmatpush.bf16.msra.mxu0 %v7632
    %8367 = vmatpush.bf16.msra.mxu0 %v7631
    %8368 = vmatpush.bf16.msra.mxu0 %v7630
    %8369 = vmatpush.bf16.msra.mxu0 %v7629
    %8370 = vmatpush.bf16.msra.mxu0 %v7628
    %8371 = vmatmul.bf16.gmra.mxu0 %v8327
    %v8372 = vpop.f32.mrf.mxu0
    %v8373 = vadd.f32 %v8344, %v8372
    %v8374 = vpop.f32.mrf.mxu0
    %v8375 = vadd.f32 %v8346, %v8374
    %8376 = vmatmul.bf16.gmra.mxu0 %v8329
    %v8377 = vpop.f32.mrf.mxu0
    %v8378 = vadd.f32 %v8349, %v8377
    %v8379 = vpop.f32.mrf.mxu0
    %v8380 = vadd.f32 %v8351, %v8379
    %8381 = vmatmul.bf16.gmra.mxu0 %v8331
    %v8382 = vpop.f32.mrf.mxu0
    %v8383 = vadd.f32 %v8354, %v8382
    %v8384 = vpop.f32.mrf.mxu0
    %v8385 = vadd.f32 %v8356, %v8384
    %8386 = vmatmul.bf16.gmra.mxu0 %v8333
    %v8387 = vpop.f32.mrf.mxu0
    %v8388 = vadd.f32 %v8359, %v8387
    %v8389 = vpop.f32.mrf.mxu0
    %v8390 = vadd.f32 %v8361, %v8389
    %8391 = vdwg.mxu0
    %v8392 = vadd.f32 %v8249, %v8373
    %v8393 = vadd.f32 %v8251, %v8375
    %v8394 = vadd.f32 %v8254, %v8378
    %v8395 = vadd.f32 %v8256, %v8380
    %v8396 = vadd.f32 %v8259, %v8383
    %v8397 = vadd.f32 %v8261, %v8385
    %v8398 = vadd.f32 %v8264, %v8388
    %v8399 = vadd.f32 %v8266, %v8390
    %8400 = vmatpush.bf16.msra.mxu0 0
    %8401 = vmatpush.bf16.msra.mxu0 0
    %8402 = vmatpush.bf16.msra.mxu0 0
    %8403 = vmatpush.bf16.msra.mxu0 0
    %8404 = vmatpush.bf16.msra.mxu0 0
    %8405 = vmatpush.bf16.msra.mxu0 0
    %8406 = vmatpush.bf16.msra.mxu0 %v6828
    %8407 = vmatpush.bf16.msra.mxu0 %v6826
    %8408 = vmatmul.bf16.gmra.mxu0 %v7748
    %v8409 = vpop.f32.mrf.mxu0
    %v8410 = vadd.f32 0.0, %v8409
    %v8411 = vpop.f32.mrf.mxu0
    %v8412 = vadd.f32 0.0, %v8411
    %8413 = vmatmul.bf16.gmra.mxu0 %v7751
    %v8414 = vpop.f32.mrf.mxu0
    %v8415 = vadd.f32 0.0, %v8414
    %v8416 = vpop.f32.mrf.mxu0
    %v8417 = vadd.f32 0.0, %v8416
    %8418 = vmatmul.bf16.gmra.mxu0 %v7754
    %v8419 = vpop.f32.mrf.mxu0
    %v8420 = vadd.f32 0.0, %v8419
    %v8421 = vpop.f32.mrf.mxu0
    %v8422 = vadd.f32 0.0, %v8421
    %8423 = vmatmul.bf16.gmra.mxu0 %v7757
    %v8424 = vpop.f32.mrf.mxu0
    %v8425 = vadd.f32 0.0, %v8424
    %v8426 = vpop.f32.mrf.mxu0
    %v8427 = vadd.f32 0.0, %v8426
    %8428 = vdwg.mxu0
    %8429 = vmatpush.bf16.msra.mxu0 0
    %8430 = vmatpush.bf16.msra.mxu0 0
    %8431 = vmatpush.bf16.msra.mxu0 0
    %8432 = vmatpush.bf16.msra.mxu0 0
    %8433 = vmatpush.bf16.msra.mxu0 0
    %8434 = vmatpush.bf16.msra.mxu0 0
    %8435 = vmatpush.bf16.msra.mxu0 %v6829
    %8436 = vmatpush.bf16.msra.mxu0 %v6827
    %8437 = vmatmul.bf16.gmra.mxu0 %v7748
    %v8438 = vpop.f32.mrf.mxu0
    %v8439 = vadd.f32 0.0, %v8438
    %v8440 = vpop.f32.mrf.mxu0
    %v8441 = vadd.f32 0.0, %v8440
    %8442 = vmatmul.bf16.gmra.mxu0 %v7751
    %v8443 = vpop.f32.mrf.mxu0
    %v8444 = vadd.f32 0.0, %v8443
    %v8445 = vpop.f32.mrf.mxu0
    %v8446 = vadd.f32 0.0, %v8445
    %8447 = vmatmul.bf16.gmra.mxu0 %v7754
    %v8448 = vpop.f32.mrf.mxu0
    %v8449 = vadd.f32 0.0, %v8448
    %v8450 = vpop.f32.mrf.mxu0
    %v8451 = vadd.f32 0.0, %v8450
    %8452 = vmatmul.bf16.gmra.mxu0 %v7757
    %v8453 = vpop.f32.mrf.mxu0
    %v8454 = vadd.f32 0.0, %v8453
    %v8455 = vpop.f32.mrf.mxu0
    %v8456 = vadd.f32 0.0, %v8455
    %8457 = vdwg.mxu0
    %v8458 = vpack.c.bf16 %v8412, %v8410
    %v8459 = vpack.c.bf16 %v8441, %v8439
    %v8460 = vpack.c.bf16 %v8417, %v8415
    %v8461 = vpack.c.bf16 %v8446, %v8444
    %v8462 = vpack.c.bf16 %v8422, %v8420
    %v8463 = vpack.c.bf16 %v8451, %v8449
    %v8464 = vpack.c.bf16 %v8427, %v8425
    %v8465 = vpack.c.bf16 %v8456, %v8454
    %8466 = vmatpush.bf16.msra.mxu0 %v7929
    %8467 = vmatpush.bf16.msra.mxu0 %v7928
    %8468 = vmatpush.bf16.msra.mxu0 %v7927
    %8469 = vmatpush.bf16.msra.mxu0 %v7926
    %8470 = vmatpush.bf16.msra.mxu0 %v7925
    %8471 = vmatpush.bf16.msra.mxu0 %v7924
    %8472 = vmatpush.bf16.msra.mxu0 %v7923
    %8473 = vmatpush.bf16.msra.mxu0 %v7922
    %8474 = vmatmul.bf16.gmra.mxu0 %v8458
    %v8475 = vpop.f32.mrf.mxu0
    %v8476 = vadd.f32 0.0, %v8475
    %v8477 = vpop.f32.mrf.mxu0
    %v8478 = vadd.f32 0.0, %v8477
    %8479 = vmatmul.bf16.gmra.mxu0 %v8460
    %v8480 = vpop.f32.mrf.mxu0
    %v8481 = vadd.f32 0.0, %v8480
    %v8482 = vpop.f32.mrf.mxu0
    %v8483 = vadd.f32 0.0, %v8482
    %8484 = vmatmul.bf16.gmra.mxu0 %v8462
    %v8485 = vpop.f32.mrf.mxu0
    %v8486 = vadd.f32 0.0, %v8485
    %v8487 = vpop.f32.mrf.mxu0
    %v8488 = vadd.f32 0.0, %v8487
    %8489 = vmatmul.bf16.gmra.mxu0 %v8464
    %v8490 = vpop.f32.mrf.mxu0
    %v8491 = vadd.f32 0.0, %v8490
    %v8492 = vpop.f32.mrf.mxu0
    %v8493 = vadd.f32 0.0, %v8492
    %8494 = vdwg.mxu0
    %8495 = vmatpush.bf16.msra.mxu0 %v7937
    %8496 = vmatpush.bf16.msra.mxu0 %v7936
    %8497 = vmatpush.bf16.msra.mxu0 %v7935
    %8498 = vmatpush.bf16.msra.mxu0 %v7934
    %8499 = vmatpush.bf16.msra.mxu0 %v7933
    %8500 = vmatpush.bf16.msra.mxu0 %v7932
    %8501 = vmatpush.bf16.msra.mxu0 %v7931
    %8502 = vmatpush.bf16.msra.mxu0 %v7930
    %8503 = vmatmul.bf16.gmra.mxu0 %v8459
    %v8504 = vpop.f32.mrf.mxu0
    %v8505 = vadd.f32 %v8476, %v8504
    %v8506 = vpop.f32.mrf.mxu0
    %v8507 = vadd.f32 %v8478, %v8506
    %8508 = vmatmul.bf16.gmra.mxu0 %v8461
    %v8509 = vpop.f32.mrf.mxu0
    %v8510 = vadd.f32 %v8481, %v8509
    %v8511 = vpop.f32.mrf.mxu0
    %v8512 = vadd.f32 %v8483, %v8511
    %8513 = vmatmul.bf16.gmra.mxu0 %v8463
    %v8514 = vpop.f32.mrf.mxu0
    %v8515 = vadd.f32 %v8486, %v8514
    %v8516 = vpop.f32.mrf.mxu0
    %v8517 = vadd.f32 %v8488, %v8516
    %8518 = vmatmul.bf16.gmra.mxu0 %v8465
    %v8519 = vpop.f32.mrf.mxu0
    %v8520 = vadd.f32 %v8491, %v8519
    %v8521 = vpop.f32.mrf.mxu0
    %v8522 = vadd.f32 %v8493, %v8521
    %8523 = vdwg.mxu0
    %v8524 = vadd.f32 %v8392, %v8505
    %v8525 = vadd.f32 %v8393, %v8507
    %v8526 = vadd.f32 %v8394, %v8510
    %v8527 = vadd.f32 %v8395, %v8512
    %v8528 = vadd.f32 %v8396, %v8515
    %v8529 = vadd.f32 %v8397, %v8517
    %v8530 = vadd.f32 %v8398, %v8520
    %v8531 = vadd.f32 %v8399, %v8522
    %v8532 = vtanh.pop %v8012
    %v8533 = vtanh.pop %v8013
    %v8534 = vtanh.pop %v8014
    %v8535 = vtanh.pop %v8015
    %v8536 = vtanh.pop %v8016
    %v8537 = vtanh.pop %v8017
    %v8538 = vtanh.pop %v8018
    %v8539 = vtanh.pop %v8019
    %8540 = vst.msk [vmem:[#allocation2] sm:$0xff] %vm624, %v8532
    %8541 = vst.msk [vmem:[#allocation2 + $0x8] sm:$0xff] %vm624, %v8533
    %8542 = vst.msk [vmem:[#allocation2 + $0x10] sm:$0xff] %vm624, %v8534
    %8543 = vst.msk [vmem:[#allocation2 + $0x18] sm:$0xff] %vm624, %v8535
    %8544 = vst.msk [vmem:[#allocation2 + $0x20] sm:$0xff] %vm624, %v8536
    %8545 = vst.msk [vmem:[#allocation2 + $0x28] sm:$0xff] %vm624, %v8537
    %8546 = vst.msk [vmem:[#allocation2 + $0x30] sm:$0xff] %vm624, %v8538
    %8547 = vst.msk [vmem:[#allocation2 + $0x38] sm:$0xff] %vm624, %v8539
    %v8548 = vtanh.pop %v8524
    %v8549 = vtanh.pop %v8525
    %v8550 = vtanh.pop %v8526
    %v8551 = vtanh.pop %v8527
    %v8552 = vtanh.pop %v8528
    %v8553 = vtanh.pop %v8529
    %v8554 = vtanh.pop %v8530
    %v8555 = vtanh.pop %v8531
    %s8556 = scalar_lea.vmem [#allocation2], 64
    %8557 = vst.msk [vmem:[%s8556] sm:$0xff] %vm624, %v8548
    %8558 = vst.msk [vmem:[%s8556 + $0x8] sm:$0xff] %vm624, %v8549
    %8559 = vst.msk [vmem:[%s8556 + $0x10] sm:$0xff] %vm624, %v8550
    %8560 = vst.msk [vmem:[%s8556 + $0x18] sm:$0xff] %vm624, %v8551
    %8561 = vst.msk [vmem:[%s8556 + $0x20] sm:$0xff] %vm624, %v8552
    %8562 = vst.msk [vmem:[%s8556 + $0x28] sm:$0xff] %vm624, %v8553
    %8563 = vst.msk [vmem:[%s8556 + $0x30] sm:$0xff] %vm624, %v8554
    %8564 = vst.msk [vmem:[%s8556 + $0x38] sm:$0xff] %vm624, %v8555
    // Predicated region
    $region110: #{generator_forward.1} parent=1 // pred_check
      _
    $region111: #{generator_forward.1} parent=1 // pred_check_branch
      %8566 = sbr.rel (0) target = $region113
    $region112: #{generator_forward.1} parent=1 // pred_region
      %8568 = vsyncadd [#allocation3], 0
      %s8569 = sshll.u32 [#allocation2], 4
      %s8570 = int_to_ptr.vmem [resolvable:$true] %s8569
      %s8571 = sshll.u32 %s27, 4
      %s8572 = int_to_ptr.hbm [resolvable:$true] %s8571
      %8577 = dma.vmem_to_hbm [thread:$0]  %s8570, 2048, %s8572, [#allocation3], 128, 128, 8
    $region113: #{generator_forward.1} parent=1 // pred_fallthru
      _
    // Predicated region
    $region114: #{generator_forward.1} parent=1 // pred_check
      _
    $region115: #{generator_forward.1} parent=1 // pred_check_branch
      %8579 = sbr.rel (0) target = $region117
    $region116: #{generator_forward.1} parent=1 // pred_region
      %8581 = dma.done [#allocation3], 2048
    $region117: #{generator_forward.1} parent=1 // pred_fallthru
      _
    %8582 = vsyncpa [#allocation3], 1

</llo_original>
